<compile_context>
chip_gen: v7x
topology: tpu7x:2x2x1
jax: 0.10.0
libtpu: 0.0.40
codegen_flags: <defaults>
</compile_context>

<pallas_src>
import jax
import jax.numpy as jnp
from jax import lax
from jax.experimental import pallas as pl
from jax.experimental.pallas import tpu as pltpu

# ----------------------------- config --------------------------------------
B = 2            # batch
S = 16           # sequence length
BS = B * S       # batch folded into rows
D = 128          # hidden size
H = 4            # attention heads
DH = D // H      # head dim (32)
FFN = 256        # MLP hidden
V = 384          # vocab: text tokens + <Motion>,</Motion> + motion codes
LAYERS = 2
LORA_R = 4
LORA_ALPHA = 8
RMS_EPS = 1e-6
NEG_INF = -1e9

S_SHIFT = S.bit_length() - 1
assert (1 << S_SHIFT) == S, "S must be a power of two for the in-kernel mask math"


# ----------------------- fused transformer-forward kernel -------------------
def _mllm_kernel(x_ref, mask_ref, tgt_ref, cos_ref, sin_ref, rot_ref,
                 attn_norm_ref, mlp_norm_ref, wq_ref, wk_ref, wv_ref,
                 wo_ref, wgu_ref, wd_ref, fnorm_ref, lm_head_ref,
                 stats_ref):
    """Single instance: batch folded into the sublane/row dim; all VMEM-resident."""
    x = x_ref[...].astype(jnp.float32)               # (BS, D) residual stream, f32
    cos = cos_ref[...]                                # (BS, DH) f32 per-row position
    sin = sin_ref[...]
    rot = rot_ref[...]                                # (DH, DH) bf16 rotate-half

    # --- additive bias: causal + key padding + block-diagonal across batches,
    #     built in VMEM from the flat (1, BS) attention mask (no HBM bias). ---
    row = lax.broadcasted_iota(jnp.int32, (BS, BS), 0)
    col = lax.broadcasted_iota(jnp.int32, (BS, BS), 1)
    same_batch = (row >> S_SHIFT) == (col >> S_SHIFT)
    causal = (col & (S - 1)) <= (row & (S - 1))
    key_ok = mask_ref[...] > 0.5                      # (1, BS), broadcasts over rows
    bias = jnp.where(same_batch & causal & key_ok, 0.0, NEG_INF)   # (BS, BS) f32

    def rmsnorm(v, w):                                # v (BS, D) f32, w (1, D) f32
        var = jnp.mean(v * v, axis=-1, keepdims=True)
        return v * lax.rsqrt(var + RMS_EPS) * w

    def rope(v):                                      # (BS, DH) f32 -> bf16
        r = jnp.dot(v.astype(jnp.bfloat16), rot, preferred_element_type=jnp.float32)
        return (v * cos + r * sin).astype(jnp.bfloat16)

    for li in range(LAYERS):
        # ---- attention: head-major weights => no activation lane slices/concat ----
        h = rmsnorm(x, attn_norm_ref[li]).astype(jnp.bfloat16)        # (BS, D)
        for hh in range(H):
            w = li * H + hh
            q = rope(jnp.dot(h, wq_ref[w], preferred_element_type=jnp.float32))
            k = rope(jnp.dot(h, wk_ref[w], preferred_element_type=jnp.float32))
            v = jnp.dot(h, wv_ref[w],
                        preferred_element_type=jnp.float32).astype(jnp.bfloat16)
            s = lax.dot_general(q, k, (((1,), (1,)), ((), ())),
                                preferred_element_type=jnp.float32) + bias  # (BS,BS)
            m = jnp.max(s, axis=-1, keepdims=True)
            p = jnp.exp(s - m)                                               # f32
            denom = jnp.sum(p, axis=-1, keepdims=True)
            o = jnp.dot(p.astype(jnp.bfloat16), v,
                        preferred_element_type=jnp.float32)                  # (BS, DH)
            o = (o * pl.reciprocal(denom, approx=True)).astype(jnp.bfloat16)
            # accumulate through the per-head row block of Wo (no heads concat)
            x = x + jnp.dot(o, wo_ref[w], preferred_element_type=jnp.float32)

        # ---------------- SwiGLU MLP block ----------------
        h2 = rmsnorm(x, mlp_norm_ref[li]).astype(jnp.bfloat16)
        gu = jnp.dot(h2, wgu_ref[li], preferred_element_type=jnp.float32)   # (BS, 2F)
        g = gu[:, :FFN]                               # 128-lane-aligned slices: cheap
        u = gu[:, FFN:]
        act = ((g * jax.nn.sigmoid(g)) * u).astype(jnp.bfloat16)            # SiLU(g)*u
        x = x + jnp.dot(act, wd_ref[li], preferred_element_type=jnp.float32)

    # ------- final norm + lm_head + argmax / NLL (no logits HBM round trip) -------
    xf = rmsnorm(x, fnorm_ref[...]).astype(jnp.bfloat16)
    logits = jnp.dot(xf, lm_head_ref[...], preferred_element_type=jnp.float32)  # (BS,V)

    m = jnp.max(logits, axis=-1, keepdims=True)
    z = logits - m
    lse = jnp.log(jnp.sum(jnp.exp(z), axis=-1, keepdims=True))              # (BS, 1)
    iota = lax.broadcasted_iota(jnp.int32, (BS, V), 1)
    # first-occurrence argmax over vocab (matches torch.max tie-breaking)
    amax = jnp.min(jnp.where(logits == m, iota, V), axis=-1, keepdims=True)  # (BS, 1)

    tgt = tgt_ref[...]                                                       # (BS, 1)
    safe_tgt = jnp.where(tgt < 0, 0, tgt)
    tgt_z = jnp.sum(jnp.where(iota == safe_tgt, z, 0.0), axis=-1, keepdims=True)

    # packed output: column 0 = per-token NLL, column 1 = argmax token id
    stats_ref[:, 0:1] = lse - tgt_z
    stats_ref[:, 1:2] = amax.astype(jnp.float32)


# ------------------------------ rope tables ----------------------------------
def _rope_tables():
    inv_freq = 1.0 / (10000.0 ** (jnp.arange(0, DH, 2, dtype=jnp.float32) / DH))
    pos = jnp.arange(BS, dtype=jnp.float32) % S           # flattened-batch positions
    freqs = jnp.outer(pos, inv_freq)                      # (BS, DH/2)
    emb = jnp.concatenate([freqs, freqs], axis=-1)        # (BS, DH)
    cos = jnp.cos(emb)
    sin = jnp.sin(emb)
    # signed permutation implementing LLaMA rotate_half for one head (DH wide);
    # entries are exactly 0/+-1 so bf16 storage is lossless.
    j = jnp.arange(DH)
    src = jnp.where(j < DH // 2, j + DH // 2, j - DH // 2)
    sign = jnp.where(j < DH // 2, -1.0, 1.0).astype(jnp.float32)
    rot = ((jnp.arange(DH)[:, None] == src[None, :]).astype(jnp.float32)
           * sign[None, :]).astype(jnp.bfloat16)          # (DH, DH)
    return cos, sin, rot


# ------------------------------ parameters -----------------------------------
def init_params(key):
    """Deterministic synthetic weights.  LoRA delta merged: W_eff = W + (a/r)*A@B.
    q/k/v/o split head-major on the host; 1/sqrt(DH) folded into Wq; gate/up
    merged into one (D,2F) weight; all projection weights stored bf16."""
    scale_lora = LORA_ALPHA / LORA_R
    attn_scale = 1.0 / (DH ** 0.5)

    def linear(k, din, dout):
        k0, k1, k2 = jax.random.split(k, 3)
        w = jax.random.normal(k0, (din, dout), jnp.float32) * 0.02
        a = jax.random.normal(k1, (din, LORA_R), jnp.float32) * 0.02
        b = jax.random.normal(k2, (LORA_R, dout), jnp.float32) * 0.02
        return w + scale_lora * (a @ b)

    keys = jax.random.split(key, 2 + LAYERS)
    wq_h, wk_h, wv_h, wo_h, wgu, wd = [], [], [], [], [], []
    attn_norms, mlp_norms = [], []
    for li in range(LAYERS):
        lk = jax.random.split(keys[2 + li], 7)
        wq = linear(lk[0], D, D) * attn_scale          # attention scale folded in
        wk = linear(lk[1], D, D)
        wv = linear(lk[2], D, D)
        wo = linear(lk[3], D, D)
        wq_h.append(wq.reshape(D, H, DH).transpose(1, 0, 2))   # (H, D, DH)
        wk_h.append(wk.reshape(D, H, DH).transpose(1, 0, 2))
        wv_h.append(wv.reshape(D, H, DH).transpose(1, 0, 2))
        wo_h.append(wo.reshape(H, DH, D))                      # (H, DH, D)
        wg = linear(lk[4], D, FFN)
        wu = linear(lk[5], D, FFN)
        wgu.append(jnp.concatenate([wg, wu], axis=1))          # (D, 2F)
        wd.append(linear(lk[6], FFN, D))
        attn_norms.append(jnp.ones((1, D), jnp.float32))
        mlp_norms.append(jnp.ones((1, D), jnp.float32))

    return {
        'embed': (jax.random.normal(keys[0], (V, D), jnp.float32) * 0.02
                  ).astype(jnp.bfloat16),                      # (V, D) bf16
        'lm_head': (jax.random.normal(keys[1], (D, V), jnp.float32) * 0.02
                    ).astype(jnp.bfloat16),                    # (D, V) bf16
        'final_norm': jnp.ones((1, D), jnp.float32),
        'attn_norms': jnp.stack(attn_norms),                   # (L, 1, D) f32
        'mlp_norms': jnp.stack(mlp_norms),                     # (L, 1, D) f32
        'wq': jnp.concatenate(wq_h, axis=0).astype(jnp.bfloat16),   # (L*H, D, DH)
        'wk': jnp.concatenate(wk_h, axis=0).astype(jnp.bfloat16),   # (L*H, D, DH)
        'wv': jnp.concatenate(wv_h, axis=0).astype(jnp.bfloat16),   # (L*H, D, DH)
        'wo': jnp.concatenate(wo_h, axis=0).astype(jnp.bfloat16),   # (L*H, DH, D)
        'wgu': jnp.stack(wgu).astype(jnp.bfloat16),            # (L, D, 2F)
        'wd': jnp.stack(wd).astype(jnp.bfloat16),              # (L, F, D)
    }


# ------------------------------ forward --------------------------------------
def motionllm_forward(params, input_ids, attention_mask, targets):
    """Mirrors MotionLLM.forward: returns (loss, gen_acc, chosen_tokens, labels)."""
    # --- embedding gather (bf16 table halves HBM traffic; f32 math in-kernel) ---
    x_emb = jnp.take(params['embed'], input_ids.reshape(-1), axis=0)     # (BS, D) bf16

    mask_flat = attention_mask.reshape(1, BS).astype(jnp.float32)        # (1, BS)

    # --- causal-LM shift: logits[:, t] predicts targets[:, t+1]; -100 = ignore ---
    shifted_t = jnp.concatenate(
        [targets[:, 1:], jnp.full((B, 1), -100, targets.dtype)], axis=1)  # (B, S)
    tgt_flat = shifted_t.astype(jnp.int32).reshape(BS, 1)

    cos, sin, rot = _rope_tables()

    stats = pl.pallas_call(
        _mllm_kernel,
        out_shape=jax.ShapeDtypeStruct((BS, 2), jnp.float32),
        grid=(1,),
        in_specs=[
            pl.BlockSpec((BS, D), lambda i: (0, 0)),                 # x_emb (bf16)
            pl.BlockSpec((1, BS), lambda i: (0, 0)),                 # attention mask
            pl.BlockSpec((BS, 1), lambda i: (0, 0)),                 # shifted targets
            pl.BlockSpec((BS, DH), lambda i: (0, 0)),                # cos
            pl.BlockSpec((BS, DH), lambda i: (0, 0)),                # sin
            pl.BlockSpec((DH, DH), lambda i: (0, 0)),                # rope rot (bf16)
            pl.BlockSpec((LAYERS, 1, D), lambda i: (0, 0, 0)),       # attn norms
            pl.BlockSpec((LAYERS, 1, D), lambda i: (0, 0, 0)),       # mlp norms
            pl.BlockSpec((LAYERS * H, D, DH), lambda i: (0, 0, 0)),  # wq (head-major)
            pl.BlockSpec((LAYERS * H, D, DH), lambda i: (0, 0, 0)),  # wk
            pl.BlockSpec((LAYERS * H, D, DH), lambda i: (0, 0, 0)),  # wv
            pl.BlockSpec((LAYERS * H, DH, D), lambda i: (0, 0, 0)),  # wo
            pl.BlockSpec((LAYERS, D, 2 * FFN), lambda i: (0, 0, 0)), # wgu
            pl.BlockSpec((LAYERS, FFN, D), lambda i: (0, 0, 0)),     # wd
            pl.BlockSpec((1, D), lambda i: (0, 0)),                  # final norm
            pl.BlockSpec((D, V), lambda i: (0, 0)),                  # lm_head
        ],
        out_specs=pl.BlockSpec((BS, 2), lambda i: (0, 0)),
        compiler_params=pltpu.CompilerParams(
            dimension_semantics=("arbitrary",)),
    )(x_emb, mask_flat, tgt_flat, cos, sin, rot,
      params['attn_norms'], params['mlp_norms'],
      params['wq'], params['wk'], params['wv'], params['wo'],
      params['wgu'], params['wd'], params['final_norm'], params['lm_head'])

    nll = stats[:, 0].reshape(B, S)                                   # (B, S)
    argmax_ids = stats[:, 1].astype(jnp.int32).reshape(B, S)          # (B, S)

    valid = shifted_t != -100
    loss = jnp.sum(jnp.where(valid, nll, 0.0)) / jnp.maximum(
        jnp.sum(valid.astype(jnp.float32)), 1.0)

    # --- gen_acc exactly as in MotionLLM.forward ---
    chosen_tokens = argmax_ids[:, 1:-1]
    labels = targets[:, 2:]
    gen_correct = (chosen_tokens.reshape(-1) == labels.reshape(-1)).astype(jnp.int32)
    valid_mask = (labels != -100).reshape(-1).astype(jnp.int32)
    valid_tokens = gen_correct & valid_mask
    gen_acc = jnp.sum(valid_tokens).astype(jnp.float32) / (
        jnp.sum(valid_mask).astype(jnp.float32) + 1.0)
    return loss, gen_acc, chosen_tokens, labels


# ------------------------------- main ---------------------------------------
if __name__ == "__main__":
    key = jax.random.PRNGKey(0)
    kp, ki = jax.random.split(key)

    params = init_params(kp)

    input_ids = jax.random.randint(ki, (B, S), 0, V, dtype=jnp.int32)

    # attention mask: batch 1 has 3 padding positions at the end
    attention_mask = jnp.ones((B, S), jnp.int32)
    attention_mask = attention_mask.at[1, S - 3:].set(0)

    # targets: prompt tokens (first 5) and padding masked with -100
    targets = input_ids
    targets = targets.at[:, :5].set(-100)
    targets = targets.at[1, S - 3:].set(-100)

    fwd = jax.jit(motionllm_forward)
    loss, gen_acc, chosen_tokens, labels = fwd(
        params, input_ids, attention_mask, targets)
    jax.block_until_ready((loss, gen_acc, chosen_tokens, labels))

    assert loss.shape == ()
    assert bool(jnp.isfinite(loss))
    assert chosen_tokens.shape == (B, S - 2)
    assert labels.shape == (B, S - 2)
    assert 0.0 <= float(gen_acc) <= 1.0

    print("KERNEL_OK")
</pallas_src>

<mosaic_0001>
module attributes {stable_mosaic.version = 11 : i64} {
  func.func @_mllm_kernel(%arg0: i32, %arg1: memref<32x128xbf16, #tpu.memory_space<vmem>>, %arg2: memref<1x32xf32, #tpu.memory_space<vmem>>, %arg3: memref<32x1xi32, #tpu.memory_space<vmem>>, %arg4: memref<32x32xf32, #tpu.memory_space<vmem>>, %arg5: memref<32x32xf32, #tpu.memory_space<vmem>>, %arg6: memref<32x32xbf16, #tpu.memory_space<vmem>>, %arg7: memref<2x1x128xf32, #tpu.memory_space<vmem>>, %arg8: memref<2x1x128xf32, #tpu.memory_space<vmem>>, %arg9: memref<8x128x32xbf16, #tpu.memory_space<vmem>>, %arg10: memref<8x128x32xbf16, #tpu.memory_space<vmem>>, %arg11: memref<8x128x32xbf16, #tpu.memory_space<vmem>>, %arg12: memref<8x32x128xbf16, #tpu.memory_space<vmem>>, %arg13: memref<2x128x512xbf16, #tpu.memory_space<vmem>>, %arg14: memref<2x256x128xbf16, #tpu.memory_space<vmem>>, %arg15: memref<1x128xf32, #tpu.memory_space<vmem>>, %arg16: memref<128x384xbf16, #tpu.memory_space<vmem>>, %arg17: memref<32x2xf32, #tpu.memory_space<vmem>>) attributes {dimension_semantics = [#tpu.dimension_semantics<arbitrary>], iteration_bounds = array<i64: 1>, scalar_prefetch = 0 : i64, scratch_operands = 0 : i64, tpu.core_type = #tpu.core_type<tc>, window_params = [{pipeline_mode = #tpu.pipeline_mode<synchronous>, transform_indices = @transform_0, window_bounds = array<i64: 32, 128>}, {pipeline_mode = #tpu.pipeline_mode<synchronous>, transform_indices = @transform_1, window_bounds = array<i64: 1, 32>}, {pipeline_mode = #tpu.pipeline_mode<synchronous>, transform_indices = @transform_2, window_bounds = array<i64: 32, 1>}, {pipeline_mode = #tpu.pipeline_mode<synchronous>, transform_indices = @transform_3, window_bounds = array<i64: 32, 32>}, {pipeline_mode = #tpu.pipeline_mode<synchronous>, transform_indices = @transform_4, window_bounds = array<i64: 32, 32>}, {pipeline_mode = #tpu.pipeline_mode<synchronous>, transform_indices = @transform_5, window_bounds = array<i64: 32, 32>}, {pipeline_mode = #tpu.pipeline_mode<synchronous>, transform_indices = @transform_6, window_bounds = array<i64: 2, 1, 128>}, {pipeline_mode = #tpu.pipeline_mode<synchronous>, transform_indices = @transform_7, window_bounds = array<i64: 2, 1, 128>}, {pipeline_mode = #tpu.pipeline_mode<synchronous>, transform_indices = @transform_8, window_bounds = array<i64: 8, 128, 32>}, {pipeline_mode = #tpu.pipeline_mode<synchronous>, transform_indices = @transform_9, window_bounds = array<i64: 8, 128, 32>}, {pipeline_mode = #tpu.pipeline_mode<synchronous>, transform_indices = @transform_10, window_bounds = array<i64: 8, 128, 32>}, {pipeline_mode = #tpu.pipeline_mode<synchronous>, transform_indices = @transform_11, window_bounds = array<i64: 8, 32, 128>}, {pipeline_mode = #tpu.pipeline_mode<synchronous>, transform_indices = @transform_12, window_bounds = array<i64: 2, 128, 512>}, {pipeline_mode = #tpu.pipeline_mode<synchronous>, transform_indices = @transform_13, window_bounds = array<i64: 2, 256, 128>}, {pipeline_mode = #tpu.pipeline_mode<synchronous>, transform_indices = @transform_14, window_bounds = array<i64: 1, 128>}, {pipeline_mode = #tpu.pipeline_mode<synchronous>, transform_indices = @transform_15, window_bounds = array<i64: 128, 384>}, {pipeline_mode = #tpu.pipeline_mode<synchronous>, transform_indices = @transform_16, window_bounds = array<i64: 32, 2>}]} {
    %c0 = arith.constant 0 : index
    %c0_0 = arith.constant 0 : index
    %0 = vector.load %arg1[%c0, %c0_0] : memref<32x128xbf16, #tpu.memory_space<vmem>>, vector<32x128xbf16>
    %1 = arith.extf %0 : vector<32x128xbf16> to vector<32x128xf32>
    %c0_1 = arith.constant 0 : index
    %c0_2 = arith.constant 0 : index
    %2 = vector.load %arg4[%c0_1, %c0_2] : memref<32x32xf32, #tpu.memory_space<vmem>>, vector<32x32xf32>
    %c0_3 = arith.constant 0 : index
    %c0_4 = arith.constant 0 : index
    %3 = vector.load %arg5[%c0_3, %c0_4] : memref<32x32xf32, #tpu.memory_space<vmem>>, vector<32x32xf32>
    %c0_5 = arith.constant 0 : index
    %c0_6 = arith.constant 0 : index
    %4 = vector.load %arg6[%c0_5, %c0_6] : memref<32x32xbf16, #tpu.memory_space<vmem>>, vector<32x32xbf16>
    %5 = tpu.iota {dimensions = array<i32: 0>} : vector<32x32xi32>
    %6 = tpu.iota {dimensions = array<i32: 1>} : vector<32x32xi32>
    %c4_i32 = arith.constant 4 : i32
    %7 = vector.broadcast %c4_i32 : i32 to vector<32x32xi32>
    %8 = arith.shrsi %5, %7 : vector<32x32xi32>
    %c4_i32_7 = arith.constant 4 : i32
    %9 = vector.broadcast %c4_i32_7 : i32 to vector<32x32xi32>
    %10 = arith.shrsi %6, %9 : vector<32x32xi32>
    %11 = arith.cmpi eq, %8, %10 : vector<32x32xi32>
    %c15_i32 = arith.constant 15 : i32
    %12 = vector.broadcast %c15_i32 : i32 to vector<32x32xi32>
    %13 = arith.andi %6, %12 : vector<32x32xi32>
    %c15_i32_8 = arith.constant 15 : i32
    %14 = vector.broadcast %c15_i32_8 : i32 to vector<32x32xi32>
    %15 = arith.andi %5, %14 : vector<32x32xi32>
    %16 = arith.cmpi sle, %13, %15 : vector<32x32xi32>
    %c0_9 = arith.constant 0 : index
    %c0_10 = arith.constant 0 : index
    %17 = vector.load %arg2[%c0_9, %c0_10] : memref<1x32xf32, #tpu.memory_space<vmem>>, vector<1x32xf32>
    %cst = arith.constant 5.000000e-01 : f32
    %18 = vector.broadcast %cst : f32 to vector<1x32xf32>
    %19 = arith.cmpf ogt, %17, %18 : vector<1x32xf32>
    %20 = arith.andi %11, %16 : vector<32x32xi1>
    %21 = vector.broadcast %19 : vector<1x32xi1> to vector<32x32xi1>
    %22 = arith.andi %20, %21 : vector<32x32xi1>
    %cst_11 = arith.constant 0.000000e+00 : f32
    %cst_12 = arith.constant -1.000000e+09 : f32
    %23 = vector.broadcast %cst_11 : f32 to vector<32x32xf32>
    %24 = vector.broadcast %cst_12 : f32 to vector<32x32xf32>
    %25 = arith.select %22, %23, %24 : vector<32x32xi1>, vector<32x32xf32>
    %c0_13 = arith.constant 0 : index
    %c0_14 = arith.constant 0 : index
    %c0_15 = arith.constant 0 : index
    %26 = vector.load %arg7[%c0_13, %c0_14, %c0_15] : memref<2x1x128xf32, #tpu.memory_space<vmem>>, vector<1x1x128xf32>
    %27 = vector.shape_cast %26 : vector<1x1x128xf32> to vector<1x128xf32>
    %28 = arith.mulf %1, %1 : vector<32x128xf32>
    %cst_16 = arith.constant dense<0.000000e+00> : vector<32xf32>
    %29 = vector.multi_reduction <add>, %28, %cst_16 [1] : vector<32x128xf32> to vector<32xf32>
    %30 = vector.shape_cast %29 : vector<32xf32> to vector<32x1xf32>
    %cst_17 = arith.constant 1.280000e+02 : f32
    %31 = vector.broadcast %cst_17 : f32 to vector<32x1xf32>
    %32 = arith.divf %30, %31 : vector<32x1xf32>
    %cst_18 = arith.constant 9.99999997E-7 : f32
    %33 = vector.broadcast %cst_18 : f32 to vector<32x1xf32>
    %34 = arith.addf %32, %33 : vector<32x1xf32>
    %35 = math.rsqrt %34 : vector<32x1xf32>
    %36 = vector.broadcast %35 : vector<32x1xf32> to vector<32x128xf32>
    %37 = arith.mulf %1, %36 : vector<32x128xf32>
    %38 = vector.broadcast %27 : vector<1x128xf32> to vector<32x128xf32>
    %39 = arith.mulf %37, %38 : vector<32x128xf32>
    %40 = arith.truncf %39 : vector<32x128xf32> to vector<32x128xbf16>
    %c0_19 = arith.constant 0 : index
    %c0_20 = arith.constant 0 : index
    %c0_21 = arith.constant 0 : index
    %41 = vector.load %arg9[%c0_19, %c0_20, %c0_21] : memref<8x128x32xbf16, #tpu.memory_space<vmem>>, vector<1x128x32xbf16>
    %42 = vector.shape_cast %41 : vector<1x128x32xbf16> to vector<128x32xbf16>
    %cst_22 = arith.constant dense<0.000000e+00> : vector<32x32xf32>
    %43 = tpu.matmul %40, %42, %cst_22 {dimension_numbers = #tpu.dot_dimension_numbers<[1], [0], [0], [1], [0, 0, 1, 1], [], []>} : vector<32x128xbf16>, vector<128x32xbf16>, vector<32x32xf32> -> vector<32x32xf32>
    %44 = arith.truncf %43 : vector<32x32xf32> to vector<32x32xbf16>
    %cst_23 = arith.constant dense<0.000000e+00> : vector<32x32xf32>
    %45 = tpu.matmul %44, %4, %cst_23 {dimension_numbers = #tpu.dot_dimension_numbers<[1], [0], [0], [1], [0, 0, 1, 1], [], []>} : vector<32x32xbf16>, vector<32x32xbf16>, vector<32x32xf32> -> vector<32x32xf32>
    %46 = arith.mulf %43, %2 : vector<32x32xf32>
    %47 = arith.mulf %45, %3 : vector<32x32xf32>
    %48 = arith.addf %46, %47 : vector<32x32xf32>
    %49 = arith.truncf %48 : vector<32x32xf32> to vector<32x32xbf16>
    %c0_24 = arith.constant 0 : index
    %c0_25 = arith.constant 0 : index
    %c0_26 = arith.constant 0 : index
    %50 = vector.load %arg10[%c0_24, %c0_25, %c0_26] : memref<8x128x32xbf16, #tpu.memory_space<vmem>>, vector<1x128x32xbf16>
    %51 = vector.shape_cast %50 : vector<1x128x32xbf16> to vector<128x32xbf16>
    %cst_27 = arith.constant dense<0.000000e+00> : vector<32x32xf32>
    %52 = tpu.matmul %40, %51, %cst_27 {dimension_numbers = #tpu.dot_dimension_numbers<[1], [0], [0], [1], [0, 0, 1, 1], [], []>} : vector<32x128xbf16>, vector<128x32xbf16>, vector<32x32xf32> -> vector<32x32xf32>
    %53 = arith.truncf %52 : vector<32x32xf32> to vector<32x32xbf16>
    %cst_28 = arith.constant dense<0.000000e+00> : vector<32x32xf32>
    %54 = tpu.matmul %53, %4, %cst_28 {dimension_numbers = #tpu.dot_dimension_numbers<[1], [0], [0], [1], [0, 0, 1, 1], [], []>} : vector<32x32xbf16>, vector<32x32xbf16>, vector<32x32xf32> -> vector<32x32xf32>
    %55 = arith.mulf %52, %2 : vector<32x32xf32>
    %56 = arith.mulf %54, %3 : vector<32x32xf32>
    %57 = arith.addf %55, %56 : vector<32x32xf32>
    %58 = arith.truncf %57 : vector<32x32xf32> to vector<32x32xbf16>
    %c0_29 = arith.constant 0 : index
    %c0_30 = arith.constant 0 : index
    %c0_31 = arith.constant 0 : index
    %59 = vector.load %arg11[%c0_29, %c0_30, %c0_31] : memref<8x128x32xbf16, #tpu.memory_space<vmem>>, vector<1x128x32xbf16>
    %60 = vector.shape_cast %59 : vector<1x128x32xbf16> to vector<128x32xbf16>
    %cst_32 = arith.constant dense<0.000000e+00> : vector<32x32xf32>
    %61 = tpu.matmul %40, %60, %cst_32 {dimension_numbers = #tpu.dot_dimension_numbers<[1], [0], [0], [1], [0, 0, 1, 1], [], []>} : vector<32x128xbf16>, vector<128x32xbf16>, vector<32x32xf32> -> vector<32x32xf32>
    %62 = arith.truncf %61 : vector<32x32xf32> to vector<32x32xbf16>
    %cst_33 = arith.constant dense<0.000000e+00> : vector<32x32xf32>
    %63 = tpu.matmul %49, %58, %cst_33 {dimension_numbers = #tpu.dot_dimension_numbers<[1], [1], [0], [0], [0, 0, 1, 0], [], []>} : vector<32x32xbf16>, vector<32x32xbf16>, vector<32x32xf32> -> vector<32x32xf32>
    %64 = arith.addf %63, %25 : vector<32x32xf32>
    %cst_34 = arith.constant dense<0xFF800000> : vector<32xf32>
    %65 = vector.multi_reduction <maximumf>, %64, %cst_34 [1] : vector<32x32xf32> to vector<32xf32>
    %66 = vector.shape_cast %65 : vector<32xf32> to vector<32x1xf32>
    %67 = vector.broadcast %66 : vector<32x1xf32> to vector<32x32xf32>
    %68 = arith.subf %64, %67 : vector<32x32xf32>
    %69 = math.exp %68 : vector<32x32xf32>
    %cst_35 = arith.constant dense<0.000000e+00> : vector<32xf32>
    %70 = vector.multi_reduction <add>, %69, %cst_35 [1] : vector<32x32xf32> to vector<32xf32>
    %71 = vector.shape_cast %70 : vector<32xf32> to vector<32x1xf32>
    %72 = arith.truncf %69 : vector<32x32xf32> to vector<32x32xbf16>
    %cst_36 = arith.constant dense<0.000000e+00> : vector<32x32xf32>
    %73 = tpu.matmul %72, %62, %cst_36 {dimension_numbers = #tpu.dot_dimension_numbers<[1], [0], [0], [1], [0, 0, 1, 1], [], []>} : vector<32x32xbf16>, vector<32x32xbf16>, vector<32x32xf32> -> vector<32x32xf32>
    %74 = tpu.reciprocal %71 {approx = true} : vector<32x1xf32> -> vector<32x1xf32>
    %75 = vector.broadcast %74 : vector<32x1xf32> to vector<32x32xf32>
    %76 = arith.mulf %73, %75 : vector<32x32xf32>
    %77 = arith.truncf %76 : vector<32x32xf32> to vector<32x32xbf16>
    %c0_37 = arith.constant 0 : index
    %c0_38 = arith.constant 0 : index
    %c0_39 = arith.constant 0 : index
    %78 = vector.load %arg12[%c0_37, %c0_38, %c0_39] : memref<8x32x128xbf16, #tpu.memory_space<vmem>>, vector<1x32x128xbf16>
    %79 = vector.shape_cast %78 : vector<1x32x128xbf16> to vector<32x128xbf16>
    %cst_40 = arith.constant dense<0.000000e+00> : vector<32x128xf32>
    %80 = tpu.matmul %77, %79, %cst_40 {dimension_numbers = #tpu.dot_dimension_numbers<[1], [0], [0], [1], [0, 0, 1, 1], [], []>} : vector<32x32xbf16>, vector<32x128xbf16>, vector<32x128xf32> -> vector<32x128xf32>
    %81 = arith.addf %1, %80 : vector<32x128xf32>
    %c1 = arith.constant 1 : index
    %c0_41 = arith.constant 0 : index
    %c0_42 = arith.constant 0 : index
    %82 = vector.load %arg9[%c1, %c0_41, %c0_42] : memref<8x128x32xbf16, #tpu.memory_space<vmem>>, vector<1x128x32xbf16>
    %83 = vector.shape_cast %82 : vector<1x128x32xbf16> to vector<128x32xbf16>
    %cst_43 = arith.constant dense<0.000000e+00> : vector<32x32xf32>
    %84 = tpu.matmul %40, %83, %cst_43 {dimension_numbers = #tpu.dot_dimension_numbers<[1], [0], [0], [1], [0, 0, 1, 1], [], []>} : vector<32x128xbf16>, vector<128x32xbf16>, vector<32x32xf32> -> vector<32x32xf32>
    %85 = arith.truncf %84 : vector<32x32xf32> to vector<32x32xbf16>
    %cst_44 = arith.constant dense<0.000000e+00> : vector<32x32xf32>
    %86 = tpu.matmul %85, %4, %cst_44 {dimension_numbers = #tpu.dot_dimension_numbers<[1], [0], [0], [1], [0, 0, 1, 1], [], []>} : vector<32x32xbf16>, vector<32x32xbf16>, vector<32x32xf32> -> vector<32x32xf32>
    %87 = arith.mulf %84, %2 : vector<32x32xf32>
    %88 = arith.mulf %86, %3 : vector<32x32xf32>
    %89 = arith.addf %87, %88 : vector<32x32xf32>
    %90 = arith.truncf %89 : vector<32x32xf32> to vector<32x32xbf16>
    %c1_45 = arith.constant 1 : index
    %c0_46 = arith.constant 0 : index
    %c0_47 = arith.constant 0 : index
    %91 = vector.load %arg10[%c1_45, %c0_46, %c0_47] : memref<8x128x32xbf16, #tpu.memory_space<vmem>>, vector<1x128x32xbf16>
    %92 = vector.shape_cast %91 : vector<1x128x32xbf16> to vector<128x32xbf16>
    %cst_48 = arith.constant dense<0.000000e+00> : vector<32x32xf32>
    %93 = tpu.matmul %40, %92, %cst_48 {dimension_numbers = #tpu.dot_dimension_numbers<[1], [0], [0], [1], [0, 0, 1, 1], [], []>} : vector<32x128xbf16>, vector<128x32xbf16>, vector<32x32xf32> -> vector<32x32xf32>
    %94 = arith.truncf %93 : vector<32x32xf32> to vector<32x32xbf16>
    %cst_49 = arith.constant dense<0.000000e+00> : vector<32x32xf32>
    %95 = tpu.matmul %94, %4, %cst_49 {dimension_numbers = #tpu.dot_dimension_numbers<[1], [0], [0], [1], [0, 0, 1, 1], [], []>} : vector<32x32xbf16>, vector<32x32xbf16>, vector<32x32xf32> -> vector<32x32xf32>
    %96 = arith.mulf %93, %2 : vector<32x32xf32>
    %97 = arith.mulf %95, %3 : vector<32x32xf32>
    %98 = arith.addf %96, %97 : vector<32x32xf32>
    %99 = arith.truncf %98 : vector<32x32xf32> to vector<32x32xbf16>
    %c1_50 = arith.constant 1 : index
    %c0_51 = arith.constant 0 : index
    %c0_52 = arith.constant 0 : index
    %100 = vector.load %arg11[%c1_50, %c0_51, %c0_52] : memref<8x128x32xbf16, #tpu.memory_space<vmem>>, vector<1x128x32xbf16>
    %101 = vector.shape_cast %100 : vector<1x128x32xbf16> to vector<128x32xbf16>
    %cst_53 = arith.constant dense<0.000000e+00> : vector<32x32xf32>
    %102 = tpu.matmul %40, %101, %cst_53 {dimension_numbers = #tpu.dot_dimension_numbers<[1], [0], [0], [1], [0, 0, 1, 1], [], []>} : vector<32x128xbf16>, vector<128x32xbf16>, vector<32x32xf32> -> vector<32x32xf32>
    %103 = arith.truncf %102 : vector<32x32xf32> to vector<32x32xbf16>
    %cst_54 = arith.constant dense<0.000000e+00> : vector<32x32xf32>
    %104 = tpu.matmul %90, %99, %cst_54 {dimension_numbers = #tpu.dot_dimension_numbers<[1], [1], [0], [0], [0, 0, 1, 0], [], []>} : vector<32x32xbf16>, vector<32x32xbf16>, vector<32x32xf32> -> vector<32x32xf32>
    %105 = arith.addf %104, %25 : vector<32x32xf32>
    %cst_55 = arith.constant dense<0xFF800000> : vector<32xf32>
    %106 = vector.multi_reduction <maximumf>, %105, %cst_55 [1] : vector<32x32xf32> to vector<32xf32>
    %107 = vector.shape_cast %106 : vector<32xf32> to vector<32x1xf32>
    %108 = vector.broadcast %107 : vector<32x1xf32> to vector<32x32xf32>
    %109 = arith.subf %105, %108 : vector<32x32xf32>
    %110 = math.exp %109 : vector<32x32xf32>
    %cst_56 = arith.constant dense<0.000000e+00> : vector<32xf32>
    %111 = vector.multi_reduction <add>, %110, %cst_56 [1] : vector<32x32xf32> to vector<32xf32>
    %112 = vector.shape_cast %111 : vector<32xf32> to vector<32x1xf32>
    %113 = arith.truncf %110 : vector<32x32xf32> to vector<32x32xbf16>
    %cst_57 = arith.constant dense<0.000000e+00> : vector<32x32xf32>
    %114 = tpu.matmul %113, %103, %cst_57 {dimension_numbers = #tpu.dot_dimension_numbers<[1], [0], [0], [1], [0, 0, 1, 1], [], []>} : vector<32x32xbf16>, vector<32x32xbf16>, vector<32x32xf32> -> vector<32x32xf32>
    %115 = tpu.reciprocal %112 {approx = true} : vector<32x1xf32> -> vector<32x1xf32>
    %116 = vector.broadcast %115 : vector<32x1xf32> to vector<32x32xf32>
    %117 = arith.mulf %114, %116 : vector<32x32xf32>
    %118 = arith.truncf %117 : vector<32x32xf32> to vector<32x32xbf16>
    %c1_58 = arith.constant 1 : index
    %c0_59 = arith.constant 0 : index
    %c0_60 = arith.constant 0 : index
    %119 = vector.load %arg12[%c1_58, %c0_59, %c0_60] : memref<8x32x128xbf16, #tpu.memory_space<vmem>>, vector<1x32x128xbf16>
    %120 = vector.shape_cast %119 : vector<1x32x128xbf16> to vector<32x128xbf16>
    %cst_61 = arith.constant dense<0.000000e+00> : vector<32x128xf32>
    %121 = tpu.matmul %118, %120, %cst_61 {dimension_numbers = #tpu.dot_dimension_numbers<[1], [0], [0], [1], [0, 0, 1, 1], [], []>} : vector<32x32xbf16>, vector<32x128xbf16>, vector<32x128xf32> -> vector<32x128xf32>
    %122 = arith.addf %81, %121 : vector<32x128xf32>
    %c2 = arith.constant 2 : index
    %c0_62 = arith.constant 0 : index
    %c0_63 = arith.constant 0 : index
    %123 = vector.load %arg9[%c2, %c0_62, %c0_63] : memref<8x128x32xbf16, #tpu.memory_space<vmem>>, vector<1x128x32xbf16>
    %124 = vector.shape_cast %123 : vector<1x128x32xbf16> to vector<128x32xbf16>
    %cst_64 = arith.constant dense<0.000000e+00> : vector<32x32xf32>
    %125 = tpu.matmul %40, %124, %cst_64 {dimension_numbers = #tpu.dot_dimension_numbers<[1], [0], [0], [1], [0, 0, 1, 1], [], []>} : vector<32x128xbf16>, vector<128x32xbf16>, vector<32x32xf32> -> vector<32x32xf32>
    %126 = arith.truncf %125 : vector<32x32xf32> to vector<32x32xbf16>
    %cst_65 = arith.constant dense<0.000000e+00> : vector<32x32xf32>
    %127 = tpu.matmul %126, %4, %cst_65 {dimension_numbers = #tpu.dot_dimension_numbers<[1], [0], [0], [1], [0, 0, 1, 1], [], []>} : vector<32x32xbf16>, vector<32x32xbf16>, vector<32x32xf32> -> vector<32x32xf32>
    %128 = arith.mulf %125, %2 : vector<32x32xf32>
    %129 = arith.mulf %127, %3 : vector<32x32xf32>
    %130 = arith.addf %128, %129 : vector<32x32xf32>
    %131 = arith.truncf %130 : vector<32x32xf32> to vector<32x32xbf16>
    %c2_66 = arith.constant 2 : index
    %c0_67 = arith.constant 0 : index
    %c0_68 = arith.constant 0 : index
    %132 = vector.load %arg10[%c2_66, %c0_67, %c0_68] : memref<8x128x32xbf16, #tpu.memory_space<vmem>>, vector<1x128x32xbf16>
    %133 = vector.shape_cast %132 : vector<1x128x32xbf16> to vector<128x32xbf16>
    %cst_69 = arith.constant dense<0.000000e+00> : vector<32x32xf32>
    %134 = tpu.matmul %40, %133, %cst_69 {dimension_numbers = #tpu.dot_dimension_numbers<[1], [0], [0], [1], [0, 0, 1, 1], [], []>} : vector<32x128xbf16>, vector<128x32xbf16>, vector<32x32xf32> -> vector<32x32xf32>
    %135 = arith.truncf %134 : vector<32x32xf32> to vector<32x32xbf16>
    %cst_70 = arith.constant dense<0.000000e+00> : vector<32x32xf32>
    %136 = tpu.matmul %135, %4, %cst_70 {dimension_numbers = #tpu.dot_dimension_numbers<[1], [0], [0], [1], [0, 0, 1, 1], [], []>} : vector<32x32xbf16>, vector<32x32xbf16>, vector<32x32xf32> -> vector<32x32xf32>
    %137 = arith.mulf %134, %2 : vector<32x32xf32>
    %138 = arith.mulf %136, %3 : vector<32x32xf32>
    %139 = arith.addf %137, %138 : vector<32x32xf32>
    %140 = arith.truncf %139 : vector<32x32xf32> to vector<32x32xbf16>
    %c2_71 = arith.constant 2 : index
    %c0_72 = arith.constant 0 : index
    %c0_73 = arith.constant 0 : index
    %141 = vector.load %arg11[%c2_71, %c0_72, %c0_73] : memref<8x128x32xbf16, #tpu.memory_space<vmem>>, vector<1x128x32xbf16>
    %142 = vector.shape_cast %141 : vector<1x128x32xbf16> to vector<128x32xbf16>
    %cst_74 = arith.constant dense<0.000000e+00> : vector<32x32xf32>
    %143 = tpu.matmul %40, %142, %cst_74 {dimension_numbers = #tpu.dot_dimension_numbers<[1], [0], [0], [1], [0, 0, 1, 1], [], []>} : vector<32x128xbf16>, vector<128x32xbf16>, vector<32x32xf32> -> vector<32x32xf32>
    %144 = arith.truncf %143 : vector<32x32xf32> to vector<32x32xbf16>
    %cst_75 = arith.constant dense<0.000000e+00> : vector<32x32xf32>
    %145 = tpu.matmul %131, %140, %cst_75 {dimension_numbers = #tpu.dot_dimension_numbers<[1], [1], [0], [0], [0, 0, 1, 0], [], []>} : vector<32x32xbf16>, vector<32x32xbf16>, vector<32x32xf32> -> vector<32x32xf32>
    %146 = arith.addf %145, %25 : vector<32x32xf32>
    %cst_76 = arith.constant dense<0xFF800000> : vector<32xf32>
    %147 = vector.multi_reduction <maximumf>, %146, %cst_76 [1] : vector<32x32xf32> to vector<32xf32>
    %148 = vector.shape_cast %147 : vector<32xf32> to vector<32x1xf32>
    %149 = vector.broadcast %148 : vector<32x1xf32> to vector<32x32xf32>
    %150 = arith.subf %146, %149 : vector<32x32xf32>
    %151 = math.exp %150 : vector<32x32xf32>
    %cst_77 = arith.constant dense<0.000000e+00> : vector<32xf32>
    %152 = vector.multi_reduction <add>, %151, %cst_77 [1] : vector<32x32xf32> to vector<32xf32>
    %153 = vector.shape_cast %152 : vector<32xf32> to vector<32x1xf32>
    %154 = arith.truncf %151 : vector<32x32xf32> to vector<32x32xbf16>
    %cst_78 = arith.constant dense<0.000000e+00> : vector<32x32xf32>
    %155 = tpu.matmul %154, %144, %cst_78 {dimension_numbers = #tpu.dot_dimension_numbers<[1], [0], [0], [1], [0, 0, 1, 1], [], []>} : vector<32x32xbf16>, vector<32x32xbf16>, vector<32x32xf32> -> vector<32x32xf32>
    %156 = tpu.reciprocal %153 {approx = true} : vector<32x1xf32> -> vector<32x1xf32>
    %157 = vector.broadcast %156 : vector<32x1xf32> to vector<32x32xf32>
    %158 = arith.mulf %155, %157 : vector<32x32xf32>
    %159 = arith.truncf %158 : vector<32x32xf32> to vector<32x32xbf16>
    %c2_79 = arith.constant 2 : index
    %c0_80 = arith.constant 0 : index
    %c0_81 = arith.constant 0 : index
    %160 = vector.load %arg12[%c2_79, %c0_80, %c0_81] : memref<8x32x128xbf16, #tpu.memory_space<vmem>>, vector<1x32x128xbf16>
    %161 = vector.shape_cast %160 : vector<1x32x128xbf16> to vector<32x128xbf16>
    %cst_82 = arith.constant dense<0.000000e+00> : vector<32x128xf32>
    %162 = tpu.matmul %159, %161, %cst_82 {dimension_numbers = #tpu.dot_dimension_numbers<[1], [0], [0], [1], [0, 0, 1, 1], [], []>} : vector<32x32xbf16>, vector<32x128xbf16>, vector<32x128xf32> -> vector<32x128xf32>
    %163 = arith.addf %122, %162 : vector<32x128xf32>
    %c3 = arith.constant 3 : index
    %c0_83 = arith.constant 0 : index
    %c0_84 = arith.constant 0 : index
    %164 = vector.load %arg9[%c3, %c0_83, %c0_84] : memref<8x128x32xbf16, #tpu.memory_space<vmem>>, vector<1x128x32xbf16>
    %165 = vector.shape_cast %164 : vector<1x128x32xbf16> to vector<128x32xbf16>
    %cst_85 = arith.constant dense<0.000000e+00> : vector<32x32xf32>
    %166 = tpu.matmul %40, %165, %cst_85 {dimension_numbers = #tpu.dot_dimension_numbers<[1], [0], [0], [1], [0, 0, 1, 1], [], []>} : vector<32x128xbf16>, vector<128x32xbf16>, vector<32x32xf32> -> vector<32x32xf32>
    %167 = arith.truncf %166 : vector<32x32xf32> to vector<32x32xbf16>
    %cst_86 = arith.constant dense<0.000000e+00> : vector<32x32xf32>
    %168 = tpu.matmul %167, %4, %cst_86 {dimension_numbers = #tpu.dot_dimension_numbers<[1], [0], [0], [1], [0, 0, 1, 1], [], []>} : vector<32x32xbf16>, vector<32x32xbf16>, vector<32x32xf32> -> vector<32x32xf32>
    %169 = arith.mulf %166, %2 : vector<32x32xf32>
    %170 = arith.mulf %168, %3 : vector<32x32xf32>
    %171 = arith.addf %169, %170 : vector<32x32xf32>
    %172 = arith.truncf %171 : vector<32x32xf32> to vector<32x32xbf16>
    %c3_87 = arith.constant 3 : index
    %c0_88 = arith.constant 0 : index
    %c0_89 = arith.constant 0 : index
    %173 = vector.load %arg10[%c3_87, %c0_88, %c0_89] : memref<8x128x32xbf16, #tpu.memory_space<vmem>>, vector<1x128x32xbf16>
    %174 = vector.shape_cast %173 : vector<1x128x32xbf16> to vector<128x32xbf16>
    %cst_90 = arith.constant dense<0.000000e+00> : vector<32x32xf32>
    %175 = tpu.matmul %40, %174, %cst_90 {dimension_numbers = #tpu.dot_dimension_numbers<[1], [0], [0], [1], [0, 0, 1, 1], [], []>} : vector<32x128xbf16>, vector<128x32xbf16>, vector<32x32xf32> -> vector<32x32xf32>
    %176 = arith.truncf %175 : vector<32x32xf32> to vector<32x32xbf16>
    %cst_91 = arith.constant dense<0.000000e+00> : vector<32x32xf32>
    %177 = tpu.matmul %176, %4, %cst_91 {dimension_numbers = #tpu.dot_dimension_numbers<[1], [0], [0], [1], [0, 0, 1, 1], [], []>} : vector<32x32xbf16>, vector<32x32xbf16>, vector<32x32xf32> -> vector<32x32xf32>
    %178 = arith.mulf %175, %2 : vector<32x32xf32>
    %179 = arith.mulf %177, %3 : vector<32x32xf32>
    %180 = arith.addf %178, %179 : vector<32x32xf32>
    %181 = arith.truncf %180 : vector<32x32xf32> to vector<32x32xbf16>
    %c3_92 = arith.constant 3 : index
    %c0_93 = arith.constant 0 : index
    %c0_94 = arith.constant 0 : index
    %182 = vector.load %arg11[%c3_92, %c0_93, %c0_94] : memref<8x128x32xbf16, #tpu.memory_space<vmem>>, vector<1x128x32xbf16>
    %183 = vector.shape_cast %182 : vector<1x128x32xbf16> to vector<128x32xbf16>
    %cst_95 = arith.constant dense<0.000000e+00> : vector<32x32xf32>
    %184 = tpu.matmul %40, %183, %cst_95 {dimension_numbers = #tpu.dot_dimension_numbers<[1], [0], [0], [1], [0, 0, 1, 1], [], []>} : vector<32x128xbf16>, vector<128x32xbf16>, vector<32x32xf32> -> vector<32x32xf32>
    %185 = arith.truncf %184 : vector<32x32xf32> to vector<32x32xbf16>
    %cst_96 = arith.constant dense<0.000000e+00> : vector<32x32xf32>
    %186 = tpu.matmul %172, %181, %cst_96 {dimension_numbers = #tpu.dot_dimension_numbers<[1], [1], [0], [0], [0, 0, 1, 0], [], []>} : vector<32x32xbf16>, vector<32x32xbf16>, vector<32x32xf32> -> vector<32x32xf32>
    %187 = arith.addf %186, %25 : vector<32x32xf32>
    %cst_97 = arith.constant dense<0xFF800000> : vector<32xf32>
    %188 = vector.multi_reduction <maximumf>, %187, %cst_97 [1] : vector<32x32xf32> to vector<32xf32>
    %189 = vector.shape_cast %188 : vector<32xf32> to vector<32x1xf32>
    %190 = vector.broadcast %189 : vector<32x1xf32> to vector<32x32xf32>
    %191 = arith.subf %187, %190 : vector<32x32xf32>
    %192 = math.exp %191 : vector<32x32xf32>
    %cst_98 = arith.constant dense<0.000000e+00> : vector<32xf32>
    %193 = vector.multi_reduction <add>, %192, %cst_98 [1] : vector<32x32xf32> to vector<32xf32>
    %194 = vector.shape_cast %193 : vector<32xf32> to vector<32x1xf32>
    %195 = arith.truncf %192 : vector<32x32xf32> to vector<32x32xbf16>
    %cst_99 = arith.constant dense<0.000000e+00> : vector<32x32xf32>
    %196 = tpu.matmul %195, %185, %cst_99 {dimension_numbers = #tpu.dot_dimension_numbers<[1], [0], [0], [1], [0, 0, 1, 1], [], []>} : vector<32x32xbf16>, vector<32x32xbf16>, vector<32x32xf32> -> vector<32x32xf32>
    %197 = tpu.reciprocal %194 {approx = true} : vector<32x1xf32> -> vector<32x1xf32>
    %198 = vector.broadcast %197 : vector<32x1xf32> to vector<32x32xf32>
    %199 = arith.mulf %196, %198 : vector<32x32xf32>
    %200 = arith.truncf %199 : vector<32x32xf32> to vector<32x32xbf16>
    %c3_100 = arith.constant 3 : index
    %c0_101 = arith.constant 0 : index
    %c0_102 = arith.constant 0 : index
    %201 = vector.load %arg12[%c3_100, %c0_101, %c0_102] : memref<8x32x128xbf16, #tpu.memory_space<vmem>>, vector<1x32x128xbf16>
    %202 = vector.shape_cast %201 : vector<1x32x128xbf16> to vector<32x128xbf16>
    %cst_103 = arith.constant dense<0.000000e+00> : vector<32x128xf32>
    %203 = tpu.matmul %200, %202, %cst_103 {dimension_numbers = #tpu.dot_dimension_numbers<[1], [0], [0], [1], [0, 0, 1, 1], [], []>} : vector<32x32xbf16>, vector<32x128xbf16>, vector<32x128xf32> -> vector<32x128xf32>
    %204 = arith.addf %163, %203 : vector<32x128xf32>
    %c0_104 = arith.constant 0 : index
    %c0_105 = arith.constant 0 : index
    %c0_106 = arith.constant 0 : index
    %205 = vector.load %arg8[%c0_104, %c0_105, %c0_106] : memref<2x1x128xf32, #tpu.memory_space<vmem>>, vector<1x1x128xf32>
    %206 = vector.shape_cast %205 : vector<1x1x128xf32> to vector<1x128xf32>
    %207 = arith.mulf %204, %204 : vector<32x128xf32>
    %cst_107 = arith.constant dense<0.000000e+00> : vector<32xf32>
    %208 = vector.multi_reduction <add>, %207, %cst_107 [1] : vector<32x128xf32> to vector<32xf32>
    %209 = vector.shape_cast %208 : vector<32xf32> to vector<32x1xf32>
    %cst_108 = arith.constant 1.280000e+02 : f32
    %210 = vector.broadcast %cst_108 : f32 to vector<32x1xf32>
    %211 = arith.divf %209, %210 : vector<32x1xf32>
    %cst_109 = arith.constant 9.99999997E-7 : f32
    %212 = vector.broadcast %cst_109 : f32 to vector<32x1xf32>
    %213 = arith.addf %211, %212 : vector<32x1xf32>
    %214 = math.rsqrt %213 : vector<32x1xf32>
    %215 = vector.broadcast %214 : vector<32x1xf32> to vector<32x128xf32>
    %216 = arith.mulf %204, %215 : vector<32x128xf32>
    %217 = vector.broadcast %206 : vector<1x128xf32> to vector<32x128xf32>
    %218 = arith.mulf %216, %217 : vector<32x128xf32>
    %219 = arith.truncf %218 : vector<32x128xf32> to vector<32x128xbf16>
    %c0_110 = arith.constant 0 : index
    %c0_111 = arith.constant 0 : index
    %c0_112 = arith.constant 0 : index
    %220 = vector.load %arg13[%c0_110, %c0_111, %c0_112] : memref<2x128x512xbf16, #tpu.memory_space<vmem>>, vector<1x128x512xbf16>
    %221 = vector.shape_cast %220 : vector<1x128x512xbf16> to vector<128x512xbf16>
    %cst_113 = arith.constant dense<0.000000e+00> : vector<32x512xf32>
    %222 = tpu.matmul %219, %221, %cst_113 {dimension_numbers = #tpu.dot_dimension_numbers<[1], [0], [0], [1], [0, 0, 1, 1], [], []>} : vector<32x128xbf16>, vector<128x512xbf16>, vector<32x512xf32> -> vector<32x512xf32>
    %223 = vector.extract_strided_slice %222 {offsets = [0, 0], sizes = [32, 256], strides = [1, 1]} : vector<32x512xf32> to vector<32x256xf32>
    %224 = vector.extract_strided_slice %222 {offsets = [0, 256], sizes = [32, 256], strides = [1, 1]} : vector<32x512xf32> to vector<32x256xf32>
    %225 = arith.negf %223 : vector<32x256xf32>
    %226 = math.exp %225 : vector<32x256xf32>
    %cst_114 = arith.constant 1.000000e+00 : f32
    %227 = vector.broadcast %cst_114 : f32 to vector<32x256xf32>
    %228 = arith.addf %227, %226 : vector<32x256xf32>
    %229 = arith.divf %227, %228 : vector<32x256xf32>
    %230 = arith.mulf %223, %229 : vector<32x256xf32>
    %231 = arith.mulf %230, %224 : vector<32x256xf32>
    %232 = arith.truncf %231 : vector<32x256xf32> to vector<32x256xbf16>
    %c0_115 = arith.constant 0 : index
    %c0_116 = arith.constant 0 : index
    %c0_117 = arith.constant 0 : index
    %233 = vector.load %arg14[%c0_115, %c0_116, %c0_117] : memref<2x256x128xbf16, #tpu.memory_space<vmem>>, vector<1x256x128xbf16>
    %234 = vector.shape_cast %233 : vector<1x256x128xbf16> to vector<256x128xbf16>
    %cst_118 = arith.constant dense<0.000000e+00> : vector<32x128xf32>
    %235 = tpu.matmul %232, %234, %cst_118 {dimension_numbers = #tpu.dot_dimension_numbers<[1], [0], [0], [1], [0, 0, 1, 1], [], []>} : vector<32x256xbf16>, vector<256x128xbf16>, vector<32x128xf32> -> vector<32x128xf32>
    %236 = arith.addf %204, %235 : vector<32x128xf32>
    %c1_119 = arith.constant 1 : index
    %c0_120 = arith.constant 0 : index
    %c0_121 = arith.constant 0 : index
    %237 = vector.load %arg7[%c1_119, %c0_120, %c0_121] : memref<2x1x128xf32, #tpu.memory_space<vmem>>, vector<1x1x128xf32>
    %238 = vector.shape_cast %237 : vector<1x1x128xf32> to vector<1x128xf32>
    %239 = arith.mulf %236, %236 : vector<32x128xf32>
    %cst_122 = arith.constant dense<0.000000e+00> : vector<32xf32>
    %240 = vector.multi_reduction <add>, %239, %cst_122 [1] : vector<32x128xf32> to vector<32xf32>
    %241 = vector.shape_cast %240 : vector<32xf32> to vector<32x1xf32>
    %cst_123 = arith.constant 1.280000e+02 : f32
    %242 = vector.broadcast %cst_123 : f32 to vector<32x1xf32>
    %243 = arith.divf %241, %242 : vector<32x1xf32>
    %cst_124 = arith.constant 9.99999997E-7 : f32
    %244 = vector.broadcast %cst_124 : f32 to vector<32x1xf32>
    %245 = arith.addf %243, %244 : vector<32x1xf32>
    %246 = math.rsqrt %245 : vector<32x1xf32>
    %247 = vector.broadcast %246 : vector<32x1xf32> to vector<32x128xf32>
    %248 = arith.mulf %236, %247 : vector<32x128xf32>
    %249 = vector.broadcast %238 : vector<1x128xf32> to vector<32x128xf32>
    %250 = arith.mulf %248, %249 : vector<32x128xf32>
    %251 = arith.truncf %250 : vector<32x128xf32> to vector<32x128xbf16>
    %c4 = arith.constant 4 : index
    %c0_125 = arith.constant 0 : index
    %c0_126 = arith.constant 0 : index
    %252 = vector.load %arg9[%c4, %c0_125, %c0_126] : memref<8x128x32xbf16, #tpu.memory_space<vmem>>, vector<1x128x32xbf16>
    %253 = vector.shape_cast %252 : vector<1x128x32xbf16> to vector<128x32xbf16>
    %cst_127 = arith.constant dense<0.000000e+00> : vector<32x32xf32>
    %254 = tpu.matmul %251, %253, %cst_127 {dimension_numbers = #tpu.dot_dimension_numbers<[1], [0], [0], [1], [0, 0, 1, 1], [], []>} : vector<32x128xbf16>, vector<128x32xbf16>, vector<32x32xf32> -> vector<32x32xf32>
    %255 = arith.truncf %254 : vector<32x32xf32> to vector<32x32xbf16>
    %cst_128 = arith.constant dense<0.000000e+00> : vector<32x32xf32>
    %256 = tpu.matmul %255, %4, %cst_128 {dimension_numbers = #tpu.dot_dimension_numbers<[1], [0], [0], [1], [0, 0, 1, 1], [], []>} : vector<32x32xbf16>, vector<32x32xbf16>, vector<32x32xf32> -> vector<32x32xf32>
    %257 = arith.mulf %254, %2 : vector<32x32xf32>
    %258 = arith.mulf %256, %3 : vector<32x32xf32>
    %259 = arith.addf %257, %258 : vector<32x32xf32>
    %260 = arith.truncf %259 : vector<32x32xf32> to vector<32x32xbf16>
    %c4_129 = arith.constant 4 : index
    %c0_130 = arith.constant 0 : index
    %c0_131 = arith.constant 0 : index
    %261 = vector.load %arg10[%c4_129, %c0_130, %c0_131] : memref<8x128x32xbf16, #tpu.memory_space<vmem>>, vector<1x128x32xbf16>
    %262 = vector.shape_cast %261 : vector<1x128x32xbf16> to vector<128x32xbf16>
    %cst_132 = arith.constant dense<0.000000e+00> : vector<32x32xf32>
    %263 = tpu.matmul %251, %262, %cst_132 {dimension_numbers = #tpu.dot_dimension_numbers<[1], [0], [0], [1], [0, 0, 1, 1], [], []>} : vector<32x128xbf16>, vector<128x32xbf16>, vector<32x32xf32> -> vector<32x32xf32>
    %264 = arith.truncf %263 : vector<32x32xf32> to vector<32x32xbf16>
    %cst_133 = arith.constant dense<0.000000e+00> : vector<32x32xf32>
    %265 = tpu.matmul %264, %4, %cst_133 {dimension_numbers = #tpu.dot_dimension_numbers<[1], [0], [0], [1], [0, 0, 1, 1], [], []>} : vector<32x32xbf16>, vector<32x32xbf16>, vector<32x32xf32> -> vector<32x32xf32>
    %266 = arith.mulf %263, %2 : vector<32x32xf32>
    %267 = arith.mulf %265, %3 : vector<32x32xf32>
    %268 = arith.addf %266, %267 : vector<32x32xf32>
    %269 = arith.truncf %268 : vector<32x32xf32> to vector<32x32xbf16>
    %c4_134 = arith.constant 4 : index
    %c0_135 = arith.constant 0 : index
    %c0_136 = arith.constant 0 : index
    %270 = vector.load %arg11[%c4_134, %c0_135, %c0_136] : memref<8x128x32xbf16, #tpu.memory_space<vmem>>, vector<1x128x32xbf16>
    %271 = vector.shape_cast %270 : vector<1x128x32xbf16> to vector<128x32xbf16>
    %cst_137 = arith.constant dense<0.000000e+00> : vector<32x32xf32>
    %272 = tpu.matmul %251, %271, %cst_137 {dimension_numbers = #tpu.dot_dimension_numbers<[1], [0], [0], [1], [0, 0, 1, 1], [], []>} : vector<32x128xbf16>, vector<128x32xbf16>, vector<32x32xf32> -> vector<32x32xf32>
    %273 = arith.truncf %272 : vector<32x32xf32> to vector<32x32xbf16>
    %cst_138 = arith.constant dense<0.000000e+00> : vector<32x32xf32>
    %274 = tpu.matmul %260, %269, %cst_138 {dimension_numbers = #tpu.dot_dimension_numbers<[1], [1], [0], [0], [0, 0, 1, 0], [], []>} : vector<32x32xbf16>, vector<32x32xbf16>, vector<32x32xf32> -> vector<32x32xf32>
    %275 = arith.addf %274, %25 : vector<32x32xf32>
    %cst_139 = arith.constant dense<0xFF800000> : vector<32xf32>
    %276 = vector.multi_reduction <maximumf>, %275, %cst_139 [1] : vector<32x32xf32> to vector<32xf32>
    %277 = vector.shape_cast %276 : vector<32xf32> to vector<32x1xf32>
    %278 = vector.broadcast %277 : vector<32x1xf32> to vector<32x32xf32>
    %279 = arith.subf %275, %278 : vector<32x32xf32>
    %280 = math.exp %279 : vector<32x32xf32>
    %cst_140 = arith.constant dense<0.000000e+00> : vector<32xf32>
    %281 = vector.multi_reduction <add>, %280, %cst_140 [1] : vector<32x32xf32> to vector<32xf32>
    %282 = vector.shape_cast %281 : vector<32xf32> to vector<32x1xf32>
    %283 = arith.truncf %280 : vector<32x32xf32> to vector<32x32xbf16>
    %cst_141 = arith.constant dense<0.000000e+00> : vector<32x32xf32>
    %284 = tpu.matmul %283, %273, %cst_141 {dimension_numbers = #tpu.dot_dimension_numbers<[1], [0], [0], [1], [0, 0, 1, 1], [], []>} : vector<32x32xbf16>, vector<32x32xbf16>, vector<32x32xf32> -> vector<32x32xf32>
    %285 = tpu.reciprocal %282 {approx = true} : vector<32x1xf32> -> vector<32x1xf32>
    %286 = vector.broadcast %285 : vector<32x1xf32> to vector<32x32xf32>
    %287 = arith.mulf %284, %286 : vector<32x32xf32>
    %288 = arith.truncf %287 : vector<32x32xf32> to vector<32x32xbf16>
    %c4_142 = arith.constant 4 : index
    %c0_143 = arith.constant 0 : index
    %c0_144 = arith.constant 0 : index
    %289 = vector.load %arg12[%c4_142, %c0_143, %c0_144] : memref<8x32x128xbf16, #tpu.memory_space<vmem>>, vector<1x32x128xbf16>
    %290 = vector.shape_cast %289 : vector<1x32x128xbf16> to vector<32x128xbf16>
    %cst_145 = arith.constant dense<0.000000e+00> : vector<32x128xf32>
    %291 = tpu.matmul %288, %290, %cst_145 {dimension_numbers = #tpu.dot_dimension_numbers<[1], [0], [0], [1], [0, 0, 1, 1], [], []>} : vector<32x32xbf16>, vector<32x128xbf16>, vector<32x128xf32> -> vector<32x128xf32>
    %292 = arith.addf %236, %291 : vector<32x128xf32>
    %c5 = arith.constant 5 : index
    %c0_146 = arith.constant 0 : index
    %c0_147 = arith.constant 0 : index
    %293 = vector.load %arg9[%c5, %c0_146, %c0_147] : memref<8x128x32xbf16, #tpu.memory_space<vmem>>, vector<1x128x32xbf16>
    %294 = vector.shape_cast %293 : vector<1x128x32xbf16> to vector<128x32xbf16>
    %cst_148 = arith.constant dense<0.000000e+00> : vector<32x32xf32>
    %295 = tpu.matmul %251, %294, %cst_148 {dimension_numbers = #tpu.dot_dimension_numbers<[1], [0], [0], [1], [0, 0, 1, 1], [], []>} : vector<32x128xbf16>, vector<128x32xbf16>, vector<32x32xf32> -> vector<32x32xf32>
    %296 = arith.truncf %295 : vector<32x32xf32> to vector<32x32xbf16>
    %cst_149 = arith.constant dense<0.000000e+00> : vector<32x32xf32>
    %297 = tpu.matmul %296, %4, %cst_149 {dimension_numbers = #tpu.dot_dimension_numbers<[1], [0], [0], [1], [0, 0, 1, 1], [], []>} : vector<32x32xbf16>, vector<32x32xbf16>, vector<32x32xf32> -> vector<32x32xf32>
    %298 = arith.mulf %295, %2 : vector<32x32xf32>
    %299 = arith.mulf %297, %3 : vector<32x32xf32>
    %300 = arith.addf %298, %299 : vector<32x32xf32>
    %301 = arith.truncf %300 : vector<32x32xf32> to vector<32x32xbf16>
    %c5_150 = arith.constant 5 : index
    %c0_151 = arith.constant 0 : index
    %c0_152 = arith.constant 0 : index
    %302 = vector.load %arg10[%c5_150, %c0_151, %c0_152] : memref<8x128x32xbf16, #tpu.memory_space<vmem>>, vector<1x128x32xbf16>
    %303 = vector.shape_cast %302 : vector<1x128x32xbf16> to vector<128x32xbf16>
    %cst_153 = arith.constant dense<0.000000e+00> : vector<32x32xf32>
    %304 = tpu.matmul %251, %303, %cst_153 {dimension_numbers = #tpu.dot_dimension_numbers<[1], [0], [0], [1], [0, 0, 1, 1], [], []>} : vector<32x128xbf16>, vector<128x32xbf16>, vector<32x32xf32> -> vector<32x32xf32>
    %305 = arith.truncf %304 : vector<32x32xf32> to vector<32x32xbf16>
    %cst_154 = arith.constant dense<0.000000e+00> : vector<32x32xf32>
    %306 = tpu.matmul %305, %4, %cst_154 {dimension_numbers = #tpu.dot_dimension_numbers<[1], [0], [0], [1], [0, 0, 1, 1], [], []>} : vector<32x32xbf16>, vector<32x32xbf16>, vector<32x32xf32> -> vector<32x32xf32>
    %307 = arith.mulf %304, %2 : vector<32x32xf32>
    %308 = arith.mulf %306, %3 : vector<32x32xf32>
    %309 = arith.addf %307, %308 : vector<32x32xf32>
    %310 = arith.truncf %309 : vector<32x32xf32> to vector<32x32xbf16>
    %c5_155 = arith.constant 5 : index
    %c0_156 = arith.constant 0 : index
    %c0_157 = arith.constant 0 : index
    %311 = vector.load %arg11[%c5_155, %c0_156, %c0_157] : memref<8x128x32xbf16, #tpu.memory_space<vmem>>, vector<1x128x32xbf16>
    %312 = vector.shape_cast %311 : vector<1x128x32xbf16> to vector<128x32xbf16>
    %cst_158 = arith.constant dense<0.000000e+00> : vector<32x32xf32>
    %313 = tpu.matmul %251, %312, %cst_158 {dimension_numbers = #tpu.dot_dimension_numbers<[1], [0], [0], [1], [0, 0, 1, 1], [], []>} : vector<32x128xbf16>, vector<128x32xbf16>, vector<32x32xf32> -> vector<32x32xf32>
    %314 = arith.truncf %313 : vector<32x32xf32> to vector<32x32xbf16>
    %cst_159 = arith.constant dense<0.000000e+00> : vector<32x32xf32>
    %315 = tpu.matmul %301, %310, %cst_159 {dimension_numbers = #tpu.dot_dimension_numbers<[1], [1], [0], [0], [0, 0, 1, 0], [], []>} : vector<32x32xbf16>, vector<32x32xbf16>, vector<32x32xf32> -> vector<32x32xf32>
    %316 = arith.addf %315, %25 : vector<32x32xf32>
    %cst_160 = arith.constant dense<0xFF800000> : vector<32xf32>
    %317 = vector.multi_reduction <maximumf>, %316, %cst_160 [1] : vector<32x32xf32> to vector<32xf32>
    %318 = vector.shape_cast %317 : vector<32xf32> to vector<32x1xf32>
    %319 = vector.broadcast %318 : vector<32x1xf32> to vector<32x32xf32>
    %320 = arith.subf %316, %319 : vector<32x32xf32>
    %321 = math.exp %320 : vector<32x32xf32>
    %cst_161 = arith.constant dense<0.000000e+00> : vector<32xf32>
    %322 = vector.multi_reduction <add>, %321, %cst_161 [1] : vector<32x32xf32> to vector<32xf32>
    %323 = vector.shape_cast %322 : vector<32xf32> to vector<32x1xf32>
    %324 = arith.truncf %321 : vector<32x32xf32> to vector<32x32xbf16>
    %cst_162 = arith.constant dense<0.000000e+00> : vector<32x32xf32>
    %325 = tpu.matmul %324, %314, %cst_162 {dimension_numbers = #tpu.dot_dimension_numbers<[1], [0], [0], [1], [0, 0, 1, 1], [], []>} : vector<32x32xbf16>, vector<32x32xbf16>, vector<32x32xf32> -> vector<32x32xf32>
    %326 = tpu.reciprocal %323 {approx = true} : vector<32x1xf32> -> vector<32x1xf32>
    %327 = vector.broadcast %326 : vector<32x1xf32> to vector<32x32xf32>
    %328 = arith.mulf %325, %327 : vector<32x32xf32>
    %329 = arith.truncf %328 : vector<32x32xf32> to vector<32x32xbf16>
    %c5_163 = arith.constant 5 : index
    %c0_164 = arith.constant 0 : index
    %c0_165 = arith.constant 0 : index
    %330 = vector.load %arg12[%c5_163, %c0_164, %c0_165] : memref<8x32x128xbf16, #tpu.memory_space<vmem>>, vector<1x32x128xbf16>
    %331 = vector.shape_cast %330 : vector<1x32x128xbf16> to vector<32x128xbf16>
    %cst_166 = arith.constant dense<0.000000e+00> : vector<32x128xf32>
    %332 = tpu.matmul %329, %331, %cst_166 {dimension_numbers = #tpu.dot_dimension_numbers<[1], [0], [0], [1], [0, 0, 1, 1], [], []>} : vector<32x32xbf16>, vector<32x128xbf16>, vector<32x128xf32> -> vector<32x128xf32>
    %333 = arith.addf %292, %332 : vector<32x128xf32>
    %c6 = arith.constant 6 : index
    %c0_167 = arith.constant 0 : index
    %c0_168 = arith.constant 0 : index
    %334 = vector.load %arg9[%c6, %c0_167, %c0_168] : memref<8x128x32xbf16, #tpu.memory_space<vmem>>, vector<1x128x32xbf16>
    %335 = vector.shape_cast %334 : vector<1x128x32xbf16> to vector<128x32xbf16>
    %cst_169 = arith.constant dense<0.000000e+00> : vector<32x32xf32>
    %336 = tpu.matmul %251, %335, %cst_169 {dimension_numbers = #tpu.dot_dimension_numbers<[1], [0], [0], [1], [0, 0, 1, 1], [], []>} : vector<32x128xbf16>, vector<128x32xbf16>, vector<32x32xf32> -> vector<32x32xf32>
    %337 = arith.truncf %336 : vector<32x32xf32> to vector<32x32xbf16>
    %cst_170 = arith.constant dense<0.000000e+00> : vector<32x32xf32>
    %338 = tpu.matmul %337, %4, %cst_170 {dimension_numbers = #tpu.dot_dimension_numbers<[1], [0], [0], [1], [0, 0, 1, 1], [], []>} : vector<32x32xbf16>, vector<32x32xbf16>, vector<32x32xf32> -> vector<32x32xf32>
    %339 = arith.mulf %336, %2 : vector<32x32xf32>
    %340 = arith.mulf %338, %3 : vector<32x32xf32>
    %341 = arith.addf %339, %340 : vector<32x32xf32>
    %342 = arith.truncf %341 : vector<32x32xf32> to vector<32x32xbf16>
    %c6_171 = arith.constant 6 : index
    %c0_172 = arith.constant 0 : index
    %c0_173 = arith.constant 0 : index
    %343 = vector.load %arg10[%c6_171, %c0_172, %c0_173] : memref<8x128x32xbf16, #tpu.memory_space<vmem>>, vector<1x128x32xbf16>
    %344 = vector.shape_cast %343 : vector<1x128x32xbf16> to vector<128x32xbf16>
    %cst_174 = arith.constant dense<0.000000e+00> : vector<32x32xf32>
    %345 = tpu.matmul %251, %344, %cst_174 {dimension_numbers = #tpu.dot_dimension_numbers<[1], [0], [0], [1], [0, 0, 1, 1], [], []>} : vector<32x128xbf16>, vector<128x32xbf16>, vector<32x32xf32> -> vector<32x32xf32>
    %346 = arith.truncf %345 : vector<32x32xf32> to vector<32x32xbf16>
    %cst_175 = arith.constant dense<0.000000e+00> : vector<32x32xf32>
    %347 = tpu.matmul %346, %4, %cst_175 {dimension_numbers = #tpu.dot_dimension_numbers<[1], [0], [0], [1], [0, 0, 1, 1], [], []>} : vector<32x32xbf16>, vector<32x32xbf16>, vector<32x32xf32> -> vector<32x32xf32>
    %348 = arith.mulf %345, %2 : vector<32x32xf32>
    %349 = arith.mulf %347, %3 : vector<32x32xf32>
    %350 = arith.addf %348, %349 : vector<32x32xf32>
    %351 = arith.truncf %350 : vector<32x32xf32> to vector<32x32xbf16>
    %c6_176 = arith.constant 6 : index
    %c0_177 = arith.constant 0 : index
    %c0_178 = arith.constant 0 : index
    %352 = vector.load %arg11[%c6_176, %c0_177, %c0_178] : memref<8x128x32xbf16, #tpu.memory_space<vmem>>, vector<1x128x32xbf16>
    %353 = vector.shape_cast %352 : vector<1x128x32xbf16> to vector<128x32xbf16>
    %cst_179 = arith.constant dense<0.000000e+00> : vector<32x32xf32>
    %354 = tpu.matmul %251, %353, %cst_179 {dimension_numbers = #tpu.dot_dimension_numbers<[1], [0], [0], [1], [0, 0, 1, 1], [], []>} : vector<32x128xbf16>, vector<128x32xbf16>, vector<32x32xf32> -> vector<32x32xf32>
    %355 = arith.truncf %354 : vector<32x32xf32> to vector<32x32xbf16>
    %cst_180 = arith.constant dense<0.000000e+00> : vector<32x32xf32>
    %356 = tpu.matmul %342, %351, %cst_180 {dimension_numbers = #tpu.dot_dimension_numbers<[1], [1], [0], [0], [0, 0, 1, 0], [], []>} : vector<32x32xbf16>, vector<32x32xbf16>, vector<32x32xf32> -> vector<32x32xf32>
    %357 = arith.addf %356, %25 : vector<32x32xf32>
    %cst_181 = arith.constant dense<0xFF800000> : vector<32xf32>
    %358 = vector.multi_reduction <maximumf>, %357, %cst_181 [1] : vector<32x32xf32> to vector<32xf32>
    %359 = vector.shape_cast %358 : vector<32xf32> to vector<32x1xf32>
    %360 = vector.broadcast %359 : vector<32x1xf32> to vector<32x32xf32>
    %361 = arith.subf %357, %360 : vector<32x32xf32>
    %362 = math.exp %361 : vector<32x32xf32>
    %cst_182 = arith.constant dense<0.000000e+00> : vector<32xf32>
    %363 = vector.multi_reduction <add>, %362, %cst_182 [1] : vector<32x32xf32> to vector<32xf32>
    %364 = vector.shape_cast %363 : vector<32xf32> to vector<32x1xf32>
    %365 = arith.truncf %362 : vector<32x32xf32> to vector<32x32xbf16>
    %cst_183 = arith.constant dense<0.000000e+00> : vector<32x32xf32>
    %366 = tpu.matmul %365, %355, %cst_183 {dimension_numbers = #tpu.dot_dimension_numbers<[1], [0], [0], [1], [0, 0, 1, 1], [], []>} : vector<32x32xbf16>, vector<32x32xbf16>, vector<32x32xf32> -> vector<32x32xf32>
    %367 = tpu.reciprocal %364 {approx = true} : vector<32x1xf32> -> vector<32x1xf32>
    %368 = vector.broadcast %367 : vector<32x1xf32> to vector<32x32xf32>
    %369 = arith.mulf %366, %368 : vector<32x32xf32>
    %370 = arith.truncf %369 : vector<32x32xf32> to vector<32x32xbf16>
    %c6_184 = arith.constant 6 : index
    %c0_185 = arith.constant 0 : index
    %c0_186 = arith.constant 0 : index
    %371 = vector.load %arg12[%c6_184, %c0_185, %c0_186] : memref<8x32x128xbf16, #tpu.memory_space<vmem>>, vector<1x32x128xbf16>
    %372 = vector.shape_cast %371 : vector<1x32x128xbf16> to vector<32x128xbf16>
    %cst_187 = arith.constant dense<0.000000e+00> : vector<32x128xf32>
    %373 = tpu.matmul %370, %372, %cst_187 {dimension_numbers = #tpu.dot_dimension_numbers<[1], [0], [0], [1], [0, 0, 1, 1], [], []>} : vector<32x32xbf16>, vector<32x128xbf16>, vector<32x128xf32> -> vector<32x128xf32>
    %374 = arith.addf %333, %373 : vector<32x128xf32>
    %c7 = arith.constant 7 : index
    %c0_188 = arith.constant 0 : index
    %c0_189 = arith.constant 0 : index
    %375 = vector.load %arg9[%c7, %c0_188, %c0_189] : memref<8x128x32xbf16, #tpu.memory_space<vmem>>, vector<1x128x32xbf16>
    %376 = vector.shape_cast %375 : vector<1x128x32xbf16> to vector<128x32xbf16>
    %cst_190 = arith.constant dense<0.000000e+00> : vector<32x32xf32>
    %377 = tpu.matmul %251, %376, %cst_190 {dimension_numbers = #tpu.dot_dimension_numbers<[1], [0], [0], [1], [0, 0, 1, 1], [], []>} : vector<32x128xbf16>, vector<128x32xbf16>, vector<32x32xf32> -> vector<32x32xf32>
    %378 = arith.truncf %377 : vector<32x32xf32> to vector<32x32xbf16>
    %cst_191 = arith.constant dense<0.000000e+00> : vector<32x32xf32>
    %379 = tpu.matmul %378, %4, %cst_191 {dimension_numbers = #tpu.dot_dimension_numbers<[1], [0], [0], [1], [0, 0, 1, 1], [], []>} : vector<32x32xbf16>, vector<32x32xbf16>, vector<32x32xf32> -> vector<32x32xf32>
    %380 = arith.mulf %377, %2 : vector<32x32xf32>
    %381 = arith.mulf %379, %3 : vector<32x32xf32>
    %382 = arith.addf %380, %381 : vector<32x32xf32>
    %383 = arith.truncf %382 : vector<32x32xf32> to vector<32x32xbf16>
    %c7_192 = arith.constant 7 : index
    %c0_193 = arith.constant 0 : index
    %c0_194 = arith.constant 0 : index
    %384 = vector.load %arg10[%c7_192, %c0_193, %c0_194] : memref<8x128x32xbf16, #tpu.memory_space<vmem>>, vector<1x128x32xbf16>
    %385 = vector.shape_cast %384 : vector<1x128x32xbf16> to vector<128x32xbf16>
    %cst_195 = arith.constant dense<0.000000e+00> : vector<32x32xf32>
    %386 = tpu.matmul %251, %385, %cst_195 {dimension_numbers = #tpu.dot_dimension_numbers<[1], [0], [0], [1], [0, 0, 1, 1], [], []>} : vector<32x128xbf16>, vector<128x32xbf16>, vector<32x32xf32> -> vector<32x32xf32>
    %387 = arith.truncf %386 : vector<32x32xf32> to vector<32x32xbf16>
    %cst_196 = arith.constant dense<0.000000e+00> : vector<32x32xf32>
    %388 = tpu.matmul %387, %4, %cst_196 {dimension_numbers = #tpu.dot_dimension_numbers<[1], [0], [0], [1], [0, 0, 1, 1], [], []>} : vector<32x32xbf16>, vector<32x32xbf16>, vector<32x32xf32> -> vector<32x32xf32>
    %389 = arith.mulf %386, %2 : vector<32x32xf32>
    %390 = arith.mulf %388, %3 : vector<32x32xf32>
    %391 = arith.addf %389, %390 : vector<32x32xf32>
    %392 = arith.truncf %391 : vector<32x32xf32> to vector<32x32xbf16>
    %c7_197 = arith.constant 7 : index
    %c0_198 = arith.constant 0 : index
    %c0_199 = arith.constant 0 : index
    %393 = vector.load %arg11[%c7_197, %c0_198, %c0_199] : memref<8x128x32xbf16, #tpu.memory_space<vmem>>, vector<1x128x32xbf16>
    %394 = vector.shape_cast %393 : vector<1x128x32xbf16> to vector<128x32xbf16>
    %cst_200 = arith.constant dense<0.000000e+00> : vector<32x32xf32>
    %395 = tpu.matmul %251, %394, %cst_200 {dimension_numbers = #tpu.dot_dimension_numbers<[1], [0], [0], [1], [0, 0, 1, 1], [], []>} : vector<32x128xbf16>, vector<128x32xbf16>, vector<32x32xf32> -> vector<32x32xf32>
    %396 = arith.truncf %395 : vector<32x32xf32> to vector<32x32xbf16>
    %cst_201 = arith.constant dense<0.000000e+00> : vector<32x32xf32>
    %397 = tpu.matmul %383, %392, %cst_201 {dimension_numbers = #tpu.dot_dimension_numbers<[1], [1], [0], [0], [0, 0, 1, 0], [], []>} : vector<32x32xbf16>, vector<32x32xbf16>, vector<32x32xf32> -> vector<32x32xf32>
    %398 = arith.addf %397, %25 : vector<32x32xf32>
    %cst_202 = arith.constant dense<0xFF800000> : vector<32xf32>
    %399 = vector.multi_reduction <maximumf>, %398, %cst_202 [1] : vector<32x32xf32> to vector<32xf32>
    %400 = vector.shape_cast %399 : vector<32xf32> to vector<32x1xf32>
    %401 = vector.broadcast %400 : vector<32x1xf32> to vector<32x32xf32>
    %402 = arith.subf %398, %401 : vector<32x32xf32>
    %403 = math.exp %402 : vector<32x32xf32>
    %cst_203 = arith.constant dense<0.000000e+00> : vector<32xf32>
    %404 = vector.multi_reduction <add>, %403, %cst_203 [1] : vector<32x32xf32> to vector<32xf32>
    %405 = vector.shape_cast %404 : vector<32xf32> to vector<32x1xf32>
    %406 = arith.truncf %403 : vector<32x32xf32> to vector<32x32xbf16>
    %cst_204 = arith.constant dense<0.000000e+00> : vector<32x32xf32>
    %407 = tpu.matmul %406, %396, %cst_204 {dimension_numbers = #tpu.dot_dimension_numbers<[1], [0], [0], [1], [0, 0, 1, 1], [], []>} : vector<32x32xbf16>, vector<32x32xbf16>, vector<32x32xf32> -> vector<32x32xf32>
    %408 = tpu.reciprocal %405 {approx = true} : vector<32x1xf32> -> vector<32x1xf32>
    %409 = vector.broadcast %408 : vector<32x1xf32> to vector<32x32xf32>
    %410 = arith.mulf %407, %409 : vector<32x32xf32>
    %411 = arith.truncf %410 : vector<32x32xf32> to vector<32x32xbf16>
    %c7_205 = arith.constant 7 : index
    %c0_206 = arith.constant 0 : index
    %c0_207 = arith.constant 0 : index
    %412 = vector.load %arg12[%c7_205, %c0_206, %c0_207] : memref<8x32x128xbf16, #tpu.memory_space<vmem>>, vector<1x32x128xbf16>
    %413 = vector.shape_cast %412 : vector<1x32x128xbf16> to vector<32x128xbf16>
    %cst_208 = arith.constant dense<0.000000e+00> : vector<32x128xf32>
    %414 = tpu.matmul %411, %413, %cst_208 {dimension_numbers = #tpu.dot_dimension_numbers<[1], [0], [0], [1], [0, 0, 1, 1], [], []>} : vector<32x32xbf16>, vector<32x128xbf16>, vector<32x128xf32> -> vector<32x128xf32>
    %415 = arith.addf %374, %414 : vector<32x128xf32>
    %c1_209 = arith.constant 1 : index
    %c0_210 = arith.constant 0 : index
    %c0_211 = arith.constant 0 : index
    %416 = vector.load %arg8[%c1_209, %c0_210, %c0_211] : memref<2x1x128xf32, #tpu.memory_space<vmem>>, vector<1x1x128xf32>
    %417 = vector.shape_cast %416 : vector<1x1x128xf32> to vector<1x128xf32>
    %418 = arith.mulf %415, %415 : vector<32x128xf32>
    %cst_212 = arith.constant dense<0.000000e+00> : vector<32xf32>
    %419 = vector.multi_reduction <add>, %418, %cst_212 [1] : vector<32x128xf32> to vector<32xf32>
    %420 = vector.shape_cast %419 : vector<32xf32> to vector<32x1xf32>
    %cst_213 = arith.constant 1.280000e+02 : f32
    %421 = vector.broadcast %cst_213 : f32 to vector<32x1xf32>
    %422 = arith.divf %420, %421 : vector<32x1xf32>
    %cst_214 = arith.constant 9.99999997E-7 : f32
    %423 = vector.broadcast %cst_214 : f32 to vector<32x1xf32>
    %424 = arith.addf %422, %423 : vector<32x1xf32>
    %425 = math.rsqrt %424 : vector<32x1xf32>
    %426 = vector.broadcast %425 : vector<32x1xf32> to vector<32x128xf32>
    %427 = arith.mulf %415, %426 : vector<32x128xf32>
    %428 = vector.broadcast %417 : vector<1x128xf32> to vector<32x128xf32>
    %429 = arith.mulf %427, %428 : vector<32x128xf32>
    %430 = arith.truncf %429 : vector<32x128xf32> to vector<32x128xbf16>
    %c1_215 = arith.constant 1 : index
    %c0_216 = arith.constant 0 : index
    %c0_217 = arith.constant 0 : index
    %431 = vector.load %arg13[%c1_215, %c0_216, %c0_217] : memref<2x128x512xbf16, #tpu.memory_space<vmem>>, vector<1x128x512xbf16>
    %432 = vector.shape_cast %431 : vector<1x128x512xbf16> to vector<128x512xbf16>
    %cst_218 = arith.constant dense<0.000000e+00> : vector<32x512xf32>
    %433 = tpu.matmul %430, %432, %cst_218 {dimension_numbers = #tpu.dot_dimension_numbers<[1], [0], [0], [1], [0, 0, 1, 1], [], []>} : vector<32x128xbf16>, vector<128x512xbf16>, vector<32x512xf32> -> vector<32x512xf32>
    %434 = vector.extract_strided_slice %433 {offsets = [0, 0], sizes = [32, 256], strides = [1, 1]} : vector<32x512xf32> to vector<32x256xf32>
    %435 = vector.extract_strided_slice %433 {offsets = [0, 256], sizes = [32, 256], strides = [1, 1]} : vector<32x512xf32> to vector<32x256xf32>
    %436 = arith.negf %434 : vector<32x256xf32>
    %437 = math.exp %436 : vector<32x256xf32>
    %cst_219 = arith.constant 1.000000e+00 : f32
    %438 = vector.broadcast %cst_219 : f32 to vector<32x256xf32>
    %439 = arith.addf %438, %437 : vector<32x256xf32>
    %440 = arith.divf %438, %439 : vector<32x256xf32>
    %441 = arith.mulf %434, %440 : vector<32x256xf32>
    %442 = arith.mulf %441, %435 : vector<32x256xf32>
    %443 = arith.truncf %442 : vector<32x256xf32> to vector<32x256xbf16>
    %c1_220 = arith.constant 1 : index
    %c0_221 = arith.constant 0 : index
    %c0_222 = arith.constant 0 : index
    %444 = vector.load %arg14[%c1_220, %c0_221, %c0_222] : memref<2x256x128xbf16, #tpu.memory_space<vmem>>, vector<1x256x128xbf16>
    %445 = vector.shape_cast %444 : vector<1x256x128xbf16> to vector<256x128xbf16>
    %cst_223 = arith.constant dense<0.000000e+00> : vector<32x128xf32>
    %446 = tpu.matmul %443, %445, %cst_223 {dimension_numbers = #tpu.dot_dimension_numbers<[1], [0], [0], [1], [0, 0, 1, 1], [], []>} : vector<32x256xbf16>, vector<256x128xbf16>, vector<32x128xf32> -> vector<32x128xf32>
    %447 = arith.addf %415, %446 : vector<32x128xf32>
    %c0_224 = arith.constant 0 : index
    %c0_225 = arith.constant 0 : index
    %448 = vector.load %arg15[%c0_224, %c0_225] : memref<1x128xf32, #tpu.memory_space<vmem>>, vector<1x128xf32>
    %449 = arith.mulf %447, %447 : vector<32x128xf32>
    %cst_226 = arith.constant dense<0.000000e+00> : vector<32xf32>
    %450 = vector.multi_reduction <add>, %449, %cst_226 [1] : vector<32x128xf32> to vector<32xf32>
    %451 = vector.shape_cast %450 : vector<32xf32> to vector<32x1xf32>
    %cst_227 = arith.constant 1.280000e+02 : f32
    %452 = vector.broadcast %cst_227 : f32 to vector<32x1xf32>
    %453 = arith.divf %451, %452 : vector<32x1xf32>
    %cst_228 = arith.constant 9.99999997E-7 : f32
    %454 = vector.broadcast %cst_228 : f32 to vector<32x1xf32>
    %455 = arith.addf %453, %454 : vector<32x1xf32>
    %456 = math.rsqrt %455 : vector<32x1xf32>
    %457 = vector.broadcast %456 : vector<32x1xf32> to vector<32x128xf32>
    %458 = arith.mulf %447, %457 : vector<32x128xf32>
    %459 = vector.broadcast %448 : vector<1x128xf32> to vector<32x128xf32>
    %460 = arith.mulf %458, %459 : vector<32x128xf32>
    %461 = arith.truncf %460 : vector<32x128xf32> to vector<32x128xbf16>
    %c0_229 = arith.constant 0 : index
    %c0_230 = arith.constant 0 : index
    %462 = vector.load %arg16[%c0_229, %c0_230] : memref<128x384xbf16, #tpu.memory_space<vmem>>, vector<128x384xbf16>
    %cst_231 = arith.constant dense<0.000000e+00> : vector<32x384xf32>
    %463 = tpu.matmul %461, %462, %cst_231 {dimension_numbers = #tpu.dot_dimension_numbers<[1], [0], [0], [1], [0, 0, 1, 1], [], []>} : vector<32x128xbf16>, vector<128x384xbf16>, vector<32x384xf32> -> vector<32x384xf32>
    %cst_232 = arith.constant dense<0xFF800000> : vector<32xf32>
    %464 = vector.multi_reduction <maximumf>, %463, %cst_232 [1] : vector<32x384xf32> to vector<32xf32>
    %465 = vector.shape_cast %464 : vector<32xf32> to vector<32x1xf32>
    %466 = vector.broadcast %465 : vector<32x1xf32> to vector<32x384xf32>
    %467 = arith.subf %463, %466 : vector<32x384xf32>
    %468 = math.exp %467 : vector<32x384xf32>
    %cst_233 = arith.constant dense<0.000000e+00> : vector<32xf32>
    %469 = vector.multi_reduction <add>, %468, %cst_233 [1] : vector<32x384xf32> to vector<32xf32>
    %470 = vector.shape_cast %469 : vector<32xf32> to vector<32x1xf32>
    %471 = math.log %470 : vector<32x1xf32>
    %472 = tpu.iota {dimensions = array<i32: 1>} : vector<32x384xi32>
    %473 = vector.broadcast %465 : vector<32x1xf32> to vector<32x384xf32>
    %474 = arith.cmpf oeq, %463, %473 : vector<32x384xf32>
    %c384_i32 = arith.constant 384 : i32
    %475 = vector.broadcast %c384_i32 : i32 to vector<32x384xi32>
    %476 = arith.select %474, %472, %475 : vector<32x384xi1>, vector<32x384xi32>
    %cst_234 = arith.constant dense<2147483647> : vector<32xi32>
    %477 = vector.multi_reduction <minsi>, %476, %cst_234 [1] : vector<32x384xi32> to vector<32xi32>
    %478 = vector.shape_cast %477 : vector<32xi32> to vector<32x1xi32>
    %c0_235 = arith.constant 0 : index
    %c0_236 = arith.constant 0 : index
    %479 = vector.load %arg3[%c0_235, %c0_236] : memref<32x1xi32, #tpu.memory_space<vmem>>, vector<32x1xi32>
    %c0_i32 = arith.constant 0 : i32
    %480 = vector.broadcast %c0_i32 : i32 to vector<32x1xi32>
    %481 = arith.cmpi slt, %479, %480 : vector<32x1xi32>
    %c0_i32_237 = arith.constant 0 : i32
    %482 = vector.broadcast %c0_i32_237 : i32 to vector<32x1xi32>
    %483 = arith.select %481, %482, %479 : vector<32x1xi1>, vector<32x1xi32>
    %484 = vector.broadcast %483 : vector<32x1xi32> to vector<32x384xi32>
    %485 = arith.cmpi eq, %472, %484 : vector<32x384xi32>
    %cst_238 = arith.constant 0.000000e+00 : f32
    %486 = vector.broadcast %cst_238 : f32 to vector<32x384xf32>
    %487 = arith.select %485, %467, %486 : vector<32x384xi1>, vector<32x384xf32>
    %cst_239 = arith.constant dense<0.000000e+00> : vector<32xf32>
    %488 = vector.multi_reduction <add>, %487, %cst_239 [1] : vector<32x384xf32> to vector<32xf32>
    %489 = vector.shape_cast %488 : vector<32xf32> to vector<32x1xf32>
    %490 = arith.subf %471, %489 : vector<32x1xf32>
    %c0_240 = arith.constant 0 : index
    %c0_241 = arith.constant 0 : index
    %491 = vector.load %arg17[%c0_240, %c0_241] : memref<32x2xf32, #tpu.memory_space<vmem>>, vector<32x1xf32>
    tpu.vector_store %arg17[%c0_240, %c0_241], %490 {strides = array<i32>} : memref<32x2xf32, #tpu.memory_space<vmem>>, vector<32x1xf32>,
    %492 = arith.sitofp %478 : vector<32x1xi32> to vector<32x1xf32>
    %c0_242 = arith.constant 0 : index
    %c1_243 = arith.constant 1 : index
    %493 = vector.load %arg17[%c0_242, %c1_243] : memref<32x2xf32, #tpu.memory_space<vmem>>, vector<32x1xf32>
    tpu.vector_store %arg17[%c0_242, %c1_243], %492 {strides = array<i32>} : memref<32x2xf32, #tpu.memory_space<vmem>>, vector<32x1xf32>,
    return
  }
  func.func @transform_0(%arg0: i32) -> (i32, i32) {
    %c0_i32 = arith.constant 0 : i32
    %c0_i32_0 = arith.constant 0 : i32
    %c0_i32_1 = arith.constant 0 : i32
    return %c0_i32, %c0_i32_0 : i32, i32
  }
  func.func @transform_1(%arg0: i32) -> (i32, i32) {
    %c0_i32 = arith.constant 0 : i32
    %c0_i32_0 = arith.constant 0 : i32
    %c0_i32_1 = arith.constant 0 : i32
    return %c0_i32, %c0_i32_0 : i32, i32
  }
  func.func @transform_2(%arg0: i32) -> (i32, i32) {
    %c0_i32 = arith.constant 0 : i32
    %c0_i32_0 = arith.constant 0 : i32
    %c0_i32_1 = arith.constant 0 : i32
    return %c0_i32, %c0_i32_0 : i32, i32
  }
  func.func @transform_3(%arg0: i32) -> (i32, i32) {
    %c0_i32 = arith.constant 0 : i32
    %c0_i32_0 = arith.constant 0 : i32
    %c0_i32_1 = arith.constant 0 : i32
    return %c0_i32, %c0_i32_0 : i32, i32
  }
  func.func @transform_4(%arg0: i32) -> (i32, i32) {
    %c0_i32 = arith.constant 0 : i32
    %c0_i32_0 = arith.constant 0 : i32
    %c0_i32_1 = arith.constant 0 : i32
    return %c0_i32, %c0_i32_0 : i32, i32
  }
  func.func @transform_5(%arg0: i32) -> (i32, i32) {
    %c0_i32 = arith.constant 0 : i32
    %c0_i32_0 = arith.constant 0 : i32
    %c0_i32_1 = arith.constant 0 : i32
    return %c0_i32, %c0_i32_0 : i32, i32
  }
  func.func @transform_6(%arg0: i32) -> (i32, i32, i32) {
    %c0_i32 = arith.constant 0 : i32
    %c0_i32_0 = arith.constant 0 : i32
    %c0_i32_1 = arith.constant 0 : i32
    %c0_i32_2 = arith.constant 0 : i32
    return %c0_i32, %c0_i32_0, %c0_i32_1 : i32, i32, i32
  }
  func.func @transform_7(%arg0: i32) -> (i32, i32, i32) {
    %c0_i32 = arith.constant 0 : i32
    %c0_i32_0 = arith.constant 0 : i32
    %c0_i32_1 = arith.constant 0 : i32
    %c0_i32_2 = arith.constant 0 : i32
    return %c0_i32, %c0_i32_0, %c0_i32_1 : i32, i32, i32
  }
  func.func @transform_8(%arg0: i32) -> (i32, i32, i32) {
    %c0_i32 = arith.constant 0 : i32
    %c0_i32_0 = arith.constant 0 : i32
    %c0_i32_1 = arith.constant 0 : i32
    %c0_i32_2 = arith.constant 0 : i32
    return %c0_i32, %c0_i32_0, %c0_i32_1 : i32, i32, i32
  }
  func.func @transform_9(%arg0: i32) -> (i32, i32, i32) {
    %c0_i32 = arith.constant 0 : i32
    %c0_i32_0 = arith.constant 0 : i32
    %c0_i32_1 = arith.constant 0 : i32
    %c0_i32_2 = arith.constant 0 : i32
    return %c0_i32, %c0_i32_0, %c0_i32_1 : i32, i32, i32
  }
  func.func @transform_10(%arg0: i32) -> (i32, i32, i32) {
    %c0_i32 = arith.constant 0 : i32
    %c0_i32_0 = arith.constant 0 : i32
    %c0_i32_1 = arith.constant 0 : i32
    %c0_i32_2 = arith.constant 0 : i32
    return %c0_i32, %c0_i32_0, %c0_i32_1 : i32, i32, i32
  }
  func.func @transform_11(%arg0: i32) -> (i32, i32, i32) {
    %c0_i32 = arith.constant 0 : i32
    %c0_i32_0 = arith.constant 0 : i32
    %c0_i32_1 = arith.constant 0 : i32
    %c0_i32_2 = arith.constant 0 : i32
    return %c0_i32, %c0_i32_0, %c0_i32_1 : i32, i32, i32
  }
  func.func @transform_12(%arg0: i32) -> (i32, i32, i32) {
    %c0_i32 = arith.constant 0 : i32
    %c0_i32_0 = arith.constant 0 : i32
    %c0_i32_1 = arith.constant 0 : i32
    %c0_i32_2 = arith.constant 0 : i32
    return %c0_i32, %c0_i32_0, %c0_i32_1 : i32, i32, i32
  }
  func.func @transform_13(%arg0: i32) -> (i32, i32, i32) {
    %c0_i32 = arith.constant 0 : i32
    %c0_i32_0 = arith.constant 0 : i32
    %c0_i32_1 = arith.constant 0 : i32
    %c0_i32_2 = arith.constant 0 : i32
    return %c0_i32, %c0_i32_0, %c0_i32_1 : i32, i32, i32
  }
  func.func @transform_14(%arg0: i32) -> (i32, i32) {
    %c0_i32 = arith.constant 0 : i32
    %c0_i32_0 = arith.constant 0 : i32
    %c0_i32_1 = arith.constant 0 : i32
    return %c0_i32, %c0_i32_0 : i32, i32
  }
  func.func @transform_15(%arg0: i32) -> (i32, i32) {
    %c0_i32 = arith.constant 0 : i32
    %c0_i32_0 = arith.constant 0 : i32
    %c0_i32_1 = arith.constant 0 : i32
    return %c0_i32, %c0_i32_0 : i32, i32
  }
  func.func @transform_16(%arg0: i32) -> (i32, i32) {
    %c0_i32 = arith.constant 0 : i32
    %c0_i32_0 = arith.constant 0 : i32
    %c0_i32_1 = arith.constant 0 : i32
    return %c0_i32, %c0_i32_0 : i32, i32
  }
}

</mosaic_0001>

<llo_original>
// kernel: squeeze.2
$region0: #{squeeze.2}
  %s0 = inlined_call_operand.vmem [shape: f32[32], index: 0, kind: input, shape index: {}]
  %s1 = inlined_call_operand.vmem [shape: f32[2,16], index: 1, kind: output, shape index: {}]
  $region1: #{squeeze.2} parent=0
    #allocation0 [shape = 'u8[4096]{0}', space=vmem, size = 0x1000, scoped, tag = 'scoped mem for output reshape']
    #allocation1 [shape = 'u8[4096]{0}', space=vmem, size = 0x1000, scoped, tag = 'scoped mem for input reshape']
    %s3 = sshllo.u32 0, 1
    %v4 = vld [vmem:[%s0] sm:%s3]
    %5 = vst [vmem:[#allocation1] sm:%s3] %v4
    %v6 = vld [vmem:[#allocation1] sm:$0x1]
    %vm7 = vcmask 130048
    %8 = vst.msk [vmem:[#allocation0] sm:$0x1] %vm7, %v6
    %v9 = vld [vmem:[#allocation1] sm:$0x1]
    %10 = vrot.lane.b32.xlu0 %v9, 112
    %v11 = vpop.permute.xlu0 %10
    %vm12 = vcmask 130048
    %s13 = scalar_lea.vmem [#allocation0], 1
    %14 = vst.msk [vmem:[%s13] sm:$0x1] %vm12, %v11
    %s16 = sshllo.u32 0, 2
    %v18 = vld [vmem:[#allocation0] sm:%s16]
    %s19 = sshllo.u32 0, 2
    %20 = vst [vmem:[%s1] sm:%s19] %v18

// kernel: motionllm_forward.1
$region0: #{motionllm_forward.1}
  #allocation0 [shape = 'u32[]', space=smem, size = 0x4, offset = 0x4, fixed_abs, tag = 'smem constant byte address 0x4 - core index']
  #allocation1 [shape = 'u32[144,128]{1,0:T(1,128)}', space=vmem, size = 0x12000, scoped, tag = 'internal scratch']
  %s0 = inlined_call_operand.vmem [shape: bf16[32,128], index: 0, kind: input, shape index: {}]
  %s1 = inlined_call_operand.vmem [shape: f32[1,32], index: 1, kind: input, shape index: {}]
  %s2 = inlined_call_operand.vmem [shape: s32[32,1], index: 2, kind: input, shape index: {}]
  %s3 = inlined_call_operand.vmem [shape: f32[32,32], index: 3, kind: input, shape index: {}]
  %s4 = inlined_call_operand.vmem [shape: f32[32,32], index: 4, kind: input, shape index: {}]
  %s5 = inlined_call_operand.vmem [shape: bf16[32,32], index: 5, kind: input, shape index: {}]
  %s6 = inlined_call_operand.vmem [shape: f32[2,1,128], index: 6, kind: input, shape index: {}]
  %s7 = inlined_call_operand.vmem [shape: f32[2,1,128], index: 7, kind: input, shape index: {}]
  %s8 = inlined_call_operand.vmem [shape: bf16[8,128,32], index: 8, kind: input, shape index: {}]
  %s9 = inlined_call_operand.vmem [shape: bf16[8,128,32], index: 9, kind: input, shape index: {}]
  %s10 = inlined_call_operand.vmem [shape: bf16[8,128,32], index: 10, kind: input, shape index: {}]
  %s11 = inlined_call_operand.vmem [shape: bf16[8,32,128], index: 11, kind: input, shape index: {}]
  %s12 = inlined_call_operand.vmem [shape: bf16[2,128,512], index: 12, kind: input, shape index: {}]
  %s13 = inlined_call_operand.vmem [shape: bf16[2,256,128], index: 13, kind: input, shape index: {}]
  %s14 = inlined_call_operand.vmem [shape: f32[1,128], index: 14, kind: input, shape index: {}]
  %s15 = inlined_call_operand.vmem [shape: bf16[128,384], index: 15, kind: input, shape index: {}]
  %s16 = inlined_call_operand.vmem [shape: f32[32,2], index: 16, kind: output, shape index: {}]
  %s17 = sld [smem:[#allocation0]]
  $region74: #{motionllm_forward.1} parent=0
    _
  %s19 = ssub.s32 1, %s17
  %s20 = scalar_select 0, %s19, %s17
  // Predicated region
  $region2: #{motionllm_forward.1} parent=0 // pred_check
    _
  $region3: #{motionllm_forward.1} parent=0 // pred_check_branch
    %22 = sbr.rel (0) target = $region5
  $region4: #{motionllm_forward.1} parent=0 // pred_region
    _
  $region5: #{motionllm_forward.1} parent=0 // pred_fallthru
    _
  // Predicated region
  $region6: #{motionllm_forward.1} parent=0 // pred_check
    _
  $region7: #{motionllm_forward.1} parent=0 // pred_check_branch
    %24 = sbr.rel (0) target = $region9
  $region8: #{motionllm_forward.1} parent=0 // pred_region
    _
  $region9: #{motionllm_forward.1} parent=0 // pred_fallthru
    _
  // Predicated region
  $region10: #{motionllm_forward.1} parent=0 // pred_check
    _
  $region11: #{motionllm_forward.1} parent=0 // pred_check_branch
    %26 = sbr.rel (0) target = $region13
  $region12: #{motionllm_forward.1} parent=0 // pred_region
    _
  $region13: #{motionllm_forward.1} parent=0 // pred_fallthru
    _
  // Predicated region
  $region14: #{motionllm_forward.1} parent=0 // pred_check
    _
  $region15: #{motionllm_forward.1} parent=0 // pred_check_branch
    %28 = sbr.rel (0) target = $region17
  $region16: #{motionllm_forward.1} parent=0 // pred_region
    _
  $region17: #{motionllm_forward.1} parent=0 // pred_fallthru
    _
  // Predicated region
  $region18: #{motionllm_forward.1} parent=0 // pred_check
    _
  $region19: #{motionllm_forward.1} parent=0 // pred_check_branch
    %30 = sbr.rel (0) target = $region21
  $region20: #{motionllm_forward.1} parent=0 // pred_region
    _
  $region21: #{motionllm_forward.1} parent=0 // pred_fallthru
    _
  // Predicated region
  $region22: #{motionllm_forward.1} parent=0 // pred_check
    _
  $region23: #{motionllm_forward.1} parent=0 // pred_check_branch
    %32 = sbr.rel (0) target = $region25
  $region24: #{motionllm_forward.1} parent=0 // pred_region
    _
  $region25: #{motionllm_forward.1} parent=0 // pred_fallthru
    _
  // Predicated region
  $region26: #{motionllm_forward.1} parent=0 // pred_check
    _
  $region27: #{motionllm_forward.1} parent=0 // pred_check_branch
    %34 = sbr.rel (0) target = $region29
  $region28: #{motionllm_forward.1} parent=0 // pred_region
    _
  $region29: #{motionllm_forward.1} parent=0 // pred_fallthru
    _
  // Predicated region
  $region30: #{motionllm_forward.1} parent=0 // pred_check
    _
  $region31: #{motionllm_forward.1} parent=0 // pred_check_branch
    %36 = sbr.rel (0) target = $region33
  $region32: #{motionllm_forward.1} parent=0 // pred_region
    _
  $region33: #{motionllm_forward.1} parent=0 // pred_fallthru
    _
  // Predicated region
  $region34: #{motionllm_forward.1} parent=0 // pred_check
    _
  $region35: #{motionllm_forward.1} parent=0 // pred_check_branch
    %38 = sbr.rel (0) target = $region37
  $region36: #{motionllm_forward.1} parent=0 // pred_region
    _
  $region37: #{motionllm_forward.1} parent=0 // pred_fallthru
    _
  // Predicated region
  $region38: #{motionllm_forward.1} parent=0 // pred_check
    _
  $region39: #{motionllm_forward.1} parent=0 // pred_check_branch
    %40 = sbr.rel (0) target = $region41
  $region40: #{motionllm_forward.1} parent=0 // pred_region
    _
  $region41: #{motionllm_forward.1} parent=0 // pred_fallthru
    _
  // Predicated region
  $region42: #{motionllm_forward.1} parent=0 // pred_check
    _
  $region43: #{motionllm_forward.1} parent=0 // pred_check_branch
    %42 = sbr.rel (0) target = $region45
  $region44: #{motionllm_forward.1} parent=0 // pred_region
    _
  $region45: #{motionllm_forward.1} parent=0 // pred_fallthru
    _
  // Predicated region
  $region46: #{motionllm_forward.1} parent=0 // pred_check
    _
  $region47: #{motionllm_forward.1} parent=0 // pred_check_branch
    %44 = sbr.rel (0) target = $region49
  $region48: #{motionllm_forward.1} parent=0 // pred_region
    _
  $region49: #{motionllm_forward.1} parent=0 // pred_fallthru
    _
  // Predicated region
  $region50: #{motionllm_forward.1} parent=0 // pred_check
    _
  $region51: #{motionllm_forward.1} parent=0 // pred_check_branch
    %46 = sbr.rel (0) target = $region53
  $region52: #{motionllm_forward.1} parent=0 // pred_region
    _
  $region53: #{motionllm_forward.1} parent=0 // pred_fallthru
    _
  // Predicated region
  $region54: #{motionllm_forward.1} parent=0 // pred_check
    _
  $region55: #{motionllm_forward.1} parent=0 // pred_check_branch
    %48 = sbr.rel (0) target = $region57
  $region56: #{motionllm_forward.1} parent=0 // pred_region
    _
  $region57: #{motionllm_forward.1} parent=0 // pred_fallthru
    _
  // Predicated region
  $region58: #{motionllm_forward.1} parent=0 // pred_check
    _
  $region59: #{motionllm_forward.1} parent=0 // pred_check_branch
    %50 = sbr.rel (0) target = $region61
  $region60: #{motionllm_forward.1} parent=0 // pred_region
    _
  $region61: #{motionllm_forward.1} parent=0 // pred_fallthru
    _
  // Predicated region
  $region62: #{motionllm_forward.1} parent=0 // pred_check
    _
  $region63: #{motionllm_forward.1} parent=0 // pred_check_branch
    %52 = sbr.rel (0) target = $region65
  $region64: #{motionllm_forward.1} parent=0 // pred_region
    _
  $region65: #{motionllm_forward.1} parent=0 // pred_fallthru
    _
  %v54 = vld [vmem:[%s0] sm:$0xf]
  %v55 = vld [vmem:[%s0 + $0x4] sm:$0xf]
  %v56 = vld [vmem:[%s0 + $0x8] sm:$0xf]
  %v57 = vld [vmem:[%s0 + $0xc] sm:$0xf]
  %v58 = vunpack.c.l.bf16 %v54
  %v59 = vunpack.c.l.bf16 %v55
  %v60 = vunpack.c.l.bf16 %v56
  %v61 = vunpack.c.l.bf16 %v57
  %v62 = vld [vmem:[%s3] sm:$0xff]
  %v63 = vld [vmem:[%s3 + $0x8] sm:$0xff]
  %v64 = vld [vmem:[%s3 + $0x10] sm:$0xff]
  %v65 = vld [vmem:[%s3 + $0x18] sm:$0xff]
  %v66 = vld [vmem:[%s4] sm:$0xff]
  %v67 = vld [vmem:[%s4 + $0x8] sm:$0xff]
  %v68 = vld [vmem:[%s4 + $0x10] sm:$0xff]
  %v69 = vld [vmem:[%s4 + $0x18] sm:$0xff]
  %v70 = vld [vmem:[%s5] sm:$0xf]
  %v71 = vld [vmem:[%s5 + $0x4] sm:$0xf]
  %v72 = vld [vmem:[%s5 + $0x8] sm:$0xf]
  %v73 = vld [vmem:[%s5 + $0xc] sm:$0xf]
  %v74 = vlaneseq
  %v75 = vshrl.u32 %v74, 7
  %v76 = vadd.s32 %v75, 8
  %v77 = vadd.s32 %v75, 16
  %v78 = vadd.s32 %v75, 24
  %v79 = vlaneseq
  %v80 = vand.u32 %v79, 127
  %v81 = vshra.s32 %v75, 4
  %v82 = vshra.s32 %v76, 4
  %v83 = vshra.s32 %v77, 4
  %v84 = vshra.s32 %v78, 4
  %v85 = vshra.s32 %v80, 4
  %vm86 = vcmp.eq.s32.totalorder %v81, %v85
  %vm87 = vcmp.eq.s32.totalorder %v82, %v85
  %vm88 = vcmp.eq.s32.totalorder %v83, %v85
  %vm89 = vcmp.eq.s32.totalorder %v84, %v85
  %v90 = vand.u32 %v80, 15
  %v91 = vand.u32 %v75, 15
  %v92 = vand.u32 %v76, 15
  %v93 = vand.u32 %v77, 15
  %v94 = vand.u32 %v78, 15
  %vm95 = vcmp.le.s32.totalorder %v90, %v91
  %vm96 = vcmp.le.s32.totalorder %v90, %v92
  %vm97 = vcmp.le.s32.totalorder %v90, %v93
  %vm98 = vcmp.le.s32.totalorder %v90, %v94
  %v99 = vld [vmem:[%s1] sm:$0x1]
  %vm100 = vcmp.gt.f32.partialorder %v99, 0.5
  %vm101 = vmand %vm86, %vm95
  %vm102 = vmand %vm87, %vm96
  %vm103 = vmand %vm88, %vm97
  %vm104 = vmand %vm89, %vm98
  %v105 = vsel %vm100, 1, 0
  %v106 = vlaneseq
  %v107 = vshrl.u32 %v106, 7
  %v108 = vsub.s32 0, %v107
  %v109 = vrot.slane %v105, %v108
  %vm110 = vcmp.eq.s32.totalorder %v109, 1
  %vm111 = vmand %vm101, %vm110
  %vm112 = vmand %vm102, %vm110
  %vm113 = vmand %vm103, %vm110
  %vm114 = vmand %vm104, %vm110
  %v115 = vsel %vm111, 0.0, -1e+09
  %v116 = vsel %vm112, 0.0, -1e+09
  %v117 = vsel %vm113, 0.0, -1e+09
  %v118 = vsel %vm114, 0.0, -1e+09
  %v119 = vld [vmem:[%s6] sm:$0x1]
  %v120 = vmul.f32 %v58, %v58
  %v121 = vmul.f32 %v59, %v59
  %v122 = vmul.f32 %v60, %v60
  %v123 = vmul.f32 %v61, %v61
  %124 = vadd.xlane.f32.xlu0 %v120
  %v125 = vpop.xlane.xlu0 %124
  %126 = vadd.xlane.f32.xlu0 %v121
  %v127 = vpop.xlane.xlu0 %126
  %128 = vadd.xlane.f32.xlu0 %v122
  %v129 = vpop.xlane.xlu0 %128
  %130 = vadd.xlane.f32.xlu0 %v123
  %v131 = vpop.xlane.xlu0 %130
  %v132 = vrcp.pop 128.0
  %v133 = vmul.f32 %v125, %v132
  %v134 = vmul.f32 %v127, %v132
  %v135 = vmul.f32 %v129, %v132
  %v136 = vmul.f32 %v131, %v132
  %v137 = vadd.f32 %v133, 1e-06
  %v138 = vadd.f32 %v134, 1e-06
  %v139 = vadd.f32 %v135, 1e-06
  %v140 = vadd.f32 %v136, 1e-06
  %v141 = vrsqrt.pop %v137
  %v142 = vrsqrt.pop %v138
  %v143 = vrsqrt.pop %v139
  %v144 = vrsqrt.pop %v140
  %v145 = vmul.f32 %v58, %v141
  %v146 = vmul.f32 %v59, %v142
  %v147 = vmul.f32 %v60, %v143
  %v148 = vmul.f32 %v61, %v144
  %v150 = vlaneseq
  %v151 = vshrl.u32 %v150, 7
  %v152 = vsub.s32 0, %v151
  %v153 = vrot.slane %v119, %v152
  %v155 = vmul.f32 %v145, %v153
  %v156 = vmul.f32 %v146, %v153
  %v157 = vmul.f32 %v147, %v153
  %v158 = vmul.f32 %v148, %v153
  %v159 = vpack.c.bf16 %v156, %v155
  %v160 = vpack.c.bf16 %v158, %v157
  %v161 = vld [vmem:[%s8] sm:$0xf]
  %v162 = vld [vmem:[%s8 + $0x4] sm:$0xf]
  %v163 = vld [vmem:[%s8 + $0x8] sm:$0xf]
  %v164 = vld [vmem:[%s8 + $0xc] sm:$0xf]
  %v165 = vld [vmem:[%s8 + $0x10] sm:$0xf]
  %v166 = vld [vmem:[%s8 + $0x14] sm:$0xf]
  %v167 = vld [vmem:[%s8 + $0x18] sm:$0xf]
  %v168 = vld [vmem:[%s8 + $0x1c] sm:$0xf]
  %v169 = vld [vmem:[%s8 + $0x20] sm:$0xf]
  %v170 = vld [vmem:[%s8 + $0x24] sm:$0xf]
  %v171 = vld [vmem:[%s8 + $0x28] sm:$0xf]
  %v172 = vld [vmem:[%s8 + $0x2c] sm:$0xf]
  %v173 = vld [vmem:[%s8 + $0x30] sm:$0xf]
  %v174 = vld [vmem:[%s8 + $0x34] sm:$0xf]
  %v175 = vld [vmem:[%s8 + $0x38] sm:$0xf]
  %v176 = vld [vmem:[%s8 + $0x3c] sm:$0xf]
  %v193 = vunpack.c.l.b16 %v161
  %v194 = vunpack.c.l.b16 %v162
  %v195 = vunpack.c.l.b16 %v163
  %v196 = vunpack.c.l.b16 %v164
  %v197 = vunpack.c.l.b16 %v165
  %v198 = vunpack.c.l.b16 %v166
  %v199 = vunpack.c.l.b16 %v167
  %v200 = vunpack.c.l.b16 %v168
  %v201 = vunpack.c.l.b16 %v169
  %v202 = vunpack.c.l.b16 %v170
  %v203 = vunpack.c.l.b16 %v171
  %v204 = vunpack.c.l.b16 %v172
  %v205 = vunpack.c.l.b16 %v173
  %v206 = vunpack.c.l.b16 %v174
  %v207 = vunpack.c.l.b16 %v175
  %v208 = vunpack.c.l.b16 %v176
  %v209 = vpack.c.b16 %v194, %v193
  %v210 = vpack.c.b16 %v196, %v195
  %v211 = vpack.c.b16 %v198, %v197
  %v212 = vpack.c.b16 %v200, %v199
  %v213 = vpack.c.b16 %v202, %v201
  %v214 = vpack.c.b16 %v204, %v203
  %v215 = vpack.c.b16 %v206, %v205
  %v216 = vpack.c.b16 %v208, %v207
  %225 = vmatprep.subr.bf16.mxu0 0
  %226 = vmatpush1.bf16.msra.mxu0 %v209
  %227 = vmatprep.subr.bf16.mxu0 0
  %228 = vmatpush1.bf16.msra.mxu0 %v210
  %229 = vmatprep.subr.bf16.mxu0 0
  %230 = vmatpush1.bf16.msra.mxu0 %v211
  %231 = vmatprep.subr.bf16.mxu0 0
  %232 = vmatpush1.bf16.msra.mxu0 %v212
  %233 = vmatprep.subr.bf16.mxu0 0
  %234 = vmatpush1.bf16.msra.mxu0 %v213
  %235 = vmatprep.subr.bf16.mxu0 0
  %236 = vmatpush1.bf16.msra.mxu0 %v214
  %237 = vmatprep.subr.bf16.mxu0 0
  %238 = vmatpush1.bf16.msra.mxu0 %v215
  %239 = vmatprep.subr.bf16.mxu0 0
  %240 = vmatpush1.bf16.msra.mxu0 %v216
  %241 = vmatprep.subr.bf16.mxu0 0
  %242 = vmatpush1.bf16.msra.mxu0 0
  %243 = vmatprep.subr.bf16.mxu0 0
  %244 = vmatpush1.bf16.msra.mxu0 0
  %245 = vmatprep.subr.bf16.mxu0 0
  %246 = vmatpush1.bf16.msra.mxu0 0
  %247 = vmatprep.subr.bf16.mxu0 0
  %248 = vmatpush1.bf16.msra.mxu0 0
  %249 = vmatprep.subr.bf16.mxu0 0
  %250 = vmatpush1.bf16.msra.mxu0 0
  %251 = vmatprep.subr.bf16.mxu0 0
  %252 = vmatpush1.bf16.msra.mxu0 0
  %253 = vmatprep.subr.bf16.mxu0 0
  %254 = vmatpush1.bf16.msra.mxu0 0
  %255 = vmatprep.subr.bf16.mxu0 0
  %256 = vmatpush1.bf16.msra.mxu0 0
  %257 = vmatprep.mubr.bf16.mxu0 0
  %258 = vmatmul.mubr.bf16.gmra.mrb[0].mxu0 %v159
  %v259 = vpop.f32.mrb[0].mxu0
  %v260 = vadd.f32 0.0, %v259
  %v261 = vpop.f32.mrb[0].mxu0
  %v262 = vpop.f32.mrb[0].mxu0
  %v263 = vadd.f32 0.0, %v262
  %v264 = vpop.f32.mrb[0].mxu0
  %265 = vmatprep.mubr.bf16.mxu0 0
  %266 = vmatmul.mubr.bf16.gmra.mrb[0].mxu0 %v160
  %v267 = vpop.f32.mrb[0].mxu0
  %v268 = vadd.f32 0.0, %v267
  %v269 = vpop.f32.mrb[0].mxu0
  %v270 = vpop.f32.mrb[0].mxu0
  %v271 = vadd.f32 0.0, %v270
  %v272 = vpop.f32.mrb[0].mxu0
  %273 = vdwg.mxu0
  %v274 = vpack.c.bf16 %v263, %v260
  %v275 = vpack.c.bf16 %v271, %v268
  %v280 = vunpack.c.l.b16 %v70
  %v281 = vunpack.c.l.b16 %v71
  %v282 = vunpack.c.l.b16 %v72
  %v283 = vunpack.c.l.b16 %v73
  %v284 = vpack.c.b16 %v281, %v280
  %v285 = vpack.c.b16 %v283, %v282
  %vm288 = vcmask 261120
  %v290 = vsel %vm288, %v274, 0
  %v293 = vsel %vm288, %v275, 0
  %295 = vmatprep.subr.bf16.mxu0 0
  %296 = vmatpush1.bf16.msra.mxu0 %v284
  %297 = vmatprep.subr.bf16.mxu0 0
  %298 = vmatpush1.bf16.msra.mxu0 %v285
  %299 = vmatprep.subr.bf16.mxu0 0
  %300 = vmatpush1.bf16.msra.mxu0 0
  %301 = vmatprep.subr.bf16.mxu0 0
  %302 = vmatpush1.bf16.msra.mxu0 0
  %303 = vmatprep.subr.bf16.mxu0 0
  %304 = vmatpush1.bf16.msra.mxu0 0
  %305 = vmatprep.subr.bf16.mxu0 0
  %306 = vmatpush1.bf16.msra.mxu0 0
  %307 = vmatprep.subr.bf16.mxu0 0
  %308 = vmatpush1.bf16.msra.mxu0 0
  %309 = vmatprep.subr.bf16.mxu0 0
  %310 = vmatpush1.bf16.msra.mxu0 0
  %311 = vmatprep.subr.bf16.mxu0 0
  %312 = vmatpush1.bf16.msra.mxu0 0
  %313 = vmatprep.subr.bf16.mxu0 0
  %314 = vmatpush1.bf16.msra.mxu0 0
  %315 = vmatprep.subr.bf16.mxu0 0
  %316 = vmatpush1.bf16.msra.mxu0 0
  %317 = vmatprep.subr.bf16.mxu0 0
  %318 = vmatpush1.bf16.msra.mxu0 0
  %319 = vmatprep.subr.bf16.mxu0 0
  %320 = vmatpush1.bf16.msra.mxu0 0
  %321 = vmatprep.subr.bf16.mxu0 0
  %322 = vmatpush1.bf16.msra.mxu0 0
  %323 = vmatprep.subr.bf16.mxu0 0
  %324 = vmatpush1.bf16.msra.mxu0 0
  %325 = vmatprep.subr.bf16.mxu0 0
  %326 = vmatpush1.bf16.msra.mxu0 0
  %327 = vmatprep.mubr.bf16.mxu0 0
  %328 = vmatmul.mubr.bf16.gmra.mrb[0].mxu0 %v290
  %v329 = vpop.f32.mrb[0].mxu0
  %v330 = vadd.f32 0.0, %v329
  %v331 = vpop.f32.mrb[0].mxu0
  %v332 = vpop.f32.mrb[0].mxu0
  %v333 = vadd.f32 0.0, %v332
  %v334 = vpop.f32.mrb[0].mxu0
  %335 = vmatprep.mubr.bf16.mxu0 0
  %336 = vmatmul.mubr.bf16.gmra.mrb[0].mxu0 %v293
  %v337 = vpop.f32.mrb[0].mxu0
  %v338 = vadd.f32 0.0, %v337
  %v339 = vpop.f32.mrb[0].mxu0
  %v340 = vpop.f32.mrb[0].mxu0
  %v341 = vadd.f32 0.0, %v340
  %v342 = vpop.f32.mrb[0].mxu0
  %343 = vdwg.mxu0
  %v344 = vmul.f32 %v260, %v62
  %v345 = vmul.f32 %v263, %v63
  %v346 = vmul.f32 %v268, %v64
  %v347 = vmul.f32 %v271, %v65
  %v348 = vmul.f32 %v330, %v66
  %v349 = vmul.f32 %v333, %v67
  %v350 = vmul.f32 %v338, %v68
  %v351 = vmul.f32 %v341, %v69
  %v352 = vadd.f32 %v344, %v348
  %v353 = vadd.f32 %v345, %v349
  %v354 = vadd.f32 %v346, %v350
  %v355 = vadd.f32 %v347, %v351
  %v356 = vpack.c.bf16 %v353, %v352
  %v357 = vpack.c.bf16 %v355, %v354
  %v358 = vld [vmem:[%s9] sm:$0xf]
  %v359 = vld [vmem:[%s9 + $0x4] sm:$0xf]
  %v360 = vld [vmem:[%s9 + $0x8] sm:$0xf]
  %v361 = vld [vmem:[%s9 + $0xc] sm:$0xf]
  %v362 = vld [vmem:[%s9 + $0x10] sm:$0xf]
  %v363 = vld [vmem:[%s9 + $0x14] sm:$0xf]
  %v364 = vld [vmem:[%s9 + $0x18] sm:$0xf]
  %v365 = vld [vmem:[%s9 + $0x1c] sm:$0xf]
  %v366 = vld [vmem:[%s9 + $0x20] sm:$0xf]
  %v367 = vld [vmem:[%s9 + $0x24] sm:$0xf]
  %v368 = vld [vmem:[%s9 + $0x28] sm:$0xf]
  %v369 = vld [vmem:[%s9 + $0x2c] sm:$0xf]
  %v370 = vld [vmem:[%s9 + $0x30] sm:$0xf]
  %v371 = vld [vmem:[%s9 + $0x34] sm:$0xf]
  %v372 = vld [vmem:[%s9 + $0x38] sm:$0xf]
  %v373 = vld [vmem:[%s9 + $0x3c] sm:$0xf]
  %v390 = vunpack.c.l.b16 %v358
  %v391 = vunpack.c.l.b16 %v359
  %v392 = vunpack.c.l.b16 %v360
  %v393 = vunpack.c.l.b16 %v361
  %v394 = vunpack.c.l.b16 %v362
  %v395 = vunpack.c.l.b16 %v363
  %v396 = vunpack.c.l.b16 %v364
  %v397 = vunpack.c.l.b16 %v365
  %v398 = vunpack.c.l.b16 %v366
  %v399 = vunpack.c.l.b16 %v367
  %v400 = vunpack.c.l.b16 %v368
  %v401 = vunpack.c.l.b16 %v369
  %v402 = vunpack.c.l.b16 %v370
  %v403 = vunpack.c.l.b16 %v371
  %v404 = vunpack.c.l.b16 %v372
  %v405 = vunpack.c.l.b16 %v373
  %v406 = vpack.c.b16 %v391, %v390
  %v407 = vpack.c.b16 %v393, %v392
  %v408 = vpack.c.b16 %v395, %v394
  %v409 = vpack.c.b16 %v397, %v396
  %v410 = vpack.c.b16 %v399, %v398
  %v411 = vpack.c.b16 %v401, %v400
  %v412 = vpack.c.b16 %v403, %v402
  %v413 = vpack.c.b16 %v405, %v404
  %422 = vmatprep.subr.bf16.mxu0 0
  %423 = vmatpush1.bf16.msra.mxu0 %v406
  %424 = vmatprep.subr.bf16.mxu0 0
  %425 = vmatpush1.bf16.msra.mxu0 %v407
  %426 = vmatprep.subr.bf16.mxu0 0
  %427 = vmatpush1.bf16.msra.mxu0 %v408
  %428 = vmatprep.subr.bf16.mxu0 0
  %429 = vmatpush1.bf16.msra.mxu0 %v409
  %430 = vmatprep.subr.bf16.mxu0 0
  %431 = vmatpush1.bf16.msra.mxu0 %v410
  %432 = vmatprep.subr.bf16.mxu0 0
  %433 = vmatpush1.bf16.msra.mxu0 %v411
  %434 = vmatprep.subr.bf16.mxu0 0
  %435 = vmatpush1.bf16.msra.mxu0 %v412
  %436 = vmatprep.subr.bf16.mxu0 0
  %437 = vmatpush1.bf16.msra.mxu0 %v413
  %438 = vmatprep.subr.bf16.mxu0 0
  %439 = vmatpush1.bf16.msra.mxu0 0
  %440 = vmatprep.subr.bf16.mxu0 0
  %441 = vmatpush1.bf16.msra.mxu0 0
  %442 = vmatprep.subr.bf16.mxu0 0
  %443 = vmatpush1.bf16.msra.mxu0 0
  %444 = vmatprep.subr.bf16.mxu0 0
  %445 = vmatpush1.bf16.msra.mxu0 0
  %446 = vmatprep.subr.bf16.mxu0 0
  %447 = vmatpush1.bf16.msra.mxu0 0
  %448 = vmatprep.subr.bf16.mxu0 0
  %449 = vmatpush1.bf16.msra.mxu0 0
  %450 = vmatprep.subr.bf16.mxu0 0
  %451 = vmatpush1.bf16.msra.mxu0 0
  %452 = vmatprep.subr.bf16.mxu0 0
  %453 = vmatpush1.bf16.msra.mxu0 0
  %454 = vmatprep.mubr.bf16.mxu0 0
  %455 = vmatmul.mubr.bf16.gmra.mrb[0].mxu0 %v159
  %v456 = vpop.f32.mrb[0].mxu0
  %v457 = vadd.f32 0.0, %v456
  %v458 = vpop.f32.mrb[0].mxu0
  %v459 = vpop.f32.mrb[0].mxu0
  %v460 = vadd.f32 0.0, %v459
  %v461 = vpop.f32.mrb[0].mxu0
  %462 = vmatprep.mubr.bf16.mxu0 0
  %463 = vmatmul.mubr.bf16.gmra.mrb[0].mxu0 %v160
  %v464 = vpop.f32.mrb[0].mxu0
  %v465 = vadd.f32 0.0, %v464
  %v466 = vpop.f32.mrb[0].mxu0
  %v467 = vpop.f32.mrb[0].mxu0
  %v468 = vadd.f32 0.0, %v467
  %v469 = vpop.f32.mrb[0].mxu0
  %470 = vdwg.mxu0
  %v471 = vpack.c.bf16 %v460, %v457
  %v472 = vpack.c.bf16 %v468, %v465
  %v474 = vsel %vm288, %v471, 0
  %v477 = vsel %vm288, %v472, 0
  %479 = vmatprep.subr.bf16.mxu0 0
  %480 = vmatpush1.bf16.msra.mxu0 %v284
  %481 = vmatprep.subr.bf16.mxu0 0
  %482 = vmatpush1.bf16.msra.mxu0 %v285
  %483 = vmatprep.subr.bf16.mxu0 0
  %484 = vmatpush1.bf16.msra.mxu0 0
  %485 = vmatprep.subr.bf16.mxu0 0
  %486 = vmatpush1.bf16.msra.mxu0 0
  %487 = vmatprep.subr.bf16.mxu0 0
  %488 = vmatpush1.bf16.msra.mxu0 0
  %489 = vmatprep.subr.bf16.mxu0 0
  %490 = vmatpush1.bf16.msra.mxu0 0
  %491 = vmatprep.subr.bf16.mxu0 0
  %492 = vmatpush1.bf16.msra.mxu0 0
  %493 = vmatprep.subr.bf16.mxu0 0
  %494 = vmatpush1.bf16.msra.mxu0 0
  %495 = vmatprep.subr.bf16.mxu0 0
  %496 = vmatpush1.bf16.msra.mxu0 0
  %497 = vmatprep.subr.bf16.mxu0 0
  %498 = vmatpush1.bf16.msra.mxu0 0
  %499 = vmatprep.subr.bf16.mxu0 0
  %500 = vmatpush1.bf16.msra.mxu0 0
  %501 = vmatprep.subr.bf16.mxu0 0
  %502 = vmatpush1.bf16.msra.mxu0 0
  %503 = vmatprep.subr.bf16.mxu0 0
  %504 = vmatpush1.bf16.msra.mxu0 0
  %505 = vmatprep.subr.bf16.mxu0 0
  %506 = vmatpush1.bf16.msra.mxu0 0
  %507 = vmatprep.subr.bf16.mxu0 0
  %508 = vmatpush1.bf16.msra.mxu0 0
  %509 = vmatprep.subr.bf16.mxu0 0
  %510 = vmatpush1.bf16.msra.mxu0 0
  %511 = vmatprep.mubr.bf16.mxu0 0
  %512 = vmatmul.mubr.bf16.gmra.mrb[0].mxu0 %v474
  %v513 = vpop.f32.mrb[0].mxu0
  %v514 = vadd.f32 0.0, %v513
  %v515 = vpop.f32.mrb[0].mxu0
  %v516 = vpop.f32.mrb[0].mxu0
  %v517 = vadd.f32 0.0, %v516
  %v518 = vpop.f32.mrb[0].mxu0
  %519 = vmatprep.mubr.bf16.mxu0 0
  %520 = vmatmul.mubr.bf16.gmra.mrb[0].mxu0 %v477
  %v521 = vpop.f32.mrb[0].mxu0
  %v522 = vadd.f32 0.0, %v521
  %v523 = vpop.f32.mrb[0].mxu0
  %v524 = vpop.f32.mrb[0].mxu0
  %v525 = vadd.f32 0.0, %v524
  %v526 = vpop.f32.mrb[0].mxu0
  %527 = vdwg.mxu0
  %v528 = vmul.f32 %v457, %v62
  %v529 = vmul.f32 %v460, %v63
  %v530 = vmul.f32 %v465, %v64
  %v531 = vmul.f32 %v468, %v65
  %v532 = vmul.f32 %v514, %v66
  %v533 = vmul.f32 %v517, %v67
  %v534 = vmul.f32 %v522, %v68
  %v535 = vmul.f32 %v525, %v69
  %v536 = vadd.f32 %v528, %v532
  %v537 = vadd.f32 %v529, %v533
  %v538 = vadd.f32 %v530, %v534
  %v539 = vadd.f32 %v531, %v535
  %v540 = vpack.c.bf16 %v537, %v536
  %v541 = vpack.c.bf16 %v539, %v538
  %v542 = vld [vmem:[%s10] sm:$0xf]
  %v543 = vld [vmem:[%s10 + $0x4] sm:$0xf]
  %v544 = vld [vmem:[%s10 + $0x8] sm:$0xf]
  %v545 = vld [vmem:[%s10 + $0xc] sm:$0xf]
  %v546 = vld [vmem:[%s10 + $0x10] sm:$0xf]
  %v547 = vld [vmem:[%s10 + $0x14] sm:$0xf]
  %v548 = vld [vmem:[%s10 + $0x18] sm:$0xf]
  %v549 = vld [vmem:[%s10 + $0x1c] sm:$0xf]
  %v550 = vld [vmem:[%s10 + $0x20] sm:$0xf]
  %v551 = vld [vmem:[%s10 + $0x24] sm:$0xf]
  %v552 = vld [vmem:[%s10 + $0x28] sm:$0xf]
  %v553 = vld [vmem:[%s10 + $0x2c] sm:$0xf]
  %v554 = vld [vmem:[%s10 + $0x30] sm:$0xf]
  %v555 = vld [vmem:[%s10 + $0x34] sm:$0xf]
  %v556 = vld [vmem:[%s10 + $0x38] sm:$0xf]
  %v557 = vld [vmem:[%s10 + $0x3c] sm:$0xf]
  %v574 = vunpack.c.l.b16 %v542
  %v575 = vunpack.c.l.b16 %v543
  %v576 = vunpack.c.l.b16 %v544
  %v577 = vunpack.c.l.b16 %v545
  %v578 = vunpack.c.l.b16 %v546
  %v579 = vunpack.c.l.b16 %v547
  %v580 = vunpack.c.l.b16 %v548
  %v581 = vunpack.c.l.b16 %v549
  %v582 = vunpack.c.l.b16 %v550
  %v583 = vunpack.c.l.b16 %v551
  %v584 = vunpack.c.l.b16 %v552
  %v585 = vunpack.c.l.b16 %v553
  %v586 = vunpack.c.l.b16 %v554
  %v587 = vunpack.c.l.b16 %v555
  %v588 = vunpack.c.l.b16 %v556
  %v589 = vunpack.c.l.b16 %v557
  %v590 = vpack.c.b16 %v575, %v574
  %v591 = vpack.c.b16 %v577, %v576
  %v592 = vpack.c.b16 %v579, %v578
  %v593 = vpack.c.b16 %v581, %v580
  %v594 = vpack.c.b16 %v583, %v582
  %v595 = vpack.c.b16 %v585, %v584
  %v596 = vpack.c.b16 %v587, %v586
  %v597 = vpack.c.b16 %v589, %v588
  %606 = vmatprep.subr.bf16.mxu0 0
  %607 = vmatpush1.bf16.msra.mxu0 %v590
  %608 = vmatprep.subr.bf16.mxu0 0
  %609 = vmatpush1.bf16.msra.mxu0 %v591
  %610 = vmatprep.subr.bf16.mxu0 0
  %611 = vmatpush1.bf16.msra.mxu0 %v592
  %612 = vmatprep.subr.bf16.mxu0 0
  %613 = vmatpush1.bf16.msra.mxu0 %v593
  %614 = vmatprep.subr.bf16.mxu0 0
  %615 = vmatpush1.bf16.msra.mxu0 %v594
  %616 = vmatprep.subr.bf16.mxu0 0
  %617 = vmatpush1.bf16.msra.mxu0 %v595
  %618 = vmatprep.subr.bf16.mxu0 0
  %619 = vmatpush1.bf16.msra.mxu0 %v596
  %620 = vmatprep.subr.bf16.mxu0 0
  %621 = vmatpush1.bf16.msra.mxu0 %v597
  %622 = vmatprep.subr.bf16.mxu0 0
  %623 = vmatpush1.bf16.msra.mxu0 0
  %624 = vmatprep.subr.bf16.mxu0 0
  %625 = vmatpush1.bf16.msra.mxu0 0
  %626 = vmatprep.subr.bf16.mxu0 0
  %627 = vmatpush1.bf16.msra.mxu0 0
  %628 = vmatprep.subr.bf16.mxu0 0
  %629 = vmatpush1.bf16.msra.mxu0 0
  %630 = vmatprep.subr.bf16.mxu0 0
  %631 = vmatpush1.bf16.msra.mxu0 0
  %632 = vmatprep.subr.bf16.mxu0 0
  %633 = vmatpush1.bf16.msra.mxu0 0
  %634 = vmatprep.subr.bf16.mxu0 0
  %635 = vmatpush1.bf16.msra.mxu0 0
  %636 = vmatprep.subr.bf16.mxu0 0
  %637 = vmatpush1.bf16.msra.mxu0 0
  %638 = vmatprep.mubr.bf16.mxu0 0
  %639 = vmatmul.mubr.bf16.gmra.mrb[0].mxu0 %v159
  %v640 = vpop.f32.mrb[0].mxu0
  %v641 = vadd.f32 0.0, %v640
  %v642 = vpop.f32.mrb[0].mxu0
  %v643 = vpop.f32.mrb[0].mxu0
  %v644 = vadd.f32 0.0, %v643
  %v645 = vpop.f32.mrb[0].mxu0
  %646 = vmatprep.mubr.bf16.mxu0 0
  %647 = vmatmul.mubr.bf16.gmra.mrb[0].mxu0 %v160
  %v648 = vpop.f32.mrb[0].mxu0
  %v649 = vadd.f32 0.0, %v648
  %v650 = vpop.f32.mrb[0].mxu0
  %v651 = vpop.f32.mrb[0].mxu0
  %v652 = vadd.f32 0.0, %v651
  %v653 = vpop.f32.mrb[0].mxu0
  %654 = vdwg.mxu0
  %v655 = vpack.c.bf16 %v644, %v641
  %v656 = vpack.c.bf16 %v652, %v649
  %v658 = vsel %vm288, %v356, 0
  %v661 = vsel %vm288, %v357, 0
  %v664 = vsel %vm288, %v540, 0
  %v667 = vsel %vm288, %v541, 0
  %669 = vmatprep.subr.bf16.mxu0 0
  %670 = vmatpush1.bf16.xpose.msra.mxu0 %v664
  %671 = vmatprep.subr.bf16.mxu0 0
  %672 = vmatpush1.bf16.xpose.msra.mxu0 %v667
  %673 = vmatprep.subr.bf16.mxu0 0
  %674 = vmatpush1.bf16.xpose.msra.mxu0 0
  %675 = vmatprep.subr.bf16.mxu0 0
  %676 = vmatpush1.bf16.xpose.msra.mxu0 0
  %677 = vmatprep.subr.bf16.mxu0 0
  %678 = vmatpush1.bf16.xpose.msra.mxu0 0
  %679 = vmatprep.subr.bf16.mxu0 0
  %680 = vmatpush1.bf16.xpose.msra.mxu0 0
  %681 = vmatprep.subr.bf16.mxu0 0
  %682 = vmatpush1.bf16.xpose.msra.mxu0 0
  %683 = vmatprep.subr.bf16.mxu0 0
  %684 = vmatpush1.bf16.xpose.msra.mxu0 0
  %685 = vmatprep.subr.bf16.mxu0 0
  %686 = vmatpush1.bf16.xpose.msra.mxu0 0
  %687 = vmatprep.subr.bf16.mxu0 0
  %688 = vmatpush1.bf16.xpose.msra.mxu0 0
  %689 = vmatprep.subr.bf16.mxu0 0
  %690 = vmatpush1.bf16.xpose.msra.mxu0 0
  %691 = vmatprep.subr.bf16.mxu0 0
  %692 = vmatpush1.bf16.xpose.msra.mxu0 0
  %693 = vmatprep.subr.bf16.mxu0 0
  %694 = vmatpush1.bf16.xpose.msra.mxu0 0
  %695 = vmatprep.subr.bf16.mxu0 0
  %696 = vmatpush1.bf16.xpose.msra.mxu0 0
  %697 = vmatprep.subr.bf16.mxu0 0
  %698 = vmatpush1.bf16.xpose.msra.mxu0 0
  %699 = vmatprep.subr.bf16.mxu0 0
  %700 = vmatpush1.bf16.xpose.msra.mxu0 0
  %701 = vmatprep.mubr.bf16.mxu0 0
  %702 = vmatmul.mubr.bf16.gmra.mrb[0].mxu0 %v658
  %v703 = vpop.f32.mrb[0].mxu0
  %v704 = vadd.f32 %v115, %v703
  %v705 = vpop.f32.mrb[0].mxu0
  %v706 = vpop.f32.mrb[0].mxu0
  %v707 = vadd.f32 %v116, %v706
  %v708 = vpop.f32.mrb[0].mxu0
  %709 = vmatprep.mubr.bf16.mxu0 0
  %710 = vmatmul.mubr.bf16.gmra.mrb[0].mxu0 %v661
  %v711 = vpop.f32.mrb[0].mxu0
  %v712 = vadd.f32 %v117, %v711
  %v713 = vpop.f32.mrb[0].mxu0
  %v714 = vpop.f32.mrb[0].mxu0
  %v715 = vadd.f32 %v118, %v714
  %v716 = vpop.f32.mrb[0].mxu0
  %717 = vdwg.mxu0
  %v718 = vsel %vm288, %v704, -inf
  %719 = vmax.xlane.f32.xlu0 %v718
  %v720 = vpop.xlane.xlu0 %719
  %v721 = vsel %vm288, %v707, -inf
  %722 = vmax.xlane.f32.xlu0 %v721
  %v723 = vpop.xlane.xlu0 %722
  %v724 = vsel %vm288, %v712, -inf
  %725 = vmax.xlane.f32.xlu0 %v724
  %v726 = vpop.xlane.xlu0 %725
  %v727 = vsel %vm288, %v715, -inf
  %728 = vmax.xlane.f32.xlu0 %v727
  %v729 = vpop.xlane.xlu0 %728
  %v730 = vsub.f32 %v704, %v720
  %v731 = vsub.f32 %v707, %v723
  %v732 = vsub.f32 %v712, %v726
  %v733 = vsub.f32 %v715, %v729
  %v734 = vmul.f32 %v730, 1.442695
  %v735 = vpow.pop %v734
  %v736 = vmul.f32 %v731, 1.442695
  %v737 = vpow.pop %v736
  %v738 = vmul.f32 %v732, 1.442695
  %v739 = vpow.pop %v738
  %v740 = vmul.f32 %v733, 1.442695
  %v741 = vpow.pop %v740
  %v742 = vsel %vm288, %v735, 0.0
  %743 = vadd.xlane.f32.xlu0 %v742
  %v744 = vpop.xlane.xlu0 %743
  %v745 = vsel %vm288, %v737, 0.0
  %746 = vadd.xlane.f32.xlu0 %v745
  %v747 = vpop.xlane.xlu0 %746
  %v748 = vsel %vm288, %v739, 0.0
  %749 = vadd.xlane.f32.xlu0 %v748
  %v750 = vpop.xlane.xlu0 %749
  %v751 = vsel %vm288, %v741, 0.0
  %752 = vadd.xlane.f32.xlu0 %v751
  %v753 = vpop.xlane.xlu0 %752
  %v754 = vpack.c.bf16 %v737, %v735
  %v755 = vpack.c.bf16 %v741, %v739
  %v757 = vsel %vm288, %v754, 0
  %v760 = vsel %vm288, %v755, 0
  %762 = vmatprep.subr.bf16.mxu0 0
  %763 = vmatpush1.bf16.msra.mxu0 %v655
  %764 = vmatprep.subr.bf16.mxu0 0
  %765 = vmatpush1.bf16.msra.mxu0 %v656
  %766 = vmatprep.subr.bf16.mxu0 0
  %767 = vmatpush1.bf16.msra.mxu0 0
  %768 = vmatprep.subr.bf16.mxu0 0
  %769 = vmatpush1.bf16.msra.mxu0 0
  %770 = vmatprep.subr.bf16.mxu0 0
  %771 = vmatpush1.bf16.msra.mxu0 0
  %772 = vmatprep.subr.bf16.mxu0 0
  %773 = vmatpush1.bf16.msra.mxu0 0
  %774 = vmatprep.subr.bf16.mxu0 0
  %775 = vmatpush1.bf16.msra.mxu0 0
  %776 = vmatprep.subr.bf16.mxu0 0
  %777 = vmatpush1.bf16.msra.mxu0 0
  %778 = vmatprep.subr.bf16.mxu0 0
  %779 = vmatpush1.bf16.msra.mxu0 0
  %780 = vmatprep.subr.bf16.mxu0 0
  %781 = vmatpush1.bf16.msra.mxu0 0
  %782 = vmatprep.subr.bf16.mxu0 0
  %783 = vmatpush1.bf16.msra.mxu0 0
  %784 = vmatprep.subr.bf16.mxu0 0
  %785 = vmatpush1.bf16.msra.mxu0 0
  %786 = vmatprep.subr.bf16.mxu0 0
  %787 = vmatpush1.bf16.msra.mxu0 0
  %788 = vmatprep.subr.bf16.mxu0 0
  %789 = vmatpush1.bf16.msra.mxu0 0
  %790 = vmatprep.subr.bf16.mxu0 0
  %791 = vmatpush1.bf16.msra.mxu0 0
  %792 = vmatprep.subr.bf16.mxu0 0
  %793 = vmatpush1.bf16.msra.mxu0 0
  %794 = vmatprep.mubr.bf16.mxu0 0
  %795 = vmatmul.mubr.bf16.gmra.mrb[0].mxu0 %v757
  %v796 = vpop.f32.mrb[0].mxu0
  %v797 = vadd.f32 0.0, %v796
  %v798 = vpop.f32.mrb[0].mxu0
  %v799 = vpop.f32.mrb[0].mxu0
  %v800 = vadd.f32 0.0, %v799
  %v801 = vpop.f32.mrb[0].mxu0
  %802 = vmatprep.mubr.bf16.mxu0 0
  %803 = vmatmul.mubr.bf16.gmra.mrb[0].mxu0 %v760
  %v804 = vpop.f32.mrb[0].mxu0
  %v805 = vadd.f32 0.0, %v804
  %v806 = vpop.f32.mrb[0].mxu0
  %v807 = vpop.f32.mrb[0].mxu0
  %v808 = vadd.f32 0.0, %v807
  %v809 = vpop.f32.mrb[0].mxu0
  %810 = vdwg.mxu0
  %v811 = vrcp.pop %v744
  %v812 = vrcp.pop %v747
  %v813 = vrcp.pop %v750
  %v814 = vrcp.pop %v753
  %v815 = vmul.f32 %v797, %v811
  %v816 = vmul.f32 %v800, %v812
  %v817 = vmul.f32 %v805, %v813
  %v818 = vmul.f32 %v808, %v814
  %v819 = vpack.c.bf16 %v816, %v815
  %v820 = vpack.c.bf16 %v818, %v817
  %v821 = vld [vmem:[%s11] sm:$0xf]
  %v822 = vld [vmem:[%s11 + $0x4] sm:$0xf]
  %v823 = vld [vmem:[%s11 + $0x8] sm:$0xf]
  %v824 = vld [vmem:[%s11 + $0xc] sm:$0xf]
  %v829 = vunpack.c.l.b16 %v821
  %v830 = vunpack.c.l.b16 %v822
  %v831 = vunpack.c.l.b16 %v823
  %v832 = vunpack.c.l.b16 %v824
  %v833 = vpack.c.b16 %v830, %v829
  %v834 = vpack.c.b16 %v832, %v831
  %v838 = vsel %vm288, %v819, 0
  %v841 = vsel %vm288, %v820, 0
  %843 = vmatprep.subr.bf16.mxu0 0
  %844 = vmatpush1.bf16.msra.mxu0 %v833
  %845 = vmatprep.subr.bf16.mxu0 0
  %846 = vmatpush1.bf16.msra.mxu0 %v834
  %847 = vmatprep.subr.bf16.mxu0 0
  %848 = vmatpush1.bf16.msra.mxu0 0
  %849 = vmatprep.subr.bf16.mxu0 0
  %850 = vmatpush1.bf16.msra.mxu0 0
  %851 = vmatprep.subr.bf16.mxu0 0
  %852 = vmatpush1.bf16.msra.mxu0 0
  %853 = vmatprep.subr.bf16.mxu0 0
  %854 = vmatpush1.bf16.msra.mxu0 0
  %855 = vmatprep.subr.bf16.mxu0 0
  %856 = vmatpush1.bf16.msra.mxu0 0
  %857 = vmatprep.subr.bf16.mxu0 0
  %858 = vmatpush1.bf16.msra.mxu0 0
  %859 = vmatprep.subr.bf16.mxu0 0
  %860 = vmatpush1.bf16.msra.mxu0 0
  %861 = vmatprep.subr.bf16.mxu0 0
  %862 = vmatpush1.bf16.msra.mxu0 0
  %863 = vmatprep.subr.bf16.mxu0 0
  %864 = vmatpush1.bf16.msra.mxu0 0
  %865 = vmatprep.subr.bf16.mxu0 0
  %866 = vmatpush1.bf16.msra.mxu0 0
  %867 = vmatprep.subr.bf16.mxu0 0
  %868 = vmatpush1.bf16.msra.mxu0 0
  %869 = vmatprep.subr.bf16.mxu0 0
  %870 = vmatpush1.bf16.msra.mxu0 0
  %871 = vmatprep.subr.bf16.mxu0 0
  %872 = vmatpush1.bf16.msra.mxu0 0
  %873 = vmatprep.subr.bf16.mxu0 0
  %874 = vmatpush1.bf16.msra.mxu0 0
  %875 = vmatprep.mubr.bf16.mxu0 0
  %876 = vmatmul.mubr.bf16.gmra.mrb[0].mxu0 %v838
  %v877 = vpop.f32.mrb[0].mxu0
  %v878 = vadd.f32 0.0, %v877
  %v879 = vpop.f32.mrb[0].mxu0
  %v880 = vpop.f32.mrb[0].mxu0
  %v881 = vadd.f32 0.0, %v880
  %v882 = vpop.f32.mrb[0].mxu0
  %883 = vmatprep.mubr.bf16.mxu0 0
  %884 = vmatmul.mubr.bf16.gmra.mrb[0].mxu0 %v841
  %v885 = vpop.f32.mrb[0].mxu0
  %v886 = vadd.f32 0.0, %v885
  %v887 = vpop.f32.mrb[0].mxu0
  %v888 = vpop.f32.mrb[0].mxu0
  %v889 = vadd.f32 0.0, %v888
  %v890 = vpop.f32.mrb[0].mxu0
  %891 = vdwg.mxu0
  %v892 = vadd.f32 %v58, %v878
  %v893 = vadd.f32 %v59, %v881
  %v894 = vadd.f32 %v60, %v886
  %v895 = vadd.f32 %v61, %v889
  %s896 = scalar_lea.vmem %s8, 64
  %v897 = vld [vmem:[%s896] sm:$0xf]
  %v898 = vld [vmem:[%s896 + $0x4] sm:$0xf]
  %v899 = vld [vmem:[%s896 + $0x8] sm:$0xf]
  %v900 = vld [vmem:[%s896 + $0xc] sm:$0xf]
  %v901 = vld [vmem:[%s896 + $0x10] sm:$0xf]
  %v902 = vld [vmem:[%s896 + $0x14] sm:$0xf]
  %v903 = vld [vmem:[%s896 + $0x18] sm:$0xf]
  %v904 = vld [vmem:[%s896 + $0x1c] sm:$0xf]
  %v905 = vld [vmem:[%s896 + $0x20] sm:$0xf]
  %v906 = vld [vmem:[%s896 + $0x24] sm:$0xf]
  %v907 = vld [vmem:[%s896 + $0x28] sm:$0xf]
  %v908 = vld [vmem:[%s896 + $0x2c] sm:$0xf]
  %v909 = vld [vmem:[%s896 + $0x30] sm:$0xf]
  %v910 = vld [vmem:[%s896 + $0x34] sm:$0xf]
  %v911 = vld [vmem:[%s896 + $0x38] sm:$0xf]
  %v912 = vld [vmem:[%s896 + $0x3c] sm:$0xf]
  %v929 = vunpack.c.l.b16 %v897
  %v930 = vunpack.c.l.b16 %v898
  %v931 = vunpack.c.l.b16 %v899
  %v932 = vunpack.c.l.b16 %v900
  %v933 = vunpack.c.l.b16 %v901
  %v934 = vunpack.c.l.b16 %v902
  %v935 = vunpack.c.l.b16 %v903
  %v936 = vunpack.c.l.b16 %v904
  %v937 = vunpack.c.l.b16 %v905
  %v938 = vunpack.c.l.b16 %v906
  %v939 = vunpack.c.l.b16 %v907
  %v940 = vunpack.c.l.b16 %v908
  %v941 = vunpack.c.l.b16 %v909
  %v942 = vunpack.c.l.b16 %v910
  %v943 = vunpack.c.l.b16 %v911
  %v944 = vunpack.c.l.b16 %v912
  %v945 = vpack.c.b16 %v930, %v929
  %v946 = vpack.c.b16 %v932, %v931
  %v947 = vpack.c.b16 %v934, %v933
  %v948 = vpack.c.b16 %v936, %v935
  %v949 = vpack.c.b16 %v938, %v937
  %v950 = vpack.c.b16 %v940, %v939
  %v951 = vpack.c.b16 %v942, %v941
  %v952 = vpack.c.b16 %v944, %v943
  %961 = vmatprep.subr.bf16.mxu0 0
  %962 = vmatpush1.bf16.msra.mxu0 %v945
  %963 = vmatprep.subr.bf16.mxu0 0
  %964 = vmatpush1.bf16.msra.mxu0 %v946
  %965 = vmatprep.subr.bf16.mxu0 0
  %966 = vmatpush1.bf16.msra.mxu0 %v947
  %967 = vmatprep.subr.bf16.mxu0 0
  %968 = vmatpush1.bf16.msra.mxu0 %v948
  %969 = vmatprep.subr.bf16.mxu0 0
  %970 = vmatpush1.bf16.msra.mxu0 %v949
  %971 = vmatprep.subr.bf16.mxu0 0
  %972 = vmatpush1.bf16.msra.mxu0 %v950
  %973 = vmatprep.subr.bf16.mxu0 0
  %974 = vmatpush1.bf16.msra.mxu0 %v951
  %975 = vmatprep.subr.bf16.mxu0 0
  %976 = vmatpush1.bf16.msra.mxu0 %v952
  %977 = vmatprep.subr.bf16.mxu0 0
  %978 = vmatpush1.bf16.msra.mxu0 0
  %979 = vmatprep.subr.bf16.mxu0 0
  %980 = vmatpush1.bf16.msra.mxu0 0
  %981 = vmatprep.subr.bf16.mxu0 0
  %982 = vmatpush1.bf16.msra.mxu0 0
  %983 = vmatprep.subr.bf16.mxu0 0
  %984 = vmatpush1.bf16.msra.mxu0 0
  %985 = vmatprep.subr.bf16.mxu0 0
  %986 = vmatpush1.bf16.msra.mxu0 0
  %987 = vmatprep.subr.bf16.mxu0 0
  %988 = vmatpush1.bf16.msra.mxu0 0
  %989 = vmatprep.subr.bf16.mxu0 0
  %990 = vmatpush1.bf16.msra.mxu0 0
  %991 = vmatprep.subr.bf16.mxu0 0
  %992 = vmatpush1.bf16.msra.mxu0 0
  %993 = vmatprep.mubr.bf16.mxu0 0
  %994 = vmatmul.mubr.bf16.gmra.mrb[0].mxu0 %v159
  %v995 = vpop.f32.mrb[0].mxu0
  %v996 = vadd.f32 0.0, %v995
  %v997 = vpop.f32.mrb[0].mxu0
  %v998 = vpop.f32.mrb[0].mxu0
  %v999 = vadd.f32 0.0, %v998
  %v1000 = vpop.f32.mrb[0].mxu0
  %1001 = vmatprep.mubr.bf16.mxu0 0
  %1002 = vmatmul.mubr.bf16.gmra.mrb[0].mxu0 %v160
  %v1003 = vpop.f32.mrb[0].mxu0
  %v1004 = vadd.f32 0.0, %v1003
  %v1005 = vpop.f32.mrb[0].mxu0
  %v1006 = vpop.f32.mrb[0].mxu0
  %v1007 = vadd.f32 0.0, %v1006
  %v1008 = vpop.f32.mrb[0].mxu0
  %1009 = vdwg.mxu0
  %v1010 = vpack.c.bf16 %v999, %v996
  %v1011 = vpack.c.bf16 %v1007, %v1004
  %v1013 = vsel %vm288, %v1010, 0
  %v1016 = vsel %vm288, %v1011, 0
  %1018 = vmatprep.subr.bf16.mxu0 0
  %1019 = vmatpush1.bf16.msra.mxu0 %v284
  %1020 = vmatprep.subr.bf16.mxu0 0
  %1021 = vmatpush1.bf16.msra.mxu0 %v285
  %1022 = vmatprep.subr.bf16.mxu0 0
  %1023 = vmatpush1.bf16.msra.mxu0 0
  %1024 = vmatprep.subr.bf16.mxu0 0
  %1025 = vmatpush1.bf16.msra.mxu0 0
  %1026 = vmatprep.subr.bf16.mxu0 0
  %1027 = vmatpush1.bf16.msra.mxu0 0
  %1028 = vmatprep.subr.bf16.mxu0 0
  %1029 = vmatpush1.bf16.msra.mxu0 0
  %1030 = vmatprep.subr.bf16.mxu0 0
  %1031 = vmatpush1.bf16.msra.mxu0 0
  %1032 = vmatprep.subr.bf16.mxu0 0
  %1033 = vmatpush1.bf16.msra.mxu0 0
  %1034 = vmatprep.subr.bf16.mxu0 0
  %1035 = vmatpush1.bf16.msra.mxu0 0
  %1036 = vmatprep.subr.bf16.mxu0 0
  %1037 = vmatpush1.bf16.msra.mxu0 0
  %1038 = vmatprep.subr.bf16.mxu0 0
  %1039 = vmatpush1.bf16.msra.mxu0 0
  %1040 = vmatprep.subr.bf16.mxu0 0
  %1041 = vmatpush1.bf16.msra.mxu0 0
  %1042 = vmatprep.subr.bf16.mxu0 0
  %1043 = vmatpush1.bf16.msra.mxu0 0
  %1044 = vmatprep.subr.bf16.mxu0 0
  %1045 = vmatpush1.bf16.msra.mxu0 0
  %1046 = vmatprep.subr.bf16.mxu0 0
  %1047 = vmatpush1.bf16.msra.mxu0 0
  %1048 = vmatprep.subr.bf16.mxu0 0
  %1049 = vmatpush1.bf16.msra.mxu0 0
  %1050 = vmatprep.mubr.bf16.mxu0 0
  %1051 = vmatmul.mubr.bf16.gmra.mrb[0].mxu0 %v1013
  %v1052 = vpop.f32.mrb[0].mxu0
  %v1053 = vadd.f32 0.0, %v1052
  %v1054 = vpop.f32.mrb[0].mxu0
  %v1055 = vpop.f32.mrb[0].mxu0
  %v1056 = vadd.f32 0.0, %v1055
  %v1057 = vpop.f32.mrb[0].mxu0
  %1058 = vmatprep.mubr.bf16.mxu0 0
  %1059 = vmatmul.mubr.bf16.gmra.mrb[0].mxu0 %v1016
  %v1060 = vpop.f32.mrb[0].mxu0
  %v1061 = vadd.f32 0.0, %v1060
  %v1062 = vpop.f32.mrb[0].mxu0
  %v1063 = vpop.f32.mrb[0].mxu0
  %v1064 = vadd.f32 0.0, %v1063
  %v1065 = vpop.f32.mrb[0].mxu0
  %1066 = vdwg.mxu0
  %v1067 = vmul.f32 %v996, %v62
  %v1068 = vmul.f32 %v999, %v63
  %v1069 = vmul.f32 %v1004, %v64
  %v1070 = vmul.f32 %v1007, %v65
  %v1071 = vmul.f32 %v1053, %v66
  %v1072 = vmul.f32 %v1056, %v67
  %v1073 = vmul.f32 %v1061, %v68
  %v1074 = vmul.f32 %v1064, %v69
  %v1075 = vadd.f32 %v1067, %v1071
  %v1076 = vadd.f32 %v1068, %v1072
  %v1077 = vadd.f32 %v1069, %v1073
  %v1078 = vadd.f32 %v1070, %v1074
  %v1079 = vpack.c.bf16 %v1076, %v1075
  %v1080 = vpack.c.bf16 %v1078, %v1077
  %s1081 = scalar_lea.vmem %s9, 64
  %v1082 = vld [vmem:[%s1081] sm:$0xf]
  %v1083 = vld [vmem:[%s1081 + $0x4] sm:$0xf]
  %v1084 = vld [vmem:[%s1081 + $0x8] sm:$0xf]
  %v1085 = vld [vmem:[%s1081 + $0xc] sm:$0xf]
  %v1086 = vld [vmem:[%s1081 + $0x10] sm:$0xf]
  %v1087 = vld [vmem:[%s1081 + $0x14] sm:$0xf]
  %v1088 = vld [vmem:[%s1081 + $0x18] sm:$0xf]
  %v1089 = vld [vmem:[%s1081 + $0x1c] sm:$0xf]
  %v1090 = vld [vmem:[%s1081 + $0x20] sm:$0xf]
  %v1091 = vld [vmem:[%s1081 + $0x24] sm:$0xf]
  %v1092 = vld [vmem:[%s1081 + $0x28] sm:$0xf]
  %v1093 = vld [vmem:[%s1081 + $0x2c] sm:$0xf]
  %v1094 = vld [vmem:[%s1081 + $0x30] sm:$0xf]
  %v1095 = vld [vmem:[%s1081 + $0x34] sm:$0xf]
  %v1096 = vld [vmem:[%s1081 + $0x38] sm:$0xf]
  %v1097 = vld [vmem:[%s1081 + $0x3c] sm:$0xf]
  %v1114 = vunpack.c.l.b16 %v1082
  %v1115 = vunpack.c.l.b16 %v1083
  %v1116 = vunpack.c.l.b16 %v1084
  %v1117 = vunpack.c.l.b16 %v1085
  %v1118 = vunpack.c.l.b16 %v1086
  %v1119 = vunpack.c.l.b16 %v1087
  %v1120 = vunpack.c.l.b16 %v1088
  %v1121 = vunpack.c.l.b16 %v1089
  %v1122 = vunpack.c.l.b16 %v1090
  %v1123 = vunpack.c.l.b16 %v1091
  %v1124 = vunpack.c.l.b16 %v1092
  %v1125 = vunpack.c.l.b16 %v1093
  %v1126 = vunpack.c.l.b16 %v1094
  %v1127 = vunpack.c.l.b16 %v1095
  %v1128 = vunpack.c.l.b16 %v1096
  %v1129 = vunpack.c.l.b16 %v1097
  %v1130 = vpack.c.b16 %v1115, %v1114
  %v1131 = vpack.c.b16 %v1117, %v1116
  %v1132 = vpack.c.b16 %v1119, %v1118
  %v1133 = vpack.c.b16 %v1121, %v1120
  %v1134 = vpack.c.b16 %v1123, %v1122
  %v1135 = vpack.c.b16 %v1125, %v1124
  %v1136 = vpack.c.b16 %v1127, %v1126
  %v1137 = vpack.c.b16 %v1129, %v1128
  %1146 = vmatprep.subr.bf16.mxu0 0
  %1147 = vmatpush1.bf16.msra.mxu0 %v1130
  %1148 = vmatprep.subr.bf16.mxu0 0
  %1149 = vmatpush1.bf16.msra.mxu0 %v1131
  %1150 = vmatprep.subr.bf16.mxu0 0
  %1151 = vmatpush1.bf16.msra.mxu0 %v1132
  %1152 = vmatprep.subr.bf16.mxu0 0
  %1153 = vmatpush1.bf16.msra.mxu0 %v1133
  %1154 = vmatprep.subr.bf16.mxu0 0
  %1155 = vmatpush1.bf16.msra.mxu0 %v1134
  %1156 = vmatprep.subr.bf16.mxu0 0
  %1157 = vmatpush1.bf16.msra.mxu0 %v1135
  %1158 = vmatprep.subr.bf16.mxu0 0
  %1159 = vmatpush1.bf16.msra.mxu0 %v1136
  %1160 = vmatprep.subr.bf16.mxu0 0
  %1161 = vmatpush1.bf16.msra.mxu0 %v1137
  %1162 = vmatprep.subr.bf16.mxu0 0
  %1163 = vmatpush1.bf16.msra.mxu0 0
  %1164 = vmatprep.subr.bf16.mxu0 0
  %1165 = vmatpush1.bf16.msra.mxu0 0
  %1166 = vmatprep.subr.bf16.mxu0 0
  %1167 = vmatpush1.bf16.msra.mxu0 0
  %1168 = vmatprep.subr.bf16.mxu0 0
  %1169 = vmatpush1.bf16.msra.mxu0 0
  %1170 = vmatprep.subr.bf16.mxu0 0
  %1171 = vmatpush1.bf16.msra.mxu0 0
  %1172 = vmatprep.subr.bf16.mxu0 0
  %1173 = vmatpush1.bf16.msra.mxu0 0
  %1174 = vmatprep.subr.bf16.mxu0 0
  %1175 = vmatpush1.bf16.msra.mxu0 0
  %1176 = vmatprep.subr.bf16.mxu0 0
  %1177 = vmatpush1.bf16.msra.mxu0 0
  %1178 = vmatprep.mubr.bf16.mxu0 0
  %1179 = vmatmul.mubr.bf16.gmra.mrb[0].mxu0 %v159
  %v1180 = vpop.f32.mrb[0].mxu0
  %v1181 = vadd.f32 0.0, %v1180
  %v1182 = vpop.f32.mrb[0].mxu0
  %v1183 = vpop.f32.mrb[0].mxu0
  %v1184 = vadd.f32 0.0, %v1183
  %v1185 = vpop.f32.mrb[0].mxu0
  %1186 = vmatprep.mubr.bf16.mxu0 0
  %1187 = vmatmul.mubr.bf16.gmra.mrb[0].mxu0 %v160
  %v1188 = vpop.f32.mrb[0].mxu0
  %v1189 = vadd.f32 0.0, %v1188
  %v1190 = vpop.f32.mrb[0].mxu0
  %v1191 = vpop.f32.mrb[0].mxu0
  %v1192 = vadd.f32 0.0, %v1191
  %v1193 = vpop.f32.mrb[0].mxu0
  %1194 = vdwg.mxu0
  %v1195 = vpack.c.bf16 %v1184, %v1181
  %v1196 = vpack.c.bf16 %v1192, %v1189
  %v1198 = vsel %vm288, %v1195, 0
  %v1201 = vsel %vm288, %v1196, 0
  %1203 = vmatprep.subr.bf16.mxu0 0
  %1204 = vmatpush1.bf16.msra.mxu0 %v284
  %1205 = vmatprep.subr.bf16.mxu0 0
  %1206 = vmatpush1.bf16.msra.mxu0 %v285
  %1207 = vmatprep.subr.bf16.mxu0 0
  %1208 = vmatpush1.bf16.msra.mxu0 0
  %1209 = vmatprep.subr.bf16.mxu0 0
  %1210 = vmatpush1.bf16.msra.mxu0 0
  %1211 = vmatprep.subr.bf16.mxu0 0
  %1212 = vmatpush1.bf16.msra.mxu0 0
  %1213 = vmatprep.subr.bf16.mxu0 0
  %1214 = vmatpush1.bf16.msra.mxu0 0
  %1215 = vmatprep.subr.bf16.mxu0 0
  %1216 = vmatpush1.bf16.msra.mxu0 0
  %1217 = vmatprep.subr.bf16.mxu0 0
  %1218 = vmatpush1.bf16.msra.mxu0 0
  %1219 = vmatprep.subr.bf16.mxu0 0
  %1220 = vmatpush1.bf16.msra.mxu0 0
  %1221 = vmatprep.subr.bf16.mxu0 0
  %1222 = vmatpush1.bf16.msra.mxu0 0
  %1223 = vmatprep.subr.bf16.mxu0 0
  %1224 = vmatpush1.bf16.msra.mxu0 0
  %1225 = vmatprep.subr.bf16.mxu0 0
  %1226 = vmatpush1.bf16.msra.mxu0 0
  %1227 = vmatprep.subr.bf16.mxu0 0
  %1228 = vmatpush1.bf16.msra.mxu0 0
  %1229 = vmatprep.subr.bf16.mxu0 0
  %1230 = vmatpush1.bf16.msra.mxu0 0
  %1231 = vmatprep.subr.bf16.mxu0 0
  %1232 = vmatpush1.bf16.msra.mxu0 0
  %1233 = vmatprep.subr.bf16.mxu0 0
  %1234 = vmatpush1.bf16.msra.mxu0 0
  %1235 = vmatprep.mubr.bf16.mxu0 0
  %1236 = vmatmul.mubr.bf16.gmra.mrb[0].mxu0 %v1198
  %v1237 = vpop.f32.mrb[0].mxu0
  %v1238 = vadd.f32 0.0, %v1237
  %v1239 = vpop.f32.mrb[0].mxu0
  %v1240 = vpop.f32.mrb[0].mxu0
  %v1241 = vadd.f32 0.0, %v1240
  %v1242 = vpop.f32.mrb[0].mxu0
  %1243 = vmatprep.mubr.bf16.mxu0 0
  %1244 = vmatmul.mubr.bf16.gmra.mrb[0].mxu0 %v1201
  %v1245 = vpop.f32.mrb[0].mxu0
  %v1246 = vadd.f32 0.0, %v1245
  %v1247 = vpop.f32.mrb[0].mxu0
  %v1248 = vpop.f32.mrb[0].mxu0
  %v1249 = vadd.f32 0.0, %v1248
  %v1250 = vpop.f32.mrb[0].mxu0
  %1251 = vdwg.mxu0
  %v1252 = vmul.f32 %v1181, %v62
  %v1253 = vmul.f32 %v1184, %v63
  %v1254 = vmul.f32 %v1189, %v64
  %v1255 = vmul.f32 %v1192, %v65
  %v1256 = vmul.f32 %v1238, %v66
  %v1257 = vmul.f32 %v1241, %v67
  %v1258 = vmul.f32 %v1246, %v68
  %v1259 = vmul.f32 %v1249, %v69
  %v1260 = vadd.f32 %v1252, %v1256
  %v1261 = vadd.f32 %v1253, %v1257
  %v1262 = vadd.f32 %v1254, %v1258
  %v1263 = vadd.f32 %v1255, %v1259
  %v1264 = vpack.c.bf16 %v1261, %v1260
  %v1265 = vpack.c.bf16 %v1263, %v1262
  %s1266 = scalar_lea.vmem %s10, 64
  %v1267 = vld [vmem:[%s1266] sm:$0xf]
  %v1268 = vld [vmem:[%s1266 + $0x4] sm:$0xf]
  %v1269 = vld [vmem:[%s1266 + $0x8] sm:$0xf]
  %v1270 = vld [vmem:[%s1266 + $0xc] sm:$0xf]
  %v1271 = vld [vmem:[%s1266 + $0x10] sm:$0xf]
  %v1272 = vld [vmem:[%s1266 + $0x14] sm:$0xf]
  %v1273 = vld [vmem:[%s1266 + $0x18] sm:$0xf]
  %v1274 = vld [vmem:[%s1266 + $0x1c] sm:$0xf]
  %v1275 = vld [vmem:[%s1266 + $0x20] sm:$0xf]
  %v1276 = vld [vmem:[%s1266 + $0x24] sm:$0xf]
  %v1277 = vld [vmem:[%s1266 + $0x28] sm:$0xf]
  %v1278 = vld [vmem:[%s1266 + $0x2c] sm:$0xf]
  %v1279 = vld [vmem:[%s1266 + $0x30] sm:$0xf]
  %v1280 = vld [vmem:[%s1266 + $0x34] sm:$0xf]
  %v1281 = vld [vmem:[%s1266 + $0x38] sm:$0xf]
  %v1282 = vld [vmem:[%s1266 + $0x3c] sm:$0xf]
  %v1299 = vunpack.c.l.b16 %v1267
  %v1300 = vunpack.c.l.b16 %v1268
  %v1301 = vunpack.c.l.b16 %v1269
  %v1302 = vunpack.c.l.b16 %v1270
  %v1303 = vunpack.c.l.b16 %v1271
  %v1304 = vunpack.c.l.b16 %v1272
  %v1305 = vunpack.c.l.b16 %v1273
  %v1306 = vunpack.c.l.b16 %v1274
  %v1307 = vunpack.c.l.b16 %v1275
  %v1308 = vunpack.c.l.b16 %v1276
  %v1309 = vunpack.c.l.b16 %v1277
  %v1310 = vunpack.c.l.b16 %v1278
  %v1311 = vunpack.c.l.b16 %v1279
  %v1312 = vunpack.c.l.b16 %v1280
  %v1313 = vunpack.c.l.b16 %v1281
  %v1314 = vunpack.c.l.b16 %v1282
  %v1315 = vpack.c.b16 %v1300, %v1299
  %v1316 = vpack.c.b16 %v1302, %v1301
  %v1317 = vpack.c.b16 %v1304, %v1303
  %v1318 = vpack.c.b16 %v1306, %v1305
  %v1319 = vpack.c.b16 %v1308, %v1307
  %v1320 = vpack.c.b16 %v1310, %v1309
  %v1321 = vpack.c.b16 %v1312, %v1311
  %v1322 = vpack.c.b16 %v1314, %v1313
  %1331 = vmatprep.subr.bf16.mxu0 0
  %1332 = vmatpush1.bf16.msra.mxu0 %v1315
  %1333 = vmatprep.subr.bf16.mxu0 0
  %1334 = vmatpush1.bf16.msra.mxu0 %v1316
  %1335 = vmatprep.subr.bf16.mxu0 0
  %1336 = vmatpush1.bf16.msra.mxu0 %v1317
  %1337 = vmatprep.subr.bf16.mxu0 0
  %1338 = vmatpush1.bf16.msra.mxu0 %v1318
  %1339 = vmatprep.subr.bf16.mxu0 0
  %1340 = vmatpush1.bf16.msra.mxu0 %v1319
  %1341 = vmatprep.subr.bf16.mxu0 0
  %1342 = vmatpush1.bf16.msra.mxu0 %v1320
  %1343 = vmatprep.subr.bf16.mxu0 0
  %1344 = vmatpush1.bf16.msra.mxu0 %v1321
  %1345 = vmatprep.subr.bf16.mxu0 0
  %1346 = vmatpush1.bf16.msra.mxu0 %v1322
  %1347 = vmatprep.subr.bf16.mxu0 0
  %1348 = vmatpush1.bf16.msra.mxu0 0
  %1349 = vmatprep.subr.bf16.mxu0 0
  %1350 = vmatpush1.bf16.msra.mxu0 0
  %1351 = vmatprep.subr.bf16.mxu0 0
  %1352 = vmatpush1.bf16.msra.mxu0 0
  %1353 = vmatprep.subr.bf16.mxu0 0
  %1354 = vmatpush1.bf16.msra.mxu0 0
  %1355 = vmatprep.subr.bf16.mxu0 0
  %1356 = vmatpush1.bf16.msra.mxu0 0
  %1357 = vmatprep.subr.bf16.mxu0 0
  %1358 = vmatpush1.bf16.msra.mxu0 0
  %1359 = vmatprep.subr.bf16.mxu0 0
  %1360 = vmatpush1.bf16.msra.mxu0 0
  %1361 = vmatprep.subr.bf16.mxu0 0
  %1362 = vmatpush1.bf16.msra.mxu0 0
  %1363 = vmatprep.mubr.bf16.mxu0 0
  %1364 = vmatmul.mubr.bf16.gmra.mrb[0].mxu0 %v159
  %v1365 = vpop.f32.mrb[0].mxu0
  %v1366 = vadd.f32 0.0, %v1365
  %v1367 = vpop.f32.mrb[0].mxu0
  %v1368 = vpop.f32.mrb[0].mxu0
  %v1369 = vadd.f32 0.0, %v1368
  %v1370 = vpop.f32.mrb[0].mxu0
  %1371 = vmatprep.mubr.bf16.mxu0 0
  %1372 = vmatmul.mubr.bf16.gmra.mrb[0].mxu0 %v160
  %v1373 = vpop.f32.mrb[0].mxu0
  %v1374 = vadd.f32 0.0, %v1373
  %v1375 = vpop.f32.mrb[0].mxu0
  %v1376 = vpop.f32.mrb[0].mxu0
  %v1377 = vadd.f32 0.0, %v1376
  %v1378 = vpop.f32.mrb[0].mxu0
  %1379 = vdwg.mxu0
  %v1380 = vpack.c.bf16 %v1369, %v1366
  %v1381 = vpack.c.bf16 %v1377, %v1374
  %v1383 = vsel %vm288, %v1079, 0
  %v1386 = vsel %vm288, %v1080, 0
  %v1389 = vsel %vm288, %v1264, 0
  %v1392 = vsel %vm288, %v1265, 0
  %1394 = vmatprep.subr.bf16.mxu0 0
  %1395 = vmatpush1.bf16.xpose.msra.mxu0 %v1389
  %1396 = vmatprep.subr.bf16.mxu0 0
  %1397 = vmatpush1.bf16.xpose.msra.mxu0 %v1392
  %1398 = vmatprep.subr.bf16.mxu0 0
  %1399 = vmatpush1.bf16.xpose.msra.mxu0 0
  %1400 = vmatprep.subr.bf16.mxu0 0
  %1401 = vmatpush1.bf16.xpose.msra.mxu0 0
  %1402 = vmatprep.subr.bf16.mxu0 0
  %1403 = vmatpush1.bf16.xpose.msra.mxu0 0
  %1404 = vmatprep.subr.bf16.mxu0 0
  %1405 = vmatpush1.bf16.xpose.msra.mxu0 0
  %1406 = vmatprep.subr.bf16.mxu0 0
  %1407 = vmatpush1.bf16.xpose.msra.mxu0 0
  %1408 = vmatprep.subr.bf16.mxu0 0
  %1409 = vmatpush1.bf16.xpose.msra.mxu0 0
  %1410 = vmatprep.subr.bf16.mxu0 0
  %1411 = vmatpush1.bf16.xpose.msra.mxu0 0
  %1412 = vmatprep.subr.bf16.mxu0 0
  %1413 = vmatpush1.bf16.xpose.msra.mxu0 0
  %1414 = vmatprep.subr.bf16.mxu0 0
  %1415 = vmatpush1.bf16.xpose.msra.mxu0 0
  %1416 = vmatprep.subr.bf16.mxu0 0
  %1417 = vmatpush1.bf16.xpose.msra.mxu0 0
  %1418 = vmatprep.subr.bf16.mxu0 0
  %1419 = vmatpush1.bf16.xpose.msra.mxu0 0
  %1420 = vmatprep.subr.bf16.mxu0 0
  %1421 = vmatpush1.bf16.xpose.msra.mxu0 0
  %1422 = vmatprep.subr.bf16.mxu0 0
  %1423 = vmatpush1.bf16.xpose.msra.mxu0 0
  %1424 = vmatprep.subr.bf16.mxu0 0
  %1425 = vmatpush1.bf16.xpose.msra.mxu0 0
  %1426 = vmatprep.mubr.bf16.mxu0 0
  %1427 = vmatmul.mubr.bf16.gmra.mrb[0].mxu0 %v1383
  %v1428 = vpop.f32.mrb[0].mxu0
  %v1429 = vadd.f32 %v115, %v1428
  %v1430 = vpop.f32.mrb[0].mxu0
  %v1431 = vpop.f32.mrb[0].mxu0
  %v1432 = vadd.f32 %v116, %v1431
  %v1433 = vpop.f32.mrb[0].mxu0
  %1434 = vmatprep.mubr.bf16.mxu0 0
  %1435 = vmatmul.mubr.bf16.gmra.mrb[0].mxu0 %v1386
  %v1436 = vpop.f32.mrb[0].mxu0
  %v1437 = vadd.f32 %v117, %v1436
  %v1438 = vpop.f32.mrb[0].mxu0
  %v1439 = vpop.f32.mrb[0].mxu0
  %v1440 = vadd.f32 %v118, %v1439
  %v1441 = vpop.f32.mrb[0].mxu0
  %1442 = vdwg.mxu0
  %v1443 = vsel %vm288, %v1429, -inf
  %1444 = vmax.xlane.f32.xlu0 %v1443
  %v1445 = vpop.xlane.xlu0 %1444
  %v1446 = vsel %vm288, %v1432, -inf
  %1447 = vmax.xlane.f32.xlu0 %v1446
  %v1448 = vpop.xlane.xlu0 %1447
  %v1449 = vsel %vm288, %v1437, -inf
  %1450 = vmax.xlane.f32.xlu0 %v1449
  %v1451 = vpop.xlane.xlu0 %1450
  %v1452 = vsel %vm288, %v1440, -inf
  %1453 = vmax.xlane.f32.xlu0 %v1452
  %v1454 = vpop.xlane.xlu0 %1453
  %v1455 = vsub.f32 %v1429, %v1445
  %v1456 = vsub.f32 %v1432, %v1448
  %v1457 = vsub.f32 %v1437, %v1451
  %v1458 = vsub.f32 %v1440, %v1454
  %v1459 = vmul.f32 %v1455, 1.442695
  %v1460 = vpow.pop %v1459
  %v1461 = vmul.f32 %v1456, 1.442695
  %v1462 = vpow.pop %v1461
  %v1463 = vmul.f32 %v1457, 1.442695
  %v1464 = vpow.pop %v1463
  %v1465 = vmul.f32 %v1458, 1.442695
  %v1466 = vpow.pop %v1465
  %v1467 = vsel %vm288, %v1460, 0.0
  %1468 = vadd.xlane.f32.xlu0 %v1467
  %v1469 = vpop.xlane.xlu0 %1468
  %v1470 = vsel %vm288, %v1462, 0.0
  %1471 = vadd.xlane.f32.xlu0 %v1470
  %v1472 = vpop.xlane.xlu0 %1471
  %v1473 = vsel %vm288, %v1464, 0.0
  %1474 = vadd.xlane.f32.xlu0 %v1473
  %v1475 = vpop.xlane.xlu0 %1474
  %v1476 = vsel %vm288, %v1466, 0.0
  %1477 = vadd.xlane.f32.xlu0 %v1476
  %v1478 = vpop.xlane.xlu0 %1477
  %v1479 = vpack.c.bf16 %v1462, %v1460
  %v1480 = vpack.c.bf16 %v1466, %v1464
  %v1482 = vsel %vm288, %v1479, 0
  %v1485 = vsel %vm288, %v1480, 0
  %1487 = vmatprep.subr.bf16.mxu0 0
  %1488 = vmatpush1.bf16.msra.mxu0 %v1380
  %1489 = vmatprep.subr.bf16.mxu0 0
  %1490 = vmatpush1.bf16.msra.mxu0 %v1381
  %1491 = vmatprep.subr.bf16.mxu0 0
  %1492 = vmatpush1.bf16.msra.mxu0 0
  %1493 = vmatprep.subr.bf16.mxu0 0
  %1494 = vmatpush1.bf16.msra.mxu0 0
  %1495 = vmatprep.subr.bf16.mxu0 0
  %1496 = vmatpush1.bf16.msra.mxu0 0
  %1497 = vmatprep.subr.bf16.mxu0 0
  %1498 = vmatpush1.bf16.msra.mxu0 0
  %1499 = vmatprep.subr.bf16.mxu0 0
  %1500 = vmatpush1.bf16.msra.mxu0 0
  %1501 = vmatprep.subr.bf16.mxu0 0
  %1502 = vmatpush1.bf16.msra.mxu0 0
  %1503 = vmatprep.subr.bf16.mxu0 0
  %1504 = vmatpush1.bf16.msra.mxu0 0
  %1505 = vmatprep.subr.bf16.mxu0 0
  %1506 = vmatpush1.bf16.msra.mxu0 0
  %1507 = vmatprep.subr.bf16.mxu0 0
  %1508 = vmatpush1.bf16.msra.mxu0 0
  %1509 = vmatprep.subr.bf16.mxu0 0
  %1510 = vmatpush1.bf16.msra.mxu0 0
  %1511 = vmatprep.subr.bf16.mxu0 0
  %1512 = vmatpush1.bf16.msra.mxu0 0
  %1513 = vmatprep.subr.bf16.mxu0 0
  %1514 = vmatpush1.bf16.msra.mxu0 0
  %1515 = vmatprep.subr.bf16.mxu0 0
  %1516 = vmatpush1.bf16.msra.mxu0 0
  %1517 = vmatprep.subr.bf16.mxu0 0
  %1518 = vmatpush1.bf16.msra.mxu0 0
  %1519 = vmatprep.mubr.bf16.mxu0 0
  %1520 = vmatmul.mubr.bf16.gmra.mrb[0].mxu0 %v1482
  %v1521 = vpop.f32.mrb[0].mxu0
  %v1522 = vadd.f32 0.0, %v1521
  %v1523 = vpop.f32.mrb[0].mxu0
  %v1524 = vpop.f32.mrb[0].mxu0
  %v1525 = vadd.f32 0.0, %v1524
  %v1526 = vpop.f32.mrb[0].mxu0
  %1527 = vmatprep.mubr.bf16.mxu0 0
  %1528 = vmatmul.mubr.bf16.gmra.mrb[0].mxu0 %v1485
  %v1529 = vpop.f32.mrb[0].mxu0
  %v1530 = vadd.f32 0.0, %v1529
  %v1531 = vpop.f32.mrb[0].mxu0
  %v1532 = vpop.f32.mrb[0].mxu0
  %v1533 = vadd.f32 0.0, %v1532
  %v1534 = vpop.f32.mrb[0].mxu0
  %1535 = vdwg.mxu0
  %v1536 = vrcp.pop %v1469
  %v1537 = vrcp.pop %v1472
  %v1538 = vrcp.pop %v1475
  %v1539 = vrcp.pop %v1478
  %v1540 = vmul.f32 %v1522, %v1536
  %v1541 = vmul.f32 %v1525, %v1537
  %v1542 = vmul.f32 %v1530, %v1538
  %v1543 = vmul.f32 %v1533, %v1539
  %v1544 = vpack.c.bf16 %v1541, %v1540
  %v1545 = vpack.c.bf16 %v1543, %v1542
  %s1546 = scalar_lea.vmem %s11, 16
  %v1547 = vld [vmem:[%s1546] sm:$0xf]
  %v1548 = vld [vmem:[%s1546 + $0x4] sm:$0xf]
  %v1549 = vld [vmem:[%s1546 + $0x8] sm:$0xf]
  %v1550 = vld [vmem:[%s1546 + $0xc] sm:$0xf]
  %v1555 = vunpack.c.l.b16 %v1547
  %v1556 = vunpack.c.l.b16 %v1548
  %v1557 = vunpack.c.l.b16 %v1549
  %v1558 = vunpack.c.l.b16 %v1550
  %v1559 = vpack.c.b16 %v1556, %v1555
  %v1560 = vpack.c.b16 %v1558, %v1557
  %v1564 = vsel %vm288, %v1544, 0
  %v1567 = vsel %vm288, %v1545, 0
  %1569 = vmatprep.subr.bf16.mxu0 0
  %1570 = vmatpush1.bf16.msra.mxu0 %v1559
  %1571 = vmatprep.subr.bf16.mxu0 0
  %1572 = vmatpush1.bf16.msra.mxu0 %v1560
  %1573 = vmatprep.subr.bf16.mxu0 0
  %1574 = vmatpush1.bf16.msra.mxu0 0
  %1575 = vmatprep.subr.bf16.mxu0 0
  %1576 = vmatpush1.bf16.msra.mxu0 0
  %1577 = vmatprep.subr.bf16.mxu0 0
  %1578 = vmatpush1.bf16.msra.mxu0 0
  %1579 = vmatprep.subr.bf16.mxu0 0
  %1580 = vmatpush1.bf16.msra.mxu0 0
  %1581 = vmatprep.subr.bf16.mxu0 0
  %1582 = vmatpush1.bf16.msra.mxu0 0
  %1583 = vmatprep.subr.bf16.mxu0 0
  %1584 = vmatpush1.bf16.msra.mxu0 0
  %1585 = vmatprep.subr.bf16.mxu0 0
  %1586 = vmatpush1.bf16.msra.mxu0 0
  %1587 = vmatprep.subr.bf16.mxu0 0
  %1588 = vmatpush1.bf16.msra.mxu0 0
  %1589 = vmatprep.subr.bf16.mxu0 0
  %1590 = vmatpush1.bf16.msra.mxu0 0
  %1591 = vmatprep.subr.bf16.mxu0 0
  %1592 = vmatpush1.bf16.msra.mxu0 0
  %1593 = vmatprep.subr.bf16.mxu0 0
  %1594 = vmatpush1.bf16.msra.mxu0 0
  %1595 = vmatprep.subr.bf16.mxu0 0
  %1596 = vmatpush1.bf16.msra.mxu0 0
  %1597 = vmatprep.subr.bf16.mxu0 0
  %1598 = vmatpush1.bf16.msra.mxu0 0
  %1599 = vmatprep.subr.bf16.mxu0 0
  %1600 = vmatpush1.bf16.msra.mxu0 0
  %1601 = vmatprep.mubr.bf16.mxu0 0
  %1602 = vmatmul.mubr.bf16.gmra.mrb[0].mxu0 %v1564
  %v1603 = vpop.f32.mrb[0].mxu0
  %v1604 = vadd.f32 0.0, %v1603
  %v1605 = vpop.f32.mrb[0].mxu0
  %v1606 = vpop.f32.mrb[0].mxu0
  %v1607 = vadd.f32 0.0, %v1606
  %v1608 = vpop.f32.mrb[0].mxu0
  %1609 = vmatprep.mubr.bf16.mxu0 0
  %1610 = vmatmul.mubr.bf16.gmra.mrb[0].mxu0 %v1567
  %v1611 = vpop.f32.mrb[0].mxu0
  %v1612 = vadd.f32 0.0, %v1611
  %v1613 = vpop.f32.mrb[0].mxu0
  %v1614 = vpop.f32.mrb[0].mxu0
  %v1615 = vadd.f32 0.0, %v1614
  %v1616 = vpop.f32.mrb[0].mxu0
  %1617 = vdwg.mxu0
  %v1618 = vadd.f32 %v892, %v1604
  %v1619 = vadd.f32 %v893, %v1607
  %v1620 = vadd.f32 %v894, %v1612
  %v1621 = vadd.f32 %v895, %v1615
  %s1622 = scalar_lea.vmem %s8, 128
  %v1623 = vld [vmem:[%s1622] sm:$0xf]
  %v1624 = vld [vmem:[%s1622 + $0x4] sm:$0xf]
  %v1625 = vld [vmem:[%s1622 + $0x8] sm:$0xf]
  %v1626 = vld [vmem:[%s1622 + $0xc] sm:$0xf]
  %v1627 = vld [vmem:[%s1622 + $0x10] sm:$0xf]
  %v1628 = vld [vmem:[%s1622 + $0x14] sm:$0xf]
  %v1629 = vld [vmem:[%s1622 + $0x18] sm:$0xf]
  %v1630 = vld [vmem:[%s1622 + $0x1c] sm:$0xf]
  %v1631 = vld [vmem:[%s1622 + $0x20] sm:$0xf]
  %v1632 = vld [vmem:[%s1622 + $0x24] sm:$0xf]
  %v1633 = vld [vmem:[%s1622 + $0x28] sm:$0xf]
  %v1634 = vld [vmem:[%s1622 + $0x2c] sm:$0xf]
  %v1635 = vld [vmem:[%s1622 + $0x30] sm:$0xf]
  %v1636 = vld [vmem:[%s1622 + $0x34] sm:$0xf]
  %v1637 = vld [vmem:[%s1622 + $0x38] sm:$0xf]
  %v1638 = vld [vmem:[%s1622 + $0x3c] sm:$0xf]
  %v1655 = vunpack.c.l.b16 %v1623
  %v1656 = vunpack.c.l.b16 %v1624
  %v1657 = vunpack.c.l.b16 %v1625
  %v1658 = vunpack.c.l.b16 %v1626
  %v1659 = vunpack.c.l.b16 %v1627
  %v1660 = vunpack.c.l.b16 %v1628
  %v1661 = vunpack.c.l.b16 %v1629
  %v1662 = vunpack.c.l.b16 %v1630
  %v1663 = vunpack.c.l.b16 %v1631
  %v1664 = vunpack.c.l.b16 %v1632
  %v1665 = vunpack.c.l.b16 %v1633
  %v1666 = vunpack.c.l.b16 %v1634
  %v1667 = vunpack.c.l.b16 %v1635
  %v1668 = vunpack.c.l.b16 %v1636
  %v1669 = vunpack.c.l.b16 %v1637
  %v1670 = vunpack.c.l.b16 %v1638
  %v1671 = vpack.c.b16 %v1656, %v1655
  %v1672 = vpack.c.b16 %v1658, %v1657
  %v1673 = vpack.c.b16 %v1660, %v1659
  %v1674 = vpack.c.b16 %v1662, %v1661
  %v1675 = vpack.c.b16 %v1664, %v1663
  %v1676 = vpack.c.b16 %v1666, %v1665
  %v1677 = vpack.c.b16 %v1668, %v1667
  %v1678 = vpack.c.b16 %v1670, %v1669
  %1687 = vmatprep.subr.bf16.mxu0 0
  %1688 = vmatpush1.bf16.msra.mxu0 %v1671
  %1689 = vmatprep.subr.bf16.mxu0 0
  %1690 = vmatpush1.bf16.msra.mxu0 %v1672
  %1691 = vmatprep.subr.bf16.mxu0 0
  %1692 = vmatpush1.bf16.msra.mxu0 %v1673
  %1693 = vmatprep.subr.bf16.mxu0 0
  %1694 = vmatpush1.bf16.msra.mxu0 %v1674
  %1695 = vmatprep.subr.bf16.mxu0 0
  %1696 = vmatpush1.bf16.msra.mxu0 %v1675
  %1697 = vmatprep.subr.bf16.mxu0 0
  %1698 = vmatpush1.bf16.msra.mxu0 %v1676
  %1699 = vmatprep.subr.bf16.mxu0 0
  %1700 = vmatpush1.bf16.msra.mxu0 %v1677
  %1701 = vmatprep.subr.bf16.mxu0 0
  %1702 = vmatpush1.bf16.msra.mxu0 %v1678
  %1703 = vmatprep.subr.bf16.mxu0 0
  %1704 = vmatpush1.bf16.msra.mxu0 0
  %1705 = vmatprep.subr.bf16.mxu0 0
  %1706 = vmatpush1.bf16.msra.mxu0 0
  %1707 = vmatprep.subr.bf16.mxu0 0
  %1708 = vmatpush1.bf16.msra.mxu0 0
  %1709 = vmatprep.subr.bf16.mxu0 0
  %1710 = vmatpush1.bf16.msra.mxu0 0
  %1711 = vmatprep.subr.bf16.mxu0 0
  %1712 = vmatpush1.bf16.msra.mxu0 0
  %1713 = vmatprep.subr.bf16.mxu0 0
  %1714 = vmatpush1.bf16.msra.mxu0 0
  %1715 = vmatprep.subr.bf16.mxu0 0
  %1716 = vmatpush1.bf16.msra.mxu0 0
  %1717 = vmatprep.subr.bf16.mxu0 0
  %1718 = vmatpush1.bf16.msra.mxu0 0
  %1719 = vmatprep.mubr.bf16.mxu0 0
  %1720 = vmatmul.mubr.bf16.gmra.mrb[0].mxu0 %v159
  %v1721 = vpop.f32.mrb[0].mxu0
  %v1722 = vadd.f32 0.0, %v1721
  %v1723 = vpop.f32.mrb[0].mxu0
  %v1724 = vpop.f32.mrb[0].mxu0
  %v1725 = vadd.f32 0.0, %v1724
  %v1726 = vpop.f32.mrb[0].mxu0
  %1727 = vmatprep.mubr.bf16.mxu0 0
  %1728 = vmatmul.mubr.bf16.gmra.mrb[0].mxu0 %v160
  %v1729 = vpop.f32.mrb[0].mxu0
  %v1730 = vadd.f32 0.0, %v1729
  %v1731 = vpop.f32.mrb[0].mxu0
  %v1732 = vpop.f32.mrb[0].mxu0
  %v1733 = vadd.f32 0.0, %v1732
  %v1734 = vpop.f32.mrb[0].mxu0
  %1735 = vdwg.mxu0
  %v1736 = vpack.c.bf16 %v1725, %v1722
  %v1737 = vpack.c.bf16 %v1733, %v1730
  %v1739 = vsel %vm288, %v1736, 0
  %v1742 = vsel %vm288, %v1737, 0
  %1744 = vmatprep.subr.bf16.mxu0 0
  %1745 = vmatpush1.bf16.msra.mxu0 %v284
  %1746 = vmatprep.subr.bf16.mxu0 0
  %1747 = vmatpush1.bf16.msra.mxu0 %v285
  %1748 = vmatprep.subr.bf16.mxu0 0
  %1749 = vmatpush1.bf16.msra.mxu0 0
  %1750 = vmatprep.subr.bf16.mxu0 0
  %1751 = vmatpush1.bf16.msra.mxu0 0
  %1752 = vmatprep.subr.bf16.mxu0 0
  %1753 = vmatpush1.bf16.msra.mxu0 0
  %1754 = vmatprep.subr.bf16.mxu0 0
  %1755 = vmatpush1.bf16.msra.mxu0 0
  %1756 = vmatprep.subr.bf16.mxu0 0
  %1757 = vmatpush1.bf16.msra.mxu0 0
  %1758 = vmatprep.subr.bf16.mxu0 0
  %1759 = vmatpush1.bf16.msra.mxu0 0
  %1760 = vmatprep.subr.bf16.mxu0 0
  %1761 = vmatpush1.bf16.msra.mxu0 0
  %1762 = vmatprep.subr.bf16.mxu0 0
  %1763 = vmatpush1.bf16.msra.mxu0 0
  %1764 = vmatprep.subr.bf16.mxu0 0
  %1765 = vmatpush1.bf16.msra.mxu0 0
  %1766 = vmatprep.subr.bf16.mxu0 0
  %1767 = vmatpush1.bf16.msra.mxu0 0
  %1768 = vmatprep.subr.bf16.mxu0 0
  %1769 = vmatpush1.bf16.msra.mxu0 0
  %1770 = vmatprep.subr.bf16.mxu0 0
  %1771 = vmatpush1.bf16.msra.mxu0 0
  %1772 = vmatprep.subr.bf16.mxu0 0
  %1773 = vmatpush1.bf16.msra.mxu0 0
  %1774 = vmatprep.subr.bf16.mxu0 0
  %1775 = vmatpush1.bf16.msra.mxu0 0
  %1776 = vmatprep.mubr.bf16.mxu0 0
  %1777 = vmatmul.mubr.bf16.gmra.mrb[0].mxu0 %v1739
  %v1778 = vpop.f32.mrb[0].mxu0
  %v1779 = vadd.f32 0.0, %v1778
  %v1780 = vpop.f32.mrb[0].mxu0
  %v1781 = vpop.f32.mrb[0].mxu0
  %v1782 = vadd.f32 0.0, %v1781
  %v1783 = vpop.f32.mrb[0].mxu0
  %1784 = vmatprep.mubr.bf16.mxu0 0
  %1785 = vmatmul.mubr.bf16.gmra.mrb[0].mxu0 %v1742
  %v1786 = vpop.f32.mrb[0].mxu0
  %v1787 = vadd.f32 0.0, %v1786
  %v1788 = vpop.f32.mrb[0].mxu0
  %v1789 = vpop.f32.mrb[0].mxu0
  %v1790 = vadd.f32 0.0, %v1789
  %v1791 = vpop.f32.mrb[0].mxu0
  %1792 = vdwg.mxu0
  %v1793 = vmul.f32 %v1722, %v62
  %v1794 = vmul.f32 %v1725, %v63
  %v1795 = vmul.f32 %v1730, %v64
  %v1796 = vmul.f32 %v1733, %v65
  %v1797 = vmul.f32 %v1779, %v66
  %v1798 = vmul.f32 %v1782, %v67
  %v1799 = vmul.f32 %v1787, %v68
  %v1800 = vmul.f32 %v1790, %v69
  %v1801 = vadd.f32 %v1793, %v1797
  %v1802 = vadd.f32 %v1794, %v1798
  %v1803 = vadd.f32 %v1795, %v1799
  %v1804 = vadd.f32 %v1796, %v1800
  %v1805 = vpack.c.bf16 %v1802, %v1801
  %v1806 = vpack.c.bf16 %v1804, %v1803
  %s1807 = scalar_lea.vmem %s9, 128
  %v1808 = vld [vmem:[%s1807] sm:$0xf]
  %v1809 = vld [vmem:[%s1807 + $0x4] sm:$0xf]
  %v1810 = vld [vmem:[%s1807 + $0x8] sm:$0xf]
  %v1811 = vld [vmem:[%s1807 + $0xc] sm:$0xf]
  %v1812 = vld [vmem:[%s1807 + $0x10] sm:$0xf]
  %v1813 = vld [vmem:[%s1807 + $0x14] sm:$0xf]
  %v1814 = vld [vmem:[%s1807 + $0x18] sm:$0xf]
  %v1815 = vld [vmem:[%s1807 + $0x1c] sm:$0xf]
  %v1816 = vld [vmem:[%s1807 + $0x20] sm:$0xf]
  %v1817 = vld [vmem:[%s1807 + $0x24] sm:$0xf]
  %v1818 = vld [vmem:[%s1807 + $0x28] sm:$0xf]
  %v1819 = vld [vmem:[%s1807 + $0x2c] sm:$0xf]
  %v1820 = vld [vmem:[%s1807 + $0x30] sm:$0xf]
  %v1821 = vld [vmem:[%s1807 + $0x34] sm:$0xf]
  %v1822 = vld [vmem:[%s1807 + $0x38] sm:$0xf]
  %v1823 = vld [vmem:[%s1807 + $0x3c] sm:$0xf]
  %v1840 = vunpack.c.l.b16 %v1808
  %v1841 = vunpack.c.l.b16 %v1809
  %v1842 = vunpack.c.l.b16 %v1810
  %v1843 = vunpack.c.l.b16 %v1811
  %v1844 = vunpack.c.l.b16 %v1812
  %v1845 = vunpack.c.l.b16 %v1813
  %v1846 = vunpack.c.l.b16 %v1814
  %v1847 = vunpack.c.l.b16 %v1815
  %v1848 = vunpack.c.l.b16 %v1816
  %v1849 = vunpack.c.l.b16 %v1817
  %v1850 = vunpack.c.l.b16 %v1818
  %v1851 = vunpack.c.l.b16 %v1819
  %v1852 = vunpack.c.l.b16 %v1820
  %v1853 = vunpack.c.l.b16 %v1821
  %v1854 = vunpack.c.l.b16 %v1822
  %v1855 = vunpack.c.l.b16 %v1823
  %v1856 = vpack.c.b16 %v1841, %v1840
  %v1857 = vpack.c.b16 %v1843, %v1842
  %v1858 = vpack.c.b16 %v1845, %v1844
  %v1859 = vpack.c.b16 %v1847, %v1846
  %v1860 = vpack.c.b16 %v1849, %v1848
  %v1861 = vpack.c.b16 %v1851, %v1850
  %v1862 = vpack.c.b16 %v1853, %v1852
  %v1863 = vpack.c.b16 %v1855, %v1854
  %1872 = vmatprep.subr.bf16.mxu0 0
  %1873 = vmatpush1.bf16.msra.mxu0 %v1856
  %1874 = vmatprep.subr.bf16.mxu0 0
  %1875 = vmatpush1.bf16.msra.mxu0 %v1857
  %1876 = vmatprep.subr.bf16.mxu0 0
  %1877 = vmatpush1.bf16.msra.mxu0 %v1858
  %1878 = vmatprep.subr.bf16.mxu0 0
  %1879 = vmatpush1.bf16.msra.mxu0 %v1859
  %1880 = vmatprep.subr.bf16.mxu0 0
  %1881 = vmatpush1.bf16.msra.mxu0 %v1860
  %1882 = vmatprep.subr.bf16.mxu0 0
  %1883 = vmatpush1.bf16.msra.mxu0 %v1861
  %1884 = vmatprep.subr.bf16.mxu0 0
  %1885 = vmatpush1.bf16.msra.mxu0 %v1862
  %1886 = vmatprep.subr.bf16.mxu0 0
  %1887 = vmatpush1.bf16.msra.mxu0 %v1863
  %1888 = vmatprep.subr.bf16.mxu0 0
  %1889 = vmatpush1.bf16.msra.mxu0 0
  %1890 = vmatprep.subr.bf16.mxu0 0
  %1891 = vmatpush1.bf16.msra.mxu0 0
  %1892 = vmatprep.subr.bf16.mxu0 0
  %1893 = vmatpush1.bf16.msra.mxu0 0
  %1894 = vmatprep.subr.bf16.mxu0 0
  %1895 = vmatpush1.bf16.msra.mxu0 0
  %1896 = vmatprep.subr.bf16.mxu0 0
  %1897 = vmatpush1.bf16.msra.mxu0 0
  %1898 = vmatprep.subr.bf16.mxu0 0
  %1899 = vmatpush1.bf16.msra.mxu0 0
  %1900 = vmatprep.subr.bf16.mxu0 0
  %1901 = vmatpush1.bf16.msra.mxu0 0
  %1902 = vmatprep.subr.bf16.mxu0 0
  %1903 = vmatpush1.bf16.msra.mxu0 0
  %1904 = vmatprep.mubr.bf16.mxu0 0
  %1905 = vmatmul.mubr.bf16.gmra.mrb[0].mxu0 %v159
  %v1906 = vpop.f32.mrb[0].mxu0
  %v1907 = vadd.f32 0.0, %v1906
  %v1908 = vpop.f32.mrb[0].mxu0
  %v1909 = vpop.f32.mrb[0].mxu0
  %v1910 = vadd.f32 0.0, %v1909
  %v1911 = vpop.f32.mrb[0].mxu0
  %1912 = vmatprep.mubr.bf16.mxu0 0
  %1913 = vmatmul.mubr.bf16.gmra.mrb[0].mxu0 %v160
  %v1914 = vpop.f32.mrb[0].mxu0
  %v1915 = vadd.f32 0.0, %v1914
  %v1916 = vpop.f32.mrb[0].mxu0
  %v1917 = vpop.f32.mrb[0].mxu0
  %v1918 = vadd.f32 0.0, %v1917
  %v1919 = vpop.f32.mrb[0].mxu0
  %1920 = vdwg.mxu0
  %v1921 = vpack.c.bf16 %v1910, %v1907
  %v1922 = vpack.c.bf16 %v1918, %v1915
  %v1924 = vsel %vm288, %v1921, 0
  %v1927 = vsel %vm288, %v1922, 0
  %1929 = vmatprep.subr.bf16.mxu0 0
  %1930 = vmatpush1.bf16.msra.mxu0 %v284
  %1931 = vmatprep.subr.bf16.mxu0 0
  %1932 = vmatpush1.bf16.msra.mxu0 %v285
  %1933 = vmatprep.subr.bf16.mxu0 0
  %1934 = vmatpush1.bf16.msra.mxu0 0
  %1935 = vmatprep.subr.bf16.mxu0 0
  %1936 = vmatpush1.bf16.msra.mxu0 0
  %1937 = vmatprep.subr.bf16.mxu0 0
  %1938 = vmatpush1.bf16.msra.mxu0 0
  %1939 = vmatprep.subr.bf16.mxu0 0
  %1940 = vmatpush1.bf16.msra.mxu0 0
  %1941 = vmatprep.subr.bf16.mxu0 0
  %1942 = vmatpush1.bf16.msra.mxu0 0
  %1943 = vmatprep.subr.bf16.mxu0 0
  %1944 = vmatpush1.bf16.msra.mxu0 0
  %1945 = vmatprep.subr.bf16.mxu0 0
  %1946 = vmatpush1.bf16.msra.mxu0 0
  %1947 = vmatprep.subr.bf16.mxu0 0
  %1948 = vmatpush1.bf16.msra.mxu0 0
  %1949 = vmatprep.subr.bf16.mxu0 0
  %1950 = vmatpush1.bf16.msra.mxu0 0
  %1951 = vmatprep.subr.bf16.mxu0 0
  %1952 = vmatpush1.bf16.msra.mxu0 0
  %1953 = vmatprep.subr.bf16.mxu0 0
  %1954 = vmatpush1.bf16.msra.mxu0 0
  %1955 = vmatprep.subr.bf16.mxu0 0
  %1956 = vmatpush1.bf16.msra.mxu0 0
  %1957 = vmatprep.subr.bf16.mxu0 0
  %1958 = vmatpush1.bf16.msra.mxu0 0
  %1959 = vmatprep.subr.bf16.mxu0 0
  %1960 = vmatpush1.bf16.msra.mxu0 0
  %1961 = vmatprep.mubr.bf16.mxu0 0
  %1962 = vmatmul.mubr.bf16.gmra.mrb[0].mxu0 %v1924
  %v1963 = vpop.f32.mrb[0].mxu0
  %v1964 = vadd.f32 0.0, %v1963
  %v1965 = vpop.f32.mrb[0].mxu0
  %v1966 = vpop.f32.mrb[0].mxu0
  %v1967 = vadd.f32 0.0, %v1966
  %v1968 = vpop.f32.mrb[0].mxu0
  %1969 = vmatprep.mubr.bf16.mxu0 0
  %1970 = vmatmul.mubr.bf16.gmra.mrb[0].mxu0 %v1927
  %v1971 = vpop.f32.mrb[0].mxu0
  %v1972 = vadd.f32 0.0, %v1971
  %v1973 = vpop.f32.mrb[0].mxu0
  %v1974 = vpop.f32.mrb[0].mxu0
  %v1975 = vadd.f32 0.0, %v1974
  %v1976 = vpop.f32.mrb[0].mxu0
  %1977 = vdwg.mxu0
  %v1978 = vmul.f32 %v1907, %v62
  %v1979 = vmul.f32 %v1910, %v63
  %v1980 = vmul.f32 %v1915, %v64
  %v1981 = vmul.f32 %v1918, %v65
  %v1982 = vmul.f32 %v1964, %v66
  %v1983 = vmul.f32 %v1967, %v67
  %v1984 = vmul.f32 %v1972, %v68
  %v1985 = vmul.f32 %v1975, %v69
  %v1986 = vadd.f32 %v1978, %v1982
  %v1987 = vadd.f32 %v1979, %v1983
  %v1988 = vadd.f32 %v1980, %v1984
  %v1989 = vadd.f32 %v1981, %v1985
  %v1990 = vpack.c.bf16 %v1987, %v1986
  %v1991 = vpack.c.bf16 %v1989, %v1988
  %s1992 = scalar_lea.vmem %s10, 128
  %v1993 = vld [vmem:[%s1992] sm:$0xf]
  %v1994 = vld [vmem:[%s1992 + $0x4] sm:$0xf]
  %v1995 = vld [vmem:[%s1992 + $0x8] sm:$0xf]
  %v1996 = vld [vmem:[%s1992 + $0xc] sm:$0xf]
  %v1997 = vld [vmem:[%s1992 + $0x10] sm:$0xf]
  %v1998 = vld [vmem:[%s1992 + $0x14] sm:$0xf]
  %v1999 = vld [vmem:[%s1992 + $0x18] sm:$0xf]
  %v2000 = vld [vmem:[%s1992 + $0x1c] sm:$0xf]
  %v2001 = vld [vmem:[%s1992 + $0x20] sm:$0xf]
  %v2002 = vld [vmem:[%s1992 + $0x24] sm:$0xf]
  %v2003 = vld [vmem:[%s1992 + $0x28] sm:$0xf]
  %v2004 = vld [vmem:[%s1992 + $0x2c] sm:$0xf]
  %v2005 = vld [vmem:[%s1992 + $0x30] sm:$0xf]
  %v2006 = vld [vmem:[%s1992 + $0x34] sm:$0xf]
  %v2007 = vld [vmem:[%s1992 + $0x38] sm:$0xf]
  %v2008 = vld [vmem:[%s1992 + $0x3c] sm:$0xf]
  %v2025 = vunpack.c.l.b16 %v1993
  %v2026 = vunpack.c.l.b16 %v1994
  %v2027 = vunpack.c.l.b16 %v1995
  %v2028 = vunpack.c.l.b16 %v1996
  %v2029 = vunpack.c.l.b16 %v1997
  %v2030 = vunpack.c.l.b16 %v1998
  %v2031 = vunpack.c.l.b16 %v1999
  %v2032 = vunpack.c.l.b16 %v2000
  %v2033 = vunpack.c.l.b16 %v2001
  %v2034 = vunpack.c.l.b16 %v2002
  %v2035 = vunpack.c.l.b16 %v2003
  %v2036 = vunpack.c.l.b16 %v2004
  %v2037 = vunpack.c.l.b16 %v2005
  %v2038 = vunpack.c.l.b16 %v2006
  %v2039 = vunpack.c.l.b16 %v2007
  %v2040 = vunpack.c.l.b16 %v2008
  %v2041 = vpack.c.b16 %v2026, %v2025
  %v2042 = vpack.c.b16 %v2028, %v2027
  %v2043 = vpack.c.b16 %v2030, %v2029
  %v2044 = vpack.c.b16 %v2032, %v2031
  %v2045 = vpack.c.b16 %v2034, %v2033
  %v2046 = vpack.c.b16 %v2036, %v2035
  %v2047 = vpack.c.b16 %v2038, %v2037
  %v2048 = vpack.c.b16 %v2040, %v2039
  %2057 = vmatprep.subr.bf16.mxu0 0
  %2058 = vmatpush1.bf16.msra.mxu0 %v2041
  %2059 = vmatprep.subr.bf16.mxu0 0
  %2060 = vmatpush1.bf16.msra.mxu0 %v2042
  %2061 = vmatprep.subr.bf16.mxu0 0
  %2062 = vmatpush1.bf16.msra.mxu0 %v2043
  %2063 = vmatprep.subr.bf16.mxu0 0
  %2064 = vmatpush1.bf16.msra.mxu0 %v2044
  %2065 = vmatprep.subr.bf16.mxu0 0
  %2066 = vmatpush1.bf16.msra.mxu0 %v2045
  %2067 = vmatprep.subr.bf16.mxu0 0
  %2068 = vmatpush1.bf16.msra.mxu0 %v2046
  %2069 = vmatprep.subr.bf16.mxu0 0
  %2070 = vmatpush1.bf16.msra.mxu0 %v2047
  %2071 = vmatprep.subr.bf16.mxu0 0
  %2072 = vmatpush1.bf16.msra.mxu0 %v2048
  %2073 = vmatprep.subr.bf16.mxu0 0
  %2074 = vmatpush1.bf16.msra.mxu0 0
  %2075 = vmatprep.subr.bf16.mxu0 0
  %2076 = vmatpush1.bf16.msra.mxu0 0
  %2077 = vmatprep.subr.bf16.mxu0 0
  %2078 = vmatpush1.bf16.msra.mxu0 0
  %2079 = vmatprep.subr.bf16.mxu0 0
  %2080 = vmatpush1.bf16.msra.mxu0 0
  %2081 = vmatprep.subr.bf16.mxu0 0
  %2082 = vmatpush1.bf16.msra.mxu0 0
  %2083 = vmatprep.subr.bf16.mxu0 0
  %2084 = vmatpush1.bf16.msra.mxu0 0
  %2085 = vmatprep.subr.bf16.mxu0 0
  %2086 = vmatpush1.bf16.msra.mxu0 0
  %2087 = vmatprep.subr.bf16.mxu0 0
  %2088 = vmatpush1.bf16.msra.mxu0 0
  %2089 = vmatprep.mubr.bf16.mxu0 0
  %2090 = vmatmul.mubr.bf16.gmra.mrb[0].mxu0 %v159
  %v2091 = vpop.f32.mrb[0].mxu0
  %v2092 = vadd.f32 0.0, %v2091
  %v2093 = vpop.f32.mrb[0].mxu0
  %v2094 = vpop.f32.mrb[0].mxu0
  %v2095 = vadd.f32 0.0, %v2094
  %v2096 = vpop.f32.mrb[0].mxu0
  %2097 = vmatprep.mubr.bf16.mxu0 0
  %2098 = vmatmul.mubr.bf16.gmra.mrb[0].mxu0 %v160
  %v2099 = vpop.f32.mrb[0].mxu0
  %v2100 = vadd.f32 0.0, %v2099
  %v2101 = vpop.f32.mrb[0].mxu0
  %v2102 = vpop.f32.mrb[0].mxu0
  %v2103 = vadd.f32 0.0, %v2102
  %v2104 = vpop.f32.mrb[0].mxu0
  %2105 = vdwg.mxu0
  %v2106 = vpack.c.bf16 %v2095, %v2092
  %v2107 = vpack.c.bf16 %v2103, %v2100
  %v2109 = vsel %vm288, %v1805, 0
  %v2112 = vsel %vm288, %v1806, 0
  %v2115 = vsel %vm288, %v1990, 0
  %v2118 = vsel %vm288, %v1991, 0
  %2120 = vmatprep.subr.bf16.mxu0 0
  %2121 = vmatpush1.bf16.xpose.msra.mxu0 %v2115
  %2122 = vmatprep.subr.bf16.mxu0 0
  %2123 = vmatpush1.bf16.xpose.msra.mxu0 %v2118
  %2124 = vmatprep.subr.bf16.mxu0 0
  %2125 = vmatpush1.bf16.xpose.msra.mxu0 0
  %2126 = vmatprep.subr.bf16.mxu0 0
  %2127 = vmatpush1.bf16.xpose.msra.mxu0 0
  %2128 = vmatprep.subr.bf16.mxu0 0
  %2129 = vmatpush1.bf16.xpose.msra.mxu0 0
  %2130 = vmatprep.subr.bf16.mxu0 0
  %2131 = vmatpush1.bf16.xpose.msra.mxu0 0
  %2132 = vmatprep.subr.bf16.mxu0 0
  %2133 = vmatpush1.bf16.xpose.msra.mxu0 0
  %2134 = vmatprep.subr.bf16.mxu0 0
  %2135 = vmatpush1.bf16.xpose.msra.mxu0 0
  %2136 = vmatprep.subr.bf16.mxu0 0
  %2137 = vmatpush1.bf16.xpose.msra.mxu0 0
  %2138 = vmatprep.subr.bf16.mxu0 0
  %2139 = vmatpush1.bf16.xpose.msra.mxu0 0
  %2140 = vmatprep.subr.bf16.mxu0 0
  %2141 = vmatpush1.bf16.xpose.msra.mxu0 0
  %2142 = vmatprep.subr.bf16.mxu0 0
  %2143 = vmatpush1.bf16.xpose.msra.mxu0 0
  %2144 = vmatprep.subr.bf16.mxu0 0
  %2145 = vmatpush1.bf16.xpose.msra.mxu0 0
  %2146 = vmatprep.subr.bf16.mxu0 0
  %2147 = vmatpush1.bf16.xpose.msra.mxu0 0
  %2148 = vmatprep.subr.bf16.mxu0 0
  %2149 = vmatpush1.bf16.xpose.msra.mxu0 0
  %2150 = vmatprep.subr.bf16.mxu0 0
  %2151 = vmatpush1.bf16.xpose.msra.mxu0 0
  %2152 = vmatprep.mubr.bf16.mxu0 0
  %2153 = vmatmul.mubr.bf16.gmra.mrb[0].mxu0 %v2109
  %v2154 = vpop.f32.mrb[0].mxu0
  %v2155 = vadd.f32 %v115, %v2154
  %v2156 = vpop.f32.mrb[0].mxu0
  %v2157 = vpop.f32.mrb[0].mxu0
  %v2158 = vadd.f32 %v116, %v2157
  %v2159 = vpop.f32.mrb[0].mxu0
  %2160 = vmatprep.mubr.bf16.mxu0 0
  %2161 = vmatmul.mubr.bf16.gmra.mrb[0].mxu0 %v2112
  %v2162 = vpop.f32.mrb[0].mxu0
  %v2163 = vadd.f32 %v117, %v2162
  %v2164 = vpop.f32.mrb[0].mxu0
  %v2165 = vpop.f32.mrb[0].mxu0
  %v2166 = vadd.f32 %v118, %v2165
  %v2167 = vpop.f32.mrb[0].mxu0
  %2168 = vdwg.mxu0
  %v2169 = vsel %vm288, %v2155, -inf
  %2170 = vmax.xlane.f32.xlu0 %v2169
  %v2171 = vpop.xlane.xlu0 %2170
  %v2172 = vsel %vm288, %v2158, -inf
  %2173 = vmax.xlane.f32.xlu0 %v2172
  %v2174 = vpop.xlane.xlu0 %2173
  %v2175 = vsel %vm288, %v2163, -inf
  %2176 = vmax.xlane.f32.xlu0 %v2175
  %v2177 = vpop.xlane.xlu0 %2176
  %v2178 = vsel %vm288, %v2166, -inf
  %2179 = vmax.xlane.f32.xlu0 %v2178
  %v2180 = vpop.xlane.xlu0 %2179
  %v2181 = vsub.f32 %v2155, %v2171
  %v2182 = vsub.f32 %v2158, %v2174
  %v2183 = vsub.f32 %v2163, %v2177
  %v2184 = vsub.f32 %v2166, %v2180
  %v2185 = vmul.f32 %v2181, 1.442695
  %v2186 = vpow.pop %v2185
  %v2187 = vmul.f32 %v2182, 1.442695
  %v2188 = vpow.pop %v2187
  %v2189 = vmul.f32 %v2183, 1.442695
  %v2190 = vpow.pop %v2189
  %v2191 = vmul.f32 %v2184, 1.442695
  %v2192 = vpow.pop %v2191
  %v2193 = vsel %vm288, %v2186, 0.0
  %2194 = vadd.xlane.f32.xlu0 %v2193
  %v2195 = vpop.xlane.xlu0 %2194
  %v2196 = vsel %vm288, %v2188, 0.0
  %2197 = vadd.xlane.f32.xlu0 %v2196
  %v2198 = vpop.xlane.xlu0 %2197
  %v2199 = vsel %vm288, %v2190, 0.0
  %2200 = vadd.xlane.f32.xlu0 %v2199
  %v2201 = vpop.xlane.xlu0 %2200
  %v2202 = vsel %vm288, %v2192, 0.0
  %2203 = vadd.xlane.f32.xlu0 %v2202
  %v2204 = vpop.xlane.xlu0 %2203
  %v2205 = vpack.c.bf16 %v2188, %v2186
  %v2206 = vpack.c.bf16 %v2192, %v2190
  %v2208 = vsel %vm288, %v2205, 0
  %v2211 = vsel %vm288, %v2206, 0
  %2213 = vmatprep.subr.bf16.mxu0 0
  %2214 = vmatpush1.bf16.msra.mxu0 %v2106
  %2215 = vmatprep.subr.bf16.mxu0 0
  %2216 = vmatpush1.bf16.msra.mxu0 %v2107
  %2217 = vmatprep.subr.bf16.mxu0 0
  %2218 = vmatpush1.bf16.msra.mxu0 0
  %2219 = vmatprep.subr.bf16.mxu0 0
  %2220 = vmatpush1.bf16.msra.mxu0 0
  %2221 = vmatprep.subr.bf16.mxu0 0
  %2222 = vmatpush1.bf16.msra.mxu0 0
  %2223 = vmatprep.subr.bf16.mxu0 0
  %2224 = vmatpush1.bf16.msra.mxu0 0
  %2225 = vmatprep.subr.bf16.mxu0 0
  %2226 = vmatpush1.bf16.msra.mxu0 0
  %2227 = vmatprep.subr.bf16.mxu0 0
  %2228 = vmatpush1.bf16.msra.mxu0 0
  %2229 = vmatprep.subr.bf16.mxu0 0
  %2230 = vmatpush1.bf16.msra.mxu0 0
  %2231 = vmatprep.subr.bf16.mxu0 0
  %2232 = vmatpush1.bf16.msra.mxu0 0
  %2233 = vmatprep.subr.bf16.mxu0 0
  %2234 = vmatpush1.bf16.msra.mxu0 0
  %2235 = vmatprep.subr.bf16.mxu0 0
  %2236 = vmatpush1.bf16.msra.mxu0 0
  %2237 = vmatprep.subr.bf16.mxu0 0
  %2238 = vmatpush1.bf16.msra.mxu0 0
  %2239 = vmatprep.subr.bf16.mxu0 0
  %2240 = vmatpush1.bf16.msra.mxu0 0
  %2241 = vmatprep.subr.bf16.mxu0 0
  %2242 = vmatpush1.bf16.msra.mxu0 0
  %2243 = vmatprep.subr.bf16.mxu0 0
  %2244 = vmatpush1.bf16.msra.mxu0 0
  %2245 = vmatprep.mubr.bf16.mxu0 0
  %2246 = vmatmul.mubr.bf16.gmra.mrb[0].mxu0 %v2208
  %v2247 = vpop.f32.mrb[0].mxu0
  %v2248 = vadd.f32 0.0, %v2247
  %v2249 = vpop.f32.mrb[0].mxu0
  %v2250 = vpop.f32.mrb[0].mxu0
  %v2251 = vadd.f32 0.0, %v2250
  %v2252 = vpop.f32.mrb[0].mxu0
  %2253 = vmatprep.mubr.bf16.mxu0 0
  %2254 = vmatmul.mubr.bf16.gmra.mrb[0].mxu0 %v2211
  %v2255 = vpop.f32.mrb[0].mxu0
  %v2256 = vadd.f32 0.0, %v2255
  %v2257 = vpop.f32.mrb[0].mxu0
  %v2258 = vpop.f32.mrb[0].mxu0
  %v2259 = vadd.f32 0.0, %v2258
  %v2260 = vpop.f32.mrb[0].mxu0
  %2261 = vdwg.mxu0
  %v2262 = vrcp.pop %v2195
  %v2263 = vrcp.pop %v2198
  %v2264 = vrcp.pop %v2201
  %v2265 = vrcp.pop %v2204
  %v2266 = vmul.f32 %v2248, %v2262
  %v2267 = vmul.f32 %v2251, %v2263
  %v2268 = vmul.f32 %v2256, %v2264
  %v2269 = vmul.f32 %v2259, %v2265
  %v2270 = vpack.c.bf16 %v2267, %v2266
  %v2271 = vpack.c.bf16 %v2269, %v2268
  %s2272 = scalar_lea.vmem %s11, 32
  %v2273 = vld [vmem:[%s2272] sm:$0xf]
  %v2274 = vld [vmem:[%s2272 + $0x4] sm:$0xf]
  %v2275 = vld [vmem:[%s2272 + $0x8] sm:$0xf]
  %v2276 = vld [vmem:[%s2272 + $0xc] sm:$0xf]
  %v2281 = vunpack.c.l.b16 %v2273
  %v2282 = vunpack.c.l.b16 %v2274
  %v2283 = vunpack.c.l.b16 %v2275
  %v2284 = vunpack.c.l.b16 %v2276
  %v2285 = vpack.c.b16 %v2282, %v2281
  %v2286 = vpack.c.b16 %v2284, %v2283
  %v2290 = vsel %vm288, %v2270, 0
  %v2293 = vsel %vm288, %v2271, 0
  %2295 = vmatprep.subr.bf16.mxu0 0
  %2296 = vmatpush1.bf16.msra.mxu0 %v2285
  %2297 = vmatprep.subr.bf16.mxu0 0
  %2298 = vmatpush1.bf16.msra.mxu0 %v2286
  %2299 = vmatprep.subr.bf16.mxu0 0
  %2300 = vmatpush1.bf16.msra.mxu0 0
  %2301 = vmatprep.subr.bf16.mxu0 0
  %2302 = vmatpush1.bf16.msra.mxu0 0
  %2303 = vmatprep.subr.bf16.mxu0 0
  %2304 = vmatpush1.bf16.msra.mxu0 0
  %2305 = vmatprep.subr.bf16.mxu0 0
  %2306 = vmatpush1.bf16.msra.mxu0 0
  %2307 = vmatprep.subr.bf16.mxu0 0
  %2308 = vmatpush1.bf16.msra.mxu0 0
  %2309 = vmatprep.subr.bf16.mxu0 0
  %2310 = vmatpush1.bf16.msra.mxu0 0
  %2311 = vmatprep.subr.bf16.mxu0 0
  %2312 = vmatpush1.bf16.msra.mxu0 0
  %2313 = vmatprep.subr.bf16.mxu0 0
  %2314 = vmatpush1.bf16.msra.mxu0 0
  %2315 = vmatprep.subr.bf16.mxu0 0
  %2316 = vmatpush1.bf16.msra.mxu0 0
  %2317 = vmatprep.subr.bf16.mxu0 0
  %2318 = vmatpush1.bf16.msra.mxu0 0
  %2319 = vmatprep.subr.bf16.mxu0 0
  %2320 = vmatpush1.bf16.msra.mxu0 0
  %2321 = vmatprep.subr.bf16.mxu0 0
  %2322 = vmatpush1.bf16.msra.mxu0 0
  %2323 = vmatprep.subr.bf16.mxu0 0
  %2324 = vmatpush1.bf16.msra.mxu0 0
  %2325 = vmatprep.subr.bf16.mxu0 0
  %2326 = vmatpush1.bf16.msra.mxu0 0
  %2327 = vmatprep.mubr.bf16.mxu0 0
  %2328 = vmatmul.mubr.bf16.gmra.mrb[0].mxu0 %v2290
  %v2329 = vpop.f32.mrb[0].mxu0
  %v2330 = vadd.f32 0.0, %v2329
  %v2331 = vpop.f32.mrb[0].mxu0
  %v2332 = vpop.f32.mrb[0].mxu0
  %v2333 = vadd.f32 0.0, %v2332
  %v2334 = vpop.f32.mrb[0].mxu0
  %2335 = vmatprep.mubr.bf16.mxu0 0
  %2336 = vmatmul.mubr.bf16.gmra.mrb[0].mxu0 %v2293
  %v2337 = vpop.f32.mrb[0].mxu0
  %v2338 = vadd.f32 0.0, %v2337
  %v2339 = vpop.f32.mrb[0].mxu0
  %v2340 = vpop.f32.mrb[0].mxu0
  %v2341 = vadd.f32 0.0, %v2340
  %v2342 = vpop.f32.mrb[0].mxu0
  %2343 = vdwg.mxu0
  %v2344 = vadd.f32 %v1618, %v2330
  %v2345 = vadd.f32 %v1619, %v2333
  %v2346 = vadd.f32 %v1620, %v2338
  %v2347 = vadd.f32 %v1621, %v2341
  %s2348 = scalar_lea.vmem %s8, 192
  %v2349 = vld [vmem:[%s2348] sm:$0xf]
  %v2350 = vld [vmem:[%s2348 + $0x4] sm:$0xf]
  %v2351 = vld [vmem:[%s2348 + $0x8] sm:$0xf]
  %v2352 = vld [vmem:[%s2348 + $0xc] sm:$0xf]
  %v2353 = vld [vmem:[%s2348 + $0x10] sm:$0xf]
  %v2354 = vld [vmem:[%s2348 + $0x14] sm:$0xf]
  %v2355 = vld [vmem:[%s2348 + $0x18] sm:$0xf]
  %v2356 = vld [vmem:[%s2348 + $0x1c] sm:$0xf]
  %v2357 = vld [vmem:[%s2348 + $0x20] sm:$0xf]
  %v2358 = vld [vmem:[%s2348 + $0x24] sm:$0xf]
  %v2359 = vld [vmem:[%s2348 + $0x28] sm:$0xf]
  %v2360 = vld [vmem:[%s2348 + $0x2c] sm:$0xf]
  %v2361 = vld [vmem:[%s2348 + $0x30] sm:$0xf]
  %v2362 = vld [vmem:[%s2348 + $0x34] sm:$0xf]
  %v2363 = vld [vmem:[%s2348 + $0x38] sm:$0xf]
  %v2364 = vld [vmem:[%s2348 + $0x3c] sm:$0xf]
  %v2381 = vunpack.c.l.b16 %v2349
  %v2382 = vunpack.c.l.b16 %v2350
  %v2383 = vunpack.c.l.b16 %v2351
  %v2384 = vunpack.c.l.b16 %v2352
  %v2385 = vunpack.c.l.b16 %v2353
  %v2386 = vunpack.c.l.b16 %v2354
  %v2387 = vunpack.c.l.b16 %v2355
  %v2388 = vunpack.c.l.b16 %v2356
  %v2389 = vunpack.c.l.b16 %v2357
  %v2390 = vunpack.c.l.b16 %v2358
  %v2391 = vunpack.c.l.b16 %v2359
  %v2392 = vunpack.c.l.b16 %v2360
  %v2393 = vunpack.c.l.b16 %v2361
  %v2394 = vunpack.c.l.b16 %v2362
  %v2395 = vunpack.c.l.b16 %v2363
  %v2396 = vunpack.c.l.b16 %v2364
  %v2397 = vpack.c.b16 %v2382, %v2381
  %v2398 = vpack.c.b16 %v2384, %v2383
  %v2399 = vpack.c.b16 %v2386, %v2385
  %v2400 = vpack.c.b16 %v2388, %v2387
  %v2401 = vpack.c.b16 %v2390, %v2389
  %v2402 = vpack.c.b16 %v2392, %v2391
  %v2403 = vpack.c.b16 %v2394, %v2393
  %v2404 = vpack.c.b16 %v2396, %v2395
  %2413 = vmatprep.subr.bf16.mxu0 0
  %2414 = vmatpush1.bf16.msra.mxu0 %v2397
  %2415 = vmatprep.subr.bf16.mxu0 0
  %2416 = vmatpush1.bf16.msra.mxu0 %v2398
  %2417 = vmatprep.subr.bf16.mxu0 0
  %2418 = vmatpush1.bf16.msra.mxu0 %v2399
  %2419 = vmatprep.subr.bf16.mxu0 0
  %2420 = vmatpush1.bf16.msra.mxu0 %v2400
  %2421 = vmatprep.subr.bf16.mxu0 0
  %2422 = vmatpush1.bf16.msra.mxu0 %v2401
  %2423 = vmatprep.subr.bf16.mxu0 0
  %2424 = vmatpush1.bf16.msra.mxu0 %v2402
  %2425 = vmatprep.subr.bf16.mxu0 0
  %2426 = vmatpush1.bf16.msra.mxu0 %v2403
  %2427 = vmatprep.subr.bf16.mxu0 0
  %2428 = vmatpush1.bf16.msra.mxu0 %v2404
  %2429 = vmatprep.subr.bf16.mxu0 0
  %2430 = vmatpush1.bf16.msra.mxu0 0
  %2431 = vmatprep.subr.bf16.mxu0 0
  %2432 = vmatpush1.bf16.msra.mxu0 0
  %2433 = vmatprep.subr.bf16.mxu0 0
  %2434 = vmatpush1.bf16.msra.mxu0 0
  %2435 = vmatprep.subr.bf16.mxu0 0
  %2436 = vmatpush1.bf16.msra.mxu0 0
  %2437 = vmatprep.subr.bf16.mxu0 0
  %2438 = vmatpush1.bf16.msra.mxu0 0
  %2439 = vmatprep.subr.bf16.mxu0 0
  %2440 = vmatpush1.bf16.msra.mxu0 0
  %2441 = vmatprep.subr.bf16.mxu0 0
  %2442 = vmatpush1.bf16.msra.mxu0 0
  %2443 = vmatprep.subr.bf16.mxu0 0
  %2444 = vmatpush1.bf16.msra.mxu0 0
  %2445 = vmatprep.mubr.bf16.mxu0 0
  %2446 = vmatmul.mubr.bf16.gmra.mrb[0].mxu0 %v159
  %v2447 = vpop.f32.mrb[0].mxu0
  %v2448 = vadd.f32 0.0, %v2447
  %v2449 = vpop.f32.mrb[0].mxu0
  %v2450 = vpop.f32.mrb[0].mxu0
  %v2451 = vadd.f32 0.0, %v2450
  %v2452 = vpop.f32.mrb[0].mxu0
  %2453 = vmatprep.mubr.bf16.mxu0 0
  %2454 = vmatmul.mubr.bf16.gmra.mrb[0].mxu0 %v160
  %v2455 = vpop.f32.mrb[0].mxu0
  %v2456 = vadd.f32 0.0, %v2455
  %v2457 = vpop.f32.mrb[0].mxu0
  %v2458 = vpop.f32.mrb[0].mxu0
  %v2459 = vadd.f32 0.0, %v2458
  %v2460 = vpop.f32.mrb[0].mxu0
  %2461 = vdwg.mxu0
  %v2462 = vpack.c.bf16 %v2451, %v2448
  %v2463 = vpack.c.bf16 %v2459, %v2456
  %v2465 = vsel %vm288, %v2462, 0
  %v2468 = vsel %vm288, %v2463, 0
  %2470 = vmatprep.subr.bf16.mxu0 0
  %2471 = vmatpush1.bf16.msra.mxu0 %v284
  %2472 = vmatprep.subr.bf16.mxu0 0
  %2473 = vmatpush1.bf16.msra.mxu0 %v285
  %2474 = vmatprep.subr.bf16.mxu0 0
  %2475 = vmatpush1.bf16.msra.mxu0 0
  %2476 = vmatprep.subr.bf16.mxu0 0
  %2477 = vmatpush1.bf16.msra.mxu0 0
  %2478 = vmatprep.subr.bf16.mxu0 0
  %2479 = vmatpush1.bf16.msra.mxu0 0
  %2480 = vmatprep.subr.bf16.mxu0 0
  %2481 = vmatpush1.bf16.msra.mxu0 0
  %2482 = vmatprep.subr.bf16.mxu0 0
  %2483 = vmatpush1.bf16.msra.mxu0 0
  %2484 = vmatprep.subr.bf16.mxu0 0
  %2485 = vmatpush1.bf16.msra.mxu0 0
  %2486 = vmatprep.subr.bf16.mxu0 0
  %2487 = vmatpush1.bf16.msra.mxu0 0
  %2488 = vmatprep.subr.bf16.mxu0 0
  %2489 = vmatpush1.bf16.msra.mxu0 0
  %2490 = vmatprep.subr.bf16.mxu0 0
  %2491 = vmatpush1.bf16.msra.mxu0 0
  %2492 = vmatprep.subr.bf16.mxu0 0
  %2493 = vmatpush1.bf16.msra.mxu0 0
  %2494 = vmatprep.subr.bf16.mxu0 0
  %2495 = vmatpush1.bf16.msra.mxu0 0
  %2496 = vmatprep.subr.bf16.mxu0 0
  %2497 = vmatpush1.bf16.msra.mxu0 0
  %2498 = vmatprep.subr.bf16.mxu0 0
  %2499 = vmatpush1.bf16.msra.mxu0 0
  %2500 = vmatprep.subr.bf16.mxu0 0
  %2501 = vmatpush1.bf16.msra.mxu0 0
  %2502 = vmatprep.mubr.bf16.mxu0 0
  %2503 = vmatmul.mubr.bf16.gmra.mrb[0].mxu0 %v2465
  %v2504 = vpop.f32.mrb[0].mxu0
  %v2505 = vadd.f32 0.0, %v2504
  %v2506 = vpop.f32.mrb[0].mxu0
  %v2507 = vpop.f32.mrb[0].mxu0
  %v2508 = vadd.f32 0.0, %v2507
  %v2509 = vpop.f32.mrb[0].mxu0
  %2510 = vmatprep.mubr.bf16.mxu0 0
  %2511 = vmatmul.mubr.bf16.gmra.mrb[0].mxu0 %v2468
  %v2512 = vpop.f32.mrb[0].mxu0
  %v2513 = vadd.f32 0.0, %v2512
  %v2514 = vpop.f32.mrb[0].mxu0
  %v2515 = vpop.f32.mrb[0].mxu0
  %v2516 = vadd.f32 0.0, %v2515
  %v2517 = vpop.f32.mrb[0].mxu0
  %2518 = vdwg.mxu0
  %v2519 = vmul.f32 %v2448, %v62
  %v2520 = vmul.f32 %v2451, %v63
  %v2521 = vmul.f32 %v2456, %v64
  %v2522 = vmul.f32 %v2459, %v65
  %v2523 = vmul.f32 %v2505, %v66
  %v2524 = vmul.f32 %v2508, %v67
  %v2525 = vmul.f32 %v2513, %v68
  %v2526 = vmul.f32 %v2516, %v69
  %v2527 = vadd.f32 %v2519, %v2523
  %v2528 = vadd.f32 %v2520, %v2524
  %v2529 = vadd.f32 %v2521, %v2525
  %v2530 = vadd.f32 %v2522, %v2526
  %v2531 = vpack.c.bf16 %v2528, %v2527
  %v2532 = vpack.c.bf16 %v2530, %v2529
  %s2533 = scalar_lea.vmem %s9, 192
  %v2534 = vld [vmem:[%s2533] sm:$0xf]
  %v2535 = vld [vmem:[%s2533 + $0x4] sm:$0xf]
  %v2536 = vld [vmem:[%s2533 + $0x8] sm:$0xf]
  %v2537 = vld [vmem:[%s2533 + $0xc] sm:$0xf]
  %v2538 = vld [vmem:[%s2533 + $0x10] sm:$0xf]
  %v2539 = vld [vmem:[%s2533 + $0x14] sm:$0xf]
  %v2540 = vld [vmem:[%s2533 + $0x18] sm:$0xf]
  %v2541 = vld [vmem:[%s2533 + $0x1c] sm:$0xf]
  %v2542 = vld [vmem:[%s2533 + $0x20] sm:$0xf]
  %v2543 = vld [vmem:[%s2533 + $0x24] sm:$0xf]
  %v2544 = vld [vmem:[%s2533 + $0x28] sm:$0xf]
  %v2545 = vld [vmem:[%s2533 + $0x2c] sm:$0xf]
  %v2546 = vld [vmem:[%s2533 + $0x30] sm:$0xf]
  %v2547 = vld [vmem:[%s2533 + $0x34] sm:$0xf]
  %v2548 = vld [vmem:[%s2533 + $0x38] sm:$0xf]
  %v2549 = vld [vmem:[%s2533 + $0x3c] sm:$0xf]
  %v2566 = vunpack.c.l.b16 %v2534
  %v2567 = vunpack.c.l.b16 %v2535
  %v2568 = vunpack.c.l.b16 %v2536
  %v2569 = vunpack.c.l.b16 %v2537
  %v2570 = vunpack.c.l.b16 %v2538
  %v2571 = vunpack.c.l.b16 %v2539
  %v2572 = vunpack.c.l.b16 %v2540
  %v2573 = vunpack.c.l.b16 %v2541
  %v2574 = vunpack.c.l.b16 %v2542
  %v2575 = vunpack.c.l.b16 %v2543
  %v2576 = vunpack.c.l.b16 %v2544
  %v2577 = vunpack.c.l.b16 %v2545
  %v2578 = vunpack.c.l.b16 %v2546
  %v2579 = vunpack.c.l.b16 %v2547
  %v2580 = vunpack.c.l.b16 %v2548
  %v2581 = vunpack.c.l.b16 %v2549
  %v2582 = vpack.c.b16 %v2567, %v2566
  %v2583 = vpack.c.b16 %v2569, %v2568
  %v2584 = vpack.c.b16 %v2571, %v2570
  %v2585 = vpack.c.b16 %v2573, %v2572
  %v2586 = vpack.c.b16 %v2575, %v2574
  %v2587 = vpack.c.b16 %v2577, %v2576
  %v2588 = vpack.c.b16 %v2579, %v2578
  %v2589 = vpack.c.b16 %v2581, %v2580
  %2598 = vmatprep.subr.bf16.mxu0 0
  %2599 = vmatpush1.bf16.msra.mxu0 %v2582
  %2600 = vmatprep.subr.bf16.mxu0 0
  %2601 = vmatpush1.bf16.msra.mxu0 %v2583
  %2602 = vmatprep.subr.bf16.mxu0 0
  %2603 = vmatpush1.bf16.msra.mxu0 %v2584
  %2604 = vmatprep.subr.bf16.mxu0 0
  %2605 = vmatpush1.bf16.msra.mxu0 %v2585
  %2606 = vmatprep.subr.bf16.mxu0 0
  %2607 = vmatpush1.bf16.msra.mxu0 %v2586
  %2608 = vmatprep.subr.bf16.mxu0 0
  %2609 = vmatpush1.bf16.msra.mxu0 %v2587
  %2610 = vmatprep.subr.bf16.mxu0 0
  %2611 = vmatpush1.bf16.msra.mxu0 %v2588
  %2612 = vmatprep.subr.bf16.mxu0 0
  %2613 = vmatpush1.bf16.msra.mxu0 %v2589
  %2614 = vmatprep.subr.bf16.mxu0 0
  %2615 = vmatpush1.bf16.msra.mxu0 0
  %2616 = vmatprep.subr.bf16.mxu0 0
  %2617 = vmatpush1.bf16.msra.mxu0 0
  %2618 = vmatprep.subr.bf16.mxu0 0
  %2619 = vmatpush1.bf16.msra.mxu0 0
  %2620 = vmatprep.subr.bf16.mxu0 0
  %2621 = vmatpush1.bf16.msra.mxu0 0
  %2622 = vmatprep.subr.bf16.mxu0 0
  %2623 = vmatpush1.bf16.msra.mxu0 0
  %2624 = vmatprep.subr.bf16.mxu0 0
  %2625 = vmatpush1.bf16.msra.mxu0 0
  %2626 = vmatprep.subr.bf16.mxu0 0
  %2627 = vmatpush1.bf16.msra.mxu0 0
  %2628 = vmatprep.subr.bf16.mxu0 0
  %2629 = vmatpush1.bf16.msra.mxu0 0
  %2630 = vmatprep.mubr.bf16.mxu0 0
  %2631 = vmatmul.mubr.bf16.gmra.mrb[0].mxu0 %v159
  %v2632 = vpop.f32.mrb[0].mxu0
  %v2633 = vadd.f32 0.0, %v2632
  %v2634 = vpop.f32.mrb[0].mxu0
  %v2635 = vpop.f32.mrb[0].mxu0
  %v2636 = vadd.f32 0.0, %v2635
  %v2637 = vpop.f32.mrb[0].mxu0
  %2638 = vmatprep.mubr.bf16.mxu0 0
  %2639 = vmatmul.mubr.bf16.gmra.mrb[0].mxu0 %v160
  %v2640 = vpop.f32.mrb[0].mxu0
  %v2641 = vadd.f32 0.0, %v2640
  %v2642 = vpop.f32.mrb[0].mxu0
  %v2643 = vpop.f32.mrb[0].mxu0
  %v2644 = vadd.f32 0.0, %v2643
  %v2645 = vpop.f32.mrb[0].mxu0
  %2646 = vdwg.mxu0
  %v2647 = vpack.c.bf16 %v2636, %v2633
  %v2648 = vpack.c.bf16 %v2644, %v2641
  %v2650 = vsel %vm288, %v2647, 0
  %v2653 = vsel %vm288, %v2648, 0
  %2655 = vmatprep.subr.bf16.mxu0 0
  %2656 = vmatpush1.bf16.msra.mxu0 %v284
  %2657 = vmatprep.subr.bf16.mxu0 0
  %2658 = vmatpush1.bf16.msra.mxu0 %v285
  %2659 = vmatprep.subr.bf16.mxu0 0
  %2660 = vmatpush1.bf16.msra.mxu0 0
  %2661 = vmatprep.subr.bf16.mxu0 0
  %2662 = vmatpush1.bf16.msra.mxu0 0
  %2663 = vmatprep.subr.bf16.mxu0 0
  %2664 = vmatpush1.bf16.msra.mxu0 0
  %2665 = vmatprep.subr.bf16.mxu0 0
  %2666 = vmatpush1.bf16.msra.mxu0 0
  %2667 = vmatprep.subr.bf16.mxu0 0
  %2668 = vmatpush1.bf16.msra.mxu0 0
  %2669 = vmatprep.subr.bf16.mxu0 0
  %2670 = vmatpush1.bf16.msra.mxu0 0
  %2671 = vmatprep.subr.bf16.mxu0 0
  %2672 = vmatpush1.bf16.msra.mxu0 0
  %2673 = vmatprep.subr.bf16.mxu0 0
  %2674 = vmatpush1.bf16.msra.mxu0 0
  %2675 = vmatprep.subr.bf16.mxu0 0
  %2676 = vmatpush1.bf16.msra.mxu0 0
  %2677 = vmatprep.subr.bf16.mxu0 0
  %2678 = vmatpush1.bf16.msra.mxu0 0
  %2679 = vmatprep.subr.bf16.mxu0 0
  %2680 = vmatpush1.bf16.msra.mxu0 0
  %2681 = vmatprep.subr.bf16.mxu0 0
  %2682 = vmatpush1.bf16.msra.mxu0 0
  %2683 = vmatprep.subr.bf16.mxu0 0
  %2684 = vmatpush1.bf16.msra.mxu0 0
  %2685 = vmatprep.subr.bf16.mxu0 0
  %2686 = vmatpush1.bf16.msra.mxu0 0
  %2687 = vmatprep.mubr.bf16.mxu0 0
  %2688 = vmatmul.mubr.bf16.gmra.mrb[0].mxu0 %v2650
  %v2689 = vpop.f32.mrb[0].mxu0
  %v2690 = vadd.f32 0.0, %v2689
  %v2691 = vpop.f32.mrb[0].mxu0
  %v2692 = vpop.f32.mrb[0].mxu0
  %v2693 = vadd.f32 0.0, %v2692
  %v2694 = vpop.f32.mrb[0].mxu0
  %2695 = vmatprep.mubr.bf16.mxu0 0
  %2696 = vmatmul.mubr.bf16.gmra.mrb[0].mxu0 %v2653
  %v2697 = vpop.f32.mrb[0].mxu0
  %v2698 = vadd.f32 0.0, %v2697
  %v2699 = vpop.f32.mrb[0].mxu0
  %v2700 = vpop.f32.mrb[0].mxu0
  %v2701 = vadd.f32 0.0, %v2700
  %v2702 = vpop.f32.mrb[0].mxu0
  %2703 = vdwg.mxu0
  %v2704 = vmul.f32 %v2633, %v62
  %v2705 = vmul.f32 %v2636, %v63
  %v2706 = vmul.f32 %v2641, %v64
  %v2707 = vmul.f32 %v2644, %v65
  %v2708 = vmul.f32 %v2690, %v66
  %v2709 = vmul.f32 %v2693, %v67
  %v2710 = vmul.f32 %v2698, %v68
  %v2711 = vmul.f32 %v2701, %v69
  %v2712 = vadd.f32 %v2704, %v2708
  %v2713 = vadd.f32 %v2705, %v2709
  %v2714 = vadd.f32 %v2706, %v2710
  %v2715 = vadd.f32 %v2707, %v2711
  %v2716 = vpack.c.bf16 %v2713, %v2712
  %v2717 = vpack.c.bf16 %v2715, %v2714
  %s2718 = scalar_lea.vmem %s10, 192
  %v2719 = vld [vmem:[%s2718] sm:$0xf]
  %v2720 = vld [vmem:[%s2718 + $0x4] sm:$0xf]
  %v2721 = vld [vmem:[%s2718 + $0x8] sm:$0xf]
  %v2722 = vld [vmem:[%s2718 + $0xc] sm:$0xf]
  %v2723 = vld [vmem:[%s2718 + $0x10] sm:$0xf]
  %v2724 = vld [vmem:[%s2718 + $0x14] sm:$0xf]
  %v2725 = vld [vmem:[%s2718 + $0x18] sm:$0xf]
  %v2726 = vld [vmem:[%s2718 + $0x1c] sm:$0xf]
  %v2727 = vld [vmem:[%s2718 + $0x20] sm:$0xf]
  %v2728 = vld [vmem:[%s2718 + $0x24] sm:$0xf]
  %v2729 = vld [vmem:[%s2718 + $0x28] sm:$0xf]
  %v2730 = vld [vmem:[%s2718 + $0x2c] sm:$0xf]
  %v2731 = vld [vmem:[%s2718 + $0x30] sm:$0xf]
  %v2732 = vld [vmem:[%s2718 + $0x34] sm:$0xf]
  %v2733 = vld [vmem:[%s2718 + $0x38] sm:$0xf]
  %v2734 = vld [vmem:[%s2718 + $0x3c] sm:$0xf]
  %v2751 = vunpack.c.l.b16 %v2719
  %v2752 = vunpack.c.l.b16 %v2720
  %v2753 = vunpack.c.l.b16 %v2721
  %v2754 = vunpack.c.l.b16 %v2722
  %v2755 = vunpack.c.l.b16 %v2723
  %v2756 = vunpack.c.l.b16 %v2724
  %v2757 = vunpack.c.l.b16 %v2725
  %v2758 = vunpack.c.l.b16 %v2726
  %v2759 = vunpack.c.l.b16 %v2727
  %v2760 = vunpack.c.l.b16 %v2728
  %v2761 = vunpack.c.l.b16 %v2729
  %v2762 = vunpack.c.l.b16 %v2730
  %v2763 = vunpack.c.l.b16 %v2731
  %v2764 = vunpack.c.l.b16 %v2732
  %v2765 = vunpack.c.l.b16 %v2733
  %v2766 = vunpack.c.l.b16 %v2734
  %v2767 = vpack.c.b16 %v2752, %v2751
  %v2768 = vpack.c.b16 %v2754, %v2753
  %v2769 = vpack.c.b16 %v2756, %v2755
  %v2770 = vpack.c.b16 %v2758, %v2757
  %v2771 = vpack.c.b16 %v2760, %v2759
  %v2772 = vpack.c.b16 %v2762, %v2761
  %v2773 = vpack.c.b16 %v2764, %v2763
  %v2774 = vpack.c.b16 %v2766, %v2765
  %2783 = vmatprep.subr.bf16.mxu0 0
  %2784 = vmatpush1.bf16.msra.mxu0 %v2767
  %2785 = vmatprep.subr.bf16.mxu0 0
  %2786 = vmatpush1.bf16.msra.mxu0 %v2768
  %2787 = vmatprep.subr.bf16.mxu0 0
  %2788 = vmatpush1.bf16.msra.mxu0 %v2769
  %2789 = vmatprep.subr.bf16.mxu0 0
  %2790 = vmatpush1.bf16.msra.mxu0 %v2770
  %2791 = vmatprep.subr.bf16.mxu0 0
  %2792 = vmatpush1.bf16.msra.mxu0 %v2771
  %2793 = vmatprep.subr.bf16.mxu0 0
  %2794 = vmatpush1.bf16.msra.mxu0 %v2772
  %2795 = vmatprep.subr.bf16.mxu0 0
  %2796 = vmatpush1.bf16.msra.mxu0 %v2773
  %2797 = vmatprep.subr.bf16.mxu0 0
  %2798 = vmatpush1.bf16.msra.mxu0 %v2774
  %2799 = vmatprep.subr.bf16.mxu0 0
  %2800 = vmatpush1.bf16.msra.mxu0 0
  %2801 = vmatprep.subr.bf16.mxu0 0
  %2802 = vmatpush1.bf16.msra.mxu0 0
  %2803 = vmatprep.subr.bf16.mxu0 0
  %2804 = vmatpush1.bf16.msra.mxu0 0
  %2805 = vmatprep.subr.bf16.mxu0 0
  %2806 = vmatpush1.bf16.msra.mxu0 0
  %2807 = vmatprep.subr.bf16.mxu0 0
  %2808 = vmatpush1.bf16.msra.mxu0 0
  %2809 = vmatprep.subr.bf16.mxu0 0
  %2810 = vmatpush1.bf16.msra.mxu0 0
  %2811 = vmatprep.subr.bf16.mxu0 0
  %2812 = vmatpush1.bf16.msra.mxu0 0
  %2813 = vmatprep.subr.bf16.mxu0 0
  %2814 = vmatpush1.bf16.msra.mxu0 0
  %2815 = vmatprep.mubr.bf16.mxu0 0
  %2816 = vmatmul.mubr.bf16.gmra.mrb[0].mxu0 %v159
  %v2817 = vpop.f32.mrb[0].mxu0
  %v2818 = vadd.f32 0.0, %v2817
  %v2819 = vpop.f32.mrb[0].mxu0
  %v2820 = vpop.f32.mrb[0].mxu0
  %v2821 = vadd.f32 0.0, %v2820
  %v2822 = vpop.f32.mrb[0].mxu0
  %2823 = vmatprep.mubr.bf16.mxu0 0
  %2824 = vmatmul.mubr.bf16.gmra.mrb[0].mxu0 %v160
  %v2825 = vpop.f32.mrb[0].mxu0
  %v2826 = vadd.f32 0.0, %v2825
  %v2827 = vpop.f32.mrb[0].mxu0
  %v2828 = vpop.f32.mrb[0].mxu0
  %v2829 = vadd.f32 0.0, %v2828
  %v2830 = vpop.f32.mrb[0].mxu0
  %2831 = vdwg.mxu0
  %v2832 = vpack.c.bf16 %v2821, %v2818
  %v2833 = vpack.c.bf16 %v2829, %v2826
  %v2835 = vsel %vm288, %v2531, 0
  %v2838 = vsel %vm288, %v2532, 0
  %v2841 = vsel %vm288, %v2716, 0
  %v2844 = vsel %vm288, %v2717, 0
  %2846 = vmatprep.subr.bf16.mxu0 0
  %2847 = vmatpush1.bf16.xpose.msra.mxu0 %v2841
  %2848 = vmatprep.subr.bf16.mxu0 0
  %2849 = vmatpush1.bf16.xpose.msra.mxu0 %v2844
  %2850 = vmatprep.subr.bf16.mxu0 0
  %2851 = vmatpush1.bf16.xpose.msra.mxu0 0
  %2852 = vmatprep.subr.bf16.mxu0 0
  %2853 = vmatpush1.bf16.xpose.msra.mxu0 0
  %2854 = vmatprep.subr.bf16.mxu0 0
  %2855 = vmatpush1.bf16.xpose.msra.mxu0 0
  %2856 = vmatprep.subr.bf16.mxu0 0
  %2857 = vmatpush1.bf16.xpose.msra.mxu0 0
  %2858 = vmatprep.subr.bf16.mxu0 0
  %2859 = vmatpush1.bf16.xpose.msra.mxu0 0
  %2860 = vmatprep.subr.bf16.mxu0 0
  %2861 = vmatpush1.bf16.xpose.msra.mxu0 0
  %2862 = vmatprep.subr.bf16.mxu0 0
  %2863 = vmatpush1.bf16.xpose.msra.mxu0 0
  %2864 = vmatprep.subr.bf16.mxu0 0
  %2865 = vmatpush1.bf16.xpose.msra.mxu0 0
  %2866 = vmatprep.subr.bf16.mxu0 0
  %2867 = vmatpush1.bf16.xpose.msra.mxu0 0
  %2868 = vmatprep.subr.bf16.mxu0 0
  %2869 = vmatpush1.bf16.xpose.msra.mxu0 0
  %2870 = vmatprep.subr.bf16.mxu0 0
  %2871 = vmatpush1.bf16.xpose.msra.mxu0 0
  %2872 = vmatprep.subr.bf16.mxu0 0
  %2873 = vmatpush1.bf16.xpose.msra.mxu0 0
  %2874 = vmatprep.subr.bf16.mxu0 0
  %2875 = vmatpush1.bf16.xpose.msra.mxu0 0
  %2876 = vmatprep.subr.bf16.mxu0 0
  %2877 = vmatpush1.bf16.xpose.msra.mxu0 0
  %2878 = vmatprep.mubr.bf16.mxu0 0
  %2879 = vmatmul.mubr.bf16.gmra.mrb[0].mxu0 %v2835
  %v2880 = vpop.f32.mrb[0].mxu0
  %v2881 = vadd.f32 %v115, %v2880
  %v2882 = vpop.f32.mrb[0].mxu0
  %v2883 = vpop.f32.mrb[0].mxu0
  %v2884 = vadd.f32 %v116, %v2883
  %v2885 = vpop.f32.mrb[0].mxu0
  %2886 = vmatprep.mubr.bf16.mxu0 0
  %2887 = vmatmul.mubr.bf16.gmra.mrb[0].mxu0 %v2838
  %v2888 = vpop.f32.mrb[0].mxu0
  %v2889 = vadd.f32 %v117, %v2888
  %v2890 = vpop.f32.mrb[0].mxu0
  %v2891 = vpop.f32.mrb[0].mxu0
  %v2892 = vadd.f32 %v118, %v2891
  %v2893 = vpop.f32.mrb[0].mxu0
  %2894 = vdwg.mxu0
  %v2895 = vsel %vm288, %v2881, -inf
  %2896 = vmax.xlane.f32.xlu0 %v2895
  %v2897 = vpop.xlane.xlu0 %2896
  %v2898 = vsel %vm288, %v2884, -inf
  %2899 = vmax.xlane.f32.xlu0 %v2898
  %v2900 = vpop.xlane.xlu0 %2899
  %v2901 = vsel %vm288, %v2889, -inf
  %2902 = vmax.xlane.f32.xlu0 %v2901
  %v2903 = vpop.xlane.xlu0 %2902
  %v2904 = vsel %vm288, %v2892, -inf
  %2905 = vmax.xlane.f32.xlu0 %v2904
  %v2906 = vpop.xlane.xlu0 %2905
  %v2907 = vsub.f32 %v2881, %v2897
  %v2908 = vsub.f32 %v2884, %v2900
  %v2909 = vsub.f32 %v2889, %v2903
  %v2910 = vsub.f32 %v2892, %v2906
  %v2911 = vmul.f32 %v2907, 1.442695
  %v2912 = vpow.pop %v2911
  %v2913 = vmul.f32 %v2908, 1.442695
  %v2914 = vpow.pop %v2913
  %v2915 = vmul.f32 %v2909, 1.442695
  %v2916 = vpow.pop %v2915
  %v2917 = vmul.f32 %v2910, 1.442695
  %v2918 = vpow.pop %v2917
  %v2919 = vsel %vm288, %v2912, 0.0
  %2920 = vadd.xlane.f32.xlu0 %v2919
  %v2921 = vpop.xlane.xlu0 %2920
  %v2922 = vsel %vm288, %v2914, 0.0
  %2923 = vadd.xlane.f32.xlu0 %v2922
  %v2924 = vpop.xlane.xlu0 %2923
  %v2925 = vsel %vm288, %v2916, 0.0
  %2926 = vadd.xlane.f32.xlu0 %v2925
  %v2927 = vpop.xlane.xlu0 %2926
  %v2928 = vsel %vm288, %v2918, 0.0
  %2929 = vadd.xlane.f32.xlu0 %v2928
  %v2930 = vpop.xlane.xlu0 %2929
  %v2931 = vpack.c.bf16 %v2914, %v2912
  %v2932 = vpack.c.bf16 %v2918, %v2916
  %v2934 = vsel %vm288, %v2931, 0
  %v2937 = vsel %vm288, %v2932, 0
  %2939 = vmatprep.subr.bf16.mxu0 0
  %2940 = vmatpush1.bf16.msra.mxu0 %v2832
  %2941 = vmatprep.subr.bf16.mxu0 0
  %2942 = vmatpush1.bf16.msra.mxu0 %v2833
  %2943 = vmatprep.subr.bf16.mxu0 0
  %2944 = vmatpush1.bf16.msra.mxu0 0
  %2945 = vmatprep.subr.bf16.mxu0 0
  %2946 = vmatpush1.bf16.msra.mxu0 0
  %2947 = vmatprep.subr.bf16.mxu0 0
  %2948 = vmatpush1.bf16.msra.mxu0 0
  %2949 = vmatprep.subr.bf16.mxu0 0
  %2950 = vmatpush1.bf16.msra.mxu0 0
  %2951 = vmatprep.subr.bf16.mxu0 0
  %2952 = vmatpush1.bf16.msra.mxu0 0
  %2953 = vmatprep.subr.bf16.mxu0 0
  %2954 = vmatpush1.bf16.msra.mxu0 0
  %2955 = vmatprep.subr.bf16.mxu0 0
  %2956 = vmatpush1.bf16.msra.mxu0 0
  %2957 = vmatprep.subr.bf16.mxu0 0
  %2958 = vmatpush1.bf16.msra.mxu0 0
  %2959 = vmatprep.subr.bf16.mxu0 0
  %2960 = vmatpush1.bf16.msra.mxu0 0
  %2961 = vmatprep.subr.bf16.mxu0 0
  %2962 = vmatpush1.bf16.msra.mxu0 0
  %2963 = vmatprep.subr.bf16.mxu0 0
  %2964 = vmatpush1.bf16.msra.mxu0 0
  %2965 = vmatprep.subr.bf16.mxu0 0
  %2966 = vmatpush1.bf16.msra.mxu0 0
  %2967 = vmatprep.subr.bf16.mxu0 0
  %2968 = vmatpush1.bf16.msra.mxu0 0
  %2969 = vmatprep.subr.bf16.mxu0 0
  %2970 = vmatpush1.bf16.msra.mxu0 0
  %2971 = vmatprep.mubr.bf16.mxu0 0
  %2972 = vmatmul.mubr.bf16.gmra.mrb[0].mxu0 %v2934
  %v2973 = vpop.f32.mrb[0].mxu0
  %v2974 = vadd.f32 0.0, %v2973
  %v2975 = vpop.f32.mrb[0].mxu0
  %v2976 = vpop.f32.mrb[0].mxu0
  %v2977 = vadd.f32 0.0, %v2976
  %v2978 = vpop.f32.mrb[0].mxu0
  %2979 = vmatprep.mubr.bf16.mxu0 0
  %2980 = vmatmul.mubr.bf16.gmra.mrb[0].mxu0 %v2937
  %v2981 = vpop.f32.mrb[0].mxu0
  %v2982 = vadd.f32 0.0, %v2981
  %v2983 = vpop.f32.mrb[0].mxu0
  %v2984 = vpop.f32.mrb[0].mxu0
  %v2985 = vadd.f32 0.0, %v2984
  %v2986 = vpop.f32.mrb[0].mxu0
  %2987 = vdwg.mxu0
  %v2988 = vrcp.pop %v2921
  %v2989 = vrcp.pop %v2924
  %v2990 = vrcp.pop %v2927
  %v2991 = vrcp.pop %v2930
  %v2992 = vmul.f32 %v2974, %v2988
  %v2993 = vmul.f32 %v2977, %v2989
  %v2994 = vmul.f32 %v2982, %v2990
  %v2995 = vmul.f32 %v2985, %v2991
  %v2996 = vpack.c.bf16 %v2993, %v2992
  %v2997 = vpack.c.bf16 %v2995, %v2994
  %s2998 = scalar_lea.vmem %s11, 48
  %v2999 = vld [vmem:[%s2998] sm:$0xf]
  %v3000 = vld [vmem:[%s2998 + $0x4] sm:$0xf]
  %v3001 = vld [vmem:[%s2998 + $0x8] sm:$0xf]
  %v3002 = vld [vmem:[%s2998 + $0xc] sm:$0xf]
  %v3007 = vunpack.c.l.b16 %v2999
  %v3008 = vunpack.c.l.b16 %v3000
  %v3009 = vunpack.c.l.b16 %v3001
  %v3010 = vunpack.c.l.b16 %v3002
  %v3011 = vpack.c.b16 %v3008, %v3007
  %v3012 = vpack.c.b16 %v3010, %v3009
  %v3016 = vsel %vm288, %v2996, 0
  %v3019 = vsel %vm288, %v2997, 0
  %3021 = vmatprep.subr.bf16.mxu0 0
  %3022 = vmatpush1.bf16.msra.mxu0 %v3011
  %3023 = vmatprep.subr.bf16.mxu0 0
  %3024 = vmatpush1.bf16.msra.mxu0 %v3012
  %3025 = vmatprep.subr.bf16.mxu0 0
  %3026 = vmatpush1.bf16.msra.mxu0 0
  %3027 = vmatprep.subr.bf16.mxu0 0
  %3028 = vmatpush1.bf16.msra.mxu0 0
  %3029 = vmatprep.subr.bf16.mxu0 0
  %3030 = vmatpush1.bf16.msra.mxu0 0
  %3031 = vmatprep.subr.bf16.mxu0 0
  %3032 = vmatpush1.bf16.msra.mxu0 0
  %3033 = vmatprep.subr.bf16.mxu0 0
  %3034 = vmatpush1.bf16.msra.mxu0 0
  %3035 = vmatprep.subr.bf16.mxu0 0
  %3036 = vmatpush1.bf16.msra.mxu0 0
  %3037 = vmatprep.subr.bf16.mxu0 0
  %3038 = vmatpush1.bf16.msra.mxu0 0
  %3039 = vmatprep.subr.bf16.mxu0 0
  %3040 = vmatpush1.bf16.msra.mxu0 0
  %3041 = vmatprep.subr.bf16.mxu0 0
  %3042 = vmatpush1.bf16.msra.mxu0 0
  %3043 = vmatprep.subr.bf16.mxu0 0
  %3044 = vmatpush1.bf16.msra.mxu0 0
  %3045 = vmatprep.subr.bf16.mxu0 0
  %3046 = vmatpush1.bf16.msra.mxu0 0
  %3047 = vmatprep.subr.bf16.mxu0 0
  %3048 = vmatpush1.bf16.msra.mxu0 0
  %3049 = vmatprep.subr.bf16.mxu0 0
  %3050 = vmatpush1.bf16.msra.mxu0 0
  %3051 = vmatprep.subr.bf16.mxu0 0
  %3052 = vmatpush1.bf16.msra.mxu0 0
  %3053 = vmatprep.mubr.bf16.mxu0 0
  %3054 = vmatmul.mubr.bf16.gmra.mrb[0].mxu0 %v3016
  %v3055 = vpop.f32.mrb[0].mxu0
  %v3056 = vadd.f32 0.0, %v3055
  %v3057 = vpop.f32.mrb[0].mxu0
  %v3058 = vpop.f32.mrb[0].mxu0
  %v3059 = vadd.f32 0.0, %v3058
  %v3060 = vpop.f32.mrb[0].mxu0
  %3061 = vmatprep.mubr.bf16.mxu0 0
  %3062 = vmatmul.mubr.bf16.gmra.mrb[0].mxu0 %v3019
  %v3063 = vpop.f32.mrb[0].mxu0
  %v3064 = vadd.f32 0.0, %v3063
  %v3065 = vpop.f32.mrb[0].mxu0
  %v3066 = vpop.f32.mrb[0].mxu0
  %v3067 = vadd.f32 0.0, %v3066
  %v3068 = vpop.f32.mrb[0].mxu0
  %3069 = vdwg.mxu0
  %v3070 = vadd.f32 %v2344, %v3056
  %v3071 = vadd.f32 %v2345, %v3059
  %v3072 = vadd.f32 %v2346, %v3064
  %v3073 = vadd.f32 %v2347, %v3067
  %v3074 = vld [vmem:[%s7] sm:$0x1]
  %v3075 = vmul.f32 %v3070, %v3070
  %v3076 = vmul.f32 %v3071, %v3071
  %v3077 = vmul.f32 %v3072, %v3072
  %v3078 = vmul.f32 %v3073, %v3073
  %3079 = vadd.xlane.f32.xlu0 %v3075
  %v3080 = vpop.xlane.xlu0 %3079
  %3081 = vadd.xlane.f32.xlu0 %v3076
  %v3082 = vpop.xlane.xlu0 %3081
  %3083 = vadd.xlane.f32.xlu0 %v3077
  %v3084 = vpop.xlane.xlu0 %3083
  %3085 = vadd.xlane.f32.xlu0 %v3078
  %v3086 = vpop.xlane.xlu0 %3085
  %v3087 = vmul.f32 %v3080, %v132
  %v3088 = vmul.f32 %v3082, %v132
  %v3089 = vmul.f32 %v3084, %v132
  %v3090 = vmul.f32 %v3086, %v132
  %v3091 = vadd.f32 %v3087, 1e-06
  %v3092 = vadd.f32 %v3088, 1e-06
  %v3093 = vadd.f32 %v3089, 1e-06
  %v3094 = vadd.f32 %v3090, 1e-06
  %v3095 = vrsqrt.pop %v3091
  %v3096 = vrsqrt.pop %v3092
  %v3097 = vrsqrt.pop %v3093
  %v3098 = vrsqrt.pop %v3094
  %v3099 = vmul.f32 %v3070, %v3095
  %v3100 = vmul.f32 %v3071, %v3096
  %v3101 = vmul.f32 %v3072, %v3097
  %v3102 = vmul.f32 %v3073, %v3098
  %v3104 = vlaneseq
  %v3105 = vshrl.u32 %v3104, 7
  %v3106 = vsub.s32 0, %v3105
  %v3107 = vrot.slane %v3074, %v3106
  %v3109 = vmul.f32 %v3099, %v3107
  %v3110 = vmul.f32 %v3100, %v3107
  %v3111 = vmul.f32 %v3101, %v3107
  %v3112 = vmul.f32 %v3102, %v3107
  %v3113 = vpack.c.bf16 %v3110, %v3109
  %v3114 = vpack.c.bf16 %v3112, %v3111
  %v3115 = vld [vmem:[%s12] sm:$0xff]
  %v3116 = vld [vmem:[%s12 + $0x8] sm:$0xff]
  %v3117 = vld [vmem:[%s12 + $0x10] sm:$0xff]
  %v3118 = vld [vmem:[%s12 + $0x18] sm:$0xff]
  %v3119 = vld [vmem:[%s12 + $0x20] sm:$0xff]
  %v3120 = vld [vmem:[%s12 + $0x28] sm:$0xff]
  %v3121 = vld [vmem:[%s12 + $0x30] sm:$0xff]
  %v3122 = vld [vmem:[%s12 + $0x38] sm:$0xff]
  %v3123 = vld [vmem:[%s12 + $0x40] sm:$0xff]
  %v3124 = vld [vmem:[%s12 + $0x48] sm:$0xff]
  %v3125 = vld [vmem:[%s12 + $0x50] sm:$0xff]
  %v3126 = vld [vmem:[%s12 + $0x58] sm:$0xff]
  %v3127 = vld [vmem:[%s12 + $0x60] sm:$0xff]
  %v3128 = vld [vmem:[%s12 + $0x68] sm:$0xff]
  %v3129 = vld [vmem:[%s12 + $0x70] sm:$0xff]
  %v3130 = vld [vmem:[%s12 + $0x78] sm:$0xff]
  %v3131 = vld [vmem:[%s12 + $0x80] sm:$0xff]
  %v3132 = vld [vmem:[%s12 + $0x88] sm:$0xff]
  %v3133 = vld [vmem:[%s12 + $0x90] sm:$0xff]
  %v3134 = vld [vmem:[%s12 + $0x98] sm:$0xff]
  %v3135 = vld [vmem:[%s12 + $0xa0] sm:$0xff]
  %v3136 = vld [vmem:[%s12 + $0xa8] sm:$0xff]
  %v3137 = vld [vmem:[%s12 + $0xb0] sm:$0xff]
  %v3138 = vld [vmem:[%s12 + $0xb8] sm:$0xff]
  %v3139 = vld [vmem:[%s12 + $0xc0] sm:$0xff]
  %v3140 = vld [vmem:[%s12 + $0xc8] sm:$0xff]
  %v3141 = vld [vmem:[%s12 + $0xd0] sm:$0xff]
  %v3142 = vld [vmem:[%s12 + $0xd8] sm:$0xff]
  %v3143 = vld [vmem:[%s12 + $0xe0] sm:$0xff]
  %v3144 = vld [vmem:[%s12 + $0xe8] sm:$0xff]
  %v3145 = vld [vmem:[%s12 + $0xf0] sm:$0xff]
  %v3146 = vld [vmem:[%s12 + $0xf8] sm:$0xff]
  %v3179 = vunpack.c.l.b16 %v3115
  %v3180 = vunpack.c.h.b16 %v3115
  %v3181 = vunpack.c.l.b16 %v3116
  %v3182 = vunpack.c.h.b16 %v3116
  %v3183 = vunpack.c.l.b16 %v3117
  %v3184 = vunpack.c.h.b16 %v3117
  %v3185 = vunpack.c.l.b16 %v3118
  %v3186 = vunpack.c.h.b16 %v3118
  %v3187 = vunpack.c.l.b16 %v3119
  %v3188 = vunpack.c.h.b16 %v3119
  %v3189 = vunpack.c.l.b16 %v3120
  %v3190 = vunpack.c.h.b16 %v3120
  %v3191 = vunpack.c.l.b16 %v3121
  %v3192 = vunpack.c.h.b16 %v3121
  %v3193 = vunpack.c.l.b16 %v3122
  %v3194 = vunpack.c.h.b16 %v3122
  %v3195 = vunpack.c.l.b16 %v3123
  %v3196 = vunpack.c.h.b16 %v3123
  %v3197 = vunpack.c.l.b16 %v3124
  %v3198 = vunpack.c.h.b16 %v3124
  %v3199 = vunpack.c.l.b16 %v3125
  %v3200 = vunpack.c.h.b16 %v3125
  %v3201 = vunpack.c.l.b16 %v3126
  %v3202 = vunpack.c.h.b16 %v3126
  %v3203 = vunpack.c.l.b16 %v3127
  %v3204 = vunpack.c.h.b16 %v3127
  %v3205 = vunpack.c.l.b16 %v3128
  %v3206 = vunpack.c.h.b16 %v3128
  %v3207 = vunpack.c.l.b16 %v3129
  %v3208 = vunpack.c.h.b16 %v3129
  %v3209 = vunpack.c.l.b16 %v3130
  %v3210 = vunpack.c.h.b16 %v3130
  %v3211 = vunpack.c.l.b16 %v3131
  %v3212 = vunpack.c.h.b16 %v3131
  %v3213 = vunpack.c.l.b16 %v3132
  %v3214 = vunpack.c.h.b16 %v3132
  %v3215 = vunpack.c.l.b16 %v3133
  %v3216 = vunpack.c.h.b16 %v3133
  %v3217 = vunpack.c.l.b16 %v3134
  %v3218 = vunpack.c.h.b16 %v3134
  %v3219 = vunpack.c.l.b16 %v3135
  %v3220 = vunpack.c.h.b16 %v3135
  %v3221 = vunpack.c.l.b16 %v3136
  %v3222 = vunpack.c.h.b16 %v3136
  %v3223 = vunpack.c.l.b16 %v3137
  %v3224 = vunpack.c.h.b16 %v3137
  %v3225 = vunpack.c.l.b16 %v3138
  %v3226 = vunpack.c.h.b16 %v3138
  %v3227 = vunpack.c.l.b16 %v3139
  %v3228 = vunpack.c.h.b16 %v3139
  %v3229 = vunpack.c.l.b16 %v3140
  %v3230 = vunpack.c.h.b16 %v3140
  %v3231 = vunpack.c.l.b16 %v3141
  %v3232 = vunpack.c.h.b16 %v3141
  %v3233 = vunpack.c.l.b16 %v3142
  %v3234 = vunpack.c.h.b16 %v3142
  %v3235 = vunpack.c.l.b16 %v3143
  %v3236 = vunpack.c.h.b16 %v3143
  %v3237 = vunpack.c.l.b16 %v3144
  %v3238 = vunpack.c.h.b16 %v3144
  %v3239 = vunpack.c.l.b16 %v3145
  %v3240 = vunpack.c.h.b16 %v3145
  %v3241 = vunpack.c.l.b16 %v3146
  %v3242 = vunpack.c.h.b16 %v3146
  %v3243 = vpack.c.b16 %v3183, %v3179
  %v3244 = vpack.c.b16 %v3184, %v3180
  %v3245 = vpack.c.b16 %v3185, %v3181
  %v3246 = vpack.c.b16 %v3186, %v3182
  %v3247 = vpack.c.b16 %v3191, %v3187
  %v3248 = vpack.c.b16 %v3192, %v3188
  %v3249 = vpack.c.b16 %v3193, %v3189
  %v3250 = vpack.c.b16 %v3194, %v3190
  %v3251 = vpack.c.b16 %v3199, %v3195
  %v3252 = vpack.c.b16 %v3200, %v3196
  %v3253 = vpack.c.b16 %v3201, %v3197
  %v3254 = vpack.c.b16 %v3202, %v3198
  %v3255 = vpack.c.b16 %v3207, %v3203
  %v3256 = vpack.c.b16 %v3208, %v3204
  %v3257 = vpack.c.b16 %v3209, %v3205
  %v3258 = vpack.c.b16 %v3210, %v3206
  %v3259 = vpack.c.b16 %v3215, %v3211
  %v3260 = vpack.c.b16 %v3216, %v3212
  %v3261 = vpack.c.b16 %v3217, %v3213
  %v3262 = vpack.c.b16 %v3218, %v3214
  %v3263 = vpack.c.b16 %v3223, %v3219
  %v3264 = vpack.c.b16 %v3224, %v3220
  %v3265 = vpack.c.b16 %v3225, %v3221
  %v3266 = vpack.c.b16 %v3226, %v3222
  %v3267 = vpack.c.b16 %v3231, %v3227
  %v3268 = vpack.c.b16 %v3232, %v3228
  %v3269 = vpack.c.b16 %v3233, %v3229
  %v3270 = vpack.c.b16 %v3234, %v3230
  %v3271 = vpack.c.b16 %v3239, %v3235
  %v3272 = vpack.c.b16 %v3240, %v3236
  %v3273 = vpack.c.b16 %v3241, %v3237
  %v3274 = vpack.c.b16 %v3242, %v3238
  %3307 = vmatprep.subr.bf16.mxu0 %v3244
  %3308 = vmatpush1.bf16.msra.mxu0 %v3243
  %3309 = vmatprep.subr.bf16.mxu0 %v3248
  %3310 = vmatpush1.bf16.msra.mxu0 %v3247
  %3311 = vmatprep.subr.bf16.mxu0 %v3252
  %3312 = vmatpush1.bf16.msra.mxu0 %v3251
  %3313 = vmatprep.subr.bf16.mxu0 %v3256
  %3314 = vmatpush1.bf16.msra.mxu0 %v3255
  %3315 = vmatprep.subr.bf16.mxu0 %v3260
  %3316 = vmatpush1.bf16.msra.mxu0 %v3259
  %3317 = vmatprep.subr.bf16.mxu0 %v3264
  %3318 = vmatpush1.bf16.msra.mxu0 %v3263
  %3319 = vmatprep.subr.bf16.mxu0 %v3268
  %3320 = vmatpush1.bf16.msra.mxu0 %v3267
  %3321 = vmatprep.subr.bf16.mxu0 %v3272
  %3322 = vmatpush1.bf16.msra.mxu0 %v3271
  %3323 = vmatprep.subr.bf16.mxu0 0
  %3324 = vmatpush1.bf16.msra.mxu0 0
  %3325 = vmatprep.subr.bf16.mxu0 0
  %3326 = vmatpush1.bf16.msra.mxu0 0
  %3327 = vmatprep.subr.bf16.mxu0 0
  %3328 = vmatpush1.bf16.msra.mxu0 0
  %3329 = vmatprep.subr.bf16.mxu0 0
  %3330 = vmatpush1.bf16.msra.mxu0 0
  %3331 = vmatprep.subr.bf16.mxu0 0
  %3332 = vmatpush1.bf16.msra.mxu0 0
  %3333 = vmatprep.subr.bf16.mxu0 0
  %3334 = vmatpush1.bf16.msra.mxu0 0
  %3335 = vmatprep.subr.bf16.mxu0 0
  %3336 = vmatpush1.bf16.msra.mxu0 0
  %3337 = vmatprep.subr.bf16.mxu0 0
  %3338 = vmatpush1.bf16.msra.mxu0 0
  %3339 = vmatprep.mubr.bf16.mxu0 0
  %3340 = vmatmul.mubr.bf16.gmra.mrb[0].mxu0 %v3113
  %v3341 = vpop.f32.mrb[0].mxu0
  %v3342 = vadd.f32 0.0, %v3341
  %v3343 = vpop.f32.mrb[0].mxu0
  %v3344 = vadd.f32 0.0, %v3343
  %v3345 = vpop.f32.mrb[0].mxu0
  %v3346 = vadd.f32 0.0, %v3345
  %v3347 = vpop.f32.mrb[0].mxu0
  %v3348 = vadd.f32 0.0, %v3347
  %3349 = vmatprep.mubr.bf16.mxu0 0
  %3350 = vmatmul.mubr.bf16.gmra.mrb[0].mxu0 %v3114
  %v3351 = vpop.f32.mrb[0].mxu0
  %v3352 = vadd.f32 0.0, %v3351
  %v3353 = vpop.f32.mrb[0].mxu0
  %v3354 = vadd.f32 0.0, %v3353
  %v3355 = vpop.f32.mrb[0].mxu0
  %v3356 = vadd.f32 0.0, %v3355
  %v3357 = vpop.f32.mrb[0].mxu0
  %v3358 = vadd.f32 0.0, %v3357
  %3359 = vdwg.mxu0
  %3360 = vmatprep.subr.bf16.mxu0 %v3246
  %3361 = vmatpush1.bf16.msra.mxu0 %v3245
  %3362 = vmatprep.subr.bf16.mxu0 %v3250
  %3363 = vmatpush1.bf16.msra.mxu0 %v3249
  %3364 = vmatprep.subr.bf16.mxu0 %v3254
  %3365 = vmatpush1.bf16.msra.mxu0 %v3253
  %3366 = vmatprep.subr.bf16.mxu0 %v3258
  %3367 = vmatpush1.bf16.msra.mxu0 %v3257
  %3368 = vmatprep.subr.bf16.mxu0 %v3262
  %3369 = vmatpush1.bf16.msra.mxu0 %v3261
  %3370 = vmatprep.subr.bf16.mxu0 %v3266
  %3371 = vmatpush1.bf16.msra.mxu0 %v3265
  %3372 = vmatprep.subr.bf16.mxu0 %v3270
  %3373 = vmatpush1.bf16.msra.mxu0 %v3269
  %3374 = vmatprep.subr.bf16.mxu0 %v3274
  %3375 = vmatpush1.bf16.msra.mxu0 %v3273
  %3376 = vmatprep.subr.bf16.mxu0 0
  %3377 = vmatpush1.bf16.msra.mxu0 0
  %3378 = vmatprep.subr.bf16.mxu0 0
  %3379 = vmatpush1.bf16.msra.mxu0 0
  %3380 = vmatprep.subr.bf16.mxu0 0
  %3381 = vmatpush1.bf16.msra.mxu0 0
  %3382 = vmatprep.subr.bf16.mxu0 0
  %3383 = vmatpush1.bf16.msra.mxu0 0
  %3384 = vmatprep.subr.bf16.mxu0 0
  %3385 = vmatpush1.bf16.msra.mxu0 0
  %3386 = vmatprep.subr.bf16.mxu0 0
  %3387 = vmatpush1.bf16.msra.mxu0 0
  %3388 = vmatprep.subr.bf16.mxu0 0
  %3389 = vmatpush1.bf16.msra.mxu0 0
  %3390 = vmatprep.subr.bf16.mxu0 0
  %3391 = vmatpush1.bf16.msra.mxu0 0
  %3392 = vmatprep.mubr.bf16.mxu0 0
  %3393 = vmatmul.mubr.bf16.gmra.mrb[0].mxu0 %v3113
  %v3394 = vpop.f32.mrb[0].mxu0
  %v3395 = vadd.f32 0.0, %v3394
  %v3396 = vpop.f32.mrb[0].mxu0
  %v3397 = vadd.f32 0.0, %v3396
  %v3398 = vpop.f32.mrb[0].mxu0
  %v3399 = vadd.f32 0.0, %v3398
  %v3400 = vpop.f32.mrb[0].mxu0
  %v3401 = vadd.f32 0.0, %v3400
  %3402 = vmatprep.mubr.bf16.mxu0 0
  %3403 = vmatmul.mubr.bf16.gmra.mrb[0].mxu0 %v3114
  %v3404 = vpop.f32.mrb[0].mxu0
  %v3405 = vadd.f32 0.0, %v3404
  %v3406 = vpop.f32.mrb[0].mxu0
  %v3407 = vadd.f32 0.0, %v3406
  %v3408 = vpop.f32.mrb[0].mxu0
  %v3409 = vadd.f32 0.0, %v3408
  %v3410 = vpop.f32.mrb[0].mxu0
  %v3411 = vadd.f32 0.0, %v3410
  %3412 = vdwg.mxu0
  %v3413 = vxor.u32 %v3342, 2147483648
  %v3414 = vxor.u32 %v3344, 2147483648
  %v3415 = vxor.u32 %v3346, 2147483648
  %v3416 = vxor.u32 %v3348, 2147483648
  %v3417 = vxor.u32 %v3352, 2147483648
  %v3418 = vxor.u32 %v3354, 2147483648
  %v3419 = vxor.u32 %v3356, 2147483648
  %v3420 = vxor.u32 %v3358, 2147483648
  %v3421 = vmul.f32 %v3413, 1.442695
  %v3422 = vpow.pop %v3421
  %v3423 = vmul.f32 %v3414, 1.442695
  %v3424 = vpow.pop %v3423
  %v3425 = vmul.f32 %v3415, 1.442695
  %v3426 = vpow.pop %v3425
  %v3427 = vmul.f32 %v3416, 1.442695
  %v3428 = vpow.pop %v3427
  %v3429 = vmul.f32 %v3417, 1.442695
  %v3430 = vpow.pop %v3429
  %v3431 = vmul.f32 %v3418, 1.442695
  %v3432 = vpow.pop %v3431
  %v3433 = vmul.f32 %v3419, 1.442695
  %v3434 = vpow.pop %v3433
  %v3435 = vmul.f32 %v3420, 1.442695
  %v3436 = vpow.pop %v3435
  %v3437 = vadd.f32 %v3422, 1.0
  %v3438 = vadd.f32 %v3424, 1.0
  %v3439 = vadd.f32 %v3426, 1.0
  %v3440 = vadd.f32 %v3428, 1.0
  %v3441 = vadd.f32 %v3430, 1.0
  %v3442 = vadd.f32 %v3432, 1.0
  %v3443 = vadd.f32 %v3434, 1.0
  %v3444 = vadd.f32 %v3436, 1.0
  %v3445 = vrcp.pop %v3437
  %v3446 = vmul.f32 1.0, %v3445
  %v3447 = vrcp.pop %v3438
  %v3448 = vmul.f32 1.0, %v3447
  %v3449 = vrcp.pop %v3439
  %v3450 = vmul.f32 1.0, %v3449
  %v3451 = vrcp.pop %v3440
  %v3452 = vmul.f32 1.0, %v3451
  %v3453 = vrcp.pop %v3441
  %v3454 = vmul.f32 1.0, %v3453
  %v3455 = vrcp.pop %v3442
  %v3456 = vmul.f32 1.0, %v3455
  %v3457 = vrcp.pop %v3443
  %v3458 = vmul.f32 1.0, %v3457
  %v3459 = vrcp.pop %v3444
  %v3460 = vmul.f32 1.0, %v3459
  %v3461 = vmul.f32 %v3342, %v3446
  %v3462 = vmul.f32 %v3344, %v3448
  %v3463 = vmul.f32 %v3346, %v3450
  %v3464 = vmul.f32 %v3348, %v3452
  %v3465 = vmul.f32 %v3352, %v3454
  %v3466 = vmul.f32 %v3354, %v3456
  %v3467 = vmul.f32 %v3356, %v3458
  %v3468 = vmul.f32 %v3358, %v3460
  %v3469 = vmul.f32 %v3461, %v3395
  %v3470 = vmul.f32 %v3462, %v3397
  %v3471 = vmul.f32 %v3463, %v3399
  %v3472 = vmul.f32 %v3464, %v3401
  %v3473 = vmul.f32 %v3465, %v3405
  %v3474 = vmul.f32 %v3466, %v3407
  %v3475 = vmul.f32 %v3467, %v3409
  %v3476 = vmul.f32 %v3468, %v3411
  %v3477 = vpack.c.bf16 %v3471, %v3469
  %v3478 = vpack.c.bf16 %v3472, %v3470
  %v3479 = vpack.c.bf16 %v3475, %v3473
  %v3480 = vpack.c.bf16 %v3476, %v3474
  %v3481 = vld [vmem:[%s13] sm:$0xf]
  %v3482 = vld [vmem:[%s13 + $0x4] sm:$0xf]
  %v3483 = vld [vmem:[%s13 + $0x8] sm:$0xf]
  %v3484 = vld [vmem:[%s13 + $0xc] sm:$0xf]
  %v3485 = vld [vmem:[%s13 + $0x10] sm:$0xf]
  %v3486 = vld [vmem:[%s13 + $0x14] sm:$0xf]
  %v3487 = vld [vmem:[%s13 + $0x18] sm:$0xf]
  %v3488 = vld [vmem:[%s13 + $0x1c] sm:$0xf]
  %v3489 = vld [vmem:[%s13 + $0x20] sm:$0xf]
  %v3490 = vld [vmem:[%s13 + $0x24] sm:$0xf]
  %v3491 = vld [vmem:[%s13 + $0x28] sm:$0xf]
  %v3492 = vld [vmem:[%s13 + $0x2c] sm:$0xf]
  %v3493 = vld [vmem:[%s13 + $0x30] sm:$0xf]
  %v3494 = vld [vmem:[%s13 + $0x34] sm:$0xf]
  %v3495 = vld [vmem:[%s13 + $0x38] sm:$0xf]
  %v3496 = vld [vmem:[%s13 + $0x3c] sm:$0xf]
  %v3497 = vld [vmem:[%s13 + $0x40] sm:$0xf]
  %v3498 = vld [vmem:[%s13 + $0x44] sm:$0xf]
  %v3499 = vld [vmem:[%s13 + $0x48] sm:$0xf]
  %v3500 = vld [vmem:[%s13 + $0x4c] sm:$0xf]
  %v3501 = vld [vmem:[%s13 + $0x50] sm:$0xf]
  %v3502 = vld [vmem:[%s13 + $0x54] sm:$0xf]
  %v3503 = vld [vmem:[%s13 + $0x58] sm:$0xf]
  %v3504 = vld [vmem:[%s13 + $0x5c] sm:$0xf]
  %v3505 = vld [vmem:[%s13 + $0x60] sm:$0xf]
  %v3506 = vld [vmem:[%s13 + $0x64] sm:$0xf]
  %v3507 = vld [vmem:[%s13 + $0x68] sm:$0xf]
  %v3508 = vld [vmem:[%s13 + $0x6c] sm:$0xf]
  %v3509 = vld [vmem:[%s13 + $0x70] sm:$0xf]
  %v3510 = vld [vmem:[%s13 + $0x74] sm:$0xf]
  %v3511 = vld [vmem:[%s13 + $0x78] sm:$0xf]
  %v3512 = vld [vmem:[%s13 + $0x7c] sm:$0xf]
  %v3545 = vunpack.c.l.b16 %v3481
  %v3546 = vunpack.c.l.b16 %v3482
  %v3547 = vunpack.c.l.b16 %v3483
  %v3548 = vunpack.c.l.b16 %v3484
  %v3549 = vunpack.c.l.b16 %v3485
  %v3550 = vunpack.c.l.b16 %v3486
  %v3551 = vunpack.c.l.b16 %v3487
  %v3552 = vunpack.c.l.b16 %v3488
  %v3553 = vunpack.c.l.b16 %v3489
  %v3554 = vunpack.c.l.b16 %v3490
  %v3555 = vunpack.c.l.b16 %v3491
  %v3556 = vunpack.c.l.b16 %v3492
  %v3557 = vunpack.c.l.b16 %v3493
  %v3558 = vunpack.c.l.b16 %v3494
  %v3559 = vunpack.c.l.b16 %v3495
  %v3560 = vunpack.c.l.b16 %v3496
  %v3561 = vunpack.c.l.b16 %v3497
  %v3562 = vunpack.c.l.b16 %v3498
  %v3563 = vunpack.c.l.b16 %v3499
  %v3564 = vunpack.c.l.b16 %v3500
  %v3565 = vunpack.c.l.b16 %v3501
  %v3566 = vunpack.c.l.b16 %v3502
  %v3567 = vunpack.c.l.b16 %v3503
  %v3568 = vunpack.c.l.b16 %v3504
  %v3569 = vunpack.c.l.b16 %v3505
  %v3570 = vunpack.c.l.b16 %v3506
  %v3571 = vunpack.c.l.b16 %v3507
  %v3572 = vunpack.c.l.b16 %v3508
  %v3573 = vunpack.c.l.b16 %v3509
  %v3574 = vunpack.c.l.b16 %v3510
  %v3575 = vunpack.c.l.b16 %v3511
  %v3576 = vunpack.c.l.b16 %v3512
  %v3577 = vpack.c.b16 %v3546, %v3545
  %v3578 = vpack.c.b16 %v3548, %v3547
  %v3579 = vpack.c.b16 %v3550, %v3549
  %v3580 = vpack.c.b16 %v3552, %v3551
  %v3581 = vpack.c.b16 %v3554, %v3553
  %v3582 = vpack.c.b16 %v3556, %v3555
  %v3583 = vpack.c.b16 %v3558, %v3557
  %v3584 = vpack.c.b16 %v3560, %v3559
  %v3585 = vpack.c.b16 %v3562, %v3561
  %v3586 = vpack.c.b16 %v3564, %v3563
  %v3587 = vpack.c.b16 %v3566, %v3565
  %v3588 = vpack.c.b16 %v3568, %v3567
  %v3589 = vpack.c.b16 %v3570, %v3569
  %v3590 = vpack.c.b16 %v3572, %v3571
  %v3591 = vpack.c.b16 %v3574, %v3573
  %v3592 = vpack.c.b16 %v3576, %v3575
  %3609 = vmatprep.subr.bf16.mxu0 0
  %3610 = vmatpush1.bf16.msra.mxu0 %v3577
  %3611 = vmatprep.subr.bf16.mxu0 0
  %3612 = vmatpush1.bf16.msra.mxu0 %v3578
  %3613 = vmatprep.subr.bf16.mxu0 0
  %3614 = vmatpush1.bf16.msra.mxu0 %v3579
  %3615 = vmatprep.subr.bf16.mxu0 0
  %3616 = vmatpush1.bf16.msra.mxu0 %v3580
  %3617 = vmatprep.subr.bf16.mxu0 0
  %3618 = vmatpush1.bf16.msra.mxu0 %v3581
  %3619 = vmatprep.subr.bf16.mxu0 0
  %3620 = vmatpush1.bf16.msra.mxu0 %v3582
  %3621 = vmatprep.subr.bf16.mxu0 0
  %3622 = vmatpush1.bf16.msra.mxu0 %v3583
  %3623 = vmatprep.subr.bf16.mxu0 0
  %3624 = vmatpush1.bf16.msra.mxu0 %v3584
  %3625 = vmatprep.subr.bf16.mxu0 0
  %3626 = vmatpush1.bf16.msra.mxu0 %v3585
  %3627 = vmatprep.subr.bf16.mxu0 0
  %3628 = vmatpush1.bf16.msra.mxu0 %v3586
  %3629 = vmatprep.subr.bf16.mxu0 0
  %3630 = vmatpush1.bf16.msra.mxu0 %v3587
  %3631 = vmatprep.subr.bf16.mxu0 0
  %3632 = vmatpush1.bf16.msra.mxu0 %v3588
  %3633 = vmatprep.subr.bf16.mxu0 0
  %3634 = vmatpush1.bf16.msra.mxu0 %v3589
  %3635 = vmatprep.subr.bf16.mxu0 0
  %3636 = vmatpush1.bf16.msra.mxu0 %v3590
  %3637 = vmatprep.subr.bf16.mxu0 0
  %3638 = vmatpush1.bf16.msra.mxu0 %v3591
  %3639 = vmatprep.subr.bf16.mxu0 0
  %3640 = vmatpush1.bf16.msra.mxu0 %v3592
  %3641 = vmatprep.mubr.bf16.mxu0 %v3478
  %3642 = vmatmul.mubr.bf16.gmra.mrb[0].mxu0 %v3477
  %v3643 = vpop.f32.mrb[0].mxu0
  %v3644 = vadd.f32 0.0, %v3643
  %v3645 = vpop.f32.mrb[0].mxu0
  %v3646 = vpop.f32.mrb[0].mxu0
  %v3647 = vadd.f32 0.0, %v3646
  %v3648 = vpop.f32.mrb[0].mxu0
  %3649 = vmatprep.mubr.bf16.mxu0 %v3480
  %3650 = vmatmul.mubr.bf16.gmra.mrb[0].mxu0 %v3479
  %v3651 = vpop.f32.mrb[0].mxu0
  %v3652 = vadd.f32 0.0, %v3651
  %v3653 = vpop.f32.mrb[0].mxu0
  %v3654 = vpop.f32.mrb[0].mxu0
  %v3655 = vadd.f32 0.0, %v3654
  %v3656 = vpop.f32.mrb[0].mxu0
  %3657 = vdwg.mxu0
  %v3658 = vadd.f32 %v3070, %v3644
  %v3659 = vadd.f32 %v3071, %v3647
  %v3660 = vadd.f32 %v3072, %v3652
  %v3661 = vadd.f32 %v3073, %v3655
  %s3662 = scalar_lea.vmem %s6, 1
  %v3663 = vld [vmem:[%s3662] sm:$0x1]
  %v3664 = vmul.f32 %v3658, %v3658
  %v3665 = vmul.f32 %v3659, %v3659
  %v3666 = vmul.f32 %v3660, %v3660
  %v3667 = vmul.f32 %v3661, %v3661
  %3668 = vadd.xlane.f32.xlu0 %v3664
  %v3669 = vpop.xlane.xlu0 %3668
  %3670 = vadd.xlane.f32.xlu0 %v3665
  %v3671 = vpop.xlane.xlu0 %3670
  %3672 = vadd.xlane.f32.xlu0 %v3666
  %v3673 = vpop.xlane.xlu0 %3672
  %3674 = vadd.xlane.f32.xlu0 %v3667
  %v3675 = vpop.xlane.xlu0 %3674
  %v3676 = vmul.f32 %v3669, %v132
  %v3677 = vmul.f32 %v3671, %v132
  %v3678 = vmul.f32 %v3673, %v132
  %v3679 = vmul.f32 %v3675, %v132
  %v3680 = vadd.f32 %v3676, 1e-06
  %v3681 = vadd.f32 %v3677, 1e-06
  %v3682 = vadd.f32 %v3678, 1e-06
  %v3683 = vadd.f32 %v3679, 1e-06
  %v3684 = vrsqrt.pop %v3680
  %v3685 = vrsqrt.pop %v3681
  %v3686 = vrsqrt.pop %v3682
  %v3687 = vrsqrt.pop %v3683
  %v3688 = vmul.f32 %v3658, %v3684
  %v3689 = vmul.f32 %v3659, %v3685
  %v3690 = vmul.f32 %v3660, %v3686
  %v3691 = vmul.f32 %v3661, %v3687
  %v3693 = vlaneseq
  %v3694 = vshrl.u32 %v3693, 7
  %v3695 = vsub.s32 0, %v3694
  %v3696 = vrot.slane %v3663, %v3695
  %v3698 = vmul.f32 %v3688, %v3696
  %v3699 = vmul.f32 %v3689, %v3696
  %v3700 = vmul.f32 %v3690, %v3696
  %v3701 = vmul.f32 %v3691, %v3696
  %v3702 = vpack.c.bf16 %v3699, %v3698
  %v3703 = vpack.c.bf16 %v3701, %v3700
  %s3704 = scalar_lea.vmem %s8, 256
  %v3705 = vld [vmem:[%s3704] sm:$0xf]
  %v3706 = vld [vmem:[%s3704 + $0x4] sm:$0xf]
  %v3707 = vld [vmem:[%s3704 + $0x8] sm:$0xf]
  %v3708 = vld [vmem:[%s3704 + $0xc] sm:$0xf]
  %v3709 = vld [vmem:[%s3704 + $0x10] sm:$0xf]
  %v3710 = vld [vmem:[%s3704 + $0x14] sm:$0xf]
  %v3711 = vld [vmem:[%s3704 + $0x18] sm:$0xf]
  %v3712 = vld [vmem:[%s3704 + $0x1c] sm:$0xf]
  %v3713 = vld [vmem:[%s3704 + $0x20] sm:$0xf]
  %v3714 = vld [vmem:[%s3704 + $0x24] sm:$0xf]
  %v3715 = vld [vmem:[%s3704 + $0x28] sm:$0xf]
  %v3716 = vld [vmem:[%s3704 + $0x2c] sm:$0xf]
  %v3717 = vld [vmem:[%s3704 + $0x30] sm:$0xf]
  %v3718 = vld [vmem:[%s3704 + $0x34] sm:$0xf]
  %v3719 = vld [vmem:[%s3704 + $0x38] sm:$0xf]
  %v3720 = vld [vmem:[%s3704 + $0x3c] sm:$0xf]
  %v3737 = vunpack.c.l.b16 %v3705
  %v3738 = vunpack.c.l.b16 %v3706
  %v3739 = vunpack.c.l.b16 %v3707
  %v3740 = vunpack.c.l.b16 %v3708
  %v3741 = vunpack.c.l.b16 %v3709
  %v3742 = vunpack.c.l.b16 %v3710
  %v3743 = vunpack.c.l.b16 %v3711
  %v3744 = vunpack.c.l.b16 %v3712
  %v3745 = vunpack.c.l.b16 %v3713
  %v3746 = vunpack.c.l.b16 %v3714
  %v3747 = vunpack.c.l.b16 %v3715
  %v3748 = vunpack.c.l.b16 %v3716
  %v3749 = vunpack.c.l.b16 %v3717
  %v3750 = vunpack.c.l.b16 %v3718
  %v3751 = vunpack.c.l.b16 %v3719
  %v3752 = vunpack.c.l.b16 %v3720
  %v3753 = vpack.c.b16 %v3738, %v3737
  %v3754 = vpack.c.b16 %v3740, %v3739
  %v3755 = vpack.c.b16 %v3742, %v3741
  %v3756 = vpack.c.b16 %v3744, %v3743
  %v3757 = vpack.c.b16 %v3746, %v3745
  %v3758 = vpack.c.b16 %v3748, %v3747
  %v3759 = vpack.c.b16 %v3750, %v3749
  %v3760 = vpack.c.b16 %v3752, %v3751
  %3769 = vmatprep.subr.bf16.mxu0 0
  %3770 = vmatpush1.bf16.msra.mxu0 %v3753
  %3771 = vmatprep.subr.bf16.mxu0 0
  %3772 = vmatpush1.bf16.msra.mxu0 %v3754
  %3773 = vmatprep.subr.bf16.mxu0 0
  %3774 = vmatpush1.bf16.msra.mxu0 %v3755
  %3775 = vmatprep.subr.bf16.mxu0 0
  %3776 = vmatpush1.bf16.msra.mxu0 %v3756
  %3777 = vmatprep.subr.bf16.mxu0 0
  %3778 = vmatpush1.bf16.msra.mxu0 %v3757
  %3779 = vmatprep.subr.bf16.mxu0 0
  %3780 = vmatpush1.bf16.msra.mxu0 %v3758
  %3781 = vmatprep.subr.bf16.mxu0 0
  %3782 = vmatpush1.bf16.msra.mxu0 %v3759
  %3783 = vmatprep.subr.bf16.mxu0 0
  %3784 = vmatpush1.bf16.msra.mxu0 %v3760
  %3785 = vmatprep.subr.bf16.mxu0 0
  %3786 = vmatpush1.bf16.msra.mxu0 0
  %3787 = vmatprep.subr.bf16.mxu0 0
  %3788 = vmatpush1.bf16.msra.mxu0 0
  %3789 = vmatprep.subr.bf16.mxu0 0
  %3790 = vmatpush1.bf16.msra.mxu0 0
  %3791 = vmatprep.subr.bf16.mxu0 0
  %3792 = vmatpush1.bf16.msra.mxu0 0
  %3793 = vmatprep.subr.bf16.mxu0 0
  %3794 = vmatpush1.bf16.msra.mxu0 0
  %3795 = vmatprep.subr.bf16.mxu0 0
  %3796 = vmatpush1.bf16.msra.mxu0 0
  %3797 = vmatprep.subr.bf16.mxu0 0
  %3798 = vmatpush1.bf16.msra.mxu0 0
  %3799 = vmatprep.subr.bf16.mxu0 0
  %3800 = vmatpush1.bf16.msra.mxu0 0
  %3801 = vmatprep.mubr.bf16.mxu0 0
  %3802 = vmatmul.mubr.bf16.gmra.mrb[0].mxu0 %v3702
  %v3803 = vpop.f32.mrb[0].mxu0
  %v3804 = vadd.f32 0.0, %v3803
  %v3805 = vpop.f32.mrb[0].mxu0
  %v3806 = vpop.f32.mrb[0].mxu0
  %v3807 = vadd.f32 0.0, %v3806
  %v3808 = vpop.f32.mrb[0].mxu0
  %3809 = vmatprep.mubr.bf16.mxu0 0
  %3810 = vmatmul.mubr.bf16.gmra.mrb[0].mxu0 %v3703
  %v3811 = vpop.f32.mrb[0].mxu0
  %v3812 = vadd.f32 0.0, %v3811
  %v3813 = vpop.f32.mrb[0].mxu0
  %v3814 = vpop.f32.mrb[0].mxu0
  %v3815 = vadd.f32 0.0, %v3814
  %v3816 = vpop.f32.mrb[0].mxu0
  %3817 = vdwg.mxu0
  %v3818 = vpack.c.bf16 %v3807, %v3804
  %v3819 = vpack.c.bf16 %v3815, %v3812
  %v3821 = vsel %vm288, %v3818, 0
  %v3824 = vsel %vm288, %v3819, 0
  %3826 = vmatprep.subr.bf16.mxu0 0
  %3827 = vmatpush1.bf16.msra.mxu0 %v284
  %3828 = vmatprep.subr.bf16.mxu0 0
  %3829 = vmatpush1.bf16.msra.mxu0 %v285
  %3830 = vmatprep.subr.bf16.mxu0 0
  %3831 = vmatpush1.bf16.msra.mxu0 0
  %3832 = vmatprep.subr.bf16.mxu0 0
  %3833 = vmatpush1.bf16.msra.mxu0 0
  %3834 = vmatprep.subr.bf16.mxu0 0
  %3835 = vmatpush1.bf16.msra.mxu0 0
  %3836 = vmatprep.subr.bf16.mxu0 0
  %3837 = vmatpush1.bf16.msra.mxu0 0
  %3838 = vmatprep.subr.bf16.mxu0 0
  %3839 = vmatpush1.bf16.msra.mxu0 0
  %3840 = vmatprep.subr.bf16.mxu0 0
  %3841 = vmatpush1.bf16.msra.mxu0 0
  %3842 = vmatprep.subr.bf16.mxu0 0
  %3843 = vmatpush1.bf16.msra.mxu0 0
  %3844 = vmatprep.subr.bf16.mxu0 0
  %3845 = vmatpush1.bf16.msra.mxu0 0
  %3846 = vmatprep.subr.bf16.mxu0 0
  %3847 = vmatpush1.bf16.msra.mxu0 0
  %3848 = vmatprep.subr.bf16.mxu0 0
  %3849 = vmatpush1.bf16.msra.mxu0 0
  %3850 = vmatprep.subr.bf16.mxu0 0
  %3851 = vmatpush1.bf16.msra.mxu0 0
  %3852 = vmatprep.subr.bf16.mxu0 0
  %3853 = vmatpush1.bf16.msra.mxu0 0
  %3854 = vmatprep.subr.bf16.mxu0 0
  %3855 = vmatpush1.bf16.msra.mxu0 0
  %3856 = vmatprep.subr.bf16.mxu0 0
  %3857 = vmatpush1.bf16.msra.mxu0 0
  %3858 = vmatprep.mubr.bf16.mxu0 0
  %3859 = vmatmul.mubr.bf16.gmra.mrb[0].mxu0 %v3821
  %v3860 = vpop.f32.mrb[0].mxu0
  %v3861 = vadd.f32 0.0, %v3860
  %v3862 = vpop.f32.mrb[0].mxu0
  %v3863 = vpop.f32.mrb[0].mxu0
  %v3864 = vadd.f32 0.0, %v3863
  %v3865 = vpop.f32.mrb[0].mxu0
  %3866 = vmatprep.mubr.bf16.mxu0 0
  %3867 = vmatmul.mubr.bf16.gmra.mrb[0].mxu0 %v3824
  %v3868 = vpop.f32.mrb[0].mxu0
  %v3869 = vadd.f32 0.0, %v3868
  %v3870 = vpop.f32.mrb[0].mxu0
  %v3871 = vpop.f32.mrb[0].mxu0
  %v3872 = vadd.f32 0.0, %v3871
  %v3873 = vpop.f32.mrb[0].mxu0
  %3874 = vdwg.mxu0
  %v3875 = vmul.f32 %v3804, %v62
  %v3876 = vmul.f32 %v3807, %v63
  %v3877 = vmul.f32 %v3812, %v64
  %v3878 = vmul.f32 %v3815, %v65
  %v3879 = vmul.f32 %v3861, %v66
  %v3880 = vmul.f32 %v3864, %v67
  %v3881 = vmul.f32 %v3869, %v68
  %v3882 = vmul.f32 %v3872, %v69
  %v3883 = vadd.f32 %v3875, %v3879
  %v3884 = vadd.f32 %v3876, %v3880
  %v3885 = vadd.f32 %v3877, %v3881
  %v3886 = vadd.f32 %v3878, %v3882
  %v3887 = vpack.c.bf16 %v3884, %v3883
  %v3888 = vpack.c.bf16 %v3886, %v3885
  %s3889 = scalar_lea.vmem %s9, 256
  %v3890 = vld [vmem:[%s3889] sm:$0xf]
  %v3891 = vld [vmem:[%s3889 + $0x4] sm:$0xf]
  %v3892 = vld [vmem:[%s3889 + $0x8] sm:$0xf]
  %v3893 = vld [vmem:[%s3889 + $0xc] sm:$0xf]
  %v3894 = vld [vmem:[%s3889 + $0x10] sm:$0xf]
  %v3895 = vld [vmem:[%s3889 + $0x14] sm:$0xf]
  %v3896 = vld [vmem:[%s3889 + $0x18] sm:$0xf]
  %v3897 = vld [vmem:[%s3889 + $0x1c] sm:$0xf]
  %v3898 = vld [vmem:[%s3889 + $0x20] sm:$0xf]
  %v3899 = vld [vmem:[%s3889 + $0x24] sm:$0xf]
  %v3900 = vld [vmem:[%s3889 + $0x28] sm:$0xf]
  %v3901 = vld [vmem:[%s3889 + $0x2c] sm:$0xf]
  %v3902 = vld [vmem:[%s3889 + $0x30] sm:$0xf]
  %v3903 = vld [vmem:[%s3889 + $0x34] sm:$0xf]
  %v3904 = vld [vmem:[%s3889 + $0x38] sm:$0xf]
  %v3905 = vld [vmem:[%s3889 + $0x3c] sm:$0xf]
  %v3922 = vunpack.c.l.b16 %v3890
  %v3923 = vunpack.c.l.b16 %v3891
  %v3924 = vunpack.c.l.b16 %v3892
  %v3925 = vunpack.c.l.b16 %v3893
  %v3926 = vunpack.c.l.b16 %v3894
  %v3927 = vunpack.c.l.b16 %v3895
  %v3928 = vunpack.c.l.b16 %v3896
  %v3929 = vunpack.c.l.b16 %v3897
  %v3930 = vunpack.c.l.b16 %v3898
  %v3931 = vunpack.c.l.b16 %v3899
  %v3932 = vunpack.c.l.b16 %v3900
  %v3933 = vunpack.c.l.b16 %v3901
  %v3934 = vunpack.c.l.b16 %v3902
  %v3935 = vunpack.c.l.b16 %v3903
  %v3936 = vunpack.c.l.b16 %v3904
  %v3937 = vunpack.c.l.b16 %v3905
  %v3938 = vpack.c.b16 %v3923, %v3922
  %v3939 = vpack.c.b16 %v3925, %v3924
  %v3940 = vpack.c.b16 %v3927, %v3926
  %v3941 = vpack.c.b16 %v3929, %v3928
  %v3942 = vpack.c.b16 %v3931, %v3930
  %v3943 = vpack.c.b16 %v3933, %v3932
  %v3944 = vpack.c.b16 %v3935, %v3934
  %v3945 = vpack.c.b16 %v3937, %v3936
  %3954 = vmatprep.subr.bf16.mxu0 0
  %3955 = vmatpush1.bf16.msra.mxu0 %v3938
  %3956 = vmatprep.subr.bf16.mxu0 0
  %3957 = vmatpush1.bf16.msra.mxu0 %v3939
  %3958 = vmatprep.subr.bf16.mxu0 0
  %3959 = vmatpush1.bf16.msra.mxu0 %v3940
  %3960 = vmatprep.subr.bf16.mxu0 0
  %3961 = vmatpush1.bf16.msra.mxu0 %v3941
  %3962 = vmatprep.subr.bf16.mxu0 0
  %3963 = vmatpush1.bf16.msra.mxu0 %v3942
  %3964 = vmatprep.subr.bf16.mxu0 0
  %3965 = vmatpush1.bf16.msra.mxu0 %v3943
  %3966 = vmatprep.subr.bf16.mxu0 0
  %3967 = vmatpush1.bf16.msra.mxu0 %v3944
  %3968 = vmatprep.subr.bf16.mxu0 0
  %3969 = vmatpush1.bf16.msra.mxu0 %v3945
  %3970 = vmatprep.subr.bf16.mxu0 0
  %3971 = vmatpush1.bf16.msra.mxu0 0
  %3972 = vmatprep.subr.bf16.mxu0 0
  %3973 = vmatpush1.bf16.msra.mxu0 0
  %3974 = vmatprep.subr.bf16.mxu0 0
  %3975 = vmatpush1.bf16.msra.mxu0 0
  %3976 = vmatprep.subr.bf16.mxu0 0
  %3977 = vmatpush1.bf16.msra.mxu0 0
  %3978 = vmatprep.subr.bf16.mxu0 0
  %3979 = vmatpush1.bf16.msra.mxu0 0
  %3980 = vmatprep.subr.bf16.mxu0 0
  %3981 = vmatpush1.bf16.msra.mxu0 0
  %3982 = vmatprep.subr.bf16.mxu0 0
  %3983 = vmatpush1.bf16.msra.mxu0 0
  %3984 = vmatprep.subr.bf16.mxu0 0
  %3985 = vmatpush1.bf16.msra.mxu0 0
  %3986 = vmatprep.mubr.bf16.mxu0 0
  %3987 = vmatmul.mubr.bf16.gmra.mrb[0].mxu0 %v3702
  %v3988 = vpop.f32.mrb[0].mxu0
  %v3989 = vadd.f32 0.0, %v3988
  %v3990 = vpop.f32.mrb[0].mxu0
  %v3991 = vpop.f32.mrb[0].mxu0
  %v3992 = vadd.f32 0.0, %v3991
  %v3993 = vpop.f32.mrb[0].mxu0
  %3994 = vmatprep.mubr.bf16.mxu0 0
  %3995 = vmatmul.mubr.bf16.gmra.mrb[0].mxu0 %v3703
  %v3996 = vpop.f32.mrb[0].mxu0
  %v3997 = vadd.f32 0.0, %v3996
  %v3998 = vpop.f32.mrb[0].mxu0
  %v3999 = vpop.f32.mrb[0].mxu0
  %v4000 = vadd.f32 0.0, %v3999
  %v4001 = vpop.f32.mrb[0].mxu0
  %4002 = vdwg.mxu0
  %v4003 = vpack.c.bf16 %v3992, %v3989
  %v4004 = vpack.c.bf16 %v4000, %v3997
  %v4006 = vsel %vm288, %v4003, 0
  %v4009 = vsel %vm288, %v4004, 0
  %4011 = vmatprep.subr.bf16.mxu0 0
  %4012 = vmatpush1.bf16.msra.mxu0 %v284
  %4013 = vmatprep.subr.bf16.mxu0 0
  %4014 = vmatpush1.bf16.msra.mxu0 %v285
  %4015 = vmatprep.subr.bf16.mxu0 0
  %4016 = vmatpush1.bf16.msra.mxu0 0
  %4017 = vmatprep.subr.bf16.mxu0 0
  %4018 = vmatpush1.bf16.msra.mxu0 0
  %4019 = vmatprep.subr.bf16.mxu0 0
  %4020 = vmatpush1.bf16.msra.mxu0 0
  %4021 = vmatprep.subr.bf16.mxu0 0
  %4022 = vmatpush1.bf16.msra.mxu0 0
  %4023 = vmatprep.subr.bf16.mxu0 0
  %4024 = vmatpush1.bf16.msra.mxu0 0
  %4025 = vmatprep.subr.bf16.mxu0 0
  %4026 = vmatpush1.bf16.msra.mxu0 0
  %4027 = vmatprep.subr.bf16.mxu0 0
  %4028 = vmatpush1.bf16.msra.mxu0 0
  %4029 = vmatprep.subr.bf16.mxu0 0
  %4030 = vmatpush1.bf16.msra.mxu0 0
  %4031 = vmatprep.subr.bf16.mxu0 0
  %4032 = vmatpush1.bf16.msra.mxu0 0
  %4033 = vmatprep.subr.bf16.mxu0 0
  %4034 = vmatpush1.bf16.msra.mxu0 0
  %4035 = vmatprep.subr.bf16.mxu0 0
  %4036 = vmatpush1.bf16.msra.mxu0 0
  %4037 = vmatprep.subr.bf16.mxu0 0
  %4038 = vmatpush1.bf16.msra.mxu0 0
  %4039 = vmatprep.subr.bf16.mxu0 0
  %4040 = vmatpush1.bf16.msra.mxu0 0
  %4041 = vmatprep.subr.bf16.mxu0 0
  %4042 = vmatpush1.bf16.msra.mxu0 0
  %4043 = vmatprep.mubr.bf16.mxu0 0
  %4044 = vmatmul.mubr.bf16.gmra.mrb[0].mxu0 %v4006
  %v4045 = vpop.f32.mrb[0].mxu0
  %v4046 = vadd.f32 0.0, %v4045
  %v4047 = vpop.f32.mrb[0].mxu0
  %v4048 = vpop.f32.mrb[0].mxu0
  %v4049 = vadd.f32 0.0, %v4048
  %v4050 = vpop.f32.mrb[0].mxu0
  %4051 = vmatprep.mubr.bf16.mxu0 0
  %4052 = vmatmul.mubr.bf16.gmra.mrb[0].mxu0 %v4009
  %v4053 = vpop.f32.mrb[0].mxu0
  %v4054 = vadd.f32 0.0, %v4053
  %v4055 = vpop.f32.mrb[0].mxu0
  %v4056 = vpop.f32.mrb[0].mxu0
  %v4057 = vadd.f32 0.0, %v4056
  %v4058 = vpop.f32.mrb[0].mxu0
  %4059 = vdwg.mxu0
  %v4060 = vmul.f32 %v3989, %v62
  %v4061 = vmul.f32 %v3992, %v63
  %v4062 = vmul.f32 %v3997, %v64
  %v4063 = vmul.f32 %v4000, %v65
  %v4064 = vmul.f32 %v4046, %v66
  %v4065 = vmul.f32 %v4049, %v67
  %v4066 = vmul.f32 %v4054, %v68
  %v4067 = vmul.f32 %v4057, %v69
  %v4068 = vadd.f32 %v4060, %v4064
  %v4069 = vadd.f32 %v4061, %v4065
  %v4070 = vadd.f32 %v4062, %v4066
  %v4071 = vadd.f32 %v4063, %v4067
  %v4072 = vpack.c.bf16 %v4069, %v4068
  %v4073 = vpack.c.bf16 %v4071, %v4070
  %s4074 = scalar_lea.vmem %s10, 256
  %v4075 = vld [vmem:[%s4074] sm:$0xf]
  %v4076 = vld [vmem:[%s4074 + $0x4] sm:$0xf]
  %v4077 = vld [vmem:[%s4074 + $0x8] sm:$0xf]
  %v4078 = vld [vmem:[%s4074 + $0xc] sm:$0xf]
  %v4079 = vld [vmem:[%s4074 + $0x10] sm:$0xf]
  %v4080 = vld [vmem:[%s4074 + $0x14] sm:$0xf]
  %v4081 = vld [vmem:[%s4074 + $0x18] sm:$0xf]
  %v4082 = vld [vmem:[%s4074 + $0x1c] sm:$0xf]
  %v4083 = vld [vmem:[%s4074 + $0x20] sm:$0xf]
  %v4084 = vld [vmem:[%s4074 + $0x24] sm:$0xf]
  %v4085 = vld [vmem:[%s4074 + $0x28] sm:$0xf]
  %v4086 = vld [vmem:[%s4074 + $0x2c] sm:$0xf]
  %v4087 = vld [vmem:[%s4074 + $0x30] sm:$0xf]
  %v4088 = vld [vmem:[%s4074 + $0x34] sm:$0xf]
  %v4089 = vld [vmem:[%s4074 + $0x38] sm:$0xf]
  %v4090 = vld [vmem:[%s4074 + $0x3c] sm:$0xf]
  %v4107 = vunpack.c.l.b16 %v4075
  %v4108 = vunpack.c.l.b16 %v4076
  %v4109 = vunpack.c.l.b16 %v4077
  %v4110 = vunpack.c.l.b16 %v4078
  %v4111 = vunpack.c.l.b16 %v4079
  %v4112 = vunpack.c.l.b16 %v4080
  %v4113 = vunpack.c.l.b16 %v4081
  %v4114 = vunpack.c.l.b16 %v4082
  %v4115 = vunpack.c.l.b16 %v4083
  %v4116 = vunpack.c.l.b16 %v4084
  %v4117 = vunpack.c.l.b16 %v4085
  %v4118 = vunpack.c.l.b16 %v4086
  %v4119 = vunpack.c.l.b16 %v4087
  %v4120 = vunpack.c.l.b16 %v4088
  %v4121 = vunpack.c.l.b16 %v4089
  %v4122 = vunpack.c.l.b16 %v4090
  %v4123 = vpack.c.b16 %v4108, %v4107
  %v4124 = vpack.c.b16 %v4110, %v4109
  %v4125 = vpack.c.b16 %v4112, %v4111
  %v4126 = vpack.c.b16 %v4114, %v4113
  %v4127 = vpack.c.b16 %v4116, %v4115
  %v4128 = vpack.c.b16 %v4118, %v4117
  %v4129 = vpack.c.b16 %v4120, %v4119
  %v4130 = vpack.c.b16 %v4122, %v4121
  %4139 = vmatprep.subr.bf16.mxu0 0
  %4140 = vmatpush1.bf16.msra.mxu0 %v4123
  %4141 = vmatprep.subr.bf16.mxu0 0
  %4142 = vmatpush1.bf16.msra.mxu0 %v4124
  %4143 = vmatprep.subr.bf16.mxu0 0
  %4144 = vmatpush1.bf16.msra.mxu0 %v4125
  %4145 = vmatprep.subr.bf16.mxu0 0
  %4146 = vmatpush1.bf16.msra.mxu0 %v4126
  %4147 = vmatprep.subr.bf16.mxu0 0
  %4148 = vmatpush1.bf16.msra.mxu0 %v4127
  %4149 = vmatprep.subr.bf16.mxu0 0
  %4150 = vmatpush1.bf16.msra.mxu0 %v4128
  %4151 = vmatprep.subr.bf16.mxu0 0
  %4152 = vmatpush1.bf16.msra.mxu0 %v4129
  %4153 = vmatprep.subr.bf16.mxu0 0
  %4154 = vmatpush1.bf16.msra.mxu0 %v4130
  %4155 = vmatprep.subr.bf16.mxu0 0
  %4156 = vmatpush1.bf16.msra.mxu0 0
  %4157 = vmatprep.subr.bf16.mxu0 0
  %4158 = vmatpush1.bf16.msra.mxu0 0
  %4159 = vmatprep.subr.bf16.mxu0 0
  %4160 = vmatpush1.bf16.msra.mxu0 0
  %4161 = vmatprep.subr.bf16.mxu0 0
  %4162 = vmatpush1.bf16.msra.mxu0 0
  %4163 = vmatprep.subr.bf16.mxu0 0
  %4164 = vmatpush1.bf16.msra.mxu0 0
  %4165 = vmatprep.subr.bf16.mxu0 0
  %4166 = vmatpush1.bf16.msra.mxu0 0
  %4167 = vmatprep.subr.bf16.mxu0 0
  %4168 = vmatpush1.bf16.msra.mxu0 0
  %4169 = vmatprep.subr.bf16.mxu0 0
  %4170 = vmatpush1.bf16.msra.mxu0 0
  %4171 = vmatprep.mubr.bf16.mxu0 0
  %4172 = vmatmul.mubr.bf16.gmra.mrb[0].mxu0 %v3702
  %v4173 = vpop.f32.mrb[0].mxu0
  %v4174 = vadd.f32 0.0, %v4173
  %v4175 = vpop.f32.mrb[0].mxu0
  %v4176 = vpop.f32.mrb[0].mxu0
  %v4177 = vadd.f32 0.0, %v4176
  %v4178 = vpop.f32.mrb[0].mxu0
  %4179 = vmatprep.mubr.bf16.mxu0 0
  %4180 = vmatmul.mubr.bf16.gmra.mrb[0].mxu0 %v3703
  %v4181 = vpop.f32.mrb[0].mxu0
  %v4182 = vadd.f32 0.0, %v4181
  %v4183 = vpop.f32.mrb[0].mxu0
  %v4184 = vpop.f32.mrb[0].mxu0
  %v4185 = vadd.f32 0.0, %v4184
  %v4186 = vpop.f32.mrb[0].mxu0
  %4187 = vdwg.mxu0
  %v4188 = vpack.c.bf16 %v4177, %v4174
  %v4189 = vpack.c.bf16 %v4185, %v4182
  %v4191 = vsel %vm288, %v3887, 0
  %v4194 = vsel %vm288, %v3888, 0
  %v4197 = vsel %vm288, %v4072, 0
  %v4200 = vsel %vm288, %v4073, 0
  %4202 = vmatprep.subr.bf16.mxu0 0
  %4203 = vmatpush1.bf16.xpose.msra.mxu0 %v4197
  %4204 = vmatprep.subr.bf16.mxu0 0
  %4205 = vmatpush1.bf16.xpose.msra.mxu0 %v4200
  %4206 = vmatprep.subr.bf16.mxu0 0
  %4207 = vmatpush1.bf16.xpose.msra.mxu0 0
  %4208 = vmatprep.subr.bf16.mxu0 0
  %4209 = vmatpush1.bf16.xpose.msra.mxu0 0
  %4210 = vmatprep.subr.bf16.mxu0 0
  %4211 = vmatpush1.bf16.xpose.msra.mxu0 0
  %4212 = vmatprep.subr.bf16.mxu0 0
  %4213 = vmatpush1.bf16.xpose.msra.mxu0 0
  %4214 = vmatprep.subr.bf16.mxu0 0
  %4215 = vmatpush1.bf16.xpose.msra.mxu0 0
  %4216 = vmatprep.subr.bf16.mxu0 0
  %4217 = vmatpush1.bf16.xpose.msra.mxu0 0
  %4218 = vmatprep.subr.bf16.mxu0 0
  %4219 = vmatpush1.bf16.xpose.msra.mxu0 0
  %4220 = vmatprep.subr.bf16.mxu0 0
  %4221 = vmatpush1.bf16.xpose.msra.mxu0 0
  %4222 = vmatprep.subr.bf16.mxu0 0
  %4223 = vmatpush1.bf16.xpose.msra.mxu0 0
  %4224 = vmatprep.subr.bf16.mxu0 0
  %4225 = vmatpush1.bf16.xpose.msra.mxu0 0
  %4226 = vmatprep.subr.bf16.mxu0 0
  %4227 = vmatpush1.bf16.xpose.msra.mxu0 0
  %4228 = vmatprep.subr.bf16.mxu0 0
  %4229 = vmatpush1.bf16.xpose.msra.mxu0 0
  %4230 = vmatprep.subr.bf16.mxu0 0
  %4231 = vmatpush1.bf16.xpose.msra.mxu0 0
  %4232 = vmatprep.subr.bf16.mxu0 0
  %4233 = vmatpush1.bf16.xpose.msra.mxu0 0
  %4234 = vmatprep.mubr.bf16.mxu0 0
  %4235 = vmatmul.mubr.bf16.gmra.mrb[0].mxu0 %v4191
  %v4236 = vpop.f32.mrb[0].mxu0
  %v4237 = vadd.f32 %v115, %v4236
  %v4238 = vpop.f32.mrb[0].mxu0
  %v4239 = vpop.f32.mrb[0].mxu0
  %v4240 = vadd.f32 %v116, %v4239
  %v4241 = vpop.f32.mrb[0].mxu0
  %4242 = vmatprep.mubr.bf16.mxu0 0
  %4243 = vmatmul.mubr.bf16.gmra.mrb[0].mxu0 %v4194
  %v4244 = vpop.f32.mrb[0].mxu0
  %v4245 = vadd.f32 %v117, %v4244
  %v4246 = vpop.f32.mrb[0].mxu0
  %v4247 = vpop.f32.mrb[0].mxu0
  %v4248 = vadd.f32 %v118, %v4247
  %v4249 = vpop.f32.mrb[0].mxu0
  %4250 = vdwg.mxu0
  %v4251 = vsel %vm288, %v4237, -inf
  %4252 = vmax.xlane.f32.xlu0 %v4251
  %v4253 = vpop.xlane.xlu0 %4252
  %v4254 = vsel %vm288, %v4240, -inf
  %4255 = vmax.xlane.f32.xlu0 %v4254
  %v4256 = vpop.xlane.xlu0 %4255
  %v4257 = vsel %vm288, %v4245, -inf
  %4258 = vmax.xlane.f32.xlu0 %v4257
  %v4259 = vpop.xlane.xlu0 %4258
  %v4260 = vsel %vm288, %v4248, -inf
  %4261 = vmax.xlane.f32.xlu0 %v4260
  %v4262 = vpop.xlane.xlu0 %4261
  %v4263 = vsub.f32 %v4237, %v4253
  %v4264 = vsub.f32 %v4240, %v4256
  %v4265 = vsub.f32 %v4245, %v4259
  %v4266 = vsub.f32 %v4248, %v4262
  %v4267 = vmul.f32 %v4263, 1.442695
  %v4268 = vpow.pop %v4267
  %v4269 = vmul.f32 %v4264, 1.442695
  %v4270 = vpow.pop %v4269
  %v4271 = vmul.f32 %v4265, 1.442695
  %v4272 = vpow.pop %v4271
  %v4273 = vmul.f32 %v4266, 1.442695
  %v4274 = vpow.pop %v4273
  %v4275 = vsel %vm288, %v4268, 0.0
  %4276 = vadd.xlane.f32.xlu0 %v4275
  %v4277 = vpop.xlane.xlu0 %4276
  %v4278 = vsel %vm288, %v4270, 0.0
  %4279 = vadd.xlane.f32.xlu0 %v4278
  %v4280 = vpop.xlane.xlu0 %4279
  %v4281 = vsel %vm288, %v4272, 0.0
  %4282 = vadd.xlane.f32.xlu0 %v4281
  %v4283 = vpop.xlane.xlu0 %4282
  %v4284 = vsel %vm288, %v4274, 0.0
  %4285 = vadd.xlane.f32.xlu0 %v4284
  %v4286 = vpop.xlane.xlu0 %4285
  %v4287 = vpack.c.bf16 %v4270, %v4268
  %v4288 = vpack.c.bf16 %v4274, %v4272
  %v4290 = vsel %vm288, %v4287, 0
  %v4293 = vsel %vm288, %v4288, 0
  %4295 = vmatprep.subr.bf16.mxu0 0
  %4296 = vmatpush1.bf16.msra.mxu0 %v4188
  %4297 = vmatprep.subr.bf16.mxu0 0
  %4298 = vmatpush1.bf16.msra.mxu0 %v4189
  %4299 = vmatprep.subr.bf16.mxu0 0
  %4300 = vmatpush1.bf16.msra.mxu0 0
  %4301 = vmatprep.subr.bf16.mxu0 0
  %4302 = vmatpush1.bf16.msra.mxu0 0
  %4303 = vmatprep.subr.bf16.mxu0 0
  %4304 = vmatpush1.bf16.msra.mxu0 0
  %4305 = vmatprep.subr.bf16.mxu0 0
  %4306 = vmatpush1.bf16.msra.mxu0 0
  %4307 = vmatprep.subr.bf16.mxu0 0
  %4308 = vmatpush1.bf16.msra.mxu0 0
  %4309 = vmatprep.subr.bf16.mxu0 0
  %4310 = vmatpush1.bf16.msra.mxu0 0
  %4311 = vmatprep.subr.bf16.mxu0 0
  %4312 = vmatpush1.bf16.msra.mxu0 0
  %4313 = vmatprep.subr.bf16.mxu0 0
  %4314 = vmatpush1.bf16.msra.mxu0 0
  %4315 = vmatprep.subr.bf16.mxu0 0
  %4316 = vmatpush1.bf16.msra.mxu0 0
  %4317 = vmatprep.subr.bf16.mxu0 0
  %4318 = vmatpush1.bf16.msra.mxu0 0
  %4319 = vmatprep.subr.bf16.mxu0 0
  %4320 = vmatpush1.bf16.msra.mxu0 0
  %4321 = vmatprep.subr.bf16.mxu0 0
  %4322 = vmatpush1.bf16.msra.mxu0 0
  %4323 = vmatprep.subr.bf16.mxu0 0
  %4324 = vmatpush1.bf16.msra.mxu0 0
  %4325 = vmatprep.subr.bf16.mxu0 0
  %4326 = vmatpush1.bf16.msra.mxu0 0
  %4327 = vmatprep.mubr.bf16.mxu0 0
  %4328 = vmatmul.mubr.bf16.gmra.mrb[0].mxu0 %v4290
  %v4329 = vpop.f32.mrb[0].mxu0
  %v4330 = vadd.f32 0.0, %v4329
  %v4331 = vpop.f32.mrb[0].mxu0
  %v4332 = vpop.f32.mrb[0].mxu0
  %v4333 = vadd.f32 0.0, %v4332
  %v4334 = vpop.f32.mrb[0].mxu0
  %4335 = vmatprep.mubr.bf16.mxu0 0
  %4336 = vmatmul.mubr.bf16.gmra.mrb[0].mxu0 %v4293
  %v4337 = vpop.f32.mrb[0].mxu0
  %v4338 = vadd.f32 0.0, %v4337
  %v4339 = vpop.f32.mrb[0].mxu0
  %v4340 = vpop.f32.mrb[0].mxu0
  %v4341 = vadd.f32 0.0, %v4340
  %v4342 = vpop.f32.mrb[0].mxu0
  %4343 = vdwg.mxu0
  %v4344 = vrcp.pop %v4277
  %v4345 = vrcp.pop %v4280
  %v4346 = vrcp.pop %v4283
  %v4347 = vrcp.pop %v4286
  %v4348 = vmul.f32 %v4330, %v4344
  %v4349 = vmul.f32 %v4333, %v4345
  %v4350 = vmul.f32 %v4338, %v4346
  %v4351 = vmul.f32 %v4341, %v4347
  %v4352 = vpack.c.bf16 %v4349, %v4348
  %v4353 = vpack.c.bf16 %v4351, %v4350
  %s4354 = scalar_lea.vmem %s11, 64
  %v4355 = vld [vmem:[%s4354] sm:$0xf]
  %v4356 = vld [vmem:[%s4354 + $0x4] sm:$0xf]
  %v4357 = vld [vmem:[%s4354 + $0x8] sm:$0xf]
  %v4358 = vld [vmem:[%s4354 + $0xc] sm:$0xf]
  %v4363 = vunpack.c.l.b16 %v4355
  %v4364 = vunpack.c.l.b16 %v4356
  %v4365 = vunpack.c.l.b16 %v4357
  %v4366 = vunpack.c.l.b16 %v4358
  %v4367 = vpack.c.b16 %v4364, %v4363
  %v4368 = vpack.c.b16 %v4366, %v4365
  %v4372 = vsel %vm288, %v4352, 0
  %v4375 = vsel %vm288, %v4353, 0
  %4377 = vmatprep.subr.bf16.mxu0 0
  %4378 = vmatpush1.bf16.msra.mxu0 %v4367
  %4379 = vmatprep.subr.bf16.mxu0 0
  %4380 = vmatpush1.bf16.msra.mxu0 %v4368
  %4381 = vmatprep.subr.bf16.mxu0 0
  %4382 = vmatpush1.bf16.msra.mxu0 0
  %4383 = vmatprep.subr.bf16.mxu0 0
  %4384 = vmatpush1.bf16.msra.mxu0 0
  %4385 = vmatprep.subr.bf16.mxu0 0
  %4386 = vmatpush1.bf16.msra.mxu0 0
  %4387 = vmatprep.subr.bf16.mxu0 0
  %4388 = vmatpush1.bf16.msra.mxu0 0
  %4389 = vmatprep.subr.bf16.mxu0 0
  %4390 = vmatpush1.bf16.msra.mxu0 0
  %4391 = vmatprep.subr.bf16.mxu0 0
  %4392 = vmatpush1.bf16.msra.mxu0 0
  %4393 = vmatprep.subr.bf16.mxu0 0
  %4394 = vmatpush1.bf16.msra.mxu0 0
  %4395 = vmatprep.subr.bf16.mxu0 0
  %4396 = vmatpush1.bf16.msra.mxu0 0
  %4397 = vmatprep.subr.bf16.mxu0 0
  %4398 = vmatpush1.bf16.msra.mxu0 0
  %4399 = vmatprep.subr.bf16.mxu0 0
  %4400 = vmatpush1.bf16.msra.mxu0 0
  %4401 = vmatprep.subr.bf16.mxu0 0
  %4402 = vmatpush1.bf16.msra.mxu0 0
  %4403 = vmatprep.subr.bf16.mxu0 0
  %4404 = vmatpush1.bf16.msra.mxu0 0
  %4405 = vmatprep.subr.bf16.mxu0 0
  %4406 = vmatpush1.bf16.msra.mxu0 0
  %4407 = vmatprep.subr.bf16.mxu0 0
  %4408 = vmatpush1.bf16.msra.mxu0 0
  %4409 = vmatprep.mubr.bf16.mxu0 0
  %4410 = vmatmul.mubr.bf16.gmra.mrb[0].mxu0 %v4372
  %v4411 = vpop.f32.mrb[0].mxu0
  %v4412 = vadd.f32 0.0, %v4411
  %v4413 = vpop.f32.mrb[0].mxu0
  %v4414 = vpop.f32.mrb[0].mxu0
  %v4415 = vadd.f32 0.0, %v4414
  %v4416 = vpop.f32.mrb[0].mxu0
  %4417 = vmatprep.mubr.bf16.mxu0 0
  %4418 = vmatmul.mubr.bf16.gmra.mrb[0].mxu0 %v4375
  %v4419 = vpop.f32.mrb[0].mxu0
  %v4420 = vadd.f32 0.0, %v4419
  %v4421 = vpop.f32.mrb[0].mxu0
  %v4422 = vpop.f32.mrb[0].mxu0
  %v4423 = vadd.f32 0.0, %v4422
  %v4424 = vpop.f32.mrb[0].mxu0
  %4425 = vdwg.mxu0
  %v4426 = vadd.f32 %v3658, %v4412
  %v4427 = vadd.f32 %v3659, %v4415
  %v4428 = vadd.f32 %v3660, %v4420
  %v4429 = vadd.f32 %v3661, %v4423
  %s4430 = scalar_lea.vmem %s8, 320
  %v4431 = vld [vmem:[%s4430] sm:$0xf]
  %v4432 = vld [vmem:[%s4430 + $0x4] sm:$0xf]
  %v4433 = vld [vmem:[%s4430 + $0x8] sm:$0xf]
  %v4434 = vld [vmem:[%s4430 + $0xc] sm:$0xf]
  %v4435 = vld [vmem:[%s4430 + $0x10] sm:$0xf]
  %v4436 = vld [vmem:[%s4430 + $0x14] sm:$0xf]
  %v4437 = vld [vmem:[%s4430 + $0x18] sm:$0xf]
  %v4438 = vld [vmem:[%s4430 + $0x1c] sm:$0xf]
  %v4439 = vld [vmem:[%s4430 + $0x20] sm:$0xf]
  %v4440 = vld [vmem:[%s4430 + $0x24] sm:$0xf]
  %v4441 = vld [vmem:[%s4430 + $0x28] sm:$0xf]
  %v4442 = vld [vmem:[%s4430 + $0x2c] sm:$0xf]
  %v4443 = vld [vmem:[%s4430 + $0x30] sm:$0xf]
  %v4444 = vld [vmem:[%s4430 + $0x34] sm:$0xf]
  %v4445 = vld [vmem:[%s4430 + $0x38] sm:$0xf]
  %v4446 = vld [vmem:[%s4430 + $0x3c] sm:$0xf]
  %v4463 = vunpack.c.l.b16 %v4431
  %v4464 = vunpack.c.l.b16 %v4432
  %v4465 = vunpack.c.l.b16 %v4433
  %v4466 = vunpack.c.l.b16 %v4434
  %v4467 = vunpack.c.l.b16 %v4435
  %v4468 = vunpack.c.l.b16 %v4436
  %v4469 = vunpack.c.l.b16 %v4437
  %v4470 = vunpack.c.l.b16 %v4438
  %v4471 = vunpack.c.l.b16 %v4439
  %v4472 = vunpack.c.l.b16 %v4440
  %v4473 = vunpack.c.l.b16 %v4441
  %v4474 = vunpack.c.l.b16 %v4442
  %v4475 = vunpack.c.l.b16 %v4443
  %v4476 = vunpack.c.l.b16 %v4444
  %v4477 = vunpack.c.l.b16 %v4445
  %v4478 = vunpack.c.l.b16 %v4446
  %v4479 = vpack.c.b16 %v4464, %v4463
  %v4480 = vpack.c.b16 %v4466, %v4465
  %v4481 = vpack.c.b16 %v4468, %v4467
  %v4482 = vpack.c.b16 %v4470, %v4469
  %v4483 = vpack.c.b16 %v4472, %v4471
  %v4484 = vpack.c.b16 %v4474, %v4473
  %v4485 = vpack.c.b16 %v4476, %v4475
  %v4486 = vpack.c.b16 %v4478, %v4477
  %4495 = vmatprep.subr.bf16.mxu0 0
  %4496 = vmatpush1.bf16.msra.mxu0 %v4479
  %4497 = vmatprep.subr.bf16.mxu0 0
  %4498 = vmatpush1.bf16.msra.mxu0 %v4480
  %4499 = vmatprep.subr.bf16.mxu0 0
  %4500 = vmatpush1.bf16.msra.mxu0 %v4481
  %4501 = vmatprep.subr.bf16.mxu0 0
  %4502 = vmatpush1.bf16.msra.mxu0 %v4482
  %4503 = vmatprep.subr.bf16.mxu0 0
  %4504 = vmatpush1.bf16.msra.mxu0 %v4483
  %4505 = vmatprep.subr.bf16.mxu0 0
  %4506 = vmatpush1.bf16.msra.mxu0 %v4484
  %4507 = vmatprep.subr.bf16.mxu0 0
  %4508 = vmatpush1.bf16.msra.mxu0 %v4485
  %4509 = vmatprep.subr.bf16.mxu0 0
  %4510 = vmatpush1.bf16.msra.mxu0 %v4486
  %4511 = vmatprep.subr.bf16.mxu0 0
  %4512 = vmatpush1.bf16.msra.mxu0 0
  %4513 = vmatprep.subr.bf16.mxu0 0
  %4514 = vmatpush1.bf16.msra.mxu0 0
  %4515 = vmatprep.subr.bf16.mxu0 0
  %4516 = vmatpush1.bf16.msra.mxu0 0
  %4517 = vmatprep.subr.bf16.mxu0 0
  %4518 = vmatpush1.bf16.msra.mxu0 0
  %4519 = vmatprep.subr.bf16.mxu0 0
  %4520 = vmatpush1.bf16.msra.mxu0 0
  %4521 = vmatprep.subr.bf16.mxu0 0
  %4522 = vmatpush1.bf16.msra.mxu0 0
  %4523 = vmatprep.subr.bf16.mxu0 0
  %4524 = vmatpush1.bf16.msra.mxu0 0
  %4525 = vmatprep.subr.bf16.mxu0 0
  %4526 = vmatpush1.bf16.msra.mxu0 0
  %4527 = vmatprep.mubr.bf16.mxu0 0
  %4528 = vmatmul.mubr.bf16.gmra.mrb[0].mxu0 %v3702
  %v4529 = vpop.f32.mrb[0].mxu0
  %v4530 = vadd.f32 0.0, %v4529
  %v4531 = vpop.f32.mrb[0].mxu0
  %v4532 = vpop.f32.mrb[0].mxu0
  %v4533 = vadd.f32 0.0, %v4532
  %v4534 = vpop.f32.mrb[0].mxu0
  %4535 = vmatprep.mubr.bf16.mxu0 0
  %4536 = vmatmul.mubr.bf16.gmra.mrb[0].mxu0 %v3703
  %v4537 = vpop.f32.mrb[0].mxu0
  %v4538 = vadd.f32 0.0, %v4537
  %v4539 = vpop.f32.mrb[0].mxu0
  %v4540 = vpop.f32.mrb[0].mxu0
  %v4541 = vadd.f32 0.0, %v4540
  %v4542 = vpop.f32.mrb[0].mxu0
  %4543 = vdwg.mxu0
  %v4544 = vpack.c.bf16 %v4533, %v4530
  %v4545 = vpack.c.bf16 %v4541, %v4538
  %v4547 = vsel %vm288, %v4544, 0
  %v4550 = vsel %vm288, %v4545, 0
  %4552 = vmatprep.subr.bf16.mxu0 0
  %4553 = vmatpush1.bf16.msra.mxu0 %v284
  %4554 = vmatprep.subr.bf16.mxu0 0
  %4555 = vmatpush1.bf16.msra.mxu0 %v285
  %4556 = vmatprep.subr.bf16.mxu0 0
  %4557 = vmatpush1.bf16.msra.mxu0 0
  %4558 = vmatprep.subr.bf16.mxu0 0
  %4559 = vmatpush1.bf16.msra.mxu0 0
  %4560 = vmatprep.subr.bf16.mxu0 0
  %4561 = vmatpush1.bf16.msra.mxu0 0
  %4562 = vmatprep.subr.bf16.mxu0 0
  %4563 = vmatpush1.bf16.msra.mxu0 0
  %4564 = vmatprep.subr.bf16.mxu0 0
  %4565 = vmatpush1.bf16.msra.mxu0 0
  %4566 = vmatprep.subr.bf16.mxu0 0
  %4567 = vmatpush1.bf16.msra.mxu0 0
  %4568 = vmatprep.subr.bf16.mxu0 0
  %4569 = vmatpush1.bf16.msra.mxu0 0
  %4570 = vmatprep.subr.bf16.mxu0 0
  %4571 = vmatpush1.bf16.msra.mxu0 0
  %4572 = vmatprep.subr.bf16.mxu0 0
  %4573 = vmatpush1.bf16.msra.mxu0 0
  %4574 = vmatprep.subr.bf16.mxu0 0
  %4575 = vmatpush1.bf16.msra.mxu0 0
  %4576 = vmatprep.subr.bf16.mxu0 0
  %4577 = vmatpush1.bf16.msra.mxu0 0
  %4578 = vmatprep.subr.bf16.mxu0 0
  %4579 = vmatpush1.bf16.msra.mxu0 0
  %4580 = vmatprep.subr.bf16.mxu0 0
  %4581 = vmatpush1.bf16.msra.mxu0 0
  %4582 = vmatprep.subr.bf16.mxu0 0
  %4583 = vmatpush1.bf16.msra.mxu0 0
  %4584 = vmatprep.mubr.bf16.mxu0 0
  %4585 = vmatmul.mubr.bf16.gmra.mrb[0].mxu0 %v4547
  %v4586 = vpop.f32.mrb[0].mxu0
  %v4587 = vadd.f32 0.0, %v4586
  %v4588 = vpop.f32.mrb[0].mxu0
  %v4589 = vpop.f32.mrb[0].mxu0
  %v4590 = vadd.f32 0.0, %v4589
  %v4591 = vpop.f32.mrb[0].mxu0
  %4592 = vmatprep.mubr.bf16.mxu0 0
  %4593 = vmatmul.mubr.bf16.gmra.mrb[0].mxu0 %v4550
  %v4594 = vpop.f32.mrb[0].mxu0
  %v4595 = vadd.f32 0.0, %v4594
  %v4596 = vpop.f32.mrb[0].mxu0
  %v4597 = vpop.f32.mrb[0].mxu0
  %v4598 = vadd.f32 0.0, %v4597
  %v4599 = vpop.f32.mrb[0].mxu0
  %4600 = vdwg.mxu0
  %v4601 = vmul.f32 %v4530, %v62
  %v4602 = vmul.f32 %v4533, %v63
  %v4603 = vmul.f32 %v4538, %v64
  %v4604 = vmul.f32 %v4541, %v65
  %v4605 = vmul.f32 %v4587, %v66
  %v4606 = vmul.f32 %v4590, %v67
  %v4607 = vmul.f32 %v4595, %v68
  %v4608 = vmul.f32 %v4598, %v69
  %v4609 = vadd.f32 %v4601, %v4605
  %v4610 = vadd.f32 %v4602, %v4606
  %v4611 = vadd.f32 %v4603, %v4607
  %v4612 = vadd.f32 %v4604, %v4608
  %v4613 = vpack.c.bf16 %v4610, %v4609
  %v4614 = vpack.c.bf16 %v4612, %v4611
  %s4615 = scalar_lea.vmem %s9, 320
  %v4616 = vld [vmem:[%s4615] sm:$0xf]
  %v4617 = vld [vmem:[%s4615 + $0x4] sm:$0xf]
  %v4618 = vld [vmem:[%s4615 + $0x8] sm:$0xf]
  %v4619 = vld [vmem:[%s4615 + $0xc] sm:$0xf]
  %v4620 = vld [vmem:[%s4615 + $0x10] sm:$0xf]
  %v4621 = vld [vmem:[%s4615 + $0x14] sm:$0xf]
  %v4622 = vld [vmem:[%s4615 + $0x18] sm:$0xf]
  %v4623 = vld [vmem:[%s4615 + $0x1c] sm:$0xf]
  %v4624 = vld [vmem:[%s4615 + $0x20] sm:$0xf]
  %v4625 = vld [vmem:[%s4615 + $0x24] sm:$0xf]
  %v4626 = vld [vmem:[%s4615 + $0x28] sm:$0xf]
  %v4627 = vld [vmem:[%s4615 + $0x2c] sm:$0xf]
  %v4628 = vld [vmem:[%s4615 + $0x30] sm:$0xf]
  %v4629 = vld [vmem:[%s4615 + $0x34] sm:$0xf]
  %v4630 = vld [vmem:[%s4615 + $0x38] sm:$0xf]
  %v4631 = vld [vmem:[%s4615 + $0x3c] sm:$0xf]
  %v4648 = vunpack.c.l.b16 %v4616
  %v4649 = vunpack.c.l.b16 %v4617
  %v4650 = vunpack.c.l.b16 %v4618
  %v4651 = vunpack.c.l.b16 %v4619
  %v4652 = vunpack.c.l.b16 %v4620
  %v4653 = vunpack.c.l.b16 %v4621
  %v4654 = vunpack.c.l.b16 %v4622
  %v4655 = vunpack.c.l.b16 %v4623
  %v4656 = vunpack.c.l.b16 %v4624
  %v4657 = vunpack.c.l.b16 %v4625
  %v4658 = vunpack.c.l.b16 %v4626
  %v4659 = vunpack.c.l.b16 %v4627
  %v4660 = vunpack.c.l.b16 %v4628
  %v4661 = vunpack.c.l.b16 %v4629
  %v4662 = vunpack.c.l.b16 %v4630
  %v4663 = vunpack.c.l.b16 %v4631
  %v4664 = vpack.c.b16 %v4649, %v4648
  %v4665 = vpack.c.b16 %v4651, %v4650
  %v4666 = vpack.c.b16 %v4653, %v4652
  %v4667 = vpack.c.b16 %v4655, %v4654
  %v4668 = vpack.c.b16 %v4657, %v4656
  %v4669 = vpack.c.b16 %v4659, %v4658
  %v4670 = vpack.c.b16 %v4661, %v4660
  %v4671 = vpack.c.b16 %v4663, %v4662
  %4680 = vmatprep.subr.bf16.mxu0 0
  %4681 = vmatpush1.bf16.msra.mxu0 %v4664
  %4682 = vmatprep.subr.bf16.mxu0 0
  %4683 = vmatpush1.bf16.msra.mxu0 %v4665
  %4684 = vmatprep.subr.bf16.mxu0 0
  %4685 = vmatpush1.bf16.msra.mxu0 %v4666
  %4686 = vmatprep.subr.bf16.mxu0 0
  %4687 = vmatpush1.bf16.msra.mxu0 %v4667
  %4688 = vmatprep.subr.bf16.mxu0 0
  %4689 = vmatpush1.bf16.msra.mxu0 %v4668
  %4690 = vmatprep.subr.bf16.mxu0 0
  %4691 = vmatpush1.bf16.msra.mxu0 %v4669
  %4692 = vmatprep.subr.bf16.mxu0 0
  %4693 = vmatpush1.bf16.msra.mxu0 %v4670
  %4694 = vmatprep.subr.bf16.mxu0 0
  %4695 = vmatpush1.bf16.msra.mxu0 %v4671
  %4696 = vmatprep.subr.bf16.mxu0 0
  %4697 = vmatpush1.bf16.msra.mxu0 0
  %4698 = vmatprep.subr.bf16.mxu0 0
  %4699 = vmatpush1.bf16.msra.mxu0 0
  %4700 = vmatprep.subr.bf16.mxu0 0
  %4701 = vmatpush1.bf16.msra.mxu0 0
  %4702 = vmatprep.subr.bf16.mxu0 0
  %4703 = vmatpush1.bf16.msra.mxu0 0
  %4704 = vmatprep.subr.bf16.mxu0 0
  %4705 = vmatpush1.bf16.msra.mxu0 0
  %4706 = vmatprep.subr.bf16.mxu0 0
  %4707 = vmatpush1.bf16.msra.mxu0 0
  %4708 = vmatprep.subr.bf16.mxu0 0
  %4709 = vmatpush1.bf16.msra.mxu0 0
  %4710 = vmatprep.subr.bf16.mxu0 0
  %4711 = vmatpush1.bf16.msra.mxu0 0
  %4712 = vmatprep.mubr.bf16.mxu0 0
  %4713 = vmatmul.mubr.bf16.gmra.mrb[0].mxu0 %v3702
  %v4714 = vpop.f32.mrb[0].mxu0
  %v4715 = vadd.f32 0.0, %v4714
  %v4716 = vpop.f32.mrb[0].mxu0
  %v4717 = vpop.f32.mrb[0].mxu0
  %v4718 = vadd.f32 0.0, %v4717
  %v4719 = vpop.f32.mrb[0].mxu0
  %4720 = vmatprep.mubr.bf16.mxu0 0
  %4721 = vmatmul.mubr.bf16.gmra.mrb[0].mxu0 %v3703
  %v4722 = vpop.f32.mrb[0].mxu0
  %v4723 = vadd.f32 0.0, %v4722
  %v4724 = vpop.f32.mrb[0].mxu0
  %v4725 = vpop.f32.mrb[0].mxu0
  %v4726 = vadd.f32 0.0, %v4725
  %v4727 = vpop.f32.mrb[0].mxu0
  %4728 = vdwg.mxu0
  %v4729 = vpack.c.bf16 %v4718, %v4715
  %v4730 = vpack.c.bf16 %v4726, %v4723
  %v4732 = vsel %vm288, %v4729, 0
  %v4735 = vsel %vm288, %v4730, 0
  %4737 = vmatprep.subr.bf16.mxu0 0
  %4738 = vmatpush1.bf16.msra.mxu0 %v284
  %4739 = vmatprep.subr.bf16.mxu0 0
  %4740 = vmatpush1.bf16.msra.mxu0 %v285
  %4741 = vmatprep.subr.bf16.mxu0 0
  %4742 = vmatpush1.bf16.msra.mxu0 0
  %4743 = vmatprep.subr.bf16.mxu0 0
  %4744 = vmatpush1.bf16.msra.mxu0 0
  %4745 = vmatprep.subr.bf16.mxu0 0
  %4746 = vmatpush1.bf16.msra.mxu0 0
  %4747 = vmatprep.subr.bf16.mxu0 0
  %4748 = vmatpush1.bf16.msra.mxu0 0
  %4749 = vmatprep.subr.bf16.mxu0 0
  %4750 = vmatpush1.bf16.msra.mxu0 0
  %4751 = vmatprep.subr.bf16.mxu0 0
  %4752 = vmatpush1.bf16.msra.mxu0 0
  %4753 = vmatprep.subr.bf16.mxu0 0
  %4754 = vmatpush1.bf16.msra.mxu0 0
  %4755 = vmatprep.subr.bf16.mxu0 0
  %4756 = vmatpush1.bf16.msra.mxu0 0
  %4757 = vmatprep.subr.bf16.mxu0 0
  %4758 = vmatpush1.bf16.msra.mxu0 0
  %4759 = vmatprep.subr.bf16.mxu0 0
  %4760 = vmatpush1.bf16.msra.mxu0 0
  %4761 = vmatprep.subr.bf16.mxu0 0
  %4762 = vmatpush1.bf16.msra.mxu0 0
  %4763 = vmatprep.subr.bf16.mxu0 0
  %4764 = vmatpush1.bf16.msra.mxu0 0
  %4765 = vmatprep.subr.bf16.mxu0 0
  %4766 = vmatpush1.bf16.msra.mxu0 0
  %4767 = vmatprep.subr.bf16.mxu0 0
  %4768 = vmatpush1.bf16.msra.mxu0 0
  %4769 = vmatprep.mubr.bf16.mxu0 0
  %4770 = vmatmul.mubr.bf16.gmra.mrb[0].mxu0 %v4732
  %v4771 = vpop.f32.mrb[0].mxu0
  %v4772 = vadd.f32 0.0, %v4771
  %v4773 = vpop.f32.mrb[0].mxu0
  %v4774 = vpop.f32.mrb[0].mxu0
  %v4775 = vadd.f32 0.0, %v4774
  %v4776 = vpop.f32.mrb[0].mxu0
  %4777 = vmatprep.mubr.bf16.mxu0 0
  %4778 = vmatmul.mubr.bf16.gmra.mrb[0].mxu0 %v4735
  %v4779 = vpop.f32.mrb[0].mxu0
  %v4780 = vadd.f32 0.0, %v4779
  %v4781 = vpop.f32.mrb[0].mxu0
  %v4782 = vpop.f32.mrb[0].mxu0
  %v4783 = vadd.f32 0.0, %v4782
  %v4784 = vpop.f32.mrb[0].mxu0
  %4785 = vdwg.mxu0
  %v4786 = vmul.f32 %v4715, %v62
  %v4787 = vmul.f32 %v4718, %v63
  %v4788 = vmul.f32 %v4723, %v64
  %v4789 = vmul.f32 %v4726, %v65
  %v4790 = vmul.f32 %v4772, %v66
  %v4791 = vmul.f32 %v4775, %v67
  %v4792 = vmul.f32 %v4780, %v68
  %v4793 = vmul.f32 %v4783, %v69
  %v4794 = vadd.f32 %v4786, %v4790
  %v4795 = vadd.f32 %v4787, %v4791
  %v4796 = vadd.f32 %v4788, %v4792
  %v4797 = vadd.f32 %v4789, %v4793
  %v4798 = vpack.c.bf16 %v4795, %v4794
  %v4799 = vpack.c.bf16 %v4797, %v4796
  %s4800 = scalar_lea.vmem %s10, 320
  %v4801 = vld [vmem:[%s4800] sm:$0xf]
  %v4802 = vld [vmem:[%s4800 + $0x4] sm:$0xf]
  %v4803 = vld [vmem:[%s4800 + $0x8] sm:$0xf]
  %v4804 = vld [vmem:[%s4800 + $0xc] sm:$0xf]
  %v4805 = vld [vmem:[%s4800 + $0x10] sm:$0xf]
  %v4806 = vld [vmem:[%s4800 + $0x14] sm:$0xf]
  %v4807 = vld [vmem:[%s4800 + $0x18] sm:$0xf]
  %v4808 = vld [vmem:[%s4800 + $0x1c] sm:$0xf]
  %v4809 = vld [vmem:[%s4800 + $0x20] sm:$0xf]
  %v4810 = vld [vmem:[%s4800 + $0x24] sm:$0xf]
  %v4811 = vld [vmem:[%s4800 + $0x28] sm:$0xf]
  %v4812 = vld [vmem:[%s4800 + $0x2c] sm:$0xf]
  %v4813 = vld [vmem:[%s4800 + $0x30] sm:$0xf]
  %v4814 = vld [vmem:[%s4800 + $0x34] sm:$0xf]
  %v4815 = vld [vmem:[%s4800 + $0x38] sm:$0xf]
  %v4816 = vld [vmem:[%s4800 + $0x3c] sm:$0xf]
  %v4833 = vunpack.c.l.b16 %v4801
  %v4834 = vunpack.c.l.b16 %v4802
  %v4835 = vunpack.c.l.b16 %v4803
  %v4836 = vunpack.c.l.b16 %v4804
  %v4837 = vunpack.c.l.b16 %v4805
  %v4838 = vunpack.c.l.b16 %v4806
  %v4839 = vunpack.c.l.b16 %v4807
  %v4840 = vunpack.c.l.b16 %v4808
  %v4841 = vunpack.c.l.b16 %v4809
  %v4842 = vunpack.c.l.b16 %v4810
  %v4843 = vunpack.c.l.b16 %v4811
  %v4844 = vunpack.c.l.b16 %v4812
  %v4845 = vunpack.c.l.b16 %v4813
  %v4846 = vunpack.c.l.b16 %v4814
  %v4847 = vunpack.c.l.b16 %v4815
  %v4848 = vunpack.c.l.b16 %v4816
  %v4849 = vpack.c.b16 %v4834, %v4833
  %v4850 = vpack.c.b16 %v4836, %v4835
  %v4851 = vpack.c.b16 %v4838, %v4837
  %v4852 = vpack.c.b16 %v4840, %v4839
  %v4853 = vpack.c.b16 %v4842, %v4841
  %v4854 = vpack.c.b16 %v4844, %v4843
  %v4855 = vpack.c.b16 %v4846, %v4845
  %v4856 = vpack.c.b16 %v4848, %v4847
  %4865 = vmatprep.subr.bf16.mxu0 0
  %4866 = vmatpush1.bf16.msra.mxu0 %v4849
  %4867 = vmatprep.subr.bf16.mxu0 0
  %4868 = vmatpush1.bf16.msra.mxu0 %v4850
  %4869 = vmatprep.subr.bf16.mxu0 0
  %4870 = vmatpush1.bf16.msra.mxu0 %v4851
  %4871 = vmatprep.subr.bf16.mxu0 0
  %4872 = vmatpush1.bf16.msra.mxu0 %v4852
  %4873 = vmatprep.subr.bf16.mxu0 0
  %4874 = vmatpush1.bf16.msra.mxu0 %v4853
  %4875 = vmatprep.subr.bf16.mxu0 0
  %4876 = vmatpush1.bf16.msra.mxu0 %v4854
  %4877 = vmatprep.subr.bf16.mxu0 0
  %4878 = vmatpush1.bf16.msra.mxu0 %v4855
  %4879 = vmatprep.subr.bf16.mxu0 0
  %4880 = vmatpush1.bf16.msra.mxu0 %v4856
  %4881 = vmatprep.subr.bf16.mxu0 0
  %4882 = vmatpush1.bf16.msra.mxu0 0
  %4883 = vmatprep.subr.bf16.mxu0 0
  %4884 = vmatpush1.bf16.msra.mxu0 0
  %4885 = vmatprep.subr.bf16.mxu0 0
  %4886 = vmatpush1.bf16.msra.mxu0 0
  %4887 = vmatprep.subr.bf16.mxu0 0
  %4888 = vmatpush1.bf16.msra.mxu0 0
  %4889 = vmatprep.subr.bf16.mxu0 0
  %4890 = vmatpush1.bf16.msra.mxu0 0
  %4891 = vmatprep.subr.bf16.mxu0 0
  %4892 = vmatpush1.bf16.msra.mxu0 0
  %4893 = vmatprep.subr.bf16.mxu0 0
  %4894 = vmatpush1.bf16.msra.mxu0 0
  %4895 = vmatprep.subr.bf16.mxu0 0
  %4896 = vmatpush1.bf16.msra.mxu0 0
  %4897 = vmatprep.mubr.bf16.mxu0 0
  %4898 = vmatmul.mubr.bf16.gmra.mrb[0].mxu0 %v3702
  %v4899 = vpop.f32.mrb[0].mxu0
  %v4900 = vadd.f32 0.0, %v4899
  %v4901 = vpop.f32.mrb[0].mxu0
  %v4902 = vpop.f32.mrb[0].mxu0
  %v4903 = vadd.f32 0.0, %v4902
  %v4904 = vpop.f32.mrb[0].mxu0
  %4905 = vmatprep.mubr.bf16.mxu0 0
  %4906 = vmatmul.mubr.bf16.gmra.mrb[0].mxu0 %v3703
  %v4907 = vpop.f32.mrb[0].mxu0
  %v4908 = vadd.f32 0.0, %v4907
  %v4909 = vpop.f32.mrb[0].mxu0
  %v4910 = vpop.f32.mrb[0].mxu0
  %v4911 = vadd.f32 0.0, %v4910
  %v4912 = vpop.f32.mrb[0].mxu0
  %4913 = vdwg.mxu0
  %v4914 = vpack.c.bf16 %v4903, %v4900
  %v4915 = vpack.c.bf16 %v4911, %v4908
  %v4917 = vsel %vm288, %v4613, 0
  %v4920 = vsel %vm288, %v4614, 0
  %v4923 = vsel %vm288, %v4798, 0
  %v4926 = vsel %vm288, %v4799, 0
  %4928 = vmatprep.subr.bf16.mxu0 0
  %4929 = vmatpush1.bf16.xpose.msra.mxu0 %v4923
  %4930 = vmatprep.subr.bf16.mxu0 0
  %4931 = vmatpush1.bf16.xpose.msra.mxu0 %v4926
  %4932 = vmatprep.subr.bf16.mxu0 0
  %4933 = vmatpush1.bf16.xpose.msra.mxu0 0
  %4934 = vmatprep.subr.bf16.mxu0 0
  %4935 = vmatpush1.bf16.xpose.msra.mxu0 0
  %4936 = vmatprep.subr.bf16.mxu0 0
  %4937 = vmatpush1.bf16.xpose.msra.mxu0 0
  %4938 = vmatprep.subr.bf16.mxu0 0
  %4939 = vmatpush1.bf16.xpose.msra.mxu0 0
  %4940 = vmatprep.subr.bf16.mxu0 0
  %4941 = vmatpush1.bf16.xpose.msra.mxu0 0
  %4942 = vmatprep.subr.bf16.mxu0 0
  %4943 = vmatpush1.bf16.xpose.msra.mxu0 0
  %4944 = vmatprep.subr.bf16.mxu0 0
  %4945 = vmatpush1.bf16.xpose.msra.mxu0 0
  %4946 = vmatprep.subr.bf16.mxu0 0
  %4947 = vmatpush1.bf16.xpose.msra.mxu0 0
  %4948 = vmatprep.subr.bf16.mxu0 0
  %4949 = vmatpush1.bf16.xpose.msra.mxu0 0
  %4950 = vmatprep.subr.bf16.mxu0 0
  %4951 = vmatpush1.bf16.xpose.msra.mxu0 0
  %4952 = vmatprep.subr.bf16.mxu0 0
  %4953 = vmatpush1.bf16.xpose.msra.mxu0 0
  %4954 = vmatprep.subr.bf16.mxu0 0
  %4955 = vmatpush1.bf16.xpose.msra.mxu0 0
  %4956 = vmatprep.subr.bf16.mxu0 0
  %4957 = vmatpush1.bf16.xpose.msra.mxu0 0
  %4958 = vmatprep.subr.bf16.mxu0 0
  %4959 = vmatpush1.bf16.xpose.msra.mxu0 0
  %4960 = vmatprep.mubr.bf16.mxu0 0
  %4961 = vmatmul.mubr.bf16.gmra.mrb[0].mxu0 %v4917
  %v4962 = vpop.f32.mrb[0].mxu0
  %v4963 = vadd.f32 %v115, %v4962
  %v4964 = vpop.f32.mrb[0].mxu0
  %v4965 = vpop.f32.mrb[0].mxu0
  %v4966 = vadd.f32 %v116, %v4965
  %v4967 = vpop.f32.mrb[0].mxu0
  %4968 = vmatprep.mubr.bf16.mxu0 0
  %4969 = vmatmul.mubr.bf16.gmra.mrb[0].mxu0 %v4920
  %v4970 = vpop.f32.mrb[0].mxu0
  %v4971 = vadd.f32 %v117, %v4970
  %v4972 = vpop.f32.mrb[0].mxu0
  %v4973 = vpop.f32.mrb[0].mxu0
  %v4974 = vadd.f32 %v118, %v4973
  %v4975 = vpop.f32.mrb[0].mxu0
  %4976 = vdwg.mxu0
  %v4977 = vsel %vm288, %v4963, -inf
  %4978 = vmax.xlane.f32.xlu0 %v4977
  %v4979 = vpop.xlane.xlu0 %4978
  %v4980 = vsel %vm288, %v4966, -inf
  %4981 = vmax.xlane.f32.xlu0 %v4980
  %v4982 = vpop.xlane.xlu0 %4981
  %v4983 = vsel %vm288, %v4971, -inf
  %4984 = vmax.xlane.f32.xlu0 %v4983
  %v4985 = vpop.xlane.xlu0 %4984
  %v4986 = vsel %vm288, %v4974, -inf
  %4987 = vmax.xlane.f32.xlu0 %v4986
  %v4988 = vpop.xlane.xlu0 %4987
  %v4989 = vsub.f32 %v4963, %v4979
  %v4990 = vsub.f32 %v4966, %v4982
  %v4991 = vsub.f32 %v4971, %v4985
  %v4992 = vsub.f32 %v4974, %v4988
  %v4993 = vmul.f32 %v4989, 1.442695
  %v4994 = vpow.pop %v4993
  %v4995 = vmul.f32 %v4990, 1.442695
  %v4996 = vpow.pop %v4995
  %v4997 = vmul.f32 %v4991, 1.442695
  %v4998 = vpow.pop %v4997
  %v4999 = vmul.f32 %v4992, 1.442695
  %v5000 = vpow.pop %v4999
  %v5001 = vsel %vm288, %v4994, 0.0
  %5002 = vadd.xlane.f32.xlu0 %v5001
  %v5003 = vpop.xlane.xlu0 %5002
  %v5004 = vsel %vm288, %v4996, 0.0
  %5005 = vadd.xlane.f32.xlu0 %v5004
  %v5006 = vpop.xlane.xlu0 %5005
  %v5007 = vsel %vm288, %v4998, 0.0
  %5008 = vadd.xlane.f32.xlu0 %v5007
  %v5009 = vpop.xlane.xlu0 %5008
  %v5010 = vsel %vm288, %v5000, 0.0
  %5011 = vadd.xlane.f32.xlu0 %v5010
  %v5012 = vpop.xlane.xlu0 %5011
  %v5013 = vpack.c.bf16 %v4996, %v4994
  %v5014 = vpack.c.bf16 %v5000, %v4998
  %v5016 = vsel %vm288, %v5013, 0
  %v5019 = vsel %vm288, %v5014, 0
  %5021 = vmatprep.subr.bf16.mxu0 0
  %5022 = vmatpush1.bf16.msra.mxu0 %v4914
  %5023 = vmatprep.subr.bf16.mxu0 0
  %5024 = vmatpush1.bf16.msra.mxu0 %v4915
  %5025 = vmatprep.subr.bf16.mxu0 0
  %5026 = vmatpush1.bf16.msra.mxu0 0
  %5027 = vmatprep.subr.bf16.mxu0 0
  %5028 = vmatpush1.bf16.msra.mxu0 0
  %5029 = vmatprep.subr.bf16.mxu0 0
  %5030 = vmatpush1.bf16.msra.mxu0 0
  %5031 = vmatprep.subr.bf16.mxu0 0
  %5032 = vmatpush1.bf16.msra.mxu0 0
  %5033 = vmatprep.subr.bf16.mxu0 0
  %5034 = vmatpush1.bf16.msra.mxu0 0
  %5035 = vmatprep.subr.bf16.mxu0 0
  %5036 = vmatpush1.bf16.msra.mxu0 0
  %5037 = vmatprep.subr.bf16.mxu0 0
  %5038 = vmatpush1.bf16.msra.mxu0 0
  %5039 = vmatprep.subr.bf16.mxu0 0
  %5040 = vmatpush1.bf16.msra.mxu0 0
  %5041 = vmatprep.subr.bf16.mxu0 0
  %5042 = vmatpush1.bf16.msra.mxu0 0
  %5043 = vmatprep.subr.bf16.mxu0 0
  %5044 = vmatpush1.bf16.msra.mxu0 0
  %5045 = vmatprep.subr.bf16.mxu0 0
  %5046 = vmatpush1.bf16.msra.mxu0 0
  %5047 = vmatprep.subr.bf16.mxu0 0
  %5048 = vmatpush1.bf16.msra.mxu0 0
  %5049 = vmatprep.subr.bf16.mxu0 0
  %5050 = vmatpush1.bf16.msra.mxu0 0
  %5051 = vmatprep.subr.bf16.mxu0 0
  %5052 = vmatpush1.bf16.msra.mxu0 0
  %5053 = vmatprep.mubr.bf16.mxu0 0
  %5054 = vmatmul.mubr.bf16.gmra.mrb[0].mxu0 %v5016
  %v5055 = vpop.f32.mrb[0].mxu0
  %v5056 = vadd.f32 0.0, %v5055
  %v5057 = vpop.f32.mrb[0].mxu0
  %v5058 = vpop.f32.mrb[0].mxu0
  %v5059 = vadd.f32 0.0, %v5058
  %v5060 = vpop.f32.mrb[0].mxu0
  %5061 = vmatprep.mubr.bf16.mxu0 0
  %5062 = vmatmul.mubr.bf16.gmra.mrb[0].mxu0 %v5019
  %v5063 = vpop.f32.mrb[0].mxu0
  %v5064 = vadd.f32 0.0, %v5063
  %v5065 = vpop.f32.mrb[0].mxu0
  %v5066 = vpop.f32.mrb[0].mxu0
  %v5067 = vadd.f32 0.0, %v5066
  %v5068 = vpop.f32.mrb[0].mxu0
  %5069 = vdwg.mxu0
  %v5070 = vrcp.pop %v5003
  %v5071 = vrcp.pop %v5006
  %v5072 = vrcp.pop %v5009
  %v5073 = vrcp.pop %v5012
  %v5074 = vmul.f32 %v5056, %v5070
  %v5075 = vmul.f32 %v5059, %v5071
  %v5076 = vmul.f32 %v5064, %v5072
  %v5077 = vmul.f32 %v5067, %v5073
  %v5078 = vpack.c.bf16 %v5075, %v5074
  %v5079 = vpack.c.bf16 %v5077, %v5076
  %s5080 = scalar_lea.vmem %s11, 80
  %v5081 = vld [vmem:[%s5080] sm:$0xf]
  %v5082 = vld [vmem:[%s5080 + $0x4] sm:$0xf]
  %v5083 = vld [vmem:[%s5080 + $0x8] sm:$0xf]
  %v5084 = vld [vmem:[%s5080 + $0xc] sm:$0xf]
  %v5089 = vunpack.c.l.b16 %v5081
  %v5090 = vunpack.c.l.b16 %v5082
  %v5091 = vunpack.c.l.b16 %v5083
  %v5092 = vunpack.c.l.b16 %v5084
  %v5093 = vpack.c.b16 %v5090, %v5089
  %v5094 = vpack.c.b16 %v5092, %v5091
  %v5098 = vsel %vm288, %v5078, 0
  %v5101 = vsel %vm288, %v5079, 0
  %5103 = vmatprep.subr.bf16.mxu0 0
  %5104 = vmatpush1.bf16.msra.mxu0 %v5093
  %5105 = vmatprep.subr.bf16.mxu0 0
  %5106 = vmatpush1.bf16.msra.mxu0 %v5094
  %5107 = vmatprep.subr.bf16.mxu0 0
  %5108 = vmatpush1.bf16.msra.mxu0 0
  %5109 = vmatprep.subr.bf16.mxu0 0
  %5110 = vmatpush1.bf16.msra.mxu0 0
  %5111 = vmatprep.subr.bf16.mxu0 0
  %5112 = vmatpush1.bf16.msra.mxu0 0
  %5113 = vmatprep.subr.bf16.mxu0 0
  %5114 = vmatpush1.bf16.msra.mxu0 0
  %5115 = vmatprep.subr.bf16.mxu0 0
  %5116 = vmatpush1.bf16.msra.mxu0 0
  %5117 = vmatprep.subr.bf16.mxu0 0
  %5118 = vmatpush1.bf16.msra.mxu0 0
  %5119 = vmatprep.subr.bf16.mxu0 0
  %5120 = vmatpush1.bf16.msra.mxu0 0
  %5121 = vmatprep.subr.bf16.mxu0 0
  %5122 = vmatpush1.bf16.msra.mxu0 0
  %5123 = vmatprep.subr.bf16.mxu0 0
  %5124 = vmatpush1.bf16.msra.mxu0 0
  %5125 = vmatprep.subr.bf16.mxu0 0
  %5126 = vmatpush1.bf16.msra.mxu0 0
  %5127 = vmatprep.subr.bf16.mxu0 0
  %5128 = vmatpush1.bf16.msra.mxu0 0
  %5129 = vmatprep.subr.bf16.mxu0 0
  %5130 = vmatpush1.bf16.msra.mxu0 0
  %5131 = vmatprep.subr.bf16.mxu0 0
  %5132 = vmatpush1.bf16.msra.mxu0 0
  %5133 = vmatprep.subr.bf16.mxu0 0
  %5134 = vmatpush1.bf16.msra.mxu0 0
  %5135 = vmatprep.mubr.bf16.mxu0 0
  %5136 = vmatmul.mubr.bf16.gmra.mrb[0].mxu0 %v5098
  %v5137 = vpop.f32.mrb[0].mxu0
  %v5138 = vadd.f32 0.0, %v5137
  %v5139 = vpop.f32.mrb[0].mxu0
  %v5140 = vpop.f32.mrb[0].mxu0
  %v5141 = vadd.f32 0.0, %v5140
  %v5142 = vpop.f32.mrb[0].mxu0
  %5143 = vmatprep.mubr.bf16.mxu0 0
  %5144 = vmatmul.mubr.bf16.gmra.mrb[0].mxu0 %v5101
  %v5145 = vpop.f32.mrb[0].mxu0
  %v5146 = vadd.f32 0.0, %v5145
  %v5147 = vpop.f32.mrb[0].mxu0
  %v5148 = vpop.f32.mrb[0].mxu0
  %v5149 = vadd.f32 0.0, %v5148
  %v5150 = vpop.f32.mrb[0].mxu0
  %5151 = vdwg.mxu0
  %v5152 = vadd.f32 %v4426, %v5138
  %v5153 = vadd.f32 %v4427, %v5141
  %v5154 = vadd.f32 %v4428, %v5146
  %v5155 = vadd.f32 %v4429, %v5149
  %s5156 = scalar_lea.vmem %s8, 384
  %v5157 = vld [vmem:[%s5156] sm:$0xf]
  %v5158 = vld [vmem:[%s5156 + $0x4] sm:$0xf]
  %v5159 = vld [vmem:[%s5156 + $0x8] sm:$0xf]
  %v5160 = vld [vmem:[%s5156 + $0xc] sm:$0xf]
  %v5161 = vld [vmem:[%s5156 + $0x10] sm:$0xf]
  %v5162 = vld [vmem:[%s5156 + $0x14] sm:$0xf]
  %v5163 = vld [vmem:[%s5156 + $0x18] sm:$0xf]
  %v5164 = vld [vmem:[%s5156 + $0x1c] sm:$0xf]
  %v5165 = vld [vmem:[%s5156 + $0x20] sm:$0xf]
  %v5166 = vld [vmem:[%s5156 + $0x24] sm:$0xf]
  %v5167 = vld [vmem:[%s5156 + $0x28] sm:$0xf]
  %v5168 = vld [vmem:[%s5156 + $0x2c] sm:$0xf]
  %v5169 = vld [vmem:[%s5156 + $0x30] sm:$0xf]
  %v5170 = vld [vmem:[%s5156 + $0x34] sm:$0xf]
  %v5171 = vld [vmem:[%s5156 + $0x38] sm:$0xf]
  %v5172 = vld [vmem:[%s5156 + $0x3c] sm:$0xf]
  %v5189 = vunpack.c.l.b16 %v5157
  %v5190 = vunpack.c.l.b16 %v5158
  %v5191 = vunpack.c.l.b16 %v5159
  %v5192 = vunpack.c.l.b16 %v5160
  %v5193 = vunpack.c.l.b16 %v5161
  %v5194 = vunpack.c.l.b16 %v5162
  %v5195 = vunpack.c.l.b16 %v5163
  %v5196 = vunpack.c.l.b16 %v5164
  %v5197 = vunpack.c.l.b16 %v5165
  %v5198 = vunpack.c.l.b16 %v5166
  %v5199 = vunpack.c.l.b16 %v5167
  %v5200 = vunpack.c.l.b16 %v5168
  %v5201 = vunpack.c.l.b16 %v5169
  %v5202 = vunpack.c.l.b16 %v5170
  %v5203 = vunpack.c.l.b16 %v5171
  %v5204 = vunpack.c.l.b16 %v5172
  %v5205 = vpack.c.b16 %v5190, %v5189
  %v5206 = vpack.c.b16 %v5192, %v5191
  %v5207 = vpack.c.b16 %v5194, %v5193
  %v5208 = vpack.c.b16 %v5196, %v5195
  %v5209 = vpack.c.b16 %v5198, %v5197
  %v5210 = vpack.c.b16 %v5200, %v5199
  %v5211 = vpack.c.b16 %v5202, %v5201
  %v5212 = vpack.c.b16 %v5204, %v5203
  %5221 = vmatprep.subr.bf16.mxu0 0
  %5222 = vmatpush1.bf16.msra.mxu0 %v5205
  %5223 = vmatprep.subr.bf16.mxu0 0
  %5224 = vmatpush1.bf16.msra.mxu0 %v5206
  %5225 = vmatprep.subr.bf16.mxu0 0
  %5226 = vmatpush1.bf16.msra.mxu0 %v5207
  %5227 = vmatprep.subr.bf16.mxu0 0
  %5228 = vmatpush1.bf16.msra.mxu0 %v5208
  %5229 = vmatprep.subr.bf16.mxu0 0
  %5230 = vmatpush1.bf16.msra.mxu0 %v5209
  %5231 = vmatprep.subr.bf16.mxu0 0
  %5232 = vmatpush1.bf16.msra.mxu0 %v5210
  %5233 = vmatprep.subr.bf16.mxu0 0
  %5234 = vmatpush1.bf16.msra.mxu0 %v5211
  %5235 = vmatprep.subr.bf16.mxu0 0
  %5236 = vmatpush1.bf16.msra.mxu0 %v5212
  %5237 = vmatprep.subr.bf16.mxu0 0
  %5238 = vmatpush1.bf16.msra.mxu0 0
  %5239 = vmatprep.subr.bf16.mxu0 0
  %5240 = vmatpush1.bf16.msra.mxu0 0
  %5241 = vmatprep.subr.bf16.mxu0 0
  %5242 = vmatpush1.bf16.msra.mxu0 0
  %5243 = vmatprep.subr.bf16.mxu0 0
  %5244 = vmatpush1.bf16.msra.mxu0 0
  %5245 = vmatprep.subr.bf16.mxu0 0
  %5246 = vmatpush1.bf16.msra.mxu0 0
  %5247 = vmatprep.subr.bf16.mxu0 0
  %5248 = vmatpush1.bf16.msra.mxu0 0
  %5249 = vmatprep.subr.bf16.mxu0 0
  %5250 = vmatpush1.bf16.msra.mxu0 0
  %5251 = vmatprep.subr.bf16.mxu0 0
  %5252 = vmatpush1.bf16.msra.mxu0 0
  %5253 = vmatprep.mubr.bf16.mxu0 0
  %5254 = vmatmul.mubr.bf16.gmra.mrb[0].mxu0 %v3702
  %v5255 = vpop.f32.mrb[0].mxu0
  %v5256 = vadd.f32 0.0, %v5255
  %v5257 = vpop.f32.mrb[0].mxu0
  %v5258 = vpop.f32.mrb[0].mxu0
  %v5259 = vadd.f32 0.0, %v5258
  %v5260 = vpop.f32.mrb[0].mxu0
  %5261 = vmatprep.mubr.bf16.mxu0 0
  %5262 = vmatmul.mubr.bf16.gmra.mrb[0].mxu0 %v3703
  %v5263 = vpop.f32.mrb[0].mxu0
  %v5264 = vadd.f32 0.0, %v5263
  %v5265 = vpop.f32.mrb[0].mxu0
  %v5266 = vpop.f32.mrb[0].mxu0
  %v5267 = vadd.f32 0.0, %v5266
  %v5268 = vpop.f32.mrb[0].mxu0
  %5269 = vdwg.mxu0
  %v5270 = vpack.c.bf16 %v5259, %v5256
  %v5271 = vpack.c.bf16 %v5267, %v5264
  %v5273 = vsel %vm288, %v5270, 0
  %v5276 = vsel %vm288, %v5271, 0
  %5278 = vmatprep.subr.bf16.mxu0 0
  %5279 = vmatpush1.bf16.msra.mxu0 %v284
  %5280 = vmatprep.subr.bf16.mxu0 0
  %5281 = vmatpush1.bf16.msra.mxu0 %v285
  %5282 = vmatprep.subr.bf16.mxu0 0
  %5283 = vmatpush1.bf16.msra.mxu0 0
  %5284 = vmatprep.subr.bf16.mxu0 0
  %5285 = vmatpush1.bf16.msra.mxu0 0
  %5286 = vmatprep.subr.bf16.mxu0 0
  %5287 = vmatpush1.bf16.msra.mxu0 0
  %5288 = vmatprep.subr.bf16.mxu0 0
  %5289 = vmatpush1.bf16.msra.mxu0 0
  %5290 = vmatprep.subr.bf16.mxu0 0
  %5291 = vmatpush1.bf16.msra.mxu0 0
  %5292 = vmatprep.subr.bf16.mxu0 0
  %5293 = vmatpush1.bf16.msra.mxu0 0
  %5294 = vmatprep.subr.bf16.mxu0 0
  %5295 = vmatpush1.bf16.msra.mxu0 0
  %5296 = vmatprep.subr.bf16.mxu0 0
  %5297 = vmatpush1.bf16.msra.mxu0 0
  %5298 = vmatprep.subr.bf16.mxu0 0
  %5299 = vmatpush1.bf16.msra.mxu0 0
  %5300 = vmatprep.subr.bf16.mxu0 0
  %5301 = vmatpush1.bf16.msra.mxu0 0
  %5302 = vmatprep.subr.bf16.mxu0 0
  %5303 = vmatpush1.bf16.msra.mxu0 0
  %5304 = vmatprep.subr.bf16.mxu0 0
  %5305 = vmatpush1.bf16.msra.mxu0 0
  %5306 = vmatprep.subr.bf16.mxu0 0
  %5307 = vmatpush1.bf16.msra.mxu0 0
  %5308 = vmatprep.subr.bf16.mxu0 0
  %5309 = vmatpush1.bf16.msra.mxu0 0
  %5310 = vmatprep.mubr.bf16.mxu0 0
  %5311 = vmatmul.mubr.bf16.gmra.mrb[0].mxu0 %v5273
  %v5312 = vpop.f32.mrb[0].mxu0
  %v5313 = vadd.f32 0.0, %v5312
  %v5314 = vpop.f32.mrb[0].mxu0
  %v5315 = vpop.f32.mrb[0].mxu0
  %v5316 = vadd.f32 0.0, %v5315
  %v5317 = vpop.f32.mrb[0].mxu0
  %5318 = vmatprep.mubr.bf16.mxu0 0
  %5319 = vmatmul.mubr.bf16.gmra.mrb[0].mxu0 %v5276
  %v5320 = vpop.f32.mrb[0].mxu0
  %v5321 = vadd.f32 0.0, %v5320
  %v5322 = vpop.f32.mrb[0].mxu0
  %v5323 = vpop.f32.mrb[0].mxu0
  %v5324 = vadd.f32 0.0, %v5323
  %v5325 = vpop.f32.mrb[0].mxu0
  %5326 = vdwg.mxu0
  %v5327 = vmul.f32 %v5256, %v62
  %v5328 = vmul.f32 %v5259, %v63
  %v5329 = vmul.f32 %v5264, %v64
  %v5330 = vmul.f32 %v5267, %v65
  %v5331 = vmul.f32 %v5313, %v66
  %v5332 = vmul.f32 %v5316, %v67
  %v5333 = vmul.f32 %v5321, %v68
  %v5334 = vmul.f32 %v5324, %v69
  %v5335 = vadd.f32 %v5327, %v5331
  %v5336 = vadd.f32 %v5328, %v5332
  %v5337 = vadd.f32 %v5329, %v5333
  %v5338 = vadd.f32 %v5330, %v5334
  %v5339 = vpack.c.bf16 %v5336, %v5335
  %v5340 = vpack.c.bf16 %v5338, %v5337
  %s5341 = scalar_lea.vmem %s9, 384
  %v5342 = vld [vmem:[%s5341] sm:$0xf]
  %v5343 = vld [vmem:[%s5341 + $0x4] sm:$0xf]
  %v5344 = vld [vmem:[%s5341 + $0x8] sm:$0xf]
  %v5345 = vld [vmem:[%s5341 + $0xc] sm:$0xf]
  %v5346 = vld [vmem:[%s5341 + $0x10] sm:$0xf]
  %v5347 = vld [vmem:[%s5341 + $0x14] sm:$0xf]
  %v5348 = vld [vmem:[%s5341 + $0x18] sm:$0xf]
  %v5349 = vld [vmem:[%s5341 + $0x1c] sm:$0xf]
  %v5350 = vld [vmem:[%s5341 + $0x20] sm:$0xf]
  %v5351 = vld [vmem:[%s5341 + $0x24] sm:$0xf]
  %v5352 = vld [vmem:[%s5341 + $0x28] sm:$0xf]
  %v5353 = vld [vmem:[%s5341 + $0x2c] sm:$0xf]
  %v5354 = vld [vmem:[%s5341 + $0x30] sm:$0xf]
  %v5355 = vld [vmem:[%s5341 + $0x34] sm:$0xf]
  %v5356 = vld [vmem:[%s5341 + $0x38] sm:$0xf]
  %v5357 = vld [vmem:[%s5341 + $0x3c] sm:$0xf]
  %v5374 = vunpack.c.l.b16 %v5342
  %v5375 = vunpack.c.l.b16 %v5343
  %v5376 = vunpack.c.l.b16 %v5344
  %v5377 = vunpack.c.l.b16 %v5345
  %v5378 = vunpack.c.l.b16 %v5346
  %v5379 = vunpack.c.l.b16 %v5347
  %v5380 = vunpack.c.l.b16 %v5348
  %v5381 = vunpack.c.l.b16 %v5349
  %v5382 = vunpack.c.l.b16 %v5350
  %v5383 = vunpack.c.l.b16 %v5351
  %v5384 = vunpack.c.l.b16 %v5352
  %v5385 = vunpack.c.l.b16 %v5353
  %v5386 = vunpack.c.l.b16 %v5354
  %v5387 = vunpack.c.l.b16 %v5355
  %v5388 = vunpack.c.l.b16 %v5356
  %v5389 = vunpack.c.l.b16 %v5357
  %v5390 = vpack.c.b16 %v5375, %v5374
  %v5391 = vpack.c.b16 %v5377, %v5376
  %v5392 = vpack.c.b16 %v5379, %v5378
  %v5393 = vpack.c.b16 %v5381, %v5380
  %v5394 = vpack.c.b16 %v5383, %v5382
  %v5395 = vpack.c.b16 %v5385, %v5384
  %v5396 = vpack.c.b16 %v5387, %v5386
  %v5397 = vpack.c.b16 %v5389, %v5388
  %5406 = vmatprep.subr.bf16.mxu0 0
  %5407 = vmatpush1.bf16.msra.mxu0 %v5390
  %5408 = vmatprep.subr.bf16.mxu0 0
  %5409 = vmatpush1.bf16.msra.mxu0 %v5391
  %5410 = vmatprep.subr.bf16.mxu0 0
  %5411 = vmatpush1.bf16.msra.mxu0 %v5392
  %5412 = vmatprep.subr.bf16.mxu0 0
  %5413 = vmatpush1.bf16.msra.mxu0 %v5393
  %5414 = vmatprep.subr.bf16.mxu0 0
  %5415 = vmatpush1.bf16.msra.mxu0 %v5394
  %5416 = vmatprep.subr.bf16.mxu0 0
  %5417 = vmatpush1.bf16.msra.mxu0 %v5395
  %5418 = vmatprep.subr.bf16.mxu0 0
  %5419 = vmatpush1.bf16.msra.mxu0 %v5396
  %5420 = vmatprep.subr.bf16.mxu0 0
  %5421 = vmatpush1.bf16.msra.mxu0 %v5397
  %5422 = vmatprep.subr.bf16.mxu0 0
  %5423 = vmatpush1.bf16.msra.mxu0 0
  %5424 = vmatprep.subr.bf16.mxu0 0
  %5425 = vmatpush1.bf16.msra.mxu0 0
  %5426 = vmatprep.subr.bf16.mxu0 0
  %5427 = vmatpush1.bf16.msra.mxu0 0
  %5428 = vmatprep.subr.bf16.mxu0 0
  %5429 = vmatpush1.bf16.msra.mxu0 0
  %5430 = vmatprep.subr.bf16.mxu0 0
  %5431 = vmatpush1.bf16.msra.mxu0 0
  %5432 = vmatprep.subr.bf16.mxu0 0
  %5433 = vmatpush1.bf16.msra.mxu0 0
  %5434 = vmatprep.subr.bf16.mxu0 0
  %5435 = vmatpush1.bf16.msra.mxu0 0
  %5436 = vmatprep.subr.bf16.mxu0 0
  %5437 = vmatpush1.bf16.msra.mxu0 0
  %5438 = vmatprep.mubr.bf16.mxu0 0
  %5439 = vmatmul.mubr.bf16.gmra.mrb[0].mxu0 %v3702
  %v5440 = vpop.f32.mrb[0].mxu0
  %v5441 = vadd.f32 0.0, %v5440
  %v5442 = vpop.f32.mrb[0].mxu0
  %v5443 = vpop.f32.mrb[0].mxu0
  %v5444 = vadd.f32 0.0, %v5443
  %v5445 = vpop.f32.mrb[0].mxu0
  %5446 = vmatprep.mubr.bf16.mxu0 0
  %5447 = vmatmul.mubr.bf16.gmra.mrb[0].mxu0 %v3703
  %v5448 = vpop.f32.mrb[0].mxu0
  %v5449 = vadd.f32 0.0, %v5448
  %v5450 = vpop.f32.mrb[0].mxu0
  %v5451 = vpop.f32.mrb[0].mxu0
  %v5452 = vadd.f32 0.0, %v5451
  %v5453 = vpop.f32.mrb[0].mxu0
  %5454 = vdwg.mxu0
  %v5455 = vpack.c.bf16 %v5444, %v5441
  %v5456 = vpack.c.bf16 %v5452, %v5449
  %v5458 = vsel %vm288, %v5455, 0
  %v5461 = vsel %vm288, %v5456, 0
  %5463 = vmatprep.subr.bf16.mxu0 0
  %5464 = vmatpush1.bf16.msra.mxu0 %v284
  %5465 = vmatprep.subr.bf16.mxu0 0
  %5466 = vmatpush1.bf16.msra.mxu0 %v285
  %5467 = vmatprep.subr.bf16.mxu0 0
  %5468 = vmatpush1.bf16.msra.mxu0 0
  %5469 = vmatprep.subr.bf16.mxu0 0
  %5470 = vmatpush1.bf16.msra.mxu0 0
  %5471 = vmatprep.subr.bf16.mxu0 0
  %5472 = vmatpush1.bf16.msra.mxu0 0
  %5473 = vmatprep.subr.bf16.mxu0 0
  %5474 = vmatpush1.bf16.msra.mxu0 0
  %5475 = vmatprep.subr.bf16.mxu0 0
  %5476 = vmatpush1.bf16.msra.mxu0 0
  %5477 = vmatprep.subr.bf16.mxu0 0
  %5478 = vmatpush1.bf16.msra.mxu0 0
  %5479 = vmatprep.subr.bf16.mxu0 0
  %5480 = vmatpush1.bf16.msra.mxu0 0
  %5481 = vmatprep.subr.bf16.mxu0 0
  %5482 = vmatpush1.bf16.msra.mxu0 0
  %5483 = vmatprep.subr.bf16.mxu0 0
  %5484 = vmatpush1.bf16.msra.mxu0 0
  %5485 = vmatprep.subr.bf16.mxu0 0
  %5486 = vmatpush1.bf16.msra.mxu0 0
  %5487 = vmatprep.subr.bf16.mxu0 0
  %5488 = vmatpush1.bf16.msra.mxu0 0
  %5489 = vmatprep.subr.bf16.mxu0 0
  %5490 = vmatpush1.bf16.msra.mxu0 0
  %5491 = vmatprep.subr.bf16.mxu0 0
  %5492 = vmatpush1.bf16.msra.mxu0 0
  %5493 = vmatprep.subr.bf16.mxu0 0
  %5494 = vmatpush1.bf16.msra.mxu0 0
  %5495 = vmatprep.mubr.bf16.mxu0 0
  %5496 = vmatmul.mubr.bf16.gmra.mrb[0].mxu0 %v5458
  %v5497 = vpop.f32.mrb[0].mxu0
  %v5498 = vadd.f32 0.0, %v5497
  %v5499 = vpop.f32.mrb[0].mxu0
  %v5500 = vpop.f32.mrb[0].mxu0
  %v5501 = vadd.f32 0.0, %v5500
  %v5502 = vpop.f32.mrb[0].mxu0
  %5503 = vmatprep.mubr.bf16.mxu0 0
  %5504 = vmatmul.mubr.bf16.gmra.mrb[0].mxu0 %v5461
  %v5505 = vpop.f32.mrb[0].mxu0
  %v5506 = vadd.f32 0.0, %v5505
  %v5507 = vpop.f32.mrb[0].mxu0
  %v5508 = vpop.f32.mrb[0].mxu0
  %v5509 = vadd.f32 0.0, %v5508
  %v5510 = vpop.f32.mrb[0].mxu0
  %5511 = vdwg.mxu0
  %v5512 = vmul.f32 %v5441, %v62
  %v5513 = vmul.f32 %v5444, %v63
  %v5514 = vmul.f32 %v5449, %v64
  %v5515 = vmul.f32 %v5452, %v65
  %v5516 = vmul.f32 %v5498, %v66
  %v5517 = vmul.f32 %v5501, %v67
  %v5518 = vmul.f32 %v5506, %v68
  %v5519 = vmul.f32 %v5509, %v69
  %v5520 = vadd.f32 %v5512, %v5516
  %v5521 = vadd.f32 %v5513, %v5517
  %v5522 = vadd.f32 %v5514, %v5518
  %v5523 = vadd.f32 %v5515, %v5519
  %v5524 = vpack.c.bf16 %v5521, %v5520
  %v5525 = vpack.c.bf16 %v5523, %v5522
  %s5526 = scalar_lea.vmem %s10, 384
  %v5527 = vld [vmem:[%s5526] sm:$0xf]
  %v5528 = vld [vmem:[%s5526 + $0x4] sm:$0xf]
  %v5529 = vld [vmem:[%s5526 + $0x8] sm:$0xf]
  %v5530 = vld [vmem:[%s5526 + $0xc] sm:$0xf]
  %v5531 = vld [vmem:[%s5526 + $0x10] sm:$0xf]
  %v5532 = vld [vmem:[%s5526 + $0x14] sm:$0xf]
  %v5533 = vld [vmem:[%s5526 + $0x18] sm:$0xf]
  %v5534 = vld [vmem:[%s5526 + $0x1c] sm:$0xf]
  %v5535 = vld [vmem:[%s5526 + $0x20] sm:$0xf]
  %v5536 = vld [vmem:[%s5526 + $0x24] sm:$0xf]
  %v5537 = vld [vmem:[%s5526 + $0x28] sm:$0xf]
  %v5538 = vld [vmem:[%s5526 + $0x2c] sm:$0xf]
  %v5539 = vld [vmem:[%s5526 + $0x30] sm:$0xf]
  %v5540 = vld [vmem:[%s5526 + $0x34] sm:$0xf]
  %v5541 = vld [vmem:[%s5526 + $0x38] sm:$0xf]
  %v5542 = vld [vmem:[%s5526 + $0x3c] sm:$0xf]
  %v5559 = vunpack.c.l.b16 %v5527
  %v5560 = vunpack.c.l.b16 %v5528
  %v5561 = vunpack.c.l.b16 %v5529
  %v5562 = vunpack.c.l.b16 %v5530
  %v5563 = vunpack.c.l.b16 %v5531
  %v5564 = vunpack.c.l.b16 %v5532
  %v5565 = vunpack.c.l.b16 %v5533
  %v5566 = vunpack.c.l.b16 %v5534
  %v5567 = vunpack.c.l.b16 %v5535
  %v5568 = vunpack.c.l.b16 %v5536
  %v5569 = vunpack.c.l.b16 %v5537
  %v5570 = vunpack.c.l.b16 %v5538
  %v5571 = vunpack.c.l.b16 %v5539
  %v5572 = vunpack.c.l.b16 %v5540
  %v5573 = vunpack.c.l.b16 %v5541
  %v5574 = vunpack.c.l.b16 %v5542
  %v5575 = vpack.c.b16 %v5560, %v5559
  %v5576 = vpack.c.b16 %v5562, %v5561
  %v5577 = vpack.c.b16 %v5564, %v5563
  %v5578 = vpack.c.b16 %v5566, %v5565
  %v5579 = vpack.c.b16 %v5568, %v5567
  %v5580 = vpack.c.b16 %v5570, %v5569
  %v5581 = vpack.c.b16 %v5572, %v5571
  %v5582 = vpack.c.b16 %v5574, %v5573
  %5591 = vmatprep.subr.bf16.mxu0 0
  %5592 = vmatpush1.bf16.msra.mxu0 %v5575
  %5593 = vmatprep.subr.bf16.mxu0 0
  %5594 = vmatpush1.bf16.msra.mxu0 %v5576
  %5595 = vmatprep.subr.bf16.mxu0 0
  %5596 = vmatpush1.bf16.msra.mxu0 %v5577
  %5597 = vmatprep.subr.bf16.mxu0 0
  %5598 = vmatpush1.bf16.msra.mxu0 %v5578
  %5599 = vmatprep.subr.bf16.mxu0 0
  %5600 = vmatpush1.bf16.msra.mxu0 %v5579
  %5601 = vmatprep.subr.bf16.mxu0 0
  %5602 = vmatpush1.bf16.msra.mxu0 %v5580
  %5603 = vmatprep.subr.bf16.mxu0 0
  %5604 = vmatpush1.bf16.msra.mxu0 %v5581
  %5605 = vmatprep.subr.bf16.mxu0 0
  %5606 = vmatpush1.bf16.msra.mxu0 %v5582
  %5607 = vmatprep.subr.bf16.mxu0 0
  %5608 = vmatpush1.bf16.msra.mxu0 0
  %5609 = vmatprep.subr.bf16.mxu0 0
  %5610 = vmatpush1.bf16.msra.mxu0 0
  %5611 = vmatprep.subr.bf16.mxu0 0
  %5612 = vmatpush1.bf16.msra.mxu0 0
  %5613 = vmatprep.subr.bf16.mxu0 0
  %5614 = vmatpush1.bf16.msra.mxu0 0
  %5615 = vmatprep.subr.bf16.mxu0 0
  %5616 = vmatpush1.bf16.msra.mxu0 0
  %5617 = vmatprep.subr.bf16.mxu0 0
  %5618 = vmatpush1.bf16.msra.mxu0 0
  %5619 = vmatprep.subr.bf16.mxu0 0
  %5620 = vmatpush1.bf16.msra.mxu0 0
  %5621 = vmatprep.subr.bf16.mxu0 0
  %5622 = vmatpush1.bf16.msra.mxu0 0
  %5623 = vmatprep.mubr.bf16.mxu0 0
  %5624 = vmatmul.mubr.bf16.gmra.mrb[0].mxu0 %v3702
  %v5625 = vpop.f32.mrb[0].mxu0
  %v5626 = vadd.f32 0.0, %v5625
  %v5627 = vpop.f32.mrb[0].mxu0
  %v5628 = vpop.f32.mrb[0].mxu0
  %v5629 = vadd.f32 0.0, %v5628
  %v5630 = vpop.f32.mrb[0].mxu0
  %5631 = vmatprep.mubr.bf16.mxu0 0
  %5632 = vmatmul.mubr.bf16.gmra.mrb[0].mxu0 %v3703
  %v5633 = vpop.f32.mrb[0].mxu0
  %v5634 = vadd.f32 0.0, %v5633
  %v5635 = vpop.f32.mrb[0].mxu0
  %v5636 = vpop.f32.mrb[0].mxu0
  %v5637 = vadd.f32 0.0, %v5636
  %v5638 = vpop.f32.mrb[0].mxu0
  %5639 = vdwg.mxu0
  %v5640 = vpack.c.bf16 %v5629, %v5626
  %v5641 = vpack.c.bf16 %v5637, %v5634
  %v5643 = vsel %vm288, %v5339, 0
  %v5646 = vsel %vm288, %v5340, 0
  %v5649 = vsel %vm288, %v5524, 0
  %v5652 = vsel %vm288, %v5525, 0
  %5654 = vmatprep.subr.bf16.mxu0 0
  %5655 = vmatpush1.bf16.xpose.msra.mxu0 %v5649
  %5656 = vmatprep.subr.bf16.mxu0 0
  %5657 = vmatpush1.bf16.xpose.msra.mxu0 %v5652
  %5658 = vmatprep.subr.bf16.mxu0 0
  %5659 = vmatpush1.bf16.xpose.msra.mxu0 0
  %5660 = vmatprep.subr.bf16.mxu0 0
  %5661 = vmatpush1.bf16.xpose.msra.mxu0 0
  %5662 = vmatprep.subr.bf16.mxu0 0
  %5663 = vmatpush1.bf16.xpose.msra.mxu0 0
  %5664 = vmatprep.subr.bf16.mxu0 0
  %5665 = vmatpush1.bf16.xpose.msra.mxu0 0
  %5666 = vmatprep.subr.bf16.mxu0 0
  %5667 = vmatpush1.bf16.xpose.msra.mxu0 0
  %5668 = vmatprep.subr.bf16.mxu0 0
  %5669 = vmatpush1.bf16.xpose.msra.mxu0 0
  %5670 = vmatprep.subr.bf16.mxu0 0
  %5671 = vmatpush1.bf16.xpose.msra.mxu0 0
  %5672 = vmatprep.subr.bf16.mxu0 0
  %5673 = vmatpush1.bf16.xpose.msra.mxu0 0
  %5674 = vmatprep.subr.bf16.mxu0 0
  %5675 = vmatpush1.bf16.xpose.msra.mxu0 0
  %5676 = vmatprep.subr.bf16.mxu0 0
  %5677 = vmatpush1.bf16.xpose.msra.mxu0 0
  %5678 = vmatprep.subr.bf16.mxu0 0
  %5679 = vmatpush1.bf16.xpose.msra.mxu0 0
  %5680 = vmatprep.subr.bf16.mxu0 0
  %5681 = vmatpush1.bf16.xpose.msra.mxu0 0
  %5682 = vmatprep.subr.bf16.mxu0 0
  %5683 = vmatpush1.bf16.xpose.msra.mxu0 0
  %5684 = vmatprep.subr.bf16.mxu0 0
  %5685 = vmatpush1.bf16.xpose.msra.mxu0 0
  %5686 = vmatprep.mubr.bf16.mxu0 0
  %5687 = vmatmul.mubr.bf16.gmra.mrb[0].mxu0 %v5643
  %v5688 = vpop.f32.mrb[0].mxu0
  %v5689 = vadd.f32 %v115, %v5688
  %v5690 = vpop.f32.mrb[0].mxu0
  %v5691 = vpop.f32.mrb[0].mxu0
  %v5692 = vadd.f32 %v116, %v5691
  %v5693 = vpop.f32.mrb[0].mxu0
  %5694 = vmatprep.mubr.bf16.mxu0 0
  %5695 = vmatmul.mubr.bf16.gmra.mrb[0].mxu0 %v5646
  %v5696 = vpop.f32.mrb[0].mxu0
  %v5697 = vadd.f32 %v117, %v5696
  %v5698 = vpop.f32.mrb[0].mxu0
  %v5699 = vpop.f32.mrb[0].mxu0
  %v5700 = vadd.f32 %v118, %v5699
  %v5701 = vpop.f32.mrb[0].mxu0
  %5702 = vdwg.mxu0
  %v5703 = vsel %vm288, %v5689, -inf
  %5704 = vmax.xlane.f32.xlu0 %v5703
  %v5705 = vpop.xlane.xlu0 %5704
  %v5706 = vsel %vm288, %v5692, -inf
  %5707 = vmax.xlane.f32.xlu0 %v5706
  %v5708 = vpop.xlane.xlu0 %5707
  %v5709 = vsel %vm288, %v5697, -inf
  %5710 = vmax.xlane.f32.xlu0 %v5709
  %v5711 = vpop.xlane.xlu0 %5710
  %v5712 = vsel %vm288, %v5700, -inf
  %5713 = vmax.xlane.f32.xlu0 %v5712
  %v5714 = vpop.xlane.xlu0 %5713
  %v5715 = vsub.f32 %v5689, %v5705
  %v5716 = vsub.f32 %v5692, %v5708
  %v5717 = vsub.f32 %v5697, %v5711
  %v5718 = vsub.f32 %v5700, %v5714
  %v5719 = vmul.f32 %v5715, 1.442695
  %v5720 = vpow.pop %v5719
  %v5721 = vmul.f32 %v5716, 1.442695
  %v5722 = vpow.pop %v5721
  %v5723 = vmul.f32 %v5717, 1.442695
  %v5724 = vpow.pop %v5723
  %v5725 = vmul.f32 %v5718, 1.442695
  %v5726 = vpow.pop %v5725
  %v5727 = vsel %vm288, %v5720, 0.0
  %5728 = vadd.xlane.f32.xlu0 %v5727
  %v5729 = vpop.xlane.xlu0 %5728
  %v5730 = vsel %vm288, %v5722, 0.0
  %5731 = vadd.xlane.f32.xlu0 %v5730
  %v5732 = vpop.xlane.xlu0 %5731
  %v5733 = vsel %vm288, %v5724, 0.0
  %5734 = vadd.xlane.f32.xlu0 %v5733
  %v5735 = vpop.xlane.xlu0 %5734
  %v5736 = vsel %vm288, %v5726, 0.0
  %5737 = vadd.xlane.f32.xlu0 %v5736
  %v5738 = vpop.xlane.xlu0 %5737
  %v5739 = vpack.c.bf16 %v5722, %v5720
  %v5740 = vpack.c.bf16 %v5726, %v5724
  %v5742 = vsel %vm288, %v5739, 0
  %v5745 = vsel %vm288, %v5740, 0
  %5747 = vmatprep.subr.bf16.mxu0 0
  %5748 = vmatpush1.bf16.msra.mxu0 %v5640
  %5749 = vmatprep.subr.bf16.mxu0 0
  %5750 = vmatpush1.bf16.msra.mxu0 %v5641
  %5751 = vmatprep.subr.bf16.mxu0 0
  %5752 = vmatpush1.bf16.msra.mxu0 0
  %5753 = vmatprep.subr.bf16.mxu0 0
  %5754 = vmatpush1.bf16.msra.mxu0 0
  %5755 = vmatprep.subr.bf16.mxu0 0
  %5756 = vmatpush1.bf16.msra.mxu0 0
  %5757 = vmatprep.subr.bf16.mxu0 0
  %5758 = vmatpush1.bf16.msra.mxu0 0
  %5759 = vmatprep.subr.bf16.mxu0 0
  %5760 = vmatpush1.bf16.msra.mxu0 0
  %5761 = vmatprep.subr.bf16.mxu0 0
  %5762 = vmatpush1.bf16.msra.mxu0 0
  %5763 = vmatprep.subr.bf16.mxu0 0
  %5764 = vmatpush1.bf16.msra.mxu0 0
  %5765 = vmatprep.subr.bf16.mxu0 0
  %5766 = vmatpush1.bf16.msra.mxu0 0
  %5767 = vmatprep.subr.bf16.mxu0 0
  %5768 = vmatpush1.bf16.msra.mxu0 0
  %5769 = vmatprep.subr.bf16.mxu0 0
  %5770 = vmatpush1.bf16.msra.mxu0 0
  %5771 = vmatprep.subr.bf16.mxu0 0
  %5772 = vmatpush1.bf16.msra.mxu0 0
  %5773 = vmatprep.subr.bf16.mxu0 0
  %5774 = vmatpush1.bf16.msra.mxu0 0
  %5775 = vmatprep.subr.bf16.mxu0 0
  %5776 = vmatpush1.bf16.msra.mxu0 0
  %5777 = vmatprep.subr.bf16.mxu0 0
  %5778 = vmatpush1.bf16.msra.mxu0 0
  %5779 = vmatprep.mubr.bf16.mxu0 0
  %5780 = vmatmul.mubr.bf16.gmra.mrb[0].mxu0 %v5742
  %v5781 = vpop.f32.mrb[0].mxu0
  %v5782 = vadd.f32 0.0, %v5781
  %v5783 = vpop.f32.mrb[0].mxu0
  %v5784 = vpop.f32.mrb[0].mxu0
  %v5785 = vadd.f32 0.0, %v5784
  %v5786 = vpop.f32.mrb[0].mxu0
  %5787 = vmatprep.mubr.bf16.mxu0 0
  %5788 = vmatmul.mubr.bf16.gmra.mrb[0].mxu0 %v5745
  %v5789 = vpop.f32.mrb[0].mxu0
  %v5790 = vadd.f32 0.0, %v5789
  %v5791 = vpop.f32.mrb[0].mxu0
  %v5792 = vpop.f32.mrb[0].mxu0
  %v5793 = vadd.f32 0.0, %v5792
  %v5794 = vpop.f32.mrb[0].mxu0
  %5795 = vdwg.mxu0
  %v5796 = vrcp.pop %v5729
  %v5797 = vrcp.pop %v5732
  %v5798 = vrcp.pop %v5735
  %v5799 = vrcp.pop %v5738
  %v5800 = vmul.f32 %v5782, %v5796
  %v5801 = vmul.f32 %v5785, %v5797
  %v5802 = vmul.f32 %v5790, %v5798
  %v5803 = vmul.f32 %v5793, %v5799
  %v5804 = vpack.c.bf16 %v5801, %v5800
  %v5805 = vpack.c.bf16 %v5803, %v5802
  %s5806 = scalar_lea.vmem %s11, 96
  %v5807 = vld [vmem:[%s5806] sm:$0xf]
  %v5808 = vld [vmem:[%s5806 + $0x4] sm:$0xf]
  %v5809 = vld [vmem:[%s5806 + $0x8] sm:$0xf]
  %v5810 = vld [vmem:[%s5806 + $0xc] sm:$0xf]
  %v5815 = vunpack.c.l.b16 %v5807
  %v5816 = vunpack.c.l.b16 %v5808
  %v5817 = vunpack.c.l.b16 %v5809
  %v5818 = vunpack.c.l.b16 %v5810
  %v5819 = vpack.c.b16 %v5816, %v5815
  %v5820 = vpack.c.b16 %v5818, %v5817
  %v5824 = vsel %vm288, %v5804, 0
  %v5827 = vsel %vm288, %v5805, 0
  %5829 = vmatprep.subr.bf16.mxu0 0
  %5830 = vmatpush1.bf16.msra.mxu0 %v5819
  %5831 = vmatprep.subr.bf16.mxu0 0
  %5832 = vmatpush1.bf16.msra.mxu0 %v5820
  %5833 = vmatprep.subr.bf16.mxu0 0
  %5834 = vmatpush1.bf16.msra.mxu0 0
  %5835 = vmatprep.subr.bf16.mxu0 0
  %5836 = vmatpush1.bf16.msra.mxu0 0
  %5837 = vmatprep.subr.bf16.mxu0 0
  %5838 = vmatpush1.bf16.msra.mxu0 0
  %5839 = vmatprep.subr.bf16.mxu0 0
  %5840 = vmatpush1.bf16.msra.mxu0 0
  %5841 = vmatprep.subr.bf16.mxu0 0
  %5842 = vmatpush1.bf16.msra.mxu0 0
  %5843 = vmatprep.subr.bf16.mxu0 0
  %5844 = vmatpush1.bf16.msra.mxu0 0
  %5845 = vmatprep.subr.bf16.mxu0 0
  %5846 = vmatpush1.bf16.msra.mxu0 0
  %5847 = vmatprep.subr.bf16.mxu0 0
  %5848 = vmatpush1.bf16.msra.mxu0 0
  %5849 = vmatprep.subr.bf16.mxu0 0
  %5850 = vmatpush1.bf16.msra.mxu0 0
  %5851 = vmatprep.subr.bf16.mxu0 0
  %5852 = vmatpush1.bf16.msra.mxu0 0
  %5853 = vmatprep.subr.bf16.mxu0 0
  %5854 = vmatpush1.bf16.msra.mxu0 0
  %5855 = vmatprep.subr.bf16.mxu0 0
  %5856 = vmatpush1.bf16.msra.mxu0 0
  %5857 = vmatprep.subr.bf16.mxu0 0
  %5858 = vmatpush1.bf16.msra.mxu0 0
  %5859 = vmatprep.subr.bf16.mxu0 0
  %5860 = vmatpush1.bf16.msra.mxu0 0
  %5861 = vmatprep.mubr.bf16.mxu0 0
  %5862 = vmatmul.mubr.bf16.gmra.mrb[0].mxu0 %v5824
  %v5863 = vpop.f32.mrb[0].mxu0
  %v5864 = vadd.f32 0.0, %v5863
  %v5865 = vpop.f32.mrb[0].mxu0
  %v5866 = vpop.f32.mrb[0].mxu0
  %v5867 = vadd.f32 0.0, %v5866
  %v5868 = vpop.f32.mrb[0].mxu0
  %5869 = vmatprep.mubr.bf16.mxu0 0
  %5870 = vmatmul.mubr.bf16.gmra.mrb[0].mxu0 %v5827
  %v5871 = vpop.f32.mrb[0].mxu0
  %v5872 = vadd.f32 0.0, %v5871
  %v5873 = vpop.f32.mrb[0].mxu0
  %v5874 = vpop.f32.mrb[0].mxu0
  %v5875 = vadd.f32 0.0, %v5874
  %v5876 = vpop.f32.mrb[0].mxu0
  %5877 = vdwg.mxu0
  %v5878 = vadd.f32 %v5152, %v5864
  %v5879 = vadd.f32 %v5153, %v5867
  %v5880 = vadd.f32 %v5154, %v5872
  %v5881 = vadd.f32 %v5155, %v5875
  %s5882 = scalar_lea.vmem %s8, 448
  %v5883 = vld [vmem:[%s5882] sm:$0xf]
  %v5884 = vld [vmem:[%s5882 + $0x4] sm:$0xf]
  %v5885 = vld [vmem:[%s5882 + $0x8] sm:$0xf]
  %v5886 = vld [vmem:[%s5882 + $0xc] sm:$0xf]
  %v5887 = vld [vmem:[%s5882 + $0x10] sm:$0xf]
  %v5888 = vld [vmem:[%s5882 + $0x14] sm:$0xf]
  %v5889 = vld [vmem:[%s5882 + $0x18] sm:$0xf]
  %v5890 = vld [vmem:[%s5882 + $0x1c] sm:$0xf]
  %v5891 = vld [vmem:[%s5882 + $0x20] sm:$0xf]
  %v5892 = vld [vmem:[%s5882 + $0x24] sm:$0xf]
  %v5893 = vld [vmem:[%s5882 + $0x28] sm:$0xf]
  %v5894 = vld [vmem:[%s5882 + $0x2c] sm:$0xf]
  %v5895 = vld [vmem:[%s5882 + $0x30] sm:$0xf]
  %v5896 = vld [vmem:[%s5882 + $0x34] sm:$0xf]
  %v5897 = vld [vmem:[%s5882 + $0x38] sm:$0xf]
  %v5898 = vld [vmem:[%s5882 + $0x3c] sm:$0xf]
  %v5915 = vunpack.c.l.b16 %v5883
  %v5916 = vunpack.c.l.b16 %v5884
  %v5917 = vunpack.c.l.b16 %v5885
  %v5918 = vunpack.c.l.b16 %v5886
  %v5919 = vunpack.c.l.b16 %v5887
  %v5920 = vunpack.c.l.b16 %v5888
  %v5921 = vunpack.c.l.b16 %v5889
  %v5922 = vunpack.c.l.b16 %v5890
  %v5923 = vunpack.c.l.b16 %v5891
  %v5924 = vunpack.c.l.b16 %v5892
  %v5925 = vunpack.c.l.b16 %v5893
  %v5926 = vunpack.c.l.b16 %v5894
  %v5927 = vunpack.c.l.b16 %v5895
  %v5928 = vunpack.c.l.b16 %v5896
  %v5929 = vunpack.c.l.b16 %v5897
  %v5930 = vunpack.c.l.b16 %v5898
  %v5931 = vpack.c.b16 %v5916, %v5915
  %v5932 = vpack.c.b16 %v5918, %v5917
  %v5933 = vpack.c.b16 %v5920, %v5919
  %v5934 = vpack.c.b16 %v5922, %v5921
  %v5935 = vpack.c.b16 %v5924, %v5923
  %v5936 = vpack.c.b16 %v5926, %v5925
  %v5937 = vpack.c.b16 %v5928, %v5927
  %v5938 = vpack.c.b16 %v5930, %v5929
  %5947 = vmatprep.subr.bf16.mxu0 0
  %5948 = vmatpush1.bf16.msra.mxu0 %v5931
  %5949 = vmatprep.subr.bf16.mxu0 0
  %5950 = vmatpush1.bf16.msra.mxu0 %v5932
  %5951 = vmatprep.subr.bf16.mxu0 0
  %5952 = vmatpush1.bf16.msra.mxu0 %v5933
  %5953 = vmatprep.subr.bf16.mxu0 0
  %5954 = vmatpush1.bf16.msra.mxu0 %v5934
  %5955 = vmatprep.subr.bf16.mxu0 0
  %5956 = vmatpush1.bf16.msra.mxu0 %v5935
  %5957 = vmatprep.subr.bf16.mxu0 0
  %5958 = vmatpush1.bf16.msra.mxu0 %v5936
  %5959 = vmatprep.subr.bf16.mxu0 0
  %5960 = vmatpush1.bf16.msra.mxu0 %v5937
  %5961 = vmatprep.subr.bf16.mxu0 0
  %5962 = vmatpush1.bf16.msra.mxu0 %v5938
  %5963 = vmatprep.subr.bf16.mxu0 0
  %5964 = vmatpush1.bf16.msra.mxu0 0
  %5965 = vmatprep.subr.bf16.mxu0 0
  %5966 = vmatpush1.bf16.msra.mxu0 0
  %5967 = vmatprep.subr.bf16.mxu0 0
  %5968 = vmatpush1.bf16.msra.mxu0 0
  %5969 = vmatprep.subr.bf16.mxu0 0
  %5970 = vmatpush1.bf16.msra.mxu0 0
  %5971 = vmatprep.subr.bf16.mxu0 0
  %5972 = vmatpush1.bf16.msra.mxu0 0
  %5973 = vmatprep.subr.bf16.mxu0 0
  %5974 = vmatpush1.bf16.msra.mxu0 0
  %5975 = vmatprep.subr.bf16.mxu0 0
  %5976 = vmatpush1.bf16.msra.mxu0 0
  %5977 = vmatprep.subr.bf16.mxu0 0
  %5978 = vmatpush1.bf16.msra.mxu0 0
  %5979 = vmatprep.mubr.bf16.mxu0 0
  %5980 = vmatmul.mubr.bf16.gmra.mrb[0].mxu0 %v3702
  %v5981 = vpop.f32.mrb[0].mxu0
  %v5982 = vadd.f32 0.0, %v5981
  %v5983 = vpop.f32.mrb[0].mxu0
  %v5984 = vpop.f32.mrb[0].mxu0
  %v5985 = vadd.f32 0.0, %v5984
  %v5986 = vpop.f32.mrb[0].mxu0
  %5987 = vmatprep.mubr.bf16.mxu0 0
  %5988 = vmatmul.mubr.bf16.gmra.mrb[0].mxu0 %v3703
  %v5989 = vpop.f32.mrb[0].mxu0
  %v5990 = vadd.f32 0.0, %v5989
  %v5991 = vpop.f32.mrb[0].mxu0
  %v5992 = vpop.f32.mrb[0].mxu0
  %v5993 = vadd.f32 0.0, %v5992
  %v5994 = vpop.f32.mrb[0].mxu0
  %5995 = vdwg.mxu0
  %v5996 = vpack.c.bf16 %v5985, %v5982
  %v5997 = vpack.c.bf16 %v5993, %v5990
  %v5999 = vsel %vm288, %v5996, 0
  %v6002 = vsel %vm288, %v5997, 0
  %6004 = vmatprep.subr.bf16.mxu0 0
  %6005 = vmatpush1.bf16.msra.mxu0 %v284
  %6006 = vmatprep.subr.bf16.mxu0 0
  %6007 = vmatpush1.bf16.msra.mxu0 %v285
  %6008 = vmatprep.subr.bf16.mxu0 0
  %6009 = vmatpush1.bf16.msra.mxu0 0
  %6010 = vmatprep.subr.bf16.mxu0 0
  %6011 = vmatpush1.bf16.msra.mxu0 0
  %6012 = vmatprep.subr.bf16.mxu0 0
  %6013 = vmatpush1.bf16.msra.mxu0 0
  %6014 = vmatprep.subr.bf16.mxu0 0
  %6015 = vmatpush1.bf16.msra.mxu0 0
  %6016 = vmatprep.subr.bf16.mxu0 0
  %6017 = vmatpush1.bf16.msra.mxu0 0
  %6018 = vmatprep.subr.bf16.mxu0 0
  %6019 = vmatpush1.bf16.msra.mxu0 0
  %6020 = vmatprep.subr.bf16.mxu0 0
  %6021 = vmatpush1.bf16.msra.mxu0 0
  %6022 = vmatprep.subr.bf16.mxu0 0
  %6023 = vmatpush1.bf16.msra.mxu0 0
  %6024 = vmatprep.subr.bf16.mxu0 0
  %6025 = vmatpush1.bf16.msra.mxu0 0
  %6026 = vmatprep.subr.bf16.mxu0 0
  %6027 = vmatpush1.bf16.msra.mxu0 0
  %6028 = vmatprep.subr.bf16.mxu0 0
  %6029 = vmatpush1.bf16.msra.mxu0 0
  %6030 = vmatprep.subr.bf16.mxu0 0
  %6031 = vmatpush1.bf16.msra.mxu0 0
  %6032 = vmatprep.subr.bf16.mxu0 0
  %6033 = vmatpush1.bf16.msra.mxu0 0
  %6034 = vmatprep.subr.bf16.mxu0 0
  %6035 = vmatpush1.bf16.msra.mxu0 0
  %6036 = vmatprep.mubr.bf16.mxu0 0
  %6037 = vmatmul.mubr.bf16.gmra.mrb[0].mxu0 %v5999
  %v6038 = vpop.f32.mrb[0].mxu0
  %v6039 = vadd.f32 0.0, %v6038
  %v6040 = vpop.f32.mrb[0].mxu0
  %v6041 = vpop.f32.mrb[0].mxu0
  %v6042 = vadd.f32 0.0, %v6041
  %v6043 = vpop.f32.mrb[0].mxu0
  %6044 = vmatprep.mubr.bf16.mxu0 0
  %6045 = vmatmul.mubr.bf16.gmra.mrb[0].mxu0 %v6002
  %v6046 = vpop.f32.mrb[0].mxu0
  %v6047 = vadd.f32 0.0, %v6046
  %v6048 = vpop.f32.mrb[0].mxu0
  %v6049 = vpop.f32.mrb[0].mxu0
  %v6050 = vadd.f32 0.0, %v6049
  %v6051 = vpop.f32.mrb[0].mxu0
  %6052 = vdwg.mxu0
  %v6053 = vmul.f32 %v5982, %v62
  %v6054 = vmul.f32 %v5985, %v63
  %v6055 = vmul.f32 %v5990, %v64
  %v6056 = vmul.f32 %v5993, %v65
  %v6057 = vmul.f32 %v6039, %v66
  %v6058 = vmul.f32 %v6042, %v67
  %v6059 = vmul.f32 %v6047, %v68
  %v6060 = vmul.f32 %v6050, %v69
  %v6061 = vadd.f32 %v6053, %v6057
  %v6062 = vadd.f32 %v6054, %v6058
  %v6063 = vadd.f32 %v6055, %v6059
  %v6064 = vadd.f32 %v6056, %v6060
  %v6065 = vpack.c.bf16 %v6062, %v6061
  %v6066 = vpack.c.bf16 %v6064, %v6063
  %s6067 = scalar_lea.vmem %s9, 448
  %v6068 = vld [vmem:[%s6067] sm:$0xf]
  %v6069 = vld [vmem:[%s6067 + $0x4] sm:$0xf]
  %v6070 = vld [vmem:[%s6067 + $0x8] sm:$0xf]
  %v6071 = vld [vmem:[%s6067 + $0xc] sm:$0xf]
  %v6072 = vld [vmem:[%s6067 + $0x10] sm:$0xf]
  %v6073 = vld [vmem:[%s6067 + $0x14] sm:$0xf]
  %v6074 = vld [vmem:[%s6067 + $0x18] sm:$0xf]
  %v6075 = vld [vmem:[%s6067 + $0x1c] sm:$0xf]
  %v6076 = vld [vmem:[%s6067 + $0x20] sm:$0xf]
  %v6077 = vld [vmem:[%s6067 + $0x24] sm:$0xf]
  %v6078 = vld [vmem:[%s6067 + $0x28] sm:$0xf]
  %v6079 = vld [vmem:[%s6067 + $0x2c] sm:$0xf]
  %v6080 = vld [vmem:[%s6067 + $0x30] sm:$0xf]
  %v6081 = vld [vmem:[%s6067 + $0x34] sm:$0xf]
  %v6082 = vld [vmem:[%s6067 + $0x38] sm:$0xf]
  %v6083 = vld [vmem:[%s6067 + $0x3c] sm:$0xf]
  %v6100 = vunpack.c.l.b16 %v6068
  %v6101 = vunpack.c.l.b16 %v6069
  %v6102 = vunpack.c.l.b16 %v6070
  %v6103 = vunpack.c.l.b16 %v6071
  %v6104 = vunpack.c.l.b16 %v6072
  %v6105 = vunpack.c.l.b16 %v6073
  %v6106 = vunpack.c.l.b16 %v6074
  %v6107 = vunpack.c.l.b16 %v6075
  %v6108 = vunpack.c.l.b16 %v6076
  %v6109 = vunpack.c.l.b16 %v6077
  %v6110 = vunpack.c.l.b16 %v6078
  %v6111 = vunpack.c.l.b16 %v6079
  %v6112 = vunpack.c.l.b16 %v6080
  %v6113 = vunpack.c.l.b16 %v6081
  %v6114 = vunpack.c.l.b16 %v6082
  %v6115 = vunpack.c.l.b16 %v6083
  %v6116 = vpack.c.b16 %v6101, %v6100
  %v6117 = vpack.c.b16 %v6103, %v6102
  %v6118 = vpack.c.b16 %v6105, %v6104
  %v6119 = vpack.c.b16 %v6107, %v6106
  %v6120 = vpack.c.b16 %v6109, %v6108
  %v6121 = vpack.c.b16 %v6111, %v6110
  %v6122 = vpack.c.b16 %v6113, %v6112
  %v6123 = vpack.c.b16 %v6115, %v6114
  %6132 = vmatprep.subr.bf16.mxu0 0
  %6133 = vmatpush1.bf16.msra.mxu0 %v6116
  %6134 = vmatprep.subr.bf16.mxu0 0
  %6135 = vmatpush1.bf16.msra.mxu0 %v6117
  %6136 = vmatprep.subr.bf16.mxu0 0
  %6137 = vmatpush1.bf16.msra.mxu0 %v6118
  %6138 = vmatprep.subr.bf16.mxu0 0
  %6139 = vmatpush1.bf16.msra.mxu0 %v6119
  %6140 = vmatprep.subr.bf16.mxu0 0
  %6141 = vmatpush1.bf16.msra.mxu0 %v6120
  %6142 = vmatprep.subr.bf16.mxu0 0
  %6143 = vmatpush1.bf16.msra.mxu0 %v6121
  %6144 = vmatprep.subr.bf16.mxu0 0
  %6145 = vmatpush1.bf16.msra.mxu0 %v6122
  %6146 = vmatprep.subr.bf16.mxu0 0
  %6147 = vmatpush1.bf16.msra.mxu0 %v6123
  %6148 = vmatprep.subr.bf16.mxu0 0
  %6149 = vmatpush1.bf16.msra.mxu0 0
  %6150 = vmatprep.subr.bf16.mxu0 0
  %6151 = vmatpush1.bf16.msra.mxu0 0
  %6152 = vmatprep.subr.bf16.mxu0 0
  %6153 = vmatpush1.bf16.msra.mxu0 0
  %6154 = vmatprep.subr.bf16.mxu0 0
  %6155 = vmatpush1.bf16.msra.mxu0 0
  %6156 = vmatprep.subr.bf16.mxu0 0
  %6157 = vmatpush1.bf16.msra.mxu0 0
  %6158 = vmatprep.subr.bf16.mxu0 0
  %6159 = vmatpush1.bf16.msra.mxu0 0
  %6160 = vmatprep.subr.bf16.mxu0 0
  %6161 = vmatpush1.bf16.msra.mxu0 0
  %6162 = vmatprep.subr.bf16.mxu0 0
  %6163 = vmatpush1.bf16.msra.mxu0 0
  %6164 = vmatprep.mubr.bf16.mxu0 0
  %6165 = vmatmul.mubr.bf16.gmra.mrb[0].mxu0 %v3702
  %v6166 = vpop.f32.mrb[0].mxu0
  %v6167 = vadd.f32 0.0, %v6166
  %v6168 = vpop.f32.mrb[0].mxu0
  %v6169 = vpop.f32.mrb[0].mxu0
  %v6170 = vadd.f32 0.0, %v6169
  %v6171 = vpop.f32.mrb[0].mxu0
  %6172 = vmatprep.mubr.bf16.mxu0 0
  %6173 = vmatmul.mubr.bf16.gmra.mrb[0].mxu0 %v3703
  %v6174 = vpop.f32.mrb[0].mxu0
  %v6175 = vadd.f32 0.0, %v6174
  %v6176 = vpop.f32.mrb[0].mxu0
  %v6177 = vpop.f32.mrb[0].mxu0
  %v6178 = vadd.f32 0.0, %v6177
  %v6179 = vpop.f32.mrb[0].mxu0
  %6180 = vdwg.mxu0
  %v6181 = vpack.c.bf16 %v6170, %v6167
  %v6182 = vpack.c.bf16 %v6178, %v6175
  %v6184 = vsel %vm288, %v6181, 0
  %v6187 = vsel %vm288, %v6182, 0
  %6189 = vmatprep.subr.bf16.mxu0 0
  %6190 = vmatpush1.bf16.msra.mxu0 %v284
  %6191 = vmatprep.subr.bf16.mxu0 0
  %6192 = vmatpush1.bf16.msra.mxu0 %v285
  %6193 = vmatprep.subr.bf16.mxu0 0
  %6194 = vmatpush1.bf16.msra.mxu0 0
  %6195 = vmatprep.subr.bf16.mxu0 0
  %6196 = vmatpush1.bf16.msra.mxu0 0
  %6197 = vmatprep.subr.bf16.mxu0 0
  %6198 = vmatpush1.bf16.msra.mxu0 0
  %6199 = vmatprep.subr.bf16.mxu0 0
  %6200 = vmatpush1.bf16.msra.mxu0 0
  %6201 = vmatprep.subr.bf16.mxu0 0
  %6202 = vmatpush1.bf16.msra.mxu0 0
  %6203 = vmatprep.subr.bf16.mxu0 0
  %6204 = vmatpush1.bf16.msra.mxu0 0
  %6205 = vmatprep.subr.bf16.mxu0 0
  %6206 = vmatpush1.bf16.msra.mxu0 0
  %6207 = vmatprep.subr.bf16.mxu0 0
  %6208 = vmatpush1.bf16.msra.mxu0 0
  %6209 = vmatprep.subr.bf16.mxu0 0
  %6210 = vmatpush1.bf16.msra.mxu0 0
  %6211 = vmatprep.subr.bf16.mxu0 0
  %6212 = vmatpush1.bf16.msra.mxu0 0
  %6213 = vmatprep.subr.bf16.mxu0 0
  %6214 = vmatpush1.bf16.msra.mxu0 0
  %6215 = vmatprep.subr.bf16.mxu0 0
  %6216 = vmatpush1.bf16.msra.mxu0 0
  %6217 = vmatprep.subr.bf16.mxu0 0
  %6218 = vmatpush1.bf16.msra.mxu0 0
  %6219 = vmatprep.subr.bf16.mxu0 0
  %6220 = vmatpush1.bf16.msra.mxu0 0
  %6221 = vmatprep.mubr.bf16.mxu0 0
  %6222 = vmatmul.mubr.bf16.gmra.mrb[0].mxu0 %v6184
  %v6223 = vpop.f32.mrb[0].mxu0
  %v6224 = vadd.f32 0.0, %v6223
  %v6225 = vpop.f32.mrb[0].mxu0
  %v6226 = vpop.f32.mrb[0].mxu0
  %v6227 = vadd.f32 0.0, %v6226
  %v6228 = vpop.f32.mrb[0].mxu0
  %6229 = vmatprep.mubr.bf16.mxu0 0
  %6230 = vmatmul.mubr.bf16.gmra.mrb[0].mxu0 %v6187
  %v6231 = vpop.f32.mrb[0].mxu0
  %v6232 = vadd.f32 0.0, %v6231
  %v6233 = vpop.f32.mrb[0].mxu0
  %v6234 = vpop.f32.mrb[0].mxu0
  %v6235 = vadd.f32 0.0, %v6234
  %v6236 = vpop.f32.mrb[0].mxu0
  %6237 = vdwg.mxu0
  %v6238 = vmul.f32 %v6167, %v62
  %v6239 = vmul.f32 %v6170, %v63
  %v6240 = vmul.f32 %v6175, %v64
  %v6241 = vmul.f32 %v6178, %v65
  %v6242 = vmul.f32 %v6224, %v66
  %v6243 = vmul.f32 %v6227, %v67
  %v6244 = vmul.f32 %v6232, %v68
  %v6245 = vmul.f32 %v6235, %v69
  %v6246 = vadd.f32 %v6238, %v6242
  %v6247 = vadd.f32 %v6239, %v6243
  %v6248 = vadd.f32 %v6240, %v6244
  %v6249 = vadd.f32 %v6241, %v6245
  %v6250 = vpack.c.bf16 %v6247, %v6246
  %v6251 = vpack.c.bf16 %v6249, %v6248
  %s6252 = scalar_lea.vmem %s10, 448
  %v6253 = vld [vmem:[%s6252] sm:$0xf]
  %v6254 = vld [vmem:[%s6252 + $0x4] sm:$0xf]
  %v6255 = vld [vmem:[%s6252 + $0x8] sm:$0xf]
  %v6256 = vld [vmem:[%s6252 + $0xc] sm:$0xf]
  %v6257 = vld [vmem:[%s6252 + $0x10] sm:$0xf]
  %v6258 = vld [vmem:[%s6252 + $0x14] sm:$0xf]
  %v6259 = vld [vmem:[%s6252 + $0x18] sm:$0xf]
  %v6260 = vld [vmem:[%s6252 + $0x1c] sm:$0xf]
  %v6261 = vld [vmem:[%s6252 + $0x20] sm:$0xf]
  %v6262 = vld [vmem:[%s6252 + $0x24] sm:$0xf]
  %v6263 = vld [vmem:[%s6252 + $0x28] sm:$0xf]
  %v6264 = vld [vmem:[%s6252 + $0x2c] sm:$0xf]
  %v6265 = vld [vmem:[%s6252 + $0x30] sm:$0xf]
  %v6266 = vld [vmem:[%s6252 + $0x34] sm:$0xf]
  %v6267 = vld [vmem:[%s6252 + $0x38] sm:$0xf]
  %v6268 = vld [vmem:[%s6252 + $0x3c] sm:$0xf]
  %v6285 = vunpack.c.l.b16 %v6253
  %v6286 = vunpack.c.l.b16 %v6254
  %v6287 = vunpack.c.l.b16 %v6255
  %v6288 = vunpack.c.l.b16 %v6256
  %v6289 = vunpack.c.l.b16 %v6257
  %v6290 = vunpack.c.l.b16 %v6258
  %v6291 = vunpack.c.l.b16 %v6259
  %v6292 = vunpack.c.l.b16 %v6260
  %v6293 = vunpack.c.l.b16 %v6261
  %v6294 = vunpack.c.l.b16 %v6262
  %v6295 = vunpack.c.l.b16 %v6263
  %v6296 = vunpack.c.l.b16 %v6264
  %v6297 = vunpack.c.l.b16 %v6265
  %v6298 = vunpack.c.l.b16 %v6266
  %v6299 = vunpack.c.l.b16 %v6267
  %v6300 = vunpack.c.l.b16 %v6268
  %v6301 = vpack.c.b16 %v6286, %v6285
  %v6302 = vpack.c.b16 %v6288, %v6287
  %v6303 = vpack.c.b16 %v6290, %v6289
  %v6304 = vpack.c.b16 %v6292, %v6291
  %v6305 = vpack.c.b16 %v6294, %v6293
  %v6306 = vpack.c.b16 %v6296, %v6295
  %v6307 = vpack.c.b16 %v6298, %v6297
  %v6308 = vpack.c.b16 %v6300, %v6299
  %6317 = vmatprep.subr.bf16.mxu0 0
  %6318 = vmatpush1.bf16.msra.mxu0 %v6301
  %6319 = vmatprep.subr.bf16.mxu0 0
  %6320 = vmatpush1.bf16.msra.mxu0 %v6302
  %6321 = vmatprep.subr.bf16.mxu0 0
  %6322 = vmatpush1.bf16.msra.mxu0 %v6303
  %6323 = vmatprep.subr.bf16.mxu0 0
  %6324 = vmatpush1.bf16.msra.mxu0 %v6304
  %6325 = vmatprep.subr.bf16.mxu0 0
  %6326 = vmatpush1.bf16.msra.mxu0 %v6305
  %6327 = vmatprep.subr.bf16.mxu0 0
  %6328 = vmatpush1.bf16.msra.mxu0 %v6306
  %6329 = vmatprep.subr.bf16.mxu0 0
  %6330 = vmatpush1.bf16.msra.mxu0 %v6307
  %6331 = vmatprep.subr.bf16.mxu0 0
  %6332 = vmatpush1.bf16.msra.mxu0 %v6308
  %6333 = vmatprep.subr.bf16.mxu0 0
  %6334 = vmatpush1.bf16.msra.mxu0 0
  %6335 = vmatprep.subr.bf16.mxu0 0
  %6336 = vmatpush1.bf16.msra.mxu0 0
  %6337 = vmatprep.subr.bf16.mxu0 0
  %6338 = vmatpush1.bf16.msra.mxu0 0
  %6339 = vmatprep.subr.bf16.mxu0 0
  %6340 = vmatpush1.bf16.msra.mxu0 0
  %6341 = vmatprep.subr.bf16.mxu0 0
  %6342 = vmatpush1.bf16.msra.mxu0 0
  %6343 = vmatprep.subr.bf16.mxu0 0
  %6344 = vmatpush1.bf16.msra.mxu0 0
  %6345 = vmatprep.subr.bf16.mxu0 0
  %6346 = vmatpush1.bf16.msra.mxu0 0
  %6347 = vmatprep.subr.bf16.mxu0 0
  %6348 = vmatpush1.bf16.msra.mxu0 0
  %6349 = vmatprep.mubr.bf16.mxu0 0
  %6350 = vmatmul.mubr.bf16.gmra.mrb[0].mxu0 %v3702
  %v6351 = vpop.f32.mrb[0].mxu0
  %v6352 = vadd.f32 0.0, %v6351
  %v6353 = vpop.f32.mrb[0].mxu0
  %v6354 = vpop.f32.mrb[0].mxu0
  %v6355 = vadd.f32 0.0, %v6354
  %v6356 = vpop.f32.mrb[0].mxu0
  %6357 = vmatprep.mubr.bf16.mxu0 0
  %6358 = vmatmul.mubr.bf16.gmra.mrb[0].mxu0 %v3703
  %v6359 = vpop.f32.mrb[0].mxu0
  %v6360 = vadd.f32 0.0, %v6359
  %v6361 = vpop.f32.mrb[0].mxu0
  %v6362 = vpop.f32.mrb[0].mxu0
  %v6363 = vadd.f32 0.0, %v6362
  %v6364 = vpop.f32.mrb[0].mxu0
  %6365 = vdwg.mxu0
  %v6366 = vpack.c.bf16 %v6355, %v6352
  %v6367 = vpack.c.bf16 %v6363, %v6360
  %v6369 = vsel %vm288, %v6065, 0
  %v6372 = vsel %vm288, %v6066, 0
  %v6375 = vsel %vm288, %v6250, 0
  %v6378 = vsel %vm288, %v6251, 0
  %6380 = vmatprep.subr.bf16.mxu0 0
  %6381 = vmatpush1.bf16.xpose.msra.mxu0 %v6375
  %6382 = vmatprep.subr.bf16.mxu0 0
  %6383 = vmatpush1.bf16.xpose.msra.mxu0 %v6378
  %6384 = vmatprep.subr.bf16.mxu0 0
  %6385 = vmatpush1.bf16.xpose.msra.mxu0 0
  %6386 = vmatprep.subr.bf16.mxu0 0
  %6387 = vmatpush1.bf16.xpose.msra.mxu0 0
  %6388 = vmatprep.subr.bf16.mxu0 0
  %6389 = vmatpush1.bf16.xpose.msra.mxu0 0
  %6390 = vmatprep.subr.bf16.mxu0 0
  %6391 = vmatpush1.bf16.xpose.msra.mxu0 0
  %6392 = vmatprep.subr.bf16.mxu0 0
  %6393 = vmatpush1.bf16.xpose.msra.mxu0 0
  %6394 = vmatprep.subr.bf16.mxu0 0
  %6395 = vmatpush1.bf16.xpose.msra.mxu0 0
  %6396 = vmatprep.subr.bf16.mxu0 0
  %6397 = vmatpush1.bf16.xpose.msra.mxu0 0
  %6398 = vmatprep.subr.bf16.mxu0 0
  %6399 = vmatpush1.bf16.xpose.msra.mxu0 0
  %6400 = vmatprep.subr.bf16.mxu0 0
  %6401 = vmatpush1.bf16.xpose.msra.mxu0 0
  %6402 = vmatprep.subr.bf16.mxu0 0
  %6403 = vmatpush1.bf16.xpose.msra.mxu0 0
  %6404 = vmatprep.subr.bf16.mxu0 0
  %6405 = vmatpush1.bf16.xpose.msra.mxu0 0
  %6406 = vmatprep.subr.bf16.mxu0 0
  %6407 = vmatpush1.bf16.xpose.msra.mxu0 0
  %6408 = vmatprep.subr.bf16.mxu0 0
  %6409 = vmatpush1.bf16.xpose.msra.mxu0 0
  %6410 = vmatprep.subr.bf16.mxu0 0
  %6411 = vmatpush1.bf16.xpose.msra.mxu0 0
  %6412 = vmatprep.mubr.bf16.mxu0 0
  %6413 = vmatmul.mubr.bf16.gmra.mrb[0].mxu0 %v6369
  %v6414 = vpop.f32.mrb[0].mxu0
  %v6415 = vadd.f32 %v115, %v6414
  %v6416 = vpop.f32.mrb[0].mxu0
  %v6417 = vpop.f32.mrb[0].mxu0
  %v6418 = vadd.f32 %v116, %v6417
  %v6419 = vpop.f32.mrb[0].mxu0
  %6420 = vmatprep.mubr.bf16.mxu0 0
  %6421 = vmatmul.mubr.bf16.gmra.mrb[0].mxu0 %v6372
  %v6422 = vpop.f32.mrb[0].mxu0
  %v6423 = vadd.f32 %v117, %v6422
  %v6424 = vpop.f32.mrb[0].mxu0
  %v6425 = vpop.f32.mrb[0].mxu0
  %v6426 = vadd.f32 %v118, %v6425
  %v6427 = vpop.f32.mrb[0].mxu0
  %6428 = vdwg.mxu0
  %v6429 = vsel %vm288, %v6415, -inf
  %6430 = vmax.xlane.f32.xlu0 %v6429
  %v6431 = vpop.xlane.xlu0 %6430
  %v6432 = vsel %vm288, %v6418, -inf
  %6433 = vmax.xlane.f32.xlu0 %v6432
  %v6434 = vpop.xlane.xlu0 %6433
  %v6435 = vsel %vm288, %v6423, -inf
  %6436 = vmax.xlane.f32.xlu0 %v6435
  %v6437 = vpop.xlane.xlu0 %6436
  %v6438 = vsel %vm288, %v6426, -inf
  %6439 = vmax.xlane.f32.xlu0 %v6438
  %v6440 = vpop.xlane.xlu0 %6439
  %v6441 = vsub.f32 %v6415, %v6431
  %v6442 = vsub.f32 %v6418, %v6434
  %v6443 = vsub.f32 %v6423, %v6437
  %v6444 = vsub.f32 %v6426, %v6440
  %v6445 = vmul.f32 %v6441, 1.442695
  %v6446 = vpow.pop %v6445
  %v6447 = vmul.f32 %v6442, 1.442695
  %v6448 = vpow.pop %v6447
  %v6449 = vmul.f32 %v6443, 1.442695
  %v6450 = vpow.pop %v6449
  %v6451 = vmul.f32 %v6444, 1.442695
  %v6452 = vpow.pop %v6451
  %v6453 = vsel %vm288, %v6446, 0.0
  %6454 = vadd.xlane.f32.xlu0 %v6453
  %v6455 = vpop.xlane.xlu0 %6454
  %v6456 = vsel %vm288, %v6448, 0.0
  %6457 = vadd.xlane.f32.xlu0 %v6456
  %v6458 = vpop.xlane.xlu0 %6457
  %v6459 = vsel %vm288, %v6450, 0.0
  %6460 = vadd.xlane.f32.xlu0 %v6459
  %v6461 = vpop.xlane.xlu0 %6460
  %v6462 = vsel %vm288, %v6452, 0.0
  %6463 = vadd.xlane.f32.xlu0 %v6462
  %v6464 = vpop.xlane.xlu0 %6463
  %v6465 = vpack.c.bf16 %v6448, %v6446
  %v6466 = vpack.c.bf16 %v6452, %v6450
  %v6468 = vsel %vm288, %v6465, 0
  %v6471 = vsel %vm288, %v6466, 0
  %6473 = vmatprep.subr.bf16.mxu0 0
  %6474 = vmatpush1.bf16.msra.mxu0 %v6366
  %6475 = vmatprep.subr.bf16.mxu0 0
  %6476 = vmatpush1.bf16.msra.mxu0 %v6367
  %6477 = vmatprep.subr.bf16.mxu0 0
  %6478 = vmatpush1.bf16.msra.mxu0 0
  %6479 = vmatprep.subr.bf16.mxu0 0
  %6480 = vmatpush1.bf16.msra.mxu0 0
  %6481 = vmatprep.subr.bf16.mxu0 0
  %6482 = vmatpush1.bf16.msra.mxu0 0
  %6483 = vmatprep.subr.bf16.mxu0 0
  %6484 = vmatpush1.bf16.msra.mxu0 0
  %6485 = vmatprep.subr.bf16.mxu0 0
  %6486 = vmatpush1.bf16.msra.mxu0 0
  %6487 = vmatprep.subr.bf16.mxu0 0
  %6488 = vmatpush1.bf16.msra.mxu0 0
  %6489 = vmatprep.subr.bf16.mxu0 0
  %6490 = vmatpush1.bf16.msra.mxu0 0
  %6491 = vmatprep.subr.bf16.mxu0 0
  %6492 = vmatpush1.bf16.msra.mxu0 0
  %6493 = vmatprep.subr.bf16.mxu0 0
  %6494 = vmatpush1.bf16.msra.mxu0 0
  %6495 = vmatprep.subr.bf16.mxu0 0
  %6496 = vmatpush1.bf16.msra.mxu0 0
  %6497 = vmatprep.subr.bf16.mxu0 0
  %6498 = vmatpush1.bf16.msra.mxu0 0
  %6499 = vmatprep.subr.bf16.mxu0 0
  %6500 = vmatpush1.bf16.msra.mxu0 0
  %6501 = vmatprep.subr.bf16.mxu0 0
  %6502 = vmatpush1.bf16.msra.mxu0 0
  %6503 = vmatprep.subr.bf16.mxu0 0
  %6504 = vmatpush1.bf16.msra.mxu0 0
  %6505 = vmatprep.mubr.bf16.mxu0 0
  %6506 = vmatmul.mubr.bf16.gmra.mrb[0].mxu0 %v6468
  %v6507 = vpop.f32.mrb[0].mxu0
  %v6508 = vadd.f32 0.0, %v6507
  %v6509 = vpop.f32.mrb[0].mxu0
  %v6510 = vpop.f32.mrb[0].mxu0
  %v6511 = vadd.f32 0.0, %v6510
  %v6512 = vpop.f32.mrb[0].mxu0
  %6513 = vmatprep.mubr.bf16.mxu0 0
  %6514 = vmatmul.mubr.bf16.gmra.mrb[0].mxu0 %v6471
  %v6515 = vpop.f32.mrb[0].mxu0
  %v6516 = vadd.f32 0.0, %v6515
  %v6517 = vpop.f32.mrb[0].mxu0
  %v6518 = vpop.f32.mrb[0].mxu0
  %v6519 = vadd.f32 0.0, %v6518
  %v6520 = vpop.f32.mrb[0].mxu0
  %6521 = vdwg.mxu0
  %v6522 = vrcp.pop %v6455
  %v6523 = vrcp.pop %v6458
  %v6524 = vrcp.pop %v6461
  %v6525 = vrcp.pop %v6464
  %v6526 = vmul.f32 %v6508, %v6522
  %v6527 = vmul.f32 %v6511, %v6523
  %v6528 = vmul.f32 %v6516, %v6524
  %v6529 = vmul.f32 %v6519, %v6525
  %v6530 = vpack.c.bf16 %v6527, %v6526
  %v6531 = vpack.c.bf16 %v6529, %v6528
  %s6532 = scalar_lea.vmem %s11, 112
  %v6533 = vld [vmem:[%s6532] sm:$0xf]
  %v6534 = vld [vmem:[%s6532 + $0x4] sm:$0xf]
  %v6535 = vld [vmem:[%s6532 + $0x8] sm:$0xf]
  %v6536 = vld [vmem:[%s6532 + $0xc] sm:$0xf]
  %v6541 = vunpack.c.l.b16 %v6533
  %v6542 = vunpack.c.l.b16 %v6534
  %v6543 = vunpack.c.l.b16 %v6535
  %v6544 = vunpack.c.l.b16 %v6536
  %v6545 = vpack.c.b16 %v6542, %v6541
  %v6546 = vpack.c.b16 %v6544, %v6543
  %v6550 = vsel %vm288, %v6530, 0
  %v6553 = vsel %vm288, %v6531, 0
  %6555 = vmatprep.subr.bf16.mxu0 0
  %6556 = vmatpush1.bf16.msra.mxu0 %v6545
  %6557 = vmatprep.subr.bf16.mxu0 0
  %6558 = vmatpush1.bf16.msra.mxu0 %v6546
  %6559 = vmatprep.subr.bf16.mxu0 0
  %6560 = vmatpush1.bf16.msra.mxu0 0
  %6561 = vmatprep.subr.bf16.mxu0 0
  %6562 = vmatpush1.bf16.msra.mxu0 0
  %6563 = vmatprep.subr.bf16.mxu0 0
  %6564 = vmatpush1.bf16.msra.mxu0 0
  %6565 = vmatprep.subr.bf16.mxu0 0
  %6566 = vmatpush1.bf16.msra.mxu0 0
  %6567 = vmatprep.subr.bf16.mxu0 0
  %6568 = vmatpush1.bf16.msra.mxu0 0
  %6569 = vmatprep.subr.bf16.mxu0 0
  %6570 = vmatpush1.bf16.msra.mxu0 0
  %6571 = vmatprep.subr.bf16.mxu0 0
  %6572 = vmatpush1.bf16.msra.mxu0 0
  %6573 = vmatprep.subr.bf16.mxu0 0
  %6574 = vmatpush1.bf16.msra.mxu0 0
  %6575 = vmatprep.subr.bf16.mxu0 0
  %6576 = vmatpush1.bf16.msra.mxu0 0
  %6577 = vmatprep.subr.bf16.mxu0 0
  %6578 = vmatpush1.bf16.msra.mxu0 0
  %6579 = vmatprep.subr.bf16.mxu0 0
  %6580 = vmatpush1.bf16.msra.mxu0 0
  %6581 = vmatprep.subr.bf16.mxu0 0
  %6582 = vmatpush1.bf16.msra.mxu0 0
  %6583 = vmatprep.subr.bf16.mxu0 0
  %6584 = vmatpush1.bf16.msra.mxu0 0
  %6585 = vmatprep.subr.bf16.mxu0 0
  %6586 = vmatpush1.bf16.msra.mxu0 0
  %6587 = vmatprep.mubr.bf16.mxu0 0
  %6588 = vmatmul.mubr.bf16.gmra.mrb[0].mxu0 %v6550
  %v6589 = vpop.f32.mrb[0].mxu0
  %v6590 = vadd.f32 0.0, %v6589
  %v6591 = vpop.f32.mrb[0].mxu0
  %v6592 = vpop.f32.mrb[0].mxu0
  %v6593 = vadd.f32 0.0, %v6592
  %v6594 = vpop.f32.mrb[0].mxu0
  %6595 = vmatprep.mubr.bf16.mxu0 0
  %6596 = vmatmul.mubr.bf16.gmra.mrb[0].mxu0 %v6553
  %v6597 = vpop.f32.mrb[0].mxu0
  %v6598 = vadd.f32 0.0, %v6597
  %v6599 = vpop.f32.mrb[0].mxu0
  %v6600 = vpop.f32.mrb[0].mxu0
  %v6601 = vadd.f32 0.0, %v6600
  %v6602 = vpop.f32.mrb[0].mxu0
  %6603 = vdwg.mxu0
  %v6604 = vadd.f32 %v5878, %v6590
  %v6605 = vadd.f32 %v5879, %v6593
  %v6606 = vadd.f32 %v5880, %v6598
  %v6607 = vadd.f32 %v5881, %v6601
  %s6608 = scalar_lea.vmem %s7, 1
  %v6609 = vld [vmem:[%s6608] sm:$0x1]
  %v6610 = vmul.f32 %v6604, %v6604
  %v6611 = vmul.f32 %v6605, %v6605
  %v6612 = vmul.f32 %v6606, %v6606
  %v6613 = vmul.f32 %v6607, %v6607
  %6614 = vadd.xlane.f32.xlu0 %v6610
  %v6615 = vpop.xlane.xlu0 %6614
  %6616 = vadd.xlane.f32.xlu0 %v6611
  %v6617 = vpop.xlane.xlu0 %6616
  %6618 = vadd.xlane.f32.xlu0 %v6612
  %v6619 = vpop.xlane.xlu0 %6618
  %6620 = vadd.xlane.f32.xlu0 %v6613
  %v6621 = vpop.xlane.xlu0 %6620
  %v6622 = vmul.f32 %v6615, %v132
  %v6623 = vmul.f32 %v6617, %v132
  %v6624 = vmul.f32 %v6619, %v132
  %v6625 = vmul.f32 %v6621, %v132
  %v6626 = vadd.f32 %v6622, 1e-06
  %v6627 = vadd.f32 %v6623, 1e-06
  %v6628 = vadd.f32 %v6624, 1e-06
  %v6629 = vadd.f32 %v6625, 1e-06
  %v6630 = vrsqrt.pop %v6626
  %v6631 = vrsqrt.pop %v6627
  %v6632 = vrsqrt.pop %v6628
  %v6633 = vrsqrt.pop %v6629
  %v6634 = vmul.f32 %v6604, %v6630
  %v6635 = vmul.f32 %v6605, %v6631
  %v6636 = vmul.f32 %v6606, %v6632
  %v6637 = vmul.f32 %v6607, %v6633
  %v6639 = vlaneseq
  %v6640 = vshrl.u32 %v6639, 7
  %v6641 = vsub.s32 0, %v6640
  %v6642 = vrot.slane %v6609, %v6641
  %v6644 = vmul.f32 %v6634, %v6642
  %v6645 = vmul.f32 %v6635, %v6642
  %v6646 = vmul.f32 %v6636, %v6642
  %v6647 = vmul.f32 %v6637, %v6642
  %v6648 = vpack.c.bf16 %v6645, %v6644
  %v6649 = vpack.c.bf16 %v6647, %v6646
  %s6650 = scalar_lea.vmem %s12, 256
  %v6651 = vld [vmem:[%s6650] sm:$0xff]
  %v6652 = vld [vmem:[%s6650 + $0x8] sm:$0xff]
  %v6653 = vld [vmem:[%s6650 + $0x10] sm:$0xff]
  %v6654 = vld [vmem:[%s6650 + $0x18] sm:$0xff]
  %v6655 = vld [vmem:[%s6650 + $0x20] sm:$0xff]
  %v6656 = vld [vmem:[%s6650 + $0x28] sm:$0xff]
  %v6657 = vld [vmem:[%s6650 + $0x30] sm:$0xff]
  %v6658 = vld [vmem:[%s6650 + $0x38] sm:$0xff]
  %v6659 = vld [vmem:[%s6650 + $0x40] sm:$0xff]
  %v6660 = vld [vmem:[%s6650 + $0x48] sm:$0xff]
  %v6661 = vld [vmem:[%s6650 + $0x50] sm:$0xff]
  %v6662 = vld [vmem:[%s6650 + $0x58] sm:$0xff]
  %v6663 = vld [vmem:[%s6650 + $0x60] sm:$0xff]
  %v6664 = vld [vmem:[%s6650 + $0x68] sm:$0xff]
  %v6665 = vld [vmem:[%s6650 + $0x70] sm:$0xff]
  %v6666 = vld [vmem:[%s6650 + $0x78] sm:$0xff]
  %v6667 = vld [vmem:[%s6650 + $0x80] sm:$0xff]
  %v6668 = vld [vmem:[%s6650 + $0x88] sm:$0xff]
  %v6669 = vld [vmem:[%s6650 + $0x90] sm:$0xff]
  %v6670 = vld [vmem:[%s6650 + $0x98] sm:$0xff]
  %v6671 = vld [vmem:[%s6650 + $0xa0] sm:$0xff]
  %v6672 = vld [vmem:[%s6650 + $0xa8] sm:$0xff]
  %v6673 = vld [vmem:[%s6650 + $0xb0] sm:$0xff]
  %v6674 = vld [vmem:[%s6650 + $0xb8] sm:$0xff]
  %v6675 = vld [vmem:[%s6650 + $0xc0] sm:$0xff]
  %v6676 = vld [vmem:[%s6650 + $0xc8] sm:$0xff]
  %v6677 = vld [vmem:[%s6650 + $0xd0] sm:$0xff]
  %v6678 = vld [vmem:[%s6650 + $0xd8] sm:$0xff]
  %v6679 = vld [vmem:[%s6650 + $0xe0] sm:$0xff]
  %v6680 = vld [vmem:[%s6650 + $0xe8] sm:$0xff]
  %v6681 = vld [vmem:[%s6650 + $0xf0] sm:$0xff]
  %v6682 = vld [vmem:[%s6650 + $0xf8] sm:$0xff]
  %v6715 = vunpack.c.l.b16 %v6651
  %v6716 = vunpack.c.h.b16 %v6651
  %v6717 = vunpack.c.l.b16 %v6652
  %v6718 = vunpack.c.h.b16 %v6652
  %v6719 = vunpack.c.l.b16 %v6653
  %v6720 = vunpack.c.h.b16 %v6653
  %v6721 = vunpack.c.l.b16 %v6654
  %v6722 = vunpack.c.h.b16 %v6654
  %v6723 = vunpack.c.l.b16 %v6655
  %v6724 = vunpack.c.h.b16 %v6655
  %v6725 = vunpack.c.l.b16 %v6656
  %v6726 = vunpack.c.h.b16 %v6656
  %v6727 = vunpack.c.l.b16 %v6657
  %v6728 = vunpack.c.h.b16 %v6657
  %v6729 = vunpack.c.l.b16 %v6658
  %v6730 = vunpack.c.h.b16 %v6658
  %v6731 = vunpack.c.l.b16 %v6659
  %v6732 = vunpack.c.h.b16 %v6659
  %v6733 = vunpack.c.l.b16 %v6660
  %v6734 = vunpack.c.h.b16 %v6660
  %v6735 = vunpack.c.l.b16 %v6661
  %v6736 = vunpack.c.h.b16 %v6661
  %v6737 = vunpack.c.l.b16 %v6662
  %v6738 = vunpack.c.h.b16 %v6662
  %v6739 = vunpack.c.l.b16 %v6663
  %v6740 = vunpack.c.h.b16 %v6663
  %v6741 = vunpack.c.l.b16 %v6664
  %v6742 = vunpack.c.h.b16 %v6664
  %v6743 = vunpack.c.l.b16 %v6665
  %v6744 = vunpack.c.h.b16 %v6665
  %v6745 = vunpack.c.l.b16 %v6666
  %v6746 = vunpack.c.h.b16 %v6666
  %v6747 = vunpack.c.l.b16 %v6667
  %v6748 = vunpack.c.h.b16 %v6667
  %v6749 = vunpack.c.l.b16 %v6668
  %v6750 = vunpack.c.h.b16 %v6668
  %v6751 = vunpack.c.l.b16 %v6669
  %v6752 = vunpack.c.h.b16 %v6669
  %v6753 = vunpack.c.l.b16 %v6670
  %v6754 = vunpack.c.h.b16 %v6670
  %v6755 = vunpack.c.l.b16 %v6671
  %v6756 = vunpack.c.h.b16 %v6671
  %v6757 = vunpack.c.l.b16 %v6672
  %v6758 = vunpack.c.h.b16 %v6672
  %v6759 = vunpack.c.l.b16 %v6673
  %v6760 = vunpack.c.h.b16 %v6673
  %v6761 = vunpack.c.l.b16 %v6674
  %v6762 = vunpack.c.h.b16 %v6674
  %v6763 = vunpack.c.l.b16 %v6675
  %v6764 = vunpack.c.h.b16 %v6675
  %v6765 = vunpack.c.l.b16 %v6676
  %v6766 = vunpack.c.h.b16 %v6676
  %v6767 = vunpack.c.l.b16 %v6677
  %v6768 = vunpack.c.h.b16 %v6677
  %v6769 = vunpack.c.l.b16 %v6678
  %v6770 = vunpack.c.h.b16 %v6678
  %v6771 = vunpack.c.l.b16 %v6679
  %v6772 = vunpack.c.h.b16 %v6679
  %v6773 = vunpack.c.l.b16 %v6680
  %v6774 = vunpack.c.h.b16 %v6680
  %v6775 = vunpack.c.l.b16 %v6681
  %v6776 = vunpack.c.h.b16 %v6681
  %v6777 = vunpack.c.l.b16 %v6682
  %v6778 = vunpack.c.h.b16 %v6682
  %v6779 = vpack.c.b16 %v6719, %v6715
  %v6780 = vpack.c.b16 %v6720, %v6716
  %v6781 = vpack.c.b16 %v6721, %v6717
  %v6782 = vpack.c.b16 %v6722, %v6718
  %v6783 = vpack.c.b16 %v6727, %v6723
  %v6784 = vpack.c.b16 %v6728, %v6724
  %v6785 = vpack.c.b16 %v6729, %v6725
  %v6786 = vpack.c.b16 %v6730, %v6726
  %v6787 = vpack.c.b16 %v6735, %v6731
  %v6788 = vpack.c.b16 %v6736, %v6732
  %v6789 = vpack.c.b16 %v6737, %v6733
  %v6790 = vpack.c.b16 %v6738, %v6734
  %v6791 = vpack.c.b16 %v6743, %v6739
  %v6792 = vpack.c.b16 %v6744, %v6740
  %v6793 = vpack.c.b16 %v6745, %v6741
  %v6794 = vpack.c.b16 %v6746, %v6742
  %v6795 = vpack.c.b16 %v6751, %v6747
  %v6796 = vpack.c.b16 %v6752, %v6748
  %v6797 = vpack.c.b16 %v6753, %v6749
  %v6798 = vpack.c.b16 %v6754, %v6750
  %v6799 = vpack.c.b16 %v6759, %v6755
  %v6800 = vpack.c.b16 %v6760, %v6756
  %v6801 = vpack.c.b16 %v6761, %v6757
  %v6802 = vpack.c.b16 %v6762, %v6758
  %v6803 = vpack.c.b16 %v6767, %v6763
  %v6804 = vpack.c.b16 %v6768, %v6764
  %v6805 = vpack.c.b16 %v6769, %v6765
  %v6806 = vpack.c.b16 %v6770, %v6766
  %v6807 = vpack.c.b16 %v6775, %v6771
  %v6808 = vpack.c.b16 %v6776, %v6772
  %v6809 = vpack.c.b16 %v6777, %v6773
  %v6810 = vpack.c.b16 %v6778, %v6774
  %6843 = vmatprep.subr.bf16.mxu0 %v6780
  %6844 = vmatpush1.bf16.msra.mxu0 %v6779
  %6845 = vmatprep.subr.bf16.mxu0 %v6784
  %6846 = vmatpush1.bf16.msra.mxu0 %v6783
  %6847 = vmatprep.subr.bf16.mxu0 %v6788
  %6848 = vmatpush1.bf16.msra.mxu0 %v6787
  %6849 = vmatprep.subr.bf16.mxu0 %v6792
  %6850 = vmatpush1.bf16.msra.mxu0 %v6791
  %6851 = vmatprep.subr.bf16.mxu0 %v6796
  %6852 = vmatpush1.bf16.msra.mxu0 %v6795
  %6853 = vmatprep.subr.bf16.mxu0 %v6800
  %6854 = vmatpush1.bf16.msra.mxu0 %v6799
  %6855 = vmatprep.subr.bf16.mxu0 %v6804
  %6856 = vmatpush1.bf16.msra.mxu0 %v6803
  %6857 = vmatprep.subr.bf16.mxu0 %v6808
  %6858 = vmatpush1.bf16.msra.mxu0 %v6807
  %6859 = vmatprep.subr.bf16.mxu0 0
  %6860 = vmatpush1.bf16.msra.mxu0 0
  %6861 = vmatprep.subr.bf16.mxu0 0
  %6862 = vmatpush1.bf16.msra.mxu0 0
  %6863 = vmatprep.subr.bf16.mxu0 0
  %6864 = vmatpush1.bf16.msra.mxu0 0
  %6865 = vmatprep.subr.bf16.mxu0 0
  %6866 = vmatpush1.bf16.msra.mxu0 0
  %6867 = vmatprep.subr.bf16.mxu0 0
  %6868 = vmatpush1.bf16.msra.mxu0 0
  %6869 = vmatprep.subr.bf16.mxu0 0
  %6870 = vmatpush1.bf16.msra.mxu0 0
  %6871 = vmatprep.subr.bf16.mxu0 0
  %6872 = vmatpush1.bf16.msra.mxu0 0
  %6873 = vmatprep.subr.bf16.mxu0 0
  %6874 = vmatpush1.bf16.msra.mxu0 0
  %6875 = vmatprep.mubr.bf16.mxu0 0
  %6876 = vmatmul.mubr.bf16.gmra.mrb[0].mxu0 %v6648
  %v6877 = vpop.f32.mrb[0].mxu0
  %v6878 = vadd.f32 0.0, %v6877
  %v6879 = vpop.f32.mrb[0].mxu0
  %v6880 = vadd.f32 0.0, %v6879
  %v6881 = vpop.f32.mrb[0].mxu0
  %v6882 = vadd.f32 0.0, %v6881
  %v6883 = vpop.f32.mrb[0].mxu0
  %v6884 = vadd.f32 0.0, %v6883
  %6885 = vmatprep.mubr.bf16.mxu0 0
  %6886 = vmatmul.mubr.bf16.gmra.mrb[0].mxu0 %v6649
  %v6887 = vpop.f32.mrb[0].mxu0
  %v6888 = vadd.f32 0.0, %v6887
  %v6889 = vpop.f32.mrb[0].mxu0
  %v6890 = vadd.f32 0.0, %v6889
  %v6891 = vpop.f32.mrb[0].mxu0
  %v6892 = vadd.f32 0.0, %v6891
  %v6893 = vpop.f32.mrb[0].mxu0
  %v6894 = vadd.f32 0.0, %v6893
  %6895 = vdwg.mxu0
  %6896 = vmatprep.subr.bf16.mxu0 %v6782
  %6897 = vmatpush1.bf16.msra.mxu0 %v6781
  %6898 = vmatprep.subr.bf16.mxu0 %v6786
  %6899 = vmatpush1.bf16.msra.mxu0 %v6785
  %6900 = vmatprep.subr.bf16.mxu0 %v6790
  %6901 = vmatpush1.bf16.msra.mxu0 %v6789
  %6902 = vmatprep.subr.bf16.mxu0 %v6794
  %6903 = vmatpush1.bf16.msra.mxu0 %v6793
  %6904 = vmatprep.subr.bf16.mxu0 %v6798
  %6905 = vmatpush1.bf16.msra.mxu0 %v6797
  %6906 = vmatprep.subr.bf16.mxu0 %v6802
  %6907 = vmatpush1.bf16.msra.mxu0 %v6801
  %6908 = vmatprep.subr.bf16.mxu0 %v6806
  %6909 = vmatpush1.bf16.msra.mxu0 %v6805
  %6910 = vmatprep.subr.bf16.mxu0 %v6810
  %6911 = vmatpush1.bf16.msra.mxu0 %v6809
  %6912 = vmatprep.subr.bf16.mxu0 0
  %6913 = vmatpush1.bf16.msra.mxu0 0
  %6914 = vmatprep.subr.bf16.mxu0 0
  %6915 = vmatpush1.bf16.msra.mxu0 0
  %6916 = vmatprep.subr.bf16.mxu0 0
  %6917 = vmatpush1.bf16.msra.mxu0 0
  %6918 = vmatprep.subr.bf16.mxu0 0
  %6919 = vmatpush1.bf16.msra.mxu0 0
  %6920 = vmatprep.subr.bf16.mxu0 0
  %6921 = vmatpush1.bf16.msra.mxu0 0
  %6922 = vmatprep.subr.bf16.mxu0 0
  %6923 = vmatpush1.bf16.msra.mxu0 0
  %6924 = vmatprep.subr.bf16.mxu0 0
  %6925 = vmatpush1.bf16.msra.mxu0 0
  %6926 = vmatprep.subr.bf16.mxu0 0
  %6927 = vmatpush1.bf16.msra.mxu0 0
  %6928 = vmatprep.mubr.bf16.mxu0 0
  %6929 = vmatmul.mubr.bf16.gmra.mrb[0].mxu0 %v6648
  %v6930 = vpop.f32.mrb[0].mxu0
  %v6931 = vadd.f32 0.0, %v6930
  %v6932 = vpop.f32.mrb[0].mxu0
  %v6933 = vadd.f32 0.0, %v6932
  %v6934 = vpop.f32.mrb[0].mxu0
  %v6935 = vadd.f32 0.0, %v6934
  %v6936 = vpop.f32.mrb[0].mxu0
  %v6937 = vadd.f32 0.0, %v6936
  %6938 = vmatprep.mubr.bf16.mxu0 0
  %6939 = vmatmul.mubr.bf16.gmra.mrb[0].mxu0 %v6649
  %v6940 = vpop.f32.mrb[0].mxu0
  %v6941 = vadd.f32 0.0, %v6940
  %v6942 = vpop.f32.mrb[0].mxu0
  %v6943 = vadd.f32 0.0, %v6942
  %v6944 = vpop.f32.mrb[0].mxu0
  %v6945 = vadd.f32 0.0, %v6944
  %v6946 = vpop.f32.mrb[0].mxu0
  %v6947 = vadd.f32 0.0, %v6946
  %6948 = vdwg.mxu0
  %v6949 = vxor.u32 %v6878, 2147483648
  %v6950 = vxor.u32 %v6880, 2147483648
  %v6951 = vxor.u32 %v6882, 2147483648
  %v6952 = vxor.u32 %v6884, 2147483648
  %v6953 = vxor.u32 %v6888, 2147483648
  %v6954 = vxor.u32 %v6890, 2147483648
  %v6955 = vxor.u32 %v6892, 2147483648
  %v6956 = vxor.u32 %v6894, 2147483648
  %v6957 = vmul.f32 %v6949, 1.442695
  %v6958 = vpow.pop %v6957
  %v6959 = vmul.f32 %v6950, 1.442695
  %v6960 = vpow.pop %v6959
  %v6961 = vmul.f32 %v6951, 1.442695
  %v6962 = vpow.pop %v6961
  %v6963 = vmul.f32 %v6952, 1.442695
  %v6964 = vpow.pop %v6963
  %v6965 = vmul.f32 %v6953, 1.442695
  %v6966 = vpow.pop %v6965
  %v6967 = vmul.f32 %v6954, 1.442695
  %v6968 = vpow.pop %v6967
  %v6969 = vmul.f32 %v6955, 1.442695
  %v6970 = vpow.pop %v6969
  %v6971 = vmul.f32 %v6956, 1.442695
  %v6972 = vpow.pop %v6971
  %v6973 = vadd.f32 %v6958, 1.0
  %v6974 = vadd.f32 %v6960, 1.0
  %v6975 = vadd.f32 %v6962, 1.0
  %v6976 = vadd.f32 %v6964, 1.0
  %v6977 = vadd.f32 %v6966, 1.0
  %v6978 = vadd.f32 %v6968, 1.0
  %v6979 = vadd.f32 %v6970, 1.0
  %v6980 = vadd.f32 %v6972, 1.0
  %v6981 = vrcp.pop %v6973
  %v6982 = vmul.f32 1.0, %v6981
  %v6983 = vrcp.pop %v6974
  %v6984 = vmul.f32 1.0, %v6983
  %v6985 = vrcp.pop %v6975
  %v6986 = vmul.f32 1.0, %v6985
  %v6987 = vrcp.pop %v6976
  %v6988 = vmul.f32 1.0, %v6987
  %v6989 = vrcp.pop %v6977
  %v6990 = vmul.f32 1.0, %v6989
  %v6991 = vrcp.pop %v6978
  %v6992 = vmul.f32 1.0, %v6991
  %v6993 = vrcp.pop %v6979
  %v6994 = vmul.f32 1.0, %v6993
  %v6995 = vrcp.pop %v6980
  %v6996 = vmul.f32 1.0, %v6995
  %v6997 = vmul.f32 %v6878, %v6982
  %v6998 = vmul.f32 %v6880, %v6984
  %v6999 = vmul.f32 %v6882, %v6986
  %v7000 = vmul.f32 %v6884, %v6988
  %v7001 = vmul.f32 %v6888, %v6990
  %v7002 = vmul.f32 %v6890, %v6992
  %v7003 = vmul.f32 %v6892, %v6994
  %v7004 = vmul.f32 %v6894, %v6996
  %v7005 = vmul.f32 %v6997, %v6931
  %v7006 = vmul.f32 %v6998, %v6933
  %v7007 = vmul.f32 %v6999, %v6935
  %v7008 = vmul.f32 %v7000, %v6937
  %v7009 = vmul.f32 %v7001, %v6941
  %v7010 = vmul.f32 %v7002, %v6943
  %v7011 = vmul.f32 %v7003, %v6945
  %v7012 = vmul.f32 %v7004, %v6947
  %v7013 = vpack.c.bf16 %v7007, %v7005
  %v7014 = vpack.c.bf16 %v7008, %v7006
  %v7015 = vpack.c.bf16 %v7011, %v7009
  %v7016 = vpack.c.bf16 %v7012, %v7010
  %s7017 = scalar_lea.vmem %s13, 128
  %v7018 = vld [vmem:[%s7017] sm:$0xf]
  %v7019 = vld [vmem:[%s7017 + $0x4] sm:$0xf]
  %v7020 = vld [vmem:[%s7017 + $0x8] sm:$0xf]
  %v7021 = vld [vmem:[%s7017 + $0xc] sm:$0xf]
  %v7022 = vld [vmem:[%s7017 + $0x10] sm:$0xf]
  %v7023 = vld [vmem:[%s7017 + $0x14] sm:$0xf]
  %v7024 = vld [vmem:[%s7017 + $0x18] sm:$0xf]
  %v7025 = vld [vmem:[%s7017 + $0x1c] sm:$0xf]
  %v7026 = vld [vmem:[%s7017 + $0x20] sm:$0xf]
  %v7027 = vld [vmem:[%s7017 + $0x24] sm:$0xf]
  %v7028 = vld [vmem:[%s7017 + $0x28] sm:$0xf]
  %v7029 = vld [vmem:[%s7017 + $0x2c] sm:$0xf]
  %v7030 = vld [vmem:[%s7017 + $0x30] sm:$0xf]
  %v7031 = vld [vmem:[%s7017 + $0x34] sm:$0xf]
  %v7032 = vld [vmem:[%s7017 + $0x38] sm:$0xf]
  %v7033 = vld [vmem:[%s7017 + $0x3c] sm:$0xf]
  %v7034 = vld [vmem:[%s7017 + $0x40] sm:$0xf]
  %v7035 = vld [vmem:[%s7017 + $0x44] sm:$0xf]
  %v7036 = vld [vmem:[%s7017 + $0x48] sm:$0xf]
  %v7037 = vld [vmem:[%s7017 + $0x4c] sm:$0xf]
  %v7038 = vld [vmem:[%s7017 + $0x50] sm:$0xf]
  %v7039 = vld [vmem:[%s7017 + $0x54] sm:$0xf]
  %v7040 = vld [vmem:[%s7017 + $0x58] sm:$0xf]
  %v7041 = vld [vmem:[%s7017 + $0x5c] sm:$0xf]
  %v7042 = vld [vmem:[%s7017 + $0x60] sm:$0xf]
  %v7043 = vld [vmem:[%s7017 + $0x64] sm:$0xf]
  %v7044 = vld [vmem:[%s7017 + $0x68] sm:$0xf]
  %v7045 = vld [vmem:[%s7017 + $0x6c] sm:$0xf]
  %v7046 = vld [vmem:[%s7017 + $0x70] sm:$0xf]
  %v7047 = vld [vmem:[%s7017 + $0x74] sm:$0xf]
  %v7048 = vld [vmem:[%s7017 + $0x78] sm:$0xf]
  %v7049 = vld [vmem:[%s7017 + $0x7c] sm:$0xf]
  %v7082 = vunpack.c.l.b16 %v7018
  %v7083 = vunpack.c.l.b16 %v7019
  %v7084 = vunpack.c.l.b16 %v7020
  %v7085 = vunpack.c.l.b16 %v7021
  %v7086 = vunpack.c.l.b16 %v7022
  %v7087 = vunpack.c.l.b16 %v7023
  %v7088 = vunpack.c.l.b16 %v7024
  %v7089 = vunpack.c.l.b16 %v7025
  %v7090 = vunpack.c.l.b16 %v7026
  %v7091 = vunpack.c.l.b16 %v7027
  %v7092 = vunpack.c.l.b16 %v7028
  %v7093 = vunpack.c.l.b16 %v7029
  %v7094 = vunpack.c.l.b16 %v7030
  %v7095 = vunpack.c.l.b16 %v7031
  %v7096 = vunpack.c.l.b16 %v7032
  %v7097 = vunpack.c.l.b16 %v7033
  %v7098 = vunpack.c.l.b16 %v7034
  %v7099 = vunpack.c.l.b16 %v7035
  %v7100 = vunpack.c.l.b16 %v7036
  %v7101 = vunpack.c.l.b16 %v7037
  %v7102 = vunpack.c.l.b16 %v7038
  %v7103 = vunpack.c.l.b16 %v7039
  %v7104 = vunpack.c.l.b16 %v7040
  %v7105 = vunpack.c.l.b16 %v7041
  %v7106 = vunpack.c.l.b16 %v7042
  %v7107 = vunpack.c.l.b16 %v7043
  %v7108 = vunpack.c.l.b16 %v7044
  %v7109 = vunpack.c.l.b16 %v7045
  %v7110 = vunpack.c.l.b16 %v7046
  %v7111 = vunpack.c.l.b16 %v7047
  %v7112 = vunpack.c.l.b16 %v7048
  %v7113 = vunpack.c.l.b16 %v7049
  %v7114 = vpack.c.b16 %v7083, %v7082
  %v7115 = vpack.c.b16 %v7085, %v7084
  %v7116 = vpack.c.b16 %v7087, %v7086
  %v7117 = vpack.c.b16 %v7089, %v7088
  %v7118 = vpack.c.b16 %v7091, %v7090
  %v7119 = vpack.c.b16 %v7093, %v7092
  %v7120 = vpack.c.b16 %v7095, %v7094
  %v7121 = vpack.c.b16 %v7097, %v7096
  %v7122 = vpack.c.b16 %v7099, %v7098
  %v7123 = vpack.c.b16 %v7101, %v7100
  %v7124 = vpack.c.b16 %v7103, %v7102
  %v7125 = vpack.c.b16 %v7105, %v7104
  %v7126 = vpack.c.b16 %v7107, %v7106
  %v7127 = vpack.c.b16 %v7109, %v7108
  %v7128 = vpack.c.b16 %v7111, %v7110
  %v7129 = vpack.c.b16 %v7113, %v7112
  %7146 = vmatprep.subr.bf16.mxu0 0
  %7147 = vmatpush1.bf16.msra.mxu0 %v7114
  %7148 = vmatprep.subr.bf16.mxu0 0
  %7149 = vmatpush1.bf16.msra.mxu0 %v7115
  %7150 = vmatprep.subr.bf16.mxu0 0
  %7151 = vmatpush1.bf16.msra.mxu0 %v7116
  %7152 = vmatprep.subr.bf16.mxu0 0
  %7153 = vmatpush1.bf16.msra.mxu0 %v7117
  %7154 = vmatprep.subr.bf16.mxu0 0
  %7155 = vmatpush1.bf16.msra.mxu0 %v7118
  %7156 = vmatprep.subr.bf16.mxu0 0
  %7157 = vmatpush1.bf16.msra.mxu0 %v7119
  %7158 = vmatprep.subr.bf16.mxu0 0
  %7159 = vmatpush1.bf16.msra.mxu0 %v7120
  %7160 = vmatprep.subr.bf16.mxu0 0
  %7161 = vmatpush1.bf16.msra.mxu0 %v7121
  %7162 = vmatprep.subr.bf16.mxu0 0
  %7163 = vmatpush1.bf16.msra.mxu0 %v7122
  %7164 = vmatprep.subr.bf16.mxu0 0
  %7165 = vmatpush1.bf16.msra.mxu0 %v7123
  %7166 = vmatprep.subr.bf16.mxu0 0
  %7167 = vmatpush1.bf16.msra.mxu0 %v7124
  %7168 = vmatprep.subr.bf16.mxu0 0
  %7169 = vmatpush1.bf16.msra.mxu0 %v7125
  %7170 = vmatprep.subr.bf16.mxu0 0
  %7171 = vmatpush1.bf16.msra.mxu0 %v7126
  %7172 = vmatprep.subr.bf16.mxu0 0
  %7173 = vmatpush1.bf16.msra.mxu0 %v7127
  %7174 = vmatprep.subr.bf16.mxu0 0
  %7175 = vmatpush1.bf16.msra.mxu0 %v7128
  %7176 = vmatprep.subr.bf16.mxu0 0
  %7177 = vmatpush1.bf16.msra.mxu0 %v7129
  %7178 = vmatprep.mubr.bf16.mxu0 %v7014
  %7179 = vmatmul.mubr.bf16.gmra.mrb[0].mxu0 %v7013
  %v7180 = vpop.f32.mrb[0].mxu0
  %v7181 = vadd.f32 0.0, %v7180
  %v7182 = vpop.f32.mrb[0].mxu0
  %v7183 = vpop.f32.mrb[0].mxu0
  %v7184 = vadd.f32 0.0, %v7183
  %v7185 = vpop.f32.mrb[0].mxu0
  %7186 = vmatprep.mubr.bf16.mxu0 %v7016
  %7187 = vmatmul.mubr.bf16.gmra.mrb[0].mxu0 %v7015
  %v7188 = vpop.f32.mrb[0].mxu0
  %v7189 = vadd.f32 0.0, %v7188
  %v7190 = vpop.f32.mrb[0].mxu0
  %v7191 = vpop.f32.mrb[0].mxu0
  %v7192 = vadd.f32 0.0, %v7191
  %v7193 = vpop.f32.mrb[0].mxu0
  %7194 = vdwg.mxu0
  %v7195 = vadd.f32 %v6604, %v7181
  %v7196 = vadd.f32 %v6605, %v7184
  %v7197 = vadd.f32 %v6606, %v7189
  %v7198 = vadd.f32 %v6607, %v7192
  %v7199 = vld [vmem:[%s14] sm:$0x1]
  %v7200 = vmul.f32 %v7195, %v7195
  %v7201 = vmul.f32 %v7196, %v7196
  %v7202 = vmul.f32 %v7197, %v7197
  %v7203 = vmul.f32 %v7198, %v7198
  %7204 = vadd.xlane.f32.xlu0 %v7200
  %v7205 = vpop.xlane.xlu0 %7204
  %7206 = vadd.xlane.f32.xlu0 %v7201
  %v7207 = vpop.xlane.xlu0 %7206
  %7208 = vadd.xlane.f32.xlu0 %v7202
  %v7209 = vpop.xlane.xlu0 %7208
  %7210 = vadd.xlane.f32.xlu0 %v7203
  %v7211 = vpop.xlane.xlu0 %7210
  %v7212 = vmul.f32 %v7205, %v132
  %v7213 = vmul.f32 %v7207, %v132
  %v7214 = vmul.f32 %v7209, %v132
  %v7215 = vmul.f32 %v7211, %v132
  %v7216 = vadd.f32 %v7212, 1e-06
  %v7217 = vadd.f32 %v7213, 1e-06
  %v7218 = vadd.f32 %v7214, 1e-06
  %v7219 = vadd.f32 %v7215, 1e-06
  %v7220 = vrsqrt.pop %v7216
  %v7221 = vrsqrt.pop %v7217
  %v7222 = vrsqrt.pop %v7218
  %v7223 = vrsqrt.pop %v7219
  %v7224 = vmul.f32 %v7195, %v7220
  %v7225 = vmul.f32 %v7196, %v7221
  %v7226 = vmul.f32 %v7197, %v7222
  %v7227 = vmul.f32 %v7198, %v7223
  %v7229 = vlaneseq
  %v7230 = vshrl.u32 %v7229, 7
  %v7231 = vsub.s32 0, %v7230
  %v7232 = vrot.slane %v7199, %v7231
  %v7234 = vmul.f32 %v7224, %v7232
  %v7235 = vmul.f32 %v7225, %v7232
  %v7236 = vmul.f32 %v7226, %v7232
  %v7237 = vmul.f32 %v7227, %v7232
  %v7238 = vpack.c.bf16 %v7235, %v7234
  %v7239 = vpack.c.bf16 %v7237, %v7236
  %v7240 = vld [vmem:[%s15] sm:$0xff]
  %v7241 = vld [vmem:[%s15 + $0x8] sm:$0xf]
  %v7242 = vld [vmem:[%s15 + $0xc] sm:$0xff]
  %v7243 = vld [vmem:[%s15 + $0x14] sm:$0xf]
  %v7244 = vld [vmem:[%s15 + $0x18] sm:$0xff]
  %v7245 = vld [vmem:[%s15 + $0x20] sm:$0xf]
  %v7246 = vld [vmem:[%s15 + $0x24] sm:$0xff]
  %v7247 = vld [vmem:[%s15 + $0x2c] sm:$0xf]
  %v7248 = vld [vmem:[%s15 + $0x30] sm:$0xff]
  %v7249 = vld [vmem:[%s15 + $0x38] sm:$0xf]
  %v7250 = vld [vmem:[%s15 + $0x3c] sm:$0xff]
  %v7251 = vld [vmem:[%s15 + $0x44] sm:$0xf]
  %v7252 = vld [vmem:[%s15 + $0x48] sm:$0xff]
  %v7253 = vld [vmem:[%s15 + $0x50] sm:$0xf]
  %v7254 = vld [vmem:[%s15 + $0x54] sm:$0xff]
  %v7255 = vld [vmem:[%s15 + $0x5c] sm:$0xf]
  %v7256 = vld [vmem:[%s15 + $0x60] sm:$0xff]
  %v7257 = vld [vmem:[%s15 + $0x68] sm:$0xf]
  %v7258 = vld [vmem:[%s15 + $0x6c] sm:$0xff]
  %v7259 = vld [vmem:[%s15 + $0x74] sm:$0xf]
  %v7260 = vld [vmem:[%s15 + $0x78] sm:$0xff]
  %v7261 = vld [vmem:[%s15 + $0x80] sm:$0xf]
  %v7262 = vld [vmem:[%s15 + $0x84] sm:$0xff]
  %v7263 = vld [vmem:[%s15 + $0x8c] sm:$0xf]
  %v7264 = vld [vmem:[%s15 + $0x90] sm:$0xff]
  %v7265 = vld [vmem:[%s15 + $0x98] sm:$0xf]
  %v7266 = vld [vmem:[%s15 + $0x9c] sm:$0xff]
  %v7267 = vld [vmem:[%s15 + $0xa4] sm:$0xf]
  %v7268 = vld [vmem:[%s15 + $0xa8] sm:$0xff]
  %v7269 = vld [vmem:[%s15 + $0xb0] sm:$0xf]
  %v7270 = vld [vmem:[%s15 + $0xb4] sm:$0xff]
  %v7271 = vld [vmem:[%s15 + $0xbc] sm:$0xf]
  %v7304 = vunpack.c.l.b16 %v7240
  %v7305 = vunpack.c.h.b16 %v7240
  %v7306 = vunpack.c.l.b16 %v7241
  %v7307 = vunpack.c.l.b16 %v7242
  %v7308 = vunpack.c.h.b16 %v7242
  %v7309 = vunpack.c.l.b16 %v7243
  %v7310 = vunpack.c.l.b16 %v7244
  %v7311 = vunpack.c.h.b16 %v7244
  %v7312 = vunpack.c.l.b16 %v7245
  %v7313 = vunpack.c.l.b16 %v7246
  %v7314 = vunpack.c.h.b16 %v7246
  %v7315 = vunpack.c.l.b16 %v7247
  %v7316 = vunpack.c.l.b16 %v7248
  %v7317 = vunpack.c.h.b16 %v7248
  %v7318 = vunpack.c.l.b16 %v7249
  %v7319 = vunpack.c.l.b16 %v7250
  %v7320 = vunpack.c.h.b16 %v7250
  %v7321 = vunpack.c.l.b16 %v7251
  %v7322 = vunpack.c.l.b16 %v7252
  %v7323 = vunpack.c.h.b16 %v7252
  %v7324 = vunpack.c.l.b16 %v7253
  %v7325 = vunpack.c.l.b16 %v7254
  %v7326 = vunpack.c.h.b16 %v7254
  %v7327 = vunpack.c.l.b16 %v7255
  %v7328 = vunpack.c.l.b16 %v7256
  %v7329 = vunpack.c.h.b16 %v7256
  %v7330 = vunpack.c.l.b16 %v7257
  %v7331 = vunpack.c.l.b16 %v7258
  %v7332 = vunpack.c.h.b16 %v7258
  %v7333 = vunpack.c.l.b16 %v7259
  %v7334 = vunpack.c.l.b16 %v7260
  %v7335 = vunpack.c.h.b16 %v7260
  %v7336 = vunpack.c.l.b16 %v7261
  %v7337 = vunpack.c.l.b16 %v7262
  %v7338 = vunpack.c.h.b16 %v7262
  %v7339 = vunpack.c.l.b16 %v7263
  %v7340 = vunpack.c.l.b16 %v7264
  %v7341 = vunpack.c.h.b16 %v7264
  %v7342 = vunpack.c.l.b16 %v7265
  %v7343 = vunpack.c.l.b16 %v7266
  %v7344 = vunpack.c.h.b16 %v7266
  %v7345 = vunpack.c.l.b16 %v7267
  %v7346 = vunpack.c.l.b16 %v7268
  %v7347 = vunpack.c.h.b16 %v7268
  %v7348 = vunpack.c.l.b16 %v7269
  %v7349 = vunpack.c.l.b16 %v7270
  %v7350 = vunpack.c.h.b16 %v7270
  %v7351 = vunpack.c.l.b16 %v7271
  %v7352 = vpack.c.b16 %v7307, %v7304
  %v7353 = vpack.c.b16 %v7308, %v7305
  %v7354 = vpack.c.b16 %v7309, %v7306
  %v7355 = vpack.c.b16 %v7313, %v7310
  %v7356 = vpack.c.b16 %v7314, %v7311
  %v7357 = vpack.c.b16 %v7315, %v7312
  %v7358 = vpack.c.b16 %v7319, %v7316
  %v7359 = vpack.c.b16 %v7320, %v7317
  %v7360 = vpack.c.b16 %v7321, %v7318
  %v7361 = vpack.c.b16 %v7325, %v7322
  %v7362 = vpack.c.b16 %v7326, %v7323
  %v7363 = vpack.c.b16 %v7327, %v7324
  %v7364 = vpack.c.b16 %v7331, %v7328
  %v7365 = vpack.c.b16 %v7332, %v7329
  %v7366 = vpack.c.b16 %v7333, %v7330
  %v7367 = vpack.c.b16 %v7337, %v7334
  %v7368 = vpack.c.b16 %v7338, %v7335
  %v7369 = vpack.c.b16 %v7339, %v7336
  %v7370 = vpack.c.b16 %v7343, %v7340
  %v7371 = vpack.c.b16 %v7344, %v7341
  %v7372 = vpack.c.b16 %v7345, %v7342
  %v7373 = vpack.c.b16 %v7349, %v7346
  %v7374 = vpack.c.b16 %v7350, %v7347
  %v7375 = vpack.c.b16 %v7351, %v7348
  %7400 = vmatprep.subr.bf16.mxu0 %v7353
  %7401 = vmatpush1.bf16.msra.mxu0 %v7352
  %7402 = vmatprep.subr.bf16.mxu0 %v7356
  %7403 = vmatpush1.bf16.msra.mxu0 %v7355
  %7404 = vmatprep.subr.bf16.mxu0 %v7359
  %7405 = vmatpush1.bf16.msra.mxu0 %v7358
  %7406 = vmatprep.subr.bf16.mxu0 %v7362
  %7407 = vmatpush1.bf16.msra.mxu0 %v7361
  %7408 = vmatprep.subr.bf16.mxu0 %v7365
  %7409 = vmatpush1.bf16.msra.mxu0 %v7364
  %7410 = vmatprep.subr.bf16.mxu0 %v7368
  %7411 = vmatpush1.bf16.msra.mxu0 %v7367
  %7412 = vmatprep.subr.bf16.mxu0 %v7371
  %7413 = vmatpush1.bf16.msra.mxu0 %v7370
  %7414 = vmatprep.subr.bf16.mxu0 %v7374
  %7415 = vmatpush1.bf16.msra.mxu0 %v7373
  %7416 = vmatprep.subr.bf16.mxu0 0
  %7417 = vmatpush1.bf16.msra.mxu0 0
  %7418 = vmatprep.subr.bf16.mxu0 0
  %7419 = vmatpush1.bf16.msra.mxu0 0
  %7420 = vmatprep.subr.bf16.mxu0 0
  %7421 = vmatpush1.bf16.msra.mxu0 0
  %7422 = vmatprep.subr.bf16.mxu0 0
  %7423 = vmatpush1.bf16.msra.mxu0 0
  %7424 = vmatprep.subr.bf16.mxu0 0
  %7425 = vmatpush1.bf16.msra.mxu0 0
  %7426 = vmatprep.subr.bf16.mxu0 0
  %7427 = vmatpush1.bf16.msra.mxu0 0
  %7428 = vmatprep.subr.bf16.mxu0 0
  %7429 = vmatpush1.bf16.msra.mxu0 0
  %7430 = vmatprep.subr.bf16.mxu0 0
  %7431 = vmatpush1.bf16.msra.mxu0 0
  %7432 = vmatprep.mubr.bf16.mxu0 0
  %7433 = vmatmul.mubr.bf16.gmra.mrb[0].mxu0 %v7238
  %v7434 = vpop.f32.mrb[0].mxu0
  %v7435 = vadd.f32 0.0, %v7434
  %v7436 = vpop.f32.mrb[0].mxu0
  %v7437 = vadd.f32 0.0, %v7436
  %v7438 = vpop.f32.mrb[0].mxu0
  %v7439 = vadd.f32 0.0, %v7438
  %v7440 = vpop.f32.mrb[0].mxu0
  %v7441 = vadd.f32 0.0, %v7440
  %7442 = vmatprep.mubr.bf16.mxu0 0
  %7443 = vmatmul.mubr.bf16.gmra.mrb[0].mxu0 %v7239
  %v7444 = vpop.f32.mrb[0].mxu0
  %v7445 = vadd.f32 0.0, %v7444
  %v7446 = vpop.f32.mrb[0].mxu0
  %v7447 = vadd.f32 0.0, %v7446
  %v7448 = vpop.f32.mrb[0].mxu0
  %v7449 = vadd.f32 0.0, %v7448
  %v7450 = vpop.f32.mrb[0].mxu0
  %v7451 = vadd.f32 0.0, %v7450
  %7452 = vdwg.mxu0
  %7453 = vmatprep.subr.bf16.mxu0 0
  %7454 = vmatpush1.bf16.msra.mxu0 %v7354
  %7455 = vmatprep.subr.bf16.mxu0 0
  %7456 = vmatpush1.bf16.msra.mxu0 %v7357
  %7457 = vmatprep.subr.bf16.mxu0 0
  %7458 = vmatpush1.bf16.msra.mxu0 %v7360
  %7459 = vmatprep.subr.bf16.mxu0 0
  %7460 = vmatpush1.bf16.msra.mxu0 %v7363
  %7461 = vmatprep.subr.bf16.mxu0 0
  %7462 = vmatpush1.bf16.msra.mxu0 %v7366
  %7463 = vmatprep.subr.bf16.mxu0 0
  %7464 = vmatpush1.bf16.msra.mxu0 %v7369
  %7465 = vmatprep.subr.bf16.mxu0 0
  %7466 = vmatpush1.bf16.msra.mxu0 %v7372
  %7467 = vmatprep.subr.bf16.mxu0 0
  %7468 = vmatpush1.bf16.msra.mxu0 %v7375
  %7469 = vmatprep.subr.bf16.mxu0 0
  %7470 = vmatpush1.bf16.msra.mxu0 0
  %7471 = vmatprep.subr.bf16.mxu0 0
  %7472 = vmatpush1.bf16.msra.mxu0 0
  %7473 = vmatprep.subr.bf16.mxu0 0
  %7474 = vmatpush1.bf16.msra.mxu0 0
  %7475 = vmatprep.subr.bf16.mxu0 0
  %7476 = vmatpush1.bf16.msra.mxu0 0
  %7477 = vmatprep.subr.bf16.mxu0 0
  %7478 = vmatpush1.bf16.msra.mxu0 0
  %7479 = vmatprep.subr.bf16.mxu0 0
  %7480 = vmatpush1.bf16.msra.mxu0 0
  %7481 = vmatprep.subr.bf16.mxu0 0
  %7482 = vmatpush1.bf16.msra.mxu0 0
  %7483 = vmatprep.subr.bf16.mxu0 0
  %7484 = vmatpush1.bf16.msra.mxu0 0
  %7485 = vmatprep.mubr.bf16.mxu0 0
  %7486 = vmatmul.mubr.bf16.gmra.mrb[0].mxu0 %v7238
  %v7487 = vpop.f32.mrb[0].mxu0
  %v7488 = vadd.f32 0.0, %v7487
  %v7489 = vpop.f32.mrb[0].mxu0
  %v7490 = vpop.f32.mrb[0].mxu0
  %v7491 = vadd.f32 0.0, %v7490
  %v7492 = vpop.f32.mrb[0].mxu0
  %7493 = vmatprep.mubr.bf16.mxu0 0
  %7494 = vmatmul.mubr.bf16.gmra.mrb[0].mxu0 %v7239
  %v7495 = vpop.f32.mrb[0].mxu0
  %v7496 = vadd.f32 0.0, %v7495
  %v7497 = vpop.f32.mrb[0].mxu0
  %v7498 = vpop.f32.mrb[0].mxu0
  %v7499 = vadd.f32 0.0, %v7498
  %v7500 = vpop.f32.mrb[0].mxu0
  %7501 = vdwg.mxu0
  %v7502 = vmax.f32 %v7435, %v7437
  %v7503 = vmax.f32 %v7502, %v7488
  %7504 = vmax.xlane.f32.xlu0 %v7503
  %v7505 = vpop.xlane.xlu0 %7504
  %v7506 = vmax.f32 %v7439, %v7441
  %v7507 = vmax.f32 %v7506, %v7491
  %7508 = vmax.xlane.f32.xlu0 %v7507
  %v7509 = vpop.xlane.xlu0 %7508
  %v7510 = vmax.f32 %v7445, %v7447
  %v7511 = vmax.f32 %v7510, %v7496
  %7512 = vmax.xlane.f32.xlu0 %v7511
  %v7513 = vpop.xlane.xlu0 %7512
  %v7514 = vmax.f32 %v7449, %v7451
  %v7515 = vmax.f32 %v7514, %v7499
  %7516 = vmax.xlane.f32.xlu0 %v7515
  %v7517 = vpop.xlane.xlu0 %7516
  %v7518 = vsub.f32 %v7435, %v7505
  %v7519 = vsub.f32 %v7437, %v7505
  %v7520 = vsub.f32 %v7488, %v7505
  %v7521 = vsub.f32 %v7439, %v7509
  %v7522 = vsub.f32 %v7441, %v7509
  %v7523 = vsub.f32 %v7491, %v7509
  %v7524 = vsub.f32 %v7445, %v7513
  %v7525 = vsub.f32 %v7447, %v7513
  %v7526 = vsub.f32 %v7496, %v7513
  %v7527 = vsub.f32 %v7449, %v7517
  %v7528 = vsub.f32 %v7451, %v7517
  %v7529 = vsub.f32 %v7499, %v7517
  %v7530 = vmul.f32 %v7518, 1.442695
  %v7531 = vpow.pop %v7530
  %v7532 = vmul.f32 %v7519, 1.442695
  %v7533 = vpow.pop %v7532
  %v7534 = vmul.f32 %v7520, 1.442695
  %v7535 = vpow.pop %v7534
  %v7536 = vmul.f32 %v7521, 1.442695
  %v7537 = vpow.pop %v7536
  %v7538 = vmul.f32 %v7522, 1.442695
  %v7539 = vpow.pop %v7538
  %v7540 = vmul.f32 %v7523, 1.442695
  %v7541 = vpow.pop %v7540
  %v7542 = vmul.f32 %v7524, 1.442695
  %v7543 = vpow.pop %v7542
  %v7544 = vmul.f32 %v7525, 1.442695
  %v7545 = vpow.pop %v7544
  %v7546 = vmul.f32 %v7526, 1.442695
  %v7547 = vpow.pop %v7546
  %v7548 = vmul.f32 %v7527, 1.442695
  %v7549 = vpow.pop %v7548
  %v7550 = vmul.f32 %v7528, 1.442695
  %v7551 = vpow.pop %v7550
  %v7552 = vmul.f32 %v7529, 1.442695
  %v7553 = vpow.pop %v7552
  %v7554 = vadd.f32 %v7531, %v7533
  %v7555 = vadd.f32 %v7554, %v7535
  %7556 = vadd.xlane.f32.xlu0 %v7555
  %v7557 = vpop.xlane.xlu0 %7556
  %v7558 = vadd.f32 %v7537, %v7539
  %v7559 = vadd.f32 %v7558, %v7541
  %7560 = vadd.xlane.f32.xlu0 %v7559
  %v7561 = vpop.xlane.xlu0 %7560
  %v7562 = vadd.f32 %v7543, %v7545
  %v7563 = vadd.f32 %v7562, %v7547
  %7564 = vadd.xlane.f32.xlu0 %v7563
  %v7565 = vpop.xlane.xlu0 %7564
  %v7566 = vadd.f32 %v7549, %v7551
  %v7567 = vadd.f32 %v7566, %v7553
  %7568 = vadd.xlane.f32.xlu0 %v7567
  %v7569 = vpop.xlane.xlu0 %7568
  %v7570 = vlog2.pop %v7557
  %v7571 = vmul.f32 %v7570, 0.6931472
  %v7572 = vlog2.pop %v7561
  %v7573 = vmul.f32 %v7572, 0.6931472
  %v7574 = vlog2.pop %v7565
  %v7575 = vmul.f32 %v7574, 0.6931472
  %v7576 = vlog2.pop %v7569
  %v7577 = vmul.f32 %v7576, 0.6931472
  %v7578 = vadd.s32 %v80, 128
  %v7579 = vadd.s32 %v80, 256
  %vm7580 = vcmp.eq.f32.partialorder %v7435, %v7505
  %vm7581 = vcmp.eq.f32.partialorder %v7437, %v7505
  %vm7582 = vcmp.eq.f32.partialorder %v7488, %v7505
  %vm7583 = vcmp.eq.f32.partialorder %v7439, %v7509
  %vm7584 = vcmp.eq.f32.partialorder %v7441, %v7509
  %vm7585 = vcmp.eq.f32.partialorder %v7491, %v7509
  %vm7586 = vcmp.eq.f32.partialorder %v7445, %v7513
  %vm7587 = vcmp.eq.f32.partialorder %v7447, %v7513
  %vm7588 = vcmp.eq.f32.partialorder %v7496, %v7513
  %vm7589 = vcmp.eq.f32.partialorder %v7449, %v7517
  %vm7590 = vcmp.eq.f32.partialorder %v7451, %v7517
  %vm7591 = vcmp.eq.f32.partialorder %v7499, %v7517
  %v7592 = vsel %vm7580, %v80, 384
  %v7593 = vsel %vm7581, %v7578, 384
  %v7594 = vsel %vm7582, %v7579, 384
  %v7595 = vsel %vm7583, %v80, 384
  %v7596 = vsel %vm7584, %v7578, 384
  %v7597 = vsel %vm7585, %v7579, 384
  %v7598 = vsel %vm7586, %v80, 384
  %v7599 = vsel %vm7587, %v7578, 384
  %v7600 = vsel %vm7588, %v7579, 384
  %v7601 = vsel %vm7589, %v80, 384
  %v7602 = vsel %vm7590, %v7578, 384
  %v7603 = vsel %vm7591, %v7579, 384
  %vm7604 = vcmp.lt.s32.totalorder %v7592, %v7593
  %v7605 = vsel %vm7604, %v7592, %v7593
  %vm7606 = vcmp.lt.s32.totalorder %v7605, %v7594
  %v7607 = vsel %vm7606, %v7605, %v7594
  %v7608 = vand.u32 %v7607, 65535
  %v7609 = vshra.s32 %v7607, 16
  %v7610 = vcvt.s32.f32 %v7608
  %v7611 = vcvt.s32.f32 %v7609
  %7612 = vmin.xlane.f32.xlu0 %v7611
  %v7613 = vpop.xlane.xlu0 %7612
  %vm7614 = vcmp.eq.f32.partialorder %v7611, %v7613
  %v7615 = vsel %vm7614, %v7610, inf
  %7616 = vmin.xlane.f32.xlu0 %v7615
  %v7617 = vpop.xlane.xlu0 %7616
  %v7618 = vcvt.f32.s32 %v7617
  %v7619 = vcvt.f32.s32 %v7613
  %v7620 = vshll.u32 %v7619, 16
  %v7621 = vadd.s32 %v7620, %v7618
  %vm7622 = vcmp.lt.s32.totalorder %v7595, %v7596
  %v7623 = vsel %vm7622, %v7595, %v7596
  %vm7624 = vcmp.lt.s32.totalorder %v7623, %v7597
  %v7625 = vsel %vm7624, %v7623, %v7597
  %v7626 = vand.u32 %v7625, 65535
  %v7627 = vshra.s32 %v7625, 16
  %v7628 = vcvt.s32.f32 %v7626
  %v7629 = vcvt.s32.f32 %v7627
  %7630 = vmin.xlane.f32.xlu0 %v7629
  %v7631 = vpop.xlane.xlu0 %7630
  %vm7632 = vcmp.eq.f32.partialorder %v7629, %v7631
  %v7633 = vsel %vm7632, %v7628, inf
  %7634 = vmin.xlane.f32.xlu0 %v7633
  %v7635 = vpop.xlane.xlu0 %7634
  %v7636 = vcvt.f32.s32 %v7635
  %v7637 = vcvt.f32.s32 %v7631
  %v7638 = vshll.u32 %v7637, 16
  %v7639 = vadd.s32 %v7638, %v7636
  %vm7640 = vcmp.lt.s32.totalorder %v7598, %v7599
  %v7641 = vsel %vm7640, %v7598, %v7599
  %vm7642 = vcmp.lt.s32.totalorder %v7641, %v7600
  %v7643 = vsel %vm7642, %v7641, %v7600
  %v7644 = vand.u32 %v7643, 65535
  %v7645 = vshra.s32 %v7643, 16
  %v7646 = vcvt.s32.f32 %v7644
  %v7647 = vcvt.s32.f32 %v7645
  %7648 = vmin.xlane.f32.xlu0 %v7647
  %v7649 = vpop.xlane.xlu0 %7648
  %vm7650 = vcmp.eq.f32.partialorder %v7647, %v7649
  %v7651 = vsel %vm7650, %v7646, inf
  %7652 = vmin.xlane.f32.xlu0 %v7651
  %v7653 = vpop.xlane.xlu0 %7652
  %v7654 = vcvt.f32.s32 %v7653
  %v7655 = vcvt.f32.s32 %v7649
  %v7656 = vshll.u32 %v7655, 16
  %v7657 = vadd.s32 %v7656, %v7654
  %vm7658 = vcmp.lt.s32.totalorder %v7601, %v7602
  %v7659 = vsel %vm7658, %v7601, %v7602
  %vm7660 = vcmp.lt.s32.totalorder %v7659, %v7603
  %v7661 = vsel %vm7660, %v7659, %v7603
  %v7662 = vand.u32 %v7661, 65535
  %v7663 = vshra.s32 %v7661, 16
  %v7664 = vcvt.s32.f32 %v7662
  %v7665 = vcvt.s32.f32 %v7663
  %7666 = vmin.xlane.f32.xlu0 %v7665
  %v7667 = vpop.xlane.xlu0 %7666
  %vm7668 = vcmp.eq.f32.partialorder %v7665, %v7667
  %v7669 = vsel %vm7668, %v7664, inf
  %7670 = vmin.xlane.f32.xlu0 %v7669
  %v7671 = vpop.xlane.xlu0 %7670
  %v7672 = vcvt.f32.s32 %v7671
  %v7673 = vcvt.f32.s32 %v7667
  %v7674 = vshll.u32 %v7673, 16
  %v7675 = vadd.s32 %v7674, %v7672
  %v7676 = vld [vmem:[%s2] sm:$0xff]
  %v7677 = vld [vmem:[%s2 + $0x8] sm:$0xff]
  %v7678 = vld [vmem:[%s2 + $0x10] sm:$0xff]
  %v7679 = vld [vmem:[%s2 + $0x18] sm:$0xff]
  %vm7680 = vcmp.lt.s32.totalorder %v7676, 0
  %vm7681 = vcmp.lt.s32.totalorder %v7677, 0
  %vm7682 = vcmp.lt.s32.totalorder %v7678, 0
  %vm7683 = vcmp.lt.s32.totalorder %v7679, 0
  %v7684 = vsel %vm7680, 0, %v7676
  %v7685 = vsel %vm7681, 0, %v7677
  %v7686 = vsel %vm7682, 0, %v7678
  %v7687 = vsel %vm7683, 0, %v7679
  %7688 = vset.pattern.permute.xlu0 0
  %7689 = vperm.xlu0 %7688, %v7684
  %v7690 = vpop.permute.xlu0 %7689
  %7691 = vset.pattern.permute.xlu0 0
  %7692 = vperm.xlu0 %7691, %v7685
  %v7693 = vpop.permute.xlu0 %7692
  %7694 = vset.pattern.permute.xlu0 0
  %7695 = vperm.xlu0 %7694, %v7686
  %v7696 = vpop.permute.xlu0 %7695
  %7697 = vset.pattern.permute.xlu0 0
  %7698 = vperm.xlu0 %7697, %v7687
  %v7699 = vpop.permute.xlu0 %7698
  %vm7700 = vcmp.eq.s32.totalorder %v80, %v7690
  %vm7701 = vcmp.eq.s32.totalorder %v7578, %v7690
  %vm7702 = vcmp.eq.s32.totalorder %v7579, %v7690
  %vm7703 = vcmp.eq.s32.totalorder %v80, %v7693
  %vm7704 = vcmp.eq.s32.totalorder %v7578, %v7693
  %vm7705 = vcmp.eq.s32.totalorder %v7579, %v7693
  %vm7706 = vcmp.eq.s32.totalorder %v80, %v7696
  %vm7707 = vcmp.eq.s32.totalorder %v7578, %v7696
  %vm7708 = vcmp.eq.s32.totalorder %v7579, %v7696
  %vm7709 = vcmp.eq.s32.totalorder %v80, %v7699
  %vm7710 = vcmp.eq.s32.totalorder %v7578, %v7699
  %vm7711 = vcmp.eq.s32.totalorder %v7579, %v7699
  %v7712 = vsel %vm7700, %v7518, 0.0
  %v7713 = vsel %vm7701, %v7519, 0.0
  %v7714 = vsel %vm7702, %v7520, 0.0
  %v7715 = vsel %vm7703, %v7521, 0.0
  %v7716 = vsel %vm7704, %v7522, 0.0
  %v7717 = vsel %vm7705, %v7523, 0.0
  %v7718 = vsel %vm7706, %v7524, 0.0
  %v7719 = vsel %vm7707, %v7525, 0.0
  %v7720 = vsel %vm7708, %v7526, 0.0
  %v7721 = vsel %vm7709, %v7527, 0.0
  %v7722 = vsel %vm7710, %v7528, 0.0
  %v7723 = vsel %vm7711, %v7529, 0.0
  %v7724 = vadd.f32 %v7712, %v7713
  %v7725 = vadd.f32 %v7724, %v7714
  %7726 = vadd.xlane.f32.xlu0 %v7725
  %v7727 = vpop.xlane.xlu0 %7726
  %v7728 = vadd.f32 %v7715, %v7716
  %v7729 = vadd.f32 %v7728, %v7717
  %7730 = vadd.xlane.f32.xlu0 %v7729
  %v7731 = vpop.xlane.xlu0 %7730
  %v7732 = vadd.f32 %v7718, %v7719
  %v7733 = vadd.f32 %v7732, %v7720
  %7734 = vadd.xlane.f32.xlu0 %v7733
  %v7735 = vpop.xlane.xlu0 %7734
  %v7736 = vadd.f32 %v7721, %v7722
  %v7737 = vadd.f32 %v7736, %v7723
  %7738 = vadd.xlane.f32.xlu0 %v7737
  %v7739 = vpop.xlane.xlu0 %7738
  %v7740 = vsub.f32 %v7571, %v7727
  %v7741 = vsub.f32 %v7573, %v7731
  %v7742 = vsub.f32 %v7575, %v7735
  %v7743 = vsub.f32 %v7577, %v7739
  %vm7744 = vcmask 7168
  %7745 = vst.msk [vmem:[%s16] sm:$0xff] %vm7744, %v7740
  %7746 = vst.msk [vmem:[%s16 + $0x8] sm:$0xff] %vm7744, %v7741
  %7747 = vst.msk [vmem:[%s16 + $0x10] sm:$0xff] %vm7744, %v7742
  %7748 = vst.msk [vmem:[%s16 + $0x18] sm:$0xff] %vm7744, %v7743
  %v7749 = vcvt.s32.f32 %v7621
  %v7750 = vcvt.s32.f32 %v7639
  %v7751 = vcvt.s32.f32 %v7657
  %v7752 = vcvt.s32.f32 %v7675
  %vm7753 = vcmask 15368
  %7754 = vst.msk [vmem:[%s16] sm:$0xff] %vm7753, %v7749
  %7755 = vst.msk [vmem:[%s16 + $0x8] sm:$0xff] %vm7753, %v7750
  %7756 = vst.msk [vmem:[%s16 + $0x10] sm:$0xff] %vm7753, %v7751
  %7757 = vst.msk [vmem:[%s16 + $0x18] sm:$0xff] %vm7753, %v7752
  // Predicated region
  $region66: #{motionllm_forward.1} parent=0 // pred_check
    _
  $region67: #{motionllm_forward.1} parent=0 // pred_check_branch
    %7759 = sbr.rel (0) target = $region69
  $region68: #{motionllm_forward.1} parent=0 // pred_region
    _
  $region69: #{motionllm_forward.1} parent=0 // pred_fallthru
    _
  // Predicated region
  $region70: #{motionllm_forward.1} parent=0 // pred_check
    _
  $region71: #{motionllm_forward.1} parent=0 // pred_check_branch
    %7761 = sbr.rel (0) target = $region73
  $region72: #{motionllm_forward.1} parent=0 // pred_region
    _
  $region73: #{motionllm_forward.1} parent=0 // pred_fallthru
    _

</llo_original>
